<compile_context>
chip_gen: v7x
topology: tpu7x:2x2x1
jax: 0.10.0
libtpu: 0.0.40
codegen_flags: <defaults>
</compile_context>

<pallas_src>
import jax
import jax.numpy as jnp
from jax.experimental import pallas as pl
from jax.experimental.pallas import tpu as pltpu

LATENT_DIM = 100
LATENT_PAD = 128          # contraction dim of layer 1 padded to lane multiple
HIDDEN = (128, 256, 512, 1024)
OUT_DIM = 784
NEG_SLOPE = 0.2
BN_EPS = 1e-5


def _leaky_relu(x):
    return jnp.where(x > 0, x, NEG_SLOPE * x)


def _batchnorm(x, gamma, beta):
    # Training-mode BatchNorm1d: per-feature batch mean / biased variance.
    # rsqrt(var+eps)*gamma folded into one per-feature multiplier; d reused.
    mean = jnp.mean(x, axis=0, keepdims=True)
    d = x - mean
    var = jnp.mean(d * d, axis=0, keepdims=True)
    scale = jax.lax.rsqrt(var + BN_EPS) * gamma
    return d * scale + beta


def generator_kernel(
    z_ref,                       # (B, 100) f32 raw latent
    w1_ref, b1_ref,              # (128, 128) bf16 (zero-padded in-dim), (1,128) f32
    w2_ref, g2_ref, be2_ref,     # (128, 256) bf16, BN gamma/beta f32 (bias dropped)
    w3_ref, g3_ref, be3_ref,     # (256, 512) bf16
    w4_ref, g4_ref, be4_ref,     # (512, 1024) bf16
    w5_ref, b5_ref,              # (1024, 784) bf16, (1, 784) f32
    o_ref,                       # (B, 784) f32
    xpad_ref,                    # VMEM scratch (B, 128) bf16
):
    # In-kernel bf16 cast + K-pad 100 -> 128 (VPU filler; no compute slot is
    # saturated here, and it removes a per-call XLA op + HBM round trip).
    xpad_ref[...] = jnp.zeros_like(xpad_ref)
    xpad_ref[:, :LATENT_DIM] = z_ref[...].astype(jnp.bfloat16)
    x = xpad_ref[...]

    # Block 1: Linear(100->128) + LeakyReLU  (K padded 100->128 with zeros)
    h = jnp.dot(x, w1_ref[...], preferred_element_type=jnp.float32) + b1_ref[...]
    h = _leaky_relu(h)

    # Block 2: Linear(128->256) + BN + LeakyReLU  (bias cancelled by BN mean)
    h = jnp.dot(h.astype(jnp.bfloat16), w2_ref[...],
                preferred_element_type=jnp.float32)
    h = _leaky_relu(_batchnorm(h, g2_ref[...], be2_ref[...]))

    # Block 3: Linear(256->512) + BN + LeakyReLU
    h = jnp.dot(h.astype(jnp.bfloat16), w3_ref[...],
                preferred_element_type=jnp.float32)
    h = _leaky_relu(_batchnorm(h, g3_ref[...], be3_ref[...]))

    # Block 4: Linear(512->1024) + BN + LeakyReLU
    h = jnp.dot(h.astype(jnp.bfloat16), w4_ref[...],
                preferred_element_type=jnp.float32)
    h = _leaky_relu(_batchnorm(h, g4_ref[...], be4_ref[...]))

    # Output: Linear(1024->784) + Tanh  (784 = 6*128 + 16; tiny masked tail)
    h = jnp.dot(h.astype(jnp.bfloat16), w5_ref[...],
                preferred_element_type=jnp.float32) + b5_ref[...]
    o_ref[...] = jnp.tanh(h)


def init_generator_params(key):
    """Deterministic synthetic f32 parameters (PyTorch-like shapes/init).

    Weights stored pre-transposed as [in, out]; biases non-zero so the
    bias-cancellation optimization for layers 2-4 is actually exercised.
    """
    dims = (LATENT_DIM,) + HIDDEN + (OUT_DIM,)
    params = {}
    keys = jax.random.split(key, 2 * (len(dims) - 1))
    for i, (din, dout) in enumerate(zip(dims[:-1], dims[1:])):
        scale = 1.0 / jnp.sqrt(float(din))
        params[f"w{i+1}"] = (scale * jax.random.normal(
            keys[2 * i], (din, dout))).astype(jnp.float32)
        params[f"b{i+1}"] = jax.random.uniform(
            keys[2 * i + 1], (1, dout), jnp.float32, -scale, scale)
    for i, c in zip((2, 3, 4), HIDDEN[1:]):
        params[f"g{i}"] = jnp.ones((1, c), jnp.float32)     # BN gamma
        params[f"be{i}"] = jnp.zeros((1, c), jnp.float32)   # BN beta
    return params


def pack_generator_params(params):
    """ONE-TIME packing of f32 params into kernel operands.

    Call once when parameters are created/updated and reuse the result for
    every forward call: bf16 weight cast, w1 in-dim zero-pad 100->128, and
    bias-drop for the BatchNorm'd layers 2-4 (exact under train-mode BN).
    """
    w1 = jnp.zeros((LATENT_PAD, HIDDEN[0]), jnp.bfloat16).at[:LATENT_DIM, :].set(
        params["w1"].astype(jnp.bfloat16))
    return (
        w1, params["b1"],
        params["w2"].astype(jnp.bfloat16), params["g2"], params["be2"],
        params["w3"].astype(jnp.bfloat16), params["g3"], params["be3"],
        params["w4"].astype(jnp.bfloat16), params["g4"], params["be4"],
        params["w5"].astype(jnp.bfloat16), params["b5"],
    )


def generator_forward(z, packed_params):
    """z: (B, 100) f32 raw latent; packed_params: output of pack_generator_params."""
    B = z.shape[0]
    vmem = pl.BlockSpec(memory_space=pltpu.MemorySpace.VMEM)

    # Advisory cost estimate: this kernel is HBM-weight-DMA bound.
    mm_terms = (LATENT_PAD * 128 + 128 * 256 + 256 * 512
                + 512 * 1024 + 1024 * OUT_DIM)
    weight_bytes = 2 * mm_terms                                   # bf16 weights
    param_bytes = 4 * (128 + 2 * 256 + 2 * 512 + 2 * 1024 + OUT_DIM)
    act_bytes = 4 * B * (LATENT_DIM + OUT_DIM)
    cost = pl.CostEstimate(
        flops=2 * B * mm_terms,
        transcendentals=B * OUT_DIM,                              # tanh
        bytes_accessed=weight_bytes + param_bytes + act_bytes,
    )

    # Single un-gridded invocation: every operand resident in VMEM
    # (~3.0 MiB weights + small activations). 32 MiB limit is safe on
    # v5e/v6e (128 MiB) and v7x (64 MiB physical).
    return pl.pallas_call(
        generator_kernel,
        out_shape=jax.ShapeDtypeStruct((B, OUT_DIM), jnp.float32),
        in_specs=[vmem] * (1 + len(packed_params)),
        out_specs=vmem,
        scratch_shapes=[pltpu.VMEM((B, LATENT_PAD), jnp.bfloat16)],
        compiler_params=pltpu.CompilerParams(vmem_limit_bytes=32 << 20),
        cost_estimate=cost,
    )(z, *packed_params)


def generator_reference(z, params):
    """Pure-JAX f32 reference matching PyTorch semantics (biases included)."""
    def bn(x, g, b):
        m = jnp.mean(x, axis=0, keepdims=True)
        v = jnp.mean((x - m) ** 2, axis=0, keepdims=True)
        return (x - m) * jax.lax.rsqrt(v + BN_EPS) * g + b

    def lrelu(x):
        return jnp.where(x > 0, x, NEG_SLOPE * x)

    h = lrelu(z @ params["w1"] + params["b1"])
    h = lrelu(bn(h @ params["w2"] + params["b2"], params["g2"], params["be2"]))
    h = lrelu(bn(h @ params["w3"] + params["b3"], params["g3"], params["be3"]))
    h = lrelu(bn(h @ params["w4"] + params["b4"], params["g4"], params["be4"]))
    return jnp.tanh(h @ params["w5"] + params["b5"])


if __name__ == "__main__":
    key = jax.random.PRNGKey(0)
    k_z, k_p = jax.random.split(key)

    # B >= 2 required for train-mode BatchNorm; 64 keeps sublane tiles clean
    # and amortizes the (per-call) weight DMA while remaining a small example.
    B = 64
    z = jax.random.normal(k_z, (B, LATENT_DIM), dtype=jnp.float32)
    params = init_generator_params(k_p)

    # One-time packing (NOT on the per-call path).
    packed = jax.block_until_ready(pack_generator_params(params))

    fwd = jax.jit(generator_forward)
    out = jax.block_until_ready(fwd(z, packed))

    ref = generator_reference(z, params)
    assert out.shape == (B, OUT_DIM), out.shape
    # bf16 weights/activation casts in the kernel vs f32 reference.
    max_err = float(jnp.max(jnp.abs(out - ref)))
    assert jnp.allclose(out, ref, atol=5e-2, rtol=5e-2), (
        f"mismatch vs JAX reference, max abs err = {max_err}")

    print("KERNEL_OK")
</pallas_src>

<mosaic_0001>
module attributes {stable_mosaic.version = 11 : i64} {
  func.func @generator_kernel(%arg0: memref<64x100xf32, #tpu.memory_space<vmem>>, %arg1: memref<128x128xbf16, #tpu.memory_space<vmem>>, %arg2: memref<1x128xf32, #tpu.memory_space<vmem>>, %arg3: memref<128x256xbf16, #tpu.memory_space<vmem>>, %arg4: memref<1x256xf32, #tpu.memory_space<vmem>>, %arg5: memref<1x256xf32, #tpu.memory_space<vmem>>, %arg6: memref<256x512xbf16, #tpu.memory_space<vmem>>, %arg7: memref<1x512xf32, #tpu.memory_space<vmem>>, %arg8: memref<1x512xf32, #tpu.memory_space<vmem>>, %arg9: memref<512x1024xbf16, #tpu.memory_space<vmem>>, %arg10: memref<1x1024xf32, #tpu.memory_space<vmem>>, %arg11: memref<1x1024xf32, #tpu.memory_space<vmem>>, %arg12: memref<1024x784xbf16, #tpu.memory_space<vmem>>, %arg13: memref<1x784xf32, #tpu.memory_space<vmem>>, %arg14: memref<64x784xf32, #tpu.memory_space<vmem>>, %arg15: memref<64x128xbf16, #tpu.memory_space<vmem>>) attributes {dimension_semantics = [], scalar_prefetch = 0 : i64, scratch_operands = 1 : i64, tpu.core_type = #tpu.core_type<tc>} {
    %cst = arith.constant 0.000000e+00 : bf16
    %0 = vector.broadcast %cst : bf16 to vector<64x128xbf16>
    %c0 = arith.constant 0 : index
    %c0_0 = arith.constant 0 : index
    %1 = vector.load %arg15[%c0, %c0_0] : memref<64x128xbf16, #tpu.memory_space<vmem>>, vector<64x128xbf16>
    tpu.vector_store %arg15[%c0, %c0_0], %0 {strides = array<i32>} : memref<64x128xbf16, #tpu.memory_space<vmem>>, vector<64x128xbf16>,
    %c0_1 = arith.constant 0 : index
    %c0_2 = arith.constant 0 : index
    %2 = vector.load %arg0[%c0_1, %c0_2] : memref<64x100xf32, #tpu.memory_space<vmem>>, vector<64x100xf32>
    %3 = arith.truncf %2 : vector<64x100xf32> to vector<64x100xbf16>
    %c0_3 = arith.constant 0 : index
    %c0_4 = arith.constant 0 : index
    %4 = vector.load %arg15[%c0_3, %c0_4] : memref<64x128xbf16, #tpu.memory_space<vmem>>, vector<64x100xbf16>
    tpu.vector_store %arg15[%c0_3, %c0_4], %3 {strides = array<i32>} : memref<64x128xbf16, #tpu.memory_space<vmem>>, vector<64x100xbf16>,
    %c0_5 = arith.constant 0 : index
    %c0_6 = arith.constant 0 : index
    %5 = vector.load %arg15[%c0_5, %c0_6] : memref<64x128xbf16, #tpu.memory_space<vmem>>, vector<64x128xbf16>
    %c0_7 = arith.constant 0 : index
    %c0_8 = arith.constant 0 : index
    %6 = vector.load %arg1[%c0_7, %c0_8] : memref<128x128xbf16, #tpu.memory_space<vmem>>, vector<128x128xbf16>
    %cst_9 = arith.constant dense<0.000000e+00> : vector<64x128xf32>
    %7 = tpu.matmul %5, %6, %cst_9 {dimension_numbers = #tpu.dot_dimension_numbers<[1], [0], [0], [1], [0, 0, 1, 1], [], []>} : vector<64x128xbf16>, vector<128x128xbf16>, vector<64x128xf32> -> vector<64x128xf32>
    %c0_10 = arith.constant 0 : index
    %c0_11 = arith.constant 0 : index
    %8 = vector.load %arg2[%c0_10, %c0_11] : memref<1x128xf32, #tpu.memory_space<vmem>>, vector<1x128xf32>
    %9 = vector.broadcast %8 : vector<1x128xf32> to vector<64x128xf32>
    %10 = arith.addf %7, %9 : vector<64x128xf32>
    %cst_12 = arith.constant 0.000000e+00 : f32
    %11 = vector.broadcast %cst_12 : f32 to vector<64x128xf32>
    %12 = arith.cmpf ogt, %10, %11 : vector<64x128xf32>
    %cst_13 = arith.constant 2.000000e-01 : f32
    %13 = vector.broadcast %cst_13 : f32 to vector<64x128xf32>
    %14 = arith.mulf %13, %10 : vector<64x128xf32>
    %15 = arith.select %12, %10, %14 : vector<64x128xi1>, vector<64x128xf32>
    %16 = arith.truncf %15 : vector<64x128xf32> to vector<64x128xbf16>
    %c0_14 = arith.constant 0 : index
    %c0_15 = arith.constant 0 : index
    %17 = vector.load %arg3[%c0_14, %c0_15] : memref<128x256xbf16, #tpu.memory_space<vmem>>, vector<128x256xbf16>
    %cst_16 = arith.constant dense<0.000000e+00> : vector<64x256xf32>
    %18 = tpu.matmul %16, %17, %cst_16 {dimension_numbers = #tpu.dot_dimension_numbers<[1], [0], [0], [1], [0, 0, 1, 1], [], []>} : vector<64x128xbf16>, vector<128x256xbf16>, vector<64x256xf32> -> vector<64x256xf32>
    %c0_17 = arith.constant 0 : index
    %c0_18 = arith.constant 0 : index
    %19 = vector.load %arg4[%c0_17, %c0_18] : memref<1x256xf32, #tpu.memory_space<vmem>>, vector<1x256xf32>
    %c0_19 = arith.constant 0 : index
    %c0_20 = arith.constant 0 : index
    %20 = vector.load %arg5[%c0_19, %c0_20] : memref<1x256xf32, #tpu.memory_space<vmem>>, vector<1x256xf32>
    %cst_21 = arith.constant dense<0.000000e+00> : vector<256xf32>
    %21 = vector.multi_reduction <add>, %18, %cst_21 [0] : vector<64x256xf32> to vector<256xf32>
    %22 = vector.shape_cast %21 : vector<256xf32> to vector<1x256xf32>
    %cst_22 = arith.constant 6.400000e+01 : f32
    %23 = vector.broadcast %cst_22 : f32 to vector<1x256xf32>
    %24 = arith.divf %22, %23 : vector<1x256xf32>
    %25 = vector.broadcast %24 : vector<1x256xf32> to vector<64x256xf32>
    %26 = arith.subf %18, %25 : vector<64x256xf32>
    %27 = arith.mulf %26, %26 : vector<64x256xf32>
    %cst_23 = arith.constant dense<0.000000e+00> : vector<256xf32>
    %28 = vector.multi_reduction <add>, %27, %cst_23 [0] : vector<64x256xf32> to vector<256xf32>
    %29 = vector.shape_cast %28 : vector<256xf32> to vector<1x256xf32>
    %cst_24 = arith.constant 6.400000e+01 : f32
    %30 = vector.broadcast %cst_24 : f32 to vector<1x256xf32>
    %31 = arith.divf %29, %30 : vector<1x256xf32>
    %cst_25 = arith.constant 9.99999974E-6 : f32
    %32 = vector.broadcast %cst_25 : f32 to vector<1x256xf32>
    %33 = arith.addf %31, %32 : vector<1x256xf32>
    %34 = math.rsqrt %33 : vector<1x256xf32>
    %35 = arith.mulf %34, %19 : vector<1x256xf32>
    %36 = vector.broadcast %35 : vector<1x256xf32> to vector<64x256xf32>
    %37 = arith.mulf %26, %36 : vector<64x256xf32>
    %38 = vector.broadcast %20 : vector<1x256xf32> to vector<64x256xf32>
    %39 = arith.addf %37, %38 : vector<64x256xf32>
    %cst_26 = arith.constant 0.000000e+00 : f32
    %40 = vector.broadcast %cst_26 : f32 to vector<64x256xf32>
    %41 = arith.cmpf ogt, %39, %40 : vector<64x256xf32>
    %cst_27 = arith.constant 2.000000e-01 : f32
    %42 = vector.broadcast %cst_27 : f32 to vector<64x256xf32>
    %43 = arith.mulf %42, %39 : vector<64x256xf32>
    %44 = arith.select %41, %39, %43 : vector<64x256xi1>, vector<64x256xf32>
    %45 = arith.truncf %44 : vector<64x256xf32> to vector<64x256xbf16>
    %c0_28 = arith.constant 0 : index
    %c0_29 = arith.constant 0 : index
    %46 = vector.load %arg6[%c0_28, %c0_29] : memref<256x512xbf16, #tpu.memory_space<vmem>>, vector<256x512xbf16>
    %cst_30 = arith.constant dense<0.000000e+00> : vector<64x512xf32>
    %47 = tpu.matmul %45, %46, %cst_30 {dimension_numbers = #tpu.dot_dimension_numbers<[1], [0], [0], [1], [0, 0, 1, 1], [], []>} : vector<64x256xbf16>, vector<256x512xbf16>, vector<64x512xf32> -> vector<64x512xf32>
    %c0_31 = arith.constant 0 : index
    %c0_32 = arith.constant 0 : index
    %48 = vector.load %arg7[%c0_31, %c0_32] : memref<1x512xf32, #tpu.memory_space<vmem>>, vector<1x512xf32>
    %c0_33 = arith.constant 0 : index
    %c0_34 = arith.constant 0 : index
    %49 = vector.load %arg8[%c0_33, %c0_34] : memref<1x512xf32, #tpu.memory_space<vmem>>, vector<1x512xf32>
    %cst_35 = arith.constant dense<0.000000e+00> : vector<512xf32>
    %50 = vector.multi_reduction <add>, %47, %cst_35 [0] : vector<64x512xf32> to vector<512xf32>
    %51 = vector.shape_cast %50 : vector<512xf32> to vector<1x512xf32>
    %cst_36 = arith.constant 6.400000e+01 : f32
    %52 = vector.broadcast %cst_36 : f32 to vector<1x512xf32>
    %53 = arith.divf %51, %52 : vector<1x512xf32>
    %54 = vector.broadcast %53 : vector<1x512xf32> to vector<64x512xf32>
    %55 = arith.subf %47, %54 : vector<64x512xf32>
    %56 = arith.mulf %55, %55 : vector<64x512xf32>
    %cst_37 = arith.constant dense<0.000000e+00> : vector<512xf32>
    %57 = vector.multi_reduction <add>, %56, %cst_37 [0] : vector<64x512xf32> to vector<512xf32>
    %58 = vector.shape_cast %57 : vector<512xf32> to vector<1x512xf32>
    %cst_38 = arith.constant 6.400000e+01 : f32
    %59 = vector.broadcast %cst_38 : f32 to vector<1x512xf32>
    %60 = arith.divf %58, %59 : vector<1x512xf32>
    %cst_39 = arith.constant 9.99999974E-6 : f32
    %61 = vector.broadcast %cst_39 : f32 to vector<1x512xf32>
    %62 = arith.addf %60, %61 : vector<1x512xf32>
    %63 = math.rsqrt %62 : vector<1x512xf32>
    %64 = arith.mulf %63, %48 : vector<1x512xf32>
    %65 = vector.broadcast %64 : vector<1x512xf32> to vector<64x512xf32>
    %66 = arith.mulf %55, %65 : vector<64x512xf32>
    %67 = vector.broadcast %49 : vector<1x512xf32> to vector<64x512xf32>
    %68 = arith.addf %66, %67 : vector<64x512xf32>
    %cst_40 = arith.constant 0.000000e+00 : f32
    %69 = vector.broadcast %cst_40 : f32 to vector<64x512xf32>
    %70 = arith.cmpf ogt, %68, %69 : vector<64x512xf32>
    %cst_41 = arith.constant 2.000000e-01 : f32
    %71 = vector.broadcast %cst_41 : f32 to vector<64x512xf32>
    %72 = arith.mulf %71, %68 : vector<64x512xf32>
    %73 = arith.select %70, %68, %72 : vector<64x512xi1>, vector<64x512xf32>
    %74 = arith.truncf %73 : vector<64x512xf32> to vector<64x512xbf16>
    %c0_42 = arith.constant 0 : index
    %c0_43 = arith.constant 0 : index
    %75 = vector.load %arg9[%c0_42, %c0_43] : memref<512x1024xbf16, #tpu.memory_space<vmem>>, vector<512x1024xbf16>
    %cst_44 = arith.constant dense<0.000000e+00> : vector<64x1024xf32>
    %76 = tpu.matmul %74, %75, %cst_44 {dimension_numbers = #tpu.dot_dimension_numbers<[1], [0], [0], [1], [0, 0, 1, 1], [], []>} : vector<64x512xbf16>, vector<512x1024xbf16>, vector<64x1024xf32> -> vector<64x1024xf32>
    %c0_45 = arith.constant 0 : index
    %c0_46 = arith.constant 0 : index
    %77 = vector.load %arg10[%c0_45, %c0_46] : memref<1x1024xf32, #tpu.memory_space<vmem>>, vector<1x1024xf32>
    %c0_47 = arith.constant 0 : index
    %c0_48 = arith.constant 0 : index
    %78 = vector.load %arg11[%c0_47, %c0_48] : memref<1x1024xf32, #tpu.memory_space<vmem>>, vector<1x1024xf32>
    %cst_49 = arith.constant dense<0.000000e+00> : vector<1024xf32>
    %79 = vector.multi_reduction <add>, %76, %cst_49 [0] : vector<64x1024xf32> to vector<1024xf32>
    %80 = vector.shape_cast %79 : vector<1024xf32> to vector<1x1024xf32>
    %cst_50 = arith.constant 6.400000e+01 : f32
    %81 = vector.broadcast %cst_50 : f32 to vector<1x1024xf32>
    %82 = arith.divf %80, %81 : vector<1x1024xf32>
    %83 = vector.broadcast %82 : vector<1x1024xf32> to vector<64x1024xf32>
    %84 = arith.subf %76, %83 : vector<64x1024xf32>
    %85 = arith.mulf %84, %84 : vector<64x1024xf32>
    %cst_51 = arith.constant dense<0.000000e+00> : vector<1024xf32>
    %86 = vector.multi_reduction <add>, %85, %cst_51 [0] : vector<64x1024xf32> to vector<1024xf32>
    %87 = vector.shape_cast %86 : vector<1024xf32> to vector<1x1024xf32>
    %cst_52 = arith.constant 6.400000e+01 : f32
    %88 = vector.broadcast %cst_52 : f32 to vector<1x1024xf32>
    %89 = arith.divf %87, %88 : vector<1x1024xf32>
    %cst_53 = arith.constant 9.99999974E-6 : f32
    %90 = vector.broadcast %cst_53 : f32 to vector<1x1024xf32>
    %91 = arith.addf %89, %90 : vector<1x1024xf32>
    %92 = math.rsqrt %91 : vector<1x1024xf32>
    %93 = arith.mulf %92, %77 : vector<1x1024xf32>
    %94 = vector.broadcast %93 : vector<1x1024xf32> to vector<64x1024xf32>
    %95 = arith.mulf %84, %94 : vector<64x1024xf32>
    %96 = vector.broadcast %78 : vector<1x1024xf32> to vector<64x1024xf32>
    %97 = arith.addf %95, %96 : vector<64x1024xf32>
    %cst_54 = arith.constant 0.000000e+00 : f32
    %98 = vector.broadcast %cst_54 : f32 to vector<64x1024xf32>
    %99 = arith.cmpf ogt, %97, %98 : vector<64x1024xf32>
    %cst_55 = arith.constant 2.000000e-01 : f32
    %100 = vector.broadcast %cst_55 : f32 to vector<64x1024xf32>
    %101 = arith.mulf %100, %97 : vector<64x1024xf32>
    %102 = arith.select %99, %97, %101 : vector<64x1024xi1>, vector<64x1024xf32>
    %103 = arith.truncf %102 : vector<64x1024xf32> to vector<64x1024xbf16>
    %c0_56 = arith.constant 0 : index
    %c0_57 = arith.constant 0 : index
    %104 = vector.load %arg12[%c0_56, %c0_57] : memref<1024x784xbf16, #tpu.memory_space<vmem>>, vector<1024x784xbf16>
    %cst_58 = arith.constant dense<0.000000e+00> : vector<64x784xf32>
    %105 = tpu.matmul %103, %104, %cst_58 {dimension_numbers = #tpu.dot_dimension_numbers<[1], [0], [0], [1], [0, 0, 1, 1], [], []>} : vector<64x1024xbf16>, vector<1024x784xbf16>, vector<64x784xf32> -> vector<64x784xf32>
    %c0_59 = arith.constant 0 : index
    %c0_60 = arith.constant 0 : index
    %106 = vector.load %arg13[%c0_59, %c0_60] : memref<1x784xf32, #tpu.memory_space<vmem>>, vector<1x784xf32>
    %107 = vector.broadcast %106 : vector<1x784xf32> to vector<64x784xf32>
    %108 = arith.addf %105, %107 : vector<64x784xf32>
    %109 = math.tanh %108 : vector<64x784xf32>
    %c0_61 = arith.constant 0 : index
    %c0_62 = arith.constant 0 : index
    %110 = vector.load %arg14[%c0_61, %c0_62] : memref<64x784xf32, #tpu.memory_space<vmem>>, vector<64x784xf32>
    tpu.vector_store %arg14[%c0_61, %c0_62], %109 {strides = array<i32>} : memref<64x784xf32, #tpu.memory_space<vmem>>, vector<64x784xf32>,
    return
  }
}

</mosaic_0001>

<llo_original>
// kernel: generator_forward.1
$region0: #{generator_forward.1}
  #allocation0 [shape = 'u32[]', space=smem, size = 0x4, offset = 0x4, fixed_abs, tag = 'smem constant byte address 0x4 - core index']
  #allocation1 [shape = 'u32[144,128]{1,0:T(1,128)}', space=vmem, size = 0x12000, scoped, tag = 'internal scratch']
  #allocation2 [shape = 'bf16[64,128]{1,0:T(16,128)(2,1)}', space=vmem, size = 0x4000, scoped, tag = 'scratch operand']
  %s0 = inlined_call_operand.vmem [shape: f32[64,100], index: 0, kind: input, shape index: {}]
  %s1 = inlined_call_operand.vmem [shape: bf16[128,128], index: 1, kind: input, shape index: {}]
  %s2 = inlined_call_operand.vmem [shape: f32[1,128], index: 2, kind: input, shape index: {}]
  %s3 = inlined_call_operand.vmem [shape: bf16[128,256], index: 3, kind: input, shape index: {}]
  %s4 = inlined_call_operand.vmem [shape: f32[1,256], index: 4, kind: input, shape index: {}]
  %s5 = inlined_call_operand.vmem [shape: f32[1,256], index: 5, kind: input, shape index: {}]
  %s6 = inlined_call_operand.vmem [shape: bf16[256,512], index: 6, kind: input, shape index: {}]
  %s7 = inlined_call_operand.vmem [shape: f32[1,512], index: 7, kind: input, shape index: {}]
  %s8 = inlined_call_operand.vmem [shape: f32[1,512], index: 8, kind: input, shape index: {}]
  %s9 = inlined_call_operand.vmem [shape: bf16[512,1024], index: 9, kind: input, shape index: {}]
  %s10 = inlined_call_operand.vmem [shape: f32[1,1024], index: 10, kind: input, shape index: {}]
  %s11 = inlined_call_operand.vmem [shape: f32[1,1024], index: 11, kind: input, shape index: {}]
  %s12 = inlined_call_operand.vmem [shape: bf16[1024,784], index: 12, kind: input, shape index: {}]
  %s13 = inlined_call_operand.vmem [shape: f32[1,784], index: 13, kind: input, shape index: {}]
  %s14 = inlined_call_operand.hbm [shape: f32[64,784], index: 14, kind: output, shape index: {}]
  %s15 = sld [smem:[#allocation0]]
  $region66: #{generator_forward.1} parent=0
    _
  %s17 = ssub.s32 1, %s15
  %s18 = scalar_select 0, %s17, %s15
  $region1: #{generator_forward.1} parent=0
    #allocation3 [shape = 'u8[229376]{0}', space=vmem, size = 0x38000, scoped, tag = 'output window, operand 0, single buffered']
    #allocation4 [shape = 's32[1]{0}', space=sflag, size = 0x4, scoped, tag = 'scoped memory for generator_forward.1']
    %19 = vsyncpa [#allocation4], 0
    // Predicated region
    $region2: #{generator_forward.1} parent=1 // pred_check
      _
    $region3: #{generator_forward.1} parent=1 // pred_check_branch
      %21 = sbr.rel (0) target = $region5
    $region4: #{generator_forward.1} parent=1 // pred_region
      _
    $region5: #{generator_forward.1} parent=1 // pred_fallthru
      _
    // Predicated region
    $region6: #{generator_forward.1} parent=1 // pred_check
      _
    $region7: #{generator_forward.1} parent=1 // pred_check_branch
      %23 = sbr.rel (0) target = $region9
    $region8: #{generator_forward.1} parent=1 // pred_region
      _
    $region9: #{generator_forward.1} parent=1 // pred_fallthru
      _
    // Predicated region
    $region10: #{generator_forward.1} parent=1 // pred_check
      _
    $region11: #{generator_forward.1} parent=1 // pred_check_branch
      %25 = sbr.rel (0) target = $region13
    $region12: #{generator_forward.1} parent=1 // pred_region
      _
    $region13: #{generator_forward.1} parent=1 // pred_fallthru
      _
    // Predicated region
    $region14: #{generator_forward.1} parent=1 // pred_check
      _
    $region15: #{generator_forward.1} parent=1 // pred_check_branch
      %27 = sbr.rel (0) target = $region17
    $region16: #{generator_forward.1} parent=1 // pred_region
      _
    $region17: #{generator_forward.1} parent=1 // pred_fallthru
      _
    // Predicated region
    $region18: #{generator_forward.1} parent=1 // pred_check
      _
    $region19: #{generator_forward.1} parent=1 // pred_check_branch
      %29 = sbr.rel (0) target = $region21
    $region20: #{generator_forward.1} parent=1 // pred_region
      _
    $region21: #{generator_forward.1} parent=1 // pred_fallthru
      _
    // Predicated region
    $region22: #{generator_forward.1} parent=1 // pred_check
      _
    $region23: #{generator_forward.1} parent=1 // pred_check_branch
      %31 = sbr.rel (0) target = $region25
    $region24: #{generator_forward.1} parent=1 // pred_region
      _
    $region25: #{generator_forward.1} parent=1 // pred_fallthru
      _
    // Predicated region
    $region26: #{generator_forward.1} parent=1 // pred_check
      _
    $region27: #{generator_forward.1} parent=1 // pred_check_branch
      %33 = sbr.rel (0) target = $region29
    $region28: #{generator_forward.1} parent=1 // pred_region
      _
    $region29: #{generator_forward.1} parent=1 // pred_fallthru
      _
    // Predicated region
    $region30: #{generator_forward.1} parent=1 // pred_check
      _
    $region31: #{generator_forward.1} parent=1 // pred_check_branch
      %35 = sbr.rel (0) target = $region33
    $region32: #{generator_forward.1} parent=1 // pred_region
      _
    $region33: #{generator_forward.1} parent=1 // pred_fallthru
      _
    // Predicated region
    $region34: #{generator_forward.1} parent=1 // pred_check
      _
    $region35: #{generator_forward.1} parent=1 // pred_check_branch
      %37 = sbr.rel (0) target = $region37
    $region36: #{generator_forward.1} parent=1 // pred_region
      _
    $region37: #{generator_forward.1} parent=1 // pred_fallthru
      _
    // Predicated region
    $region38: #{generator_forward.1} parent=1 // pred_check
      _
    $region39: #{generator_forward.1} parent=1 // pred_check_branch
      %39 = sbr.rel (0) target = $region41
    $region40: #{generator_forward.1} parent=1 // pred_region
      _
    $region41: #{generator_forward.1} parent=1 // pred_fallthru
      _
    // Predicated region
    $region42: #{generator_forward.1} parent=1 // pred_check
      _
    $region43: #{generator_forward.1} parent=1 // pred_check_branch
      %41 = sbr.rel (0) target = $region45
    $region44: #{generator_forward.1} parent=1 // pred_region
      _
    $region45: #{generator_forward.1} parent=1 // pred_fallthru
      _
    // Predicated region
    $region46: #{generator_forward.1} parent=1 // pred_check
      _
    $region47: #{generator_forward.1} parent=1 // pred_check_branch
      %43 = sbr.rel (0) target = $region49
    $region48: #{generator_forward.1} parent=1 // pred_region
      _
    $region49: #{generator_forward.1} parent=1 // pred_fallthru
      _
    // Predicated region
    $region50: #{generator_forward.1} parent=1 // pred_check
      _
    $region51: #{generator_forward.1} parent=1 // pred_check_branch
      %45 = sbr.rel (0) target = $region53
    $region52: #{generator_forward.1} parent=1 // pred_region
      _
    $region53: #{generator_forward.1} parent=1 // pred_fallthru
      _
    // Predicated region
    $region54: #{generator_forward.1} parent=1 // pred_check
      _
    $region55: #{generator_forward.1} parent=1 // pred_check_branch
      %47 = sbr.rel (0) target = $region57
    $region56: #{generator_forward.1} parent=1 // pred_region
      _
    $region57: #{generator_forward.1} parent=1 // pred_fallthru
      _
    %49 = vst [vmem:[#allocation2] sm:$0xff] 0
    %50 = vst [vmem:[#allocation2 + $0x8] sm:$0xff] 0
    %51 = vst [vmem:[#allocation2 + $0x10] sm:$0xff] 0
    %52 = vst [vmem:[#allocation2 + $0x18] sm:$0xff] 0
    %v53 = vld [vmem:[%s0] sm:$0xff]
    %v54 = vld [vmem:[%s0 + $0x8] sm:$0xff]
    %v55 = vld [vmem:[%s0 + $0x10] sm:$0xff]
    %v56 = vld [vmem:[%s0 + $0x18] sm:$0xff]
    %v57 = vld [vmem:[%s0 + $0x20] sm:$0xff]
    %v58 = vld [vmem:[%s0 + $0x28] sm:$0xff]
    %v59 = vld [vmem:[%s0 + $0x30] sm:$0xff]
    %v60 = vld [vmem:[%s0 + $0x38] sm:$0xff]
    %v61 = vpack.c.bf16 %v54, %v53
    %v62 = vpack.c.bf16 %v56, %v55
    %v63 = vpack.c.bf16 %v58, %v57
    %v64 = vpack.c.bf16 %v60, %v59
    %vm65 = vcmask 818176
    %66 = vst.msk [vmem:[#allocation2] sm:$0xff] %vm65, %v61
    %67 = vst.msk [vmem:[#allocation2 + $0x8] sm:$0xff] %vm65, %v62
    %68 = vst.msk [vmem:[#allocation2 + $0x10] sm:$0xff] %vm65, %v63
    %69 = vst.msk [vmem:[#allocation2 + $0x18] sm:$0xff] %vm65, %v64
    %v70 = vld [vmem:[#allocation2] sm:$0xff]
    %v71 = vld [vmem:[#allocation2 + $0x8] sm:$0xff]
    %v72 = vld [vmem:[#allocation2 + $0x10] sm:$0xff]
    %v73 = vld [vmem:[#allocation2 + $0x18] sm:$0xff]
    %v74 = vld [vmem:[%s1] sm:$0xf]
    %v75 = vld [vmem:[%s1 + $0x4] sm:$0xf]
    %v76 = vld [vmem:[%s1 + $0x8] sm:$0xf]
    %v77 = vld [vmem:[%s1 + $0xc] sm:$0xf]
    %v78 = vld [vmem:[%s1 + $0x10] sm:$0xf]
    %v79 = vld [vmem:[%s1 + $0x14] sm:$0xf]
    %v80 = vld [vmem:[%s1 + $0x18] sm:$0xf]
    %v81 = vld [vmem:[%s1 + $0x1c] sm:$0xf]
    %v82 = vld [vmem:[%s1 + $0x20] sm:$0xf]
    %v83 = vld [vmem:[%s1 + $0x24] sm:$0xf]
    %v84 = vld [vmem:[%s1 + $0x28] sm:$0xf]
    %v85 = vld [vmem:[%s1 + $0x2c] sm:$0xf]
    %v86 = vld [vmem:[%s1 + $0x30] sm:$0xf]
    %v87 = vld [vmem:[%s1 + $0x34] sm:$0xf]
    %v88 = vld [vmem:[%s1 + $0x38] sm:$0xf]
    %v89 = vld [vmem:[%s1 + $0x3c] sm:$0xf]
    %v90 = vld [vmem:[%s2] sm:$0x1]
    %v92 = vlaneseq
    %v93 = vshrl.u32 %v92, 7
    %v94 = vsub.s32 0, %v93
    %v95 = vrot.slane %v90, %v94
    %v113 = vunpack.c.l.b16 %v74
    %v114 = vunpack.c.l.b16 %v75
    %v115 = vunpack.c.l.b16 %v76
    %v116 = vunpack.c.l.b16 %v77
    %v117 = vunpack.c.l.b16 %v78
    %v118 = vunpack.c.l.b16 %v79
    %v119 = vunpack.c.l.b16 %v80
    %v120 = vunpack.c.l.b16 %v81
    %v121 = vunpack.c.l.b16 %v82
    %v122 = vunpack.c.l.b16 %v83
    %v123 = vunpack.c.l.b16 %v84
    %v124 = vunpack.c.l.b16 %v85
    %v125 = vunpack.c.l.b16 %v86
    %v126 = vunpack.c.l.b16 %v87
    %v127 = vunpack.c.l.b16 %v88
    %v128 = vunpack.c.l.b16 %v89
    %v129 = vpack.c.b16 %v114, %v113
    %v130 = vpack.c.b16 %v116, %v115
    %v131 = vpack.c.b16 %v118, %v117
    %v132 = vpack.c.b16 %v120, %v119
    %v133 = vpack.c.b16 %v122, %v121
    %v134 = vpack.c.b16 %v124, %v123
    %v135 = vpack.c.b16 %v126, %v125
    %v136 = vpack.c.b16 %v128, %v127
    %145 = vmatprep.subr.bf16.mxu0 0
    %146 = vmatpush1.bf16.msra.mxu0 %v129
    %147 = vmatprep.subr.bf16.mxu0 0
    %148 = vmatpush1.bf16.msra.mxu0 %v130
    %149 = vmatprep.subr.bf16.mxu0 0
    %150 = vmatpush1.bf16.msra.mxu0 %v131
    %151 = vmatprep.subr.bf16.mxu0 0
    %152 = vmatpush1.bf16.msra.mxu0 %v132
    %153 = vmatprep.subr.bf16.mxu0 0
    %154 = vmatpush1.bf16.msra.mxu0 %v133
    %155 = vmatprep.subr.bf16.mxu0 0
    %156 = vmatpush1.bf16.msra.mxu0 %v134
    %157 = vmatprep.subr.bf16.mxu0 0
    %158 = vmatpush1.bf16.msra.mxu0 %v135
    %159 = vmatprep.subr.bf16.mxu0 0
    %160 = vmatpush1.bf16.msra.mxu0 %v136
    %161 = vmatprep.subr.bf16.mxu0 0
    %162 = vmatpush1.bf16.msra.mxu0 0
    %163 = vmatprep.subr.bf16.mxu0 0
    %164 = vmatpush1.bf16.msra.mxu0 0
    %165 = vmatprep.subr.bf16.mxu0 0
    %166 = vmatpush1.bf16.msra.mxu0 0
    %167 = vmatprep.subr.bf16.mxu0 0
    %168 = vmatpush1.bf16.msra.mxu0 0
    %169 = vmatprep.subr.bf16.mxu0 0
    %170 = vmatpush1.bf16.msra.mxu0 0
    %171 = vmatprep.subr.bf16.mxu0 0
    %172 = vmatpush1.bf16.msra.mxu0 0
    %173 = vmatprep.subr.bf16.mxu0 0
    %174 = vmatpush1.bf16.msra.mxu0 0
    %175 = vmatprep.subr.bf16.mxu0 0
    %176 = vmatpush1.bf16.msra.mxu0 0
    %177 = vmatprep.mubr.bf16.mxu0 0
    %178 = vmatmul.mubr.bf16.gmra.mrb[0].mxu0 %v70
    %v179 = vpop.f32.mrb[0].mxu0
    %v180 = vadd.f32 %v95, %v179
    %v181 = vpop.f32.mrb[0].mxu0
    %v182 = vpop.f32.mrb[0].mxu0
    %v183 = vadd.f32 %v95, %v182
    %v184 = vpop.f32.mrb[0].mxu0
    %185 = vmatprep.mubr.bf16.mxu0 0
    %186 = vmatmul.mubr.bf16.gmra.mrb[0].mxu0 %v71
    %v187 = vpop.f32.mrb[0].mxu0
    %v188 = vadd.f32 %v95, %v187
    %v189 = vpop.f32.mrb[0].mxu0
    %v190 = vpop.f32.mrb[0].mxu0
    %v191 = vadd.f32 %v95, %v190
    %v192 = vpop.f32.mrb[0].mxu0
    %193 = vmatprep.mubr.bf16.mxu0 0
    %194 = vmatmul.mubr.bf16.gmra.mrb[0].mxu0 %v72
    %v195 = vpop.f32.mrb[0].mxu0
    %v196 = vadd.f32 %v95, %v195
    %v197 = vpop.f32.mrb[0].mxu0
    %v198 = vpop.f32.mrb[0].mxu0
    %v199 = vadd.f32 %v95, %v198
    %v200 = vpop.f32.mrb[0].mxu0
    %201 = vmatprep.mubr.bf16.mxu0 0
    %202 = vmatmul.mubr.bf16.gmra.mrb[0].mxu0 %v73
    %v203 = vpop.f32.mrb[0].mxu0
    %v204 = vadd.f32 %v95, %v203
    %v205 = vpop.f32.mrb[0].mxu0
    %v206 = vpop.f32.mrb[0].mxu0
    %v207 = vadd.f32 %v95, %v206
    %v208 = vpop.f32.mrb[0].mxu0
    %209 = vdwg.mxu0
    %vm210 = vcmp.gt.f32.partialorder %v180, 0.0
    %vm211 = vcmp.gt.f32.partialorder %v183, 0.0
    %vm212 = vcmp.gt.f32.partialorder %v188, 0.0
    %vm213 = vcmp.gt.f32.partialorder %v191, 0.0
    %vm214 = vcmp.gt.f32.partialorder %v196, 0.0
    %vm215 = vcmp.gt.f32.partialorder %v199, 0.0
    %vm216 = vcmp.gt.f32.partialorder %v204, 0.0
    %vm217 = vcmp.gt.f32.partialorder %v207, 0.0
    %v218 = vmul.f32 %v180, 0.2
    %v219 = vmul.f32 %v183, 0.2
    %v220 = vmul.f32 %v188, 0.2
    %v221 = vmul.f32 %v191, 0.2
    %v222 = vmul.f32 %v196, 0.2
    %v223 = vmul.f32 %v199, 0.2
    %v224 = vmul.f32 %v204, 0.2
    %v225 = vmul.f32 %v207, 0.2
    %v226 = vsel %vm210, %v180, %v218
    %v227 = vsel %vm211, %v183, %v219
    %v228 = vsel %vm212, %v188, %v220
    %v229 = vsel %vm213, %v191, %v221
    %v230 = vsel %vm214, %v196, %v222
    %v231 = vsel %vm215, %v199, %v223
    %v232 = vsel %vm216, %v204, %v224
    %v233 = vsel %vm217, %v207, %v225
    %v234 = vpack.c.bf16 %v227, %v226
    %v235 = vpack.c.bf16 %v229, %v228
    %v236 = vpack.c.bf16 %v231, %v230
    %v237 = vpack.c.bf16 %v233, %v232
    %v238 = vld [vmem:[%s3] sm:$0xff]
    %v239 = vld [vmem:[%s3 + $0x8] sm:$0xff]
    %v240 = vld [vmem:[%s3 + $0x10] sm:$0xff]
    %v241 = vld [vmem:[%s3 + $0x18] sm:$0xff]
    %v242 = vld [vmem:[%s3 + $0x20] sm:$0xff]
    %v243 = vld [vmem:[%s3 + $0x28] sm:$0xff]
    %v244 = vld [vmem:[%s3 + $0x30] sm:$0xff]
    %v245 = vld [vmem:[%s3 + $0x38] sm:$0xff]
    %v246 = vld [vmem:[%s3 + $0x40] sm:$0xff]
    %v247 = vld [vmem:[%s3 + $0x48] sm:$0xff]
    %v248 = vld [vmem:[%s3 + $0x50] sm:$0xff]
    %v249 = vld [vmem:[%s3 + $0x58] sm:$0xff]
    %v250 = vld [vmem:[%s3 + $0x60] sm:$0xff]
    %v251 = vld [vmem:[%s3 + $0x68] sm:$0xff]
    %v252 = vld [vmem:[%s3 + $0x70] sm:$0xff]
    %v253 = vld [vmem:[%s3 + $0x78] sm:$0xff]
    %v270 = vunpack.c.l.b16 %v238
    %v271 = vunpack.c.h.b16 %v238
    %v272 = vunpack.c.l.b16 %v239
    %v273 = vunpack.c.h.b16 %v239
    %v274 = vunpack.c.l.b16 %v240
    %v275 = vunpack.c.h.b16 %v240
    %v276 = vunpack.c.l.b16 %v241
    %v277 = vunpack.c.h.b16 %v241
    %v278 = vunpack.c.l.b16 %v242
    %v279 = vunpack.c.h.b16 %v242
    %v280 = vunpack.c.l.b16 %v243
    %v281 = vunpack.c.h.b16 %v243
    %v282 = vunpack.c.l.b16 %v244
    %v283 = vunpack.c.h.b16 %v244
    %v284 = vunpack.c.l.b16 %v245
    %v285 = vunpack.c.h.b16 %v245
    %v286 = vunpack.c.l.b16 %v246
    %v287 = vunpack.c.h.b16 %v246
    %v288 = vunpack.c.l.b16 %v247
    %v289 = vunpack.c.h.b16 %v247
    %v290 = vunpack.c.l.b16 %v248
    %v291 = vunpack.c.h.b16 %v248
    %v292 = vunpack.c.l.b16 %v249
    %v293 = vunpack.c.h.b16 %v249
    %v294 = vunpack.c.l.b16 %v250
    %v295 = vunpack.c.h.b16 %v250
    %v296 = vunpack.c.l.b16 %v251
    %v297 = vunpack.c.h.b16 %v251
    %v298 = vunpack.c.l.b16 %v252
    %v299 = vunpack.c.h.b16 %v252
    %v300 = vunpack.c.l.b16 %v253
    %v301 = vunpack.c.h.b16 %v253
    %v302 = vpack.c.b16 %v272, %v270
    %v303 = vpack.c.b16 %v273, %v271
    %v304 = vpack.c.b16 %v276, %v274
    %v305 = vpack.c.b16 %v277, %v275
    %v306 = vpack.c.b16 %v280, %v278
    %v307 = vpack.c.b16 %v281, %v279
    %v308 = vpack.c.b16 %v284, %v282
    %v309 = vpack.c.b16 %v285, %v283
    %v310 = vpack.c.b16 %v288, %v286
    %v311 = vpack.c.b16 %v289, %v287
    %v312 = vpack.c.b16 %v292, %v290
    %v313 = vpack.c.b16 %v293, %v291
    %v314 = vpack.c.b16 %v296, %v294
    %v315 = vpack.c.b16 %v297, %v295
    %v316 = vpack.c.b16 %v300, %v298
    %v317 = vpack.c.b16 %v301, %v299
    %334 = vmatprep.subr.bf16.mxu0 %v303
    %335 = vmatpush1.bf16.msra.mxu0 %v302
    %336 = vmatprep.subr.bf16.mxu0 %v305
    %337 = vmatpush1.bf16.msra.mxu0 %v304
    %338 = vmatprep.subr.bf16.mxu0 %v307
    %339 = vmatpush1.bf16.msra.mxu0 %v306
    %340 = vmatprep.subr.bf16.mxu0 %v309
    %341 = vmatpush1.bf16.msra.mxu0 %v308
    %342 = vmatprep.subr.bf16.mxu0 %v311
    %343 = vmatpush1.bf16.msra.mxu0 %v310
    %344 = vmatprep.subr.bf16.mxu0 %v313
    %345 = vmatpush1.bf16.msra.mxu0 %v312
    %346 = vmatprep.subr.bf16.mxu0 %v315
    %347 = vmatpush1.bf16.msra.mxu0 %v314
    %348 = vmatprep.subr.bf16.mxu0 %v317
    %349 = vmatpush1.bf16.msra.mxu0 %v316
    %350 = vmatprep.subr.bf16.mxu0 0
    %351 = vmatpush1.bf16.msra.mxu0 0
    %352 = vmatprep.subr.bf16.mxu0 0
    %353 = vmatpush1.bf16.msra.mxu0 0
    %354 = vmatprep.subr.bf16.mxu0 0
    %355 = vmatpush1.bf16.msra.mxu0 0
    %356 = vmatprep.subr.bf16.mxu0 0
    %357 = vmatpush1.bf16.msra.mxu0 0
    %358 = vmatprep.subr.bf16.mxu0 0
    %359 = vmatpush1.bf16.msra.mxu0 0
    %360 = vmatprep.subr.bf16.mxu0 0
    %361 = vmatpush1.bf16.msra.mxu0 0
    %362 = vmatprep.subr.bf16.mxu0 0
    %363 = vmatpush1.bf16.msra.mxu0 0
    %364 = vmatprep.subr.bf16.mxu0 0
    %365 = vmatpush1.bf16.msra.mxu0 0
    %366 = vmatprep.mubr.bf16.mxu0 0
    %367 = vmatmul.mubr.bf16.gmra.mrb[0].mxu0 %v234
    %v368 = vpop.f32.mrb[0].mxu0
    %v369 = vadd.f32 0.0, %v368
    %v370 = vpop.f32.mrb[0].mxu0
    %v371 = vadd.f32 0.0, %v370
    %v372 = vpop.f32.mrb[0].mxu0
    %v373 = vadd.f32 0.0, %v372
    %v374 = vpop.f32.mrb[0].mxu0
    %v375 = vadd.f32 0.0, %v374
    %376 = vmatprep.mubr.bf16.mxu0 0
    %377 = vmatmul.mubr.bf16.gmra.mrb[0].mxu0 %v235
    %v378 = vpop.f32.mrb[0].mxu0
    %v379 = vadd.f32 0.0, %v378
    %v380 = vpop.f32.mrb[0].mxu0
    %v381 = vadd.f32 0.0, %v380
    %v382 = vpop.f32.mrb[0].mxu0
    %v383 = vadd.f32 0.0, %v382
    %v384 = vpop.f32.mrb[0].mxu0
    %v385 = vadd.f32 0.0, %v384
    %386 = vmatprep.mubr.bf16.mxu0 0
    %387 = vmatmul.mubr.bf16.gmra.mrb[0].mxu0 %v236
    %v388 = vpop.f32.mrb[0].mxu0
    %v389 = vadd.f32 0.0, %v388
    %v390 = vpop.f32.mrb[0].mxu0
    %v391 = vadd.f32 0.0, %v390
    %v392 = vpop.f32.mrb[0].mxu0
    %v393 = vadd.f32 0.0, %v392
    %v394 = vpop.f32.mrb[0].mxu0
    %v395 = vadd.f32 0.0, %v394
    %396 = vmatprep.mubr.bf16.mxu0 0
    %397 = vmatmul.mubr.bf16.gmra.mrb[0].mxu0 %v237
    %v398 = vpop.f32.mrb[0].mxu0
    %v399 = vadd.f32 0.0, %v398
    %v400 = vpop.f32.mrb[0].mxu0
    %v401 = vadd.f32 0.0, %v400
    %v402 = vpop.f32.mrb[0].mxu0
    %v403 = vadd.f32 0.0, %v402
    %v404 = vpop.f32.mrb[0].mxu0
    %v405 = vadd.f32 0.0, %v404
    %406 = vdwg.mxu0
    %v407 = vld [vmem:[%s4] sm:$0x3]
    %v408 = vld [vmem:[%s5] sm:$0x3]
    %v409 = vadd.f32 %v369, %v373
    %v410 = vadd.f32 %v409, %v379
    %v411 = vadd.f32 %v410, %v383
    %v412 = vadd.f32 %v411, %v389
    %v413 = vadd.f32 %v412, %v393
    %v414 = vadd.f32 %v413, %v399
    %v415 = vadd.f32 %v414, %v403
    %v416 = vrot.slane %v415, 4
    %v417 = vadd.f32 %v415, %v416
    %v418 = vrot.slane %v417, 2
    %v419 = vadd.f32 %v417, %v418
    %v420 = vrot.slane %v419, 1
    %v421 = vadd.f32 %v419, %v420
    %v422 = vadd.f32 %v371, %v375
    %v423 = vadd.f32 %v422, %v381
    %v424 = vadd.f32 %v423, %v385
    %v425 = vadd.f32 %v424, %v391
    %v426 = vadd.f32 %v425, %v395
    %v427 = vadd.f32 %v426, %v401
    %v428 = vadd.f32 %v427, %v405
    %v429 = vrot.slane %v428, 4
    %v430 = vadd.f32 %v428, %v429
    %v431 = vrot.slane %v430, 2
    %v432 = vadd.f32 %v430, %v431
    %v433 = vrot.slane %v432, 1
    %v434 = vadd.f32 %v432, %v433
    %v435 = vrcp.pop 64.0
    %v436 = vmul.f32 %v421, %v435
    %v437 = vmul.f32 %v434, %v435
    %v438 = vsub.f32 %v369, %v436
    %v439 = vsub.f32 %v371, %v437
    %v440 = vsub.f32 %v373, %v436
    %v441 = vsub.f32 %v375, %v437
    %v442 = vsub.f32 %v379, %v436
    %v443 = vsub.f32 %v381, %v437
    %v444 = vsub.f32 %v383, %v436
    %v445 = vsub.f32 %v385, %v437
    %v446 = vsub.f32 %v389, %v436
    %v447 = vsub.f32 %v391, %v437
    %v448 = vsub.f32 %v393, %v436
    %v449 = vsub.f32 %v395, %v437
    %v450 = vsub.f32 %v399, %v436
    %v451 = vsub.f32 %v401, %v437
    %v452 = vsub.f32 %v403, %v436
    %v453 = vsub.f32 %v405, %v437
    %v454 = vmul.f32 %v438, %v438
    %v455 = vmul.f32 %v439, %v439
    %v456 = vmul.f32 %v440, %v440
    %v457 = vmul.f32 %v441, %v441
    %v458 = vmul.f32 %v442, %v442
    %v459 = vmul.f32 %v443, %v443
    %v460 = vmul.f32 %v444, %v444
    %v461 = vmul.f32 %v445, %v445
    %v462 = vmul.f32 %v446, %v446
    %v463 = vmul.f32 %v447, %v447
    %v464 = vmul.f32 %v448, %v448
    %v465 = vmul.f32 %v449, %v449
    %v466 = vmul.f32 %v450, %v450
    %v467 = vmul.f32 %v451, %v451
    %v468 = vmul.f32 %v452, %v452
    %v469 = vmul.f32 %v453, %v453
    %v470 = vadd.f32 %v454, %v456
    %v471 = vadd.f32 %v470, %v458
    %v472 = vadd.f32 %v471, %v460
    %v473 = vadd.f32 %v472, %v462
    %v474 = vadd.f32 %v473, %v464
    %v475 = vadd.f32 %v474, %v466
    %v476 = vadd.f32 %v475, %v468
    %v477 = vrot.slane %v476, 4
    %v478 = vadd.f32 %v476, %v477
    %v479 = vrot.slane %v478, 2
    %v480 = vadd.f32 %v478, %v479
    %v481 = vrot.slane %v480, 1
    %v482 = vadd.f32 %v480, %v481
    %v483 = vadd.f32 %v455, %v457
    %v484 = vadd.f32 %v483, %v459
    %v485 = vadd.f32 %v484, %v461
    %v486 = vadd.f32 %v485, %v463
    %v487 = vadd.f32 %v486, %v465
    %v488 = vadd.f32 %v487, %v467
    %v489 = vadd.f32 %v488, %v469
    %v490 = vrot.slane %v489, 4
    %v491 = vadd.f32 %v489, %v490
    %v492 = vrot.slane %v491, 2
    %v493 = vadd.f32 %v491, %v492
    %v494 = vrot.slane %v493, 1
    %v495 = vadd.f32 %v493, %v494
    %v496 = vmul.f32 %v482, %v435
    %v497 = vmul.f32 %v495, %v435
    %v498 = vadd.f32 %v496, 1e-05
    %v499 = vadd.f32 %v497, 1e-05
    %v500 = vrsqrt.pop %v498
    %v501 = vrsqrt.pop %v499
    %v503 = vlaneseq
    %v504 = vshrl.u32 %v503, 7
    %v505 = vsub.s32 0, %v504
    %v506 = vrot.slane %v407, %v505
    %v507 = vlaneseq
    %v508 = vshrl.u32 %v507, 7
    %v509 = vsub.s32 1, %v508
    %v510 = vrot.slane %v407, %v509
    %v513 = vmul.f32 %v500, %v506
    %v514 = vmul.f32 %v501, %v510
    %v515 = vlaneseq
    %v516 = vshrl.u32 %v515, 7
    %v517 = vsub.s32 0, %v516
    %v518 = vrot.slane %v513, %v517
    %v519 = vlaneseq
    %v520 = vshrl.u32 %v519, 7
    %v521 = vsub.s32 0, %v520
    %v522 = vrot.slane %v514, %v521
    %v523 = vmul.f32 %v438, %v518
    %v524 = vmul.f32 %v439, %v522
    %v525 = vmul.f32 %v440, %v518
    %v526 = vmul.f32 %v441, %v522
    %v527 = vmul.f32 %v442, %v518
    %v528 = vmul.f32 %v443, %v522
    %v529 = vmul.f32 %v444, %v518
    %v530 = vmul.f32 %v445, %v522
    %v531 = vmul.f32 %v446, %v518
    %v532 = vmul.f32 %v447, %v522
    %v533 = vmul.f32 %v448, %v518
    %v534 = vmul.f32 %v449, %v522
    %v535 = vmul.f32 %v450, %v518
    %v536 = vmul.f32 %v451, %v522
    %v537 = vmul.f32 %v452, %v518
    %v538 = vmul.f32 %v453, %v522
    %v540 = vlaneseq
    %v541 = vshrl.u32 %v540, 7
    %v542 = vsub.s32 0, %v541
    %v543 = vrot.slane %v408, %v542
    %v544 = vlaneseq
    %v545 = vshrl.u32 %v544, 7
    %v546 = vsub.s32 1, %v545
    %v547 = vrot.slane %v408, %v546
    %v550 = vadd.f32 %v523, %v543
    %v551 = vadd.f32 %v524, %v547
    %v552 = vadd.f32 %v525, %v543
    %v553 = vadd.f32 %v526, %v547
    %v554 = vadd.f32 %v527, %v543
    %v555 = vadd.f32 %v528, %v547
    %v556 = vadd.f32 %v529, %v543
    %v557 = vadd.f32 %v530, %v547
    %v558 = vadd.f32 %v531, %v543
    %v559 = vadd.f32 %v532, %v547
    %v560 = vadd.f32 %v533, %v543
    %v561 = vadd.f32 %v534, %v547
    %v562 = vadd.f32 %v535, %v543
    %v563 = vadd.f32 %v536, %v547
    %v564 = vadd.f32 %v537, %v543
    %v565 = vadd.f32 %v538, %v547
    %vm566 = vcmp.gt.f32.partialorder %v550, 0.0
    %vm567 = vcmp.gt.f32.partialorder %v551, 0.0
    %vm568 = vcmp.gt.f32.partialorder %v552, 0.0
    %vm569 = vcmp.gt.f32.partialorder %v553, 0.0
    %vm570 = vcmp.gt.f32.partialorder %v554, 0.0
    %vm571 = vcmp.gt.f32.partialorder %v555, 0.0
    %vm572 = vcmp.gt.f32.partialorder %v556, 0.0
    %vm573 = vcmp.gt.f32.partialorder %v557, 0.0
    %vm574 = vcmp.gt.f32.partialorder %v558, 0.0
    %vm575 = vcmp.gt.f32.partialorder %v559, 0.0
    %vm576 = vcmp.gt.f32.partialorder %v560, 0.0
    %vm577 = vcmp.gt.f32.partialorder %v561, 0.0
    %vm578 = vcmp.gt.f32.partialorder %v562, 0.0
    %vm579 = vcmp.gt.f32.partialorder %v563, 0.0
    %vm580 = vcmp.gt.f32.partialorder %v564, 0.0
    %vm581 = vcmp.gt.f32.partialorder %v565, 0.0
    %v582 = vmul.f32 %v550, 0.2
    %v583 = vmul.f32 %v551, 0.2
    %v584 = vmul.f32 %v552, 0.2
    %v585 = vmul.f32 %v553, 0.2
    %v586 = vmul.f32 %v554, 0.2
    %v587 = vmul.f32 %v555, 0.2
    %v588 = vmul.f32 %v556, 0.2
    %v589 = vmul.f32 %v557, 0.2
    %v590 = vmul.f32 %v558, 0.2
    %v591 = vmul.f32 %v559, 0.2
    %v592 = vmul.f32 %v560, 0.2
    %v593 = vmul.f32 %v561, 0.2
    %v594 = vmul.f32 %v562, 0.2
    %v595 = vmul.f32 %v563, 0.2
    %v596 = vmul.f32 %v564, 0.2
    %v597 = vmul.f32 %v565, 0.2
    %v598 = vsel %vm566, %v550, %v582
    %v599 = vsel %vm567, %v551, %v583
    %v600 = vsel %vm568, %v552, %v584
    %v601 = vsel %vm569, %v553, %v585
    %v602 = vsel %vm570, %v554, %v586
    %v603 = vsel %vm571, %v555, %v587
    %v604 = vsel %vm572, %v556, %v588
    %v605 = vsel %vm573, %v557, %v589
    %v606 = vsel %vm574, %v558, %v590
    %v607 = vsel %vm575, %v559, %v591
    %v608 = vsel %vm576, %v560, %v592
    %v609 = vsel %vm577, %v561, %v593
    %v610 = vsel %vm578, %v562, %v594
    %v611 = vsel %vm579, %v563, %v595
    %v612 = vsel %vm580, %v564, %v596
    %v613 = vsel %vm581, %v565, %v597
    %v614 = vpack.c.bf16 %v600, %v598
    %v615 = vpack.c.bf16 %v601, %v599
    %v616 = vpack.c.bf16 %v604, %v602
    %v617 = vpack.c.bf16 %v605, %v603
    %v618 = vpack.c.bf16 %v608, %v606
    %v619 = vpack.c.bf16 %v609, %v607
    %v620 = vpack.c.bf16 %v612, %v610
    %v621 = vpack.c.bf16 %v613, %v611
    %v622 = vld [vmem:[%s6] sm:$0xff]
    %v623 = vld [vmem:[%s6 + $0x8] sm:$0xff]
    %v624 = vld [vmem:[%s6 + $0x10] sm:$0xff]
    %v625 = vld [vmem:[%s6 + $0x18] sm:$0xff]
    %v626 = vld [vmem:[%s6 + $0x20] sm:$0xff]
    %v627 = vld [vmem:[%s6 + $0x28] sm:$0xff]
    %v628 = vld [vmem:[%s6 + $0x30] sm:$0xff]
    %v629 = vld [vmem:[%s6 + $0x38] sm:$0xff]
    %v630 = vld [vmem:[%s6 + $0x40] sm:$0xff]
    %v631 = vld [vmem:[%s6 + $0x48] sm:$0xff]
    %v632 = vld [vmem:[%s6 + $0x50] sm:$0xff]
    %v633 = vld [vmem:[%s6 + $0x58] sm:$0xff]
    %v634 = vld [vmem:[%s6 + $0x60] sm:$0xff]
    %v635 = vld [vmem:[%s6 + $0x68] sm:$0xff]
    %v636 = vld [vmem:[%s6 + $0x70] sm:$0xff]
    %v637 = vld [vmem:[%s6 + $0x78] sm:$0xff]
    %v638 = vld [vmem:[%s6 + $0x80] sm:$0xff]
    %v639 = vld [vmem:[%s6 + $0x88] sm:$0xff]
    %v640 = vld [vmem:[%s6 + $0x90] sm:$0xff]
    %v641 = vld [vmem:[%s6 + $0x98] sm:$0xff]
    %v642 = vld [vmem:[%s6 + $0xa0] sm:$0xff]
    %v643 = vld [vmem:[%s6 + $0xa8] sm:$0xff]
    %v644 = vld [vmem:[%s6 + $0xb0] sm:$0xff]
    %v645 = vld [vmem:[%s6 + $0xb8] sm:$0xff]
    %v646 = vld [vmem:[%s6 + $0xc0] sm:$0xff]
    %v647 = vld [vmem:[%s6 + $0xc8] sm:$0xff]
    %v648 = vld [vmem:[%s6 + $0xd0] sm:$0xff]
    %v649 = vld [vmem:[%s6 + $0xd8] sm:$0xff]
    %v650 = vld [vmem:[%s6 + $0xe0] sm:$0xff]
    %v651 = vld [vmem:[%s6 + $0xe8] sm:$0xff]
    %v652 = vld [vmem:[%s6 + $0xf0] sm:$0xff]
    %v653 = vld [vmem:[%s6 + $0xf8] sm:$0xff]
    %v654 = vld [vmem:[%s6 + $0x100] sm:$0xff]
    %v655 = vld [vmem:[%s6 + $0x108] sm:$0xff]
    %v656 = vld [vmem:[%s6 + $0x110] sm:$0xff]
    %v657 = vld [vmem:[%s6 + $0x118] sm:$0xff]
    %v658 = vld [vmem:[%s6 + $0x120] sm:$0xff]
    %v659 = vld [vmem:[%s6 + $0x128] sm:$0xff]
    %v660 = vld [vmem:[%s6 + $0x130] sm:$0xff]
    %v661 = vld [vmem:[%s6 + $0x138] sm:$0xff]
    %v662 = vld [vmem:[%s6 + $0x140] sm:$0xff]
    %v663 = vld [vmem:[%s6 + $0x148] sm:$0xff]
    %v664 = vld [vmem:[%s6 + $0x150] sm:$0xff]
    %v665 = vld [vmem:[%s6 + $0x158] sm:$0xff]
    %v666 = vld [vmem:[%s6 + $0x160] sm:$0xff]
    %v667 = vld [vmem:[%s6 + $0x168] sm:$0xff]
    %v668 = vld [vmem:[%s6 + $0x170] sm:$0xff]
    %v669 = vld [vmem:[%s6 + $0x178] sm:$0xff]
    %v670 = vld [vmem:[%s6 + $0x180] sm:$0xff]
    %v671 = vld [vmem:[%s6 + $0x188] sm:$0xff]
    %v672 = vld [vmem:[%s6 + $0x190] sm:$0xff]
    %v673 = vld [vmem:[%s6 + $0x198] sm:$0xff]
    %v674 = vld [vmem:[%s6 + $0x1a0] sm:$0xff]
    %v675 = vld [vmem:[%s6 + $0x1a8] sm:$0xff]
    %v676 = vld [vmem:[%s6 + $0x1b0] sm:$0xff]
    %v677 = vld [vmem:[%s6 + $0x1b8] sm:$0xff]
    %v678 = vld [vmem:[%s6 + $0x1c0] sm:$0xff]
    %v679 = vld [vmem:[%s6 + $0x1c8] sm:$0xff]
    %v680 = vld [vmem:[%s6 + $0x1d0] sm:$0xff]
    %v681 = vld [vmem:[%s6 + $0x1d8] sm:$0xff]
    %v682 = vld [vmem:[%s6 + $0x1e0] sm:$0xff]
    %v683 = vld [vmem:[%s6 + $0x1e8] sm:$0xff]
    %v684 = vld [vmem:[%s6 + $0x1f0] sm:$0xff]
    %v685 = vld [vmem:[%s6 + $0x1f8] sm:$0xff]
    %v750 = vunpack.c.l.b16 %v622
    %v751 = vunpack.c.h.b16 %v622
    %v752 = vunpack.c.l.b16 %v623
    %v753 = vunpack.c.h.b16 %v623
    %v754 = vunpack.c.l.b16 %v624
    %v755 = vunpack.c.h.b16 %v624
    %v756 = vunpack.c.l.b16 %v625
    %v757 = vunpack.c.h.b16 %v625
    %v758 = vunpack.c.l.b16 %v626
    %v759 = vunpack.c.h.b16 %v626
    %v760 = vunpack.c.l.b16 %v627
    %v761 = vunpack.c.h.b16 %v627
    %v762 = vunpack.c.l.b16 %v628
    %v763 = vunpack.c.h.b16 %v628
    %v764 = vunpack.c.l.b16 %v629
    %v765 = vunpack.c.h.b16 %v629
    %v766 = vunpack.c.l.b16 %v630
    %v767 = vunpack.c.h.b16 %v630
    %v768 = vunpack.c.l.b16 %v631
    %v769 = vunpack.c.h.b16 %v631
    %v770 = vunpack.c.l.b16 %v632
    %v771 = vunpack.c.h.b16 %v632
    %v772 = vunpack.c.l.b16 %v633
    %v773 = vunpack.c.h.b16 %v633
    %v774 = vunpack.c.l.b16 %v634
    %v775 = vunpack.c.h.b16 %v634
    %v776 = vunpack.c.l.b16 %v635
    %v777 = vunpack.c.h.b16 %v635
    %v778 = vunpack.c.l.b16 %v636
    %v779 = vunpack.c.h.b16 %v636
    %v780 = vunpack.c.l.b16 %v637
    %v781 = vunpack.c.h.b16 %v637
    %v782 = vunpack.c.l.b16 %v638
    %v783 = vunpack.c.h.b16 %v638
    %v784 = vunpack.c.l.b16 %v639
    %v785 = vunpack.c.h.b16 %v639
    %v786 = vunpack.c.l.b16 %v640
    %v787 = vunpack.c.h.b16 %v640
    %v788 = vunpack.c.l.b16 %v641
    %v789 = vunpack.c.h.b16 %v641
    %v790 = vunpack.c.l.b16 %v642
    %v791 = vunpack.c.h.b16 %v642
    %v792 = vunpack.c.l.b16 %v643
    %v793 = vunpack.c.h.b16 %v643
    %v794 = vunpack.c.l.b16 %v644
    %v795 = vunpack.c.h.b16 %v644
    %v796 = vunpack.c.l.b16 %v645
    %v797 = vunpack.c.h.b16 %v645
    %v798 = vunpack.c.l.b16 %v646
    %v799 = vunpack.c.h.b16 %v646
    %v800 = vunpack.c.l.b16 %v647
    %v801 = vunpack.c.h.b16 %v647
    %v802 = vunpack.c.l.b16 %v648
    %v803 = vunpack.c.h.b16 %v648
    %v804 = vunpack.c.l.b16 %v649
    %v805 = vunpack.c.h.b16 %v649
    %v806 = vunpack.c.l.b16 %v650
    %v807 = vunpack.c.h.b16 %v650
    %v808 = vunpack.c.l.b16 %v651
    %v809 = vunpack.c.h.b16 %v651
    %v810 = vunpack.c.l.b16 %v652
    %v811 = vunpack.c.h.b16 %v652
    %v812 = vunpack.c.l.b16 %v653
    %v813 = vunpack.c.h.b16 %v653
    %v814 = vunpack.c.l.b16 %v654
    %v815 = vunpack.c.h.b16 %v654
    %v816 = vunpack.c.l.b16 %v655
    %v817 = vunpack.c.h.b16 %v655
    %v818 = vunpack.c.l.b16 %v656
    %v819 = vunpack.c.h.b16 %v656
    %v820 = vunpack.c.l.b16 %v657
    %v821 = vunpack.c.h.b16 %v657
    %v822 = vunpack.c.l.b16 %v658
    %v823 = vunpack.c.h.b16 %v658
    %v824 = vunpack.c.l.b16 %v659
    %v825 = vunpack.c.h.b16 %v659
    %v826 = vunpack.c.l.b16 %v660
    %v827 = vunpack.c.h.b16 %v660
    %v828 = vunpack.c.l.b16 %v661
    %v829 = vunpack.c.h.b16 %v661
    %v830 = vunpack.c.l.b16 %v662
    %v831 = vunpack.c.h.b16 %v662
    %v832 = vunpack.c.l.b16 %v663
    %v833 = vunpack.c.h.b16 %v663
    %v834 = vunpack.c.l.b16 %v664
    %v835 = vunpack.c.h.b16 %v664
    %v836 = vunpack.c.l.b16 %v665
    %v837 = vunpack.c.h.b16 %v665
    %v838 = vunpack.c.l.b16 %v666
    %v839 = vunpack.c.h.b16 %v666
    %v840 = vunpack.c.l.b16 %v667
    %v841 = vunpack.c.h.b16 %v667
    %v842 = vunpack.c.l.b16 %v668
    %v843 = vunpack.c.h.b16 %v668
    %v844 = vunpack.c.l.b16 %v669
    %v845 = vunpack.c.h.b16 %v669
    %v846 = vunpack.c.l.b16 %v670
    %v847 = vunpack.c.h.b16 %v670
    %v848 = vunpack.c.l.b16 %v671
    %v849 = vunpack.c.h.b16 %v671
    %v850 = vunpack.c.l.b16 %v672
    %v851 = vunpack.c.h.b16 %v672
    %v852 = vunpack.c.l.b16 %v673
    %v853 = vunpack.c.h.b16 %v673
    %v854 = vunpack.c.l.b16 %v674
    %v855 = vunpack.c.h.b16 %v674
    %v856 = vunpack.c.l.b16 %v675
    %v857 = vunpack.c.h.b16 %v675
    %v858 = vunpack.c.l.b16 %v676
    %v859 = vunpack.c.h.b16 %v676
    %v860 = vunpack.c.l.b16 %v677
    %v861 = vunpack.c.h.b16 %v677
    %v862 = vunpack.c.l.b16 %v678
    %v863 = vunpack.c.h.b16 %v678
    %v864 = vunpack.c.l.b16 %v679
    %v865 = vunpack.c.h.b16 %v679
    %v866 = vunpack.c.l.b16 %v680
    %v867 = vunpack.c.h.b16 %v680
    %v868 = vunpack.c.l.b16 %v681
    %v869 = vunpack.c.h.b16 %v681
    %v870 = vunpack.c.l.b16 %v682
    %v871 = vunpack.c.h.b16 %v682
    %v872 = vunpack.c.l.b16 %v683
    %v873 = vunpack.c.h.b16 %v683
    %v874 = vunpack.c.l.b16 %v684
    %v875 = vunpack.c.h.b16 %v684
    %v876 = vunpack.c.l.b16 %v685
    %v877 = vunpack.c.h.b16 %v685
    %v878 = vpack.c.b16 %v754, %v750
    %v879 = vpack.c.b16 %v755, %v751
    %v880 = vpack.c.b16 %v756, %v752
    %v881 = vpack.c.b16 %v757, %v753
    %v882 = vpack.c.b16 %v762, %v758
    %v883 = vpack.c.b16 %v763, %v759
    %v884 = vpack.c.b16 %v764, %v760
    %v885 = vpack.c.b16 %v765, %v761
    %v886 = vpack.c.b16 %v770, %v766
    %v887 = vpack.c.b16 %v771, %v767
    %v888 = vpack.c.b16 %v772, %v768
    %v889 = vpack.c.b16 %v773, %v769
    %v890 = vpack.c.b16 %v778, %v774
    %v891 = vpack.c.b16 %v779, %v775
    %v892 = vpack.c.b16 %v780, %v776
    %v893 = vpack.c.b16 %v781, %v777
    %v894 = vpack.c.b16 %v786, %v782
    %v895 = vpack.c.b16 %v787, %v783
    %v896 = vpack.c.b16 %v788, %v784
    %v897 = vpack.c.b16 %v789, %v785
    %v898 = vpack.c.b16 %v794, %v790
    %v899 = vpack.c.b16 %v795, %v791
    %v900 = vpack.c.b16 %v796, %v792
    %v901 = vpack.c.b16 %v797, %v793
    %v902 = vpack.c.b16 %v802, %v798
    %v903 = vpack.c.b16 %v803, %v799
    %v904 = vpack.c.b16 %v804, %v800
    %v905 = vpack.c.b16 %v805, %v801
    %v906 = vpack.c.b16 %v810, %v806
    %v907 = vpack.c.b16 %v811, %v807
    %v908 = vpack.c.b16 %v812, %v808
    %v909 = vpack.c.b16 %v813, %v809
    %v910 = vpack.c.b16 %v818, %v814
    %v911 = vpack.c.b16 %v819, %v815
    %v912 = vpack.c.b16 %v820, %v816
    %v913 = vpack.c.b16 %v821, %v817
    %v914 = vpack.c.b16 %v826, %v822
    %v915 = vpack.c.b16 %v827, %v823
    %v916 = vpack.c.b16 %v828, %v824
    %v917 = vpack.c.b16 %v829, %v825
    %v918 = vpack.c.b16 %v834, %v830
    %v919 = vpack.c.b16 %v835, %v831
    %v920 = vpack.c.b16 %v836, %v832
    %v921 = vpack.c.b16 %v837, %v833
    %v922 = vpack.c.b16 %v842, %v838
    %v923 = vpack.c.b16 %v843, %v839
    %v924 = vpack.c.b16 %v844, %v840
    %v925 = vpack.c.b16 %v845, %v841
    %v926 = vpack.c.b16 %v850, %v846
    %v927 = vpack.c.b16 %v851, %v847
    %v928 = vpack.c.b16 %v852, %v848
    %v929 = vpack.c.b16 %v853, %v849
    %v930 = vpack.c.b16 %v858, %v854
    %v931 = vpack.c.b16 %v859, %v855
    %v932 = vpack.c.b16 %v860, %v856
    %v933 = vpack.c.b16 %v861, %v857
    %v934 = vpack.c.b16 %v866, %v862
    %v935 = vpack.c.b16 %v867, %v863
    %v936 = vpack.c.b16 %v868, %v864
    %v937 = vpack.c.b16 %v869, %v865
    %v938 = vpack.c.b16 %v874, %v870
    %v939 = vpack.c.b16 %v875, %v871
    %v940 = vpack.c.b16 %v876, %v872
    %v941 = vpack.c.b16 %v877, %v873
    %1006 = vmatprep.subr.bf16.mxu0 %v879
    %1007 = vmatpush1.bf16.msra.mxu0 %v878
    %1008 = vmatprep.subr.bf16.mxu0 %v883
    %1009 = vmatpush1.bf16.msra.mxu0 %v882
    %1010 = vmatprep.subr.bf16.mxu0 %v887
    %1011 = vmatpush1.bf16.msra.mxu0 %v886
    %1012 = vmatprep.subr.bf16.mxu0 %v891
    %1013 = vmatpush1.bf16.msra.mxu0 %v890
    %1014 = vmatprep.subr.bf16.mxu0 %v895
    %1015 = vmatpush1.bf16.msra.mxu0 %v894
    %1016 = vmatprep.subr.bf16.mxu0 %v899
    %1017 = vmatpush1.bf16.msra.mxu0 %v898
    %1018 = vmatprep.subr.bf16.mxu0 %v903
    %1019 = vmatpush1.bf16.msra.mxu0 %v902
    %1020 = vmatprep.subr.bf16.mxu0 %v907
    %1021 = vmatpush1.bf16.msra.mxu0 %v906
    %1022 = vmatprep.subr.bf16.mxu0 %v911
    %1023 = vmatpush1.bf16.msra.mxu0 %v910
    %1024 = vmatprep.subr.bf16.mxu0 %v915
    %1025 = vmatpush1.bf16.msra.mxu0 %v914
    %1026 = vmatprep.subr.bf16.mxu0 %v919
    %1027 = vmatpush1.bf16.msra.mxu0 %v918
    %1028 = vmatprep.subr.bf16.mxu0 %v923
    %1029 = vmatpush1.bf16.msra.mxu0 %v922
    %1030 = vmatprep.subr.bf16.mxu0 %v927
    %1031 = vmatpush1.bf16.msra.mxu0 %v926
    %1032 = vmatprep.subr.bf16.mxu0 %v931
    %1033 = vmatpush1.bf16.msra.mxu0 %v930
    %1034 = vmatprep.subr.bf16.mxu0 %v935
    %1035 = vmatpush1.bf16.msra.mxu0 %v934
    %1036 = vmatprep.subr.bf16.mxu0 %v939
    %1037 = vmatpush1.bf16.msra.mxu0 %v938
    %1038 = vmatprep.mubr.bf16.mxu0 %v615
    %1039 = vmatmul.mubr.bf16.gmra.mrb[0].mxu0 %v614
    %v1040 = vpop.f32.mrb[0].mxu0
    %v1041 = vadd.f32 0.0, %v1040
    %v1042 = vpop.f32.mrb[0].mxu0
    %v1043 = vadd.f32 0.0, %v1042
    %v1044 = vpop.f32.mrb[0].mxu0
    %v1045 = vadd.f32 0.0, %v1044
    %v1046 = vpop.f32.mrb[0].mxu0
    %v1047 = vadd.f32 0.0, %v1046
    %1048 = vmatprep.mubr.bf16.mxu0 %v617
    %1049 = vmatmul.mubr.bf16.gmra.mrb[0].mxu0 %v616
    %v1050 = vpop.f32.mrb[0].mxu0
    %v1051 = vadd.f32 0.0, %v1050
    %v1052 = vpop.f32.mrb[0].mxu0
    %v1053 = vadd.f32 0.0, %v1052
    %v1054 = vpop.f32.mrb[0].mxu0
    %v1055 = vadd.f32 0.0, %v1054
    %v1056 = vpop.f32.mrb[0].mxu0
    %v1057 = vadd.f32 0.0, %v1056
    %1058 = vmatprep.mubr.bf16.mxu0 %v619
    %1059 = vmatmul.mubr.bf16.gmra.mrb[0].mxu0 %v618
    %v1060 = vpop.f32.mrb[0].mxu0
    %v1061 = vadd.f32 0.0, %v1060
    %v1062 = vpop.f32.mrb[0].mxu0
    %v1063 = vadd.f32 0.0, %v1062
    %v1064 = vpop.f32.mrb[0].mxu0
    %v1065 = vadd.f32 0.0, %v1064
    %v1066 = vpop.f32.mrb[0].mxu0
    %v1067 = vadd.f32 0.0, %v1066
    %1068 = vmatprep.mubr.bf16.mxu0 %v621
    %1069 = vmatmul.mubr.bf16.gmra.mrb[0].mxu0 %v620
    %v1070 = vpop.f32.mrb[0].mxu0
    %v1071 = vadd.f32 0.0, %v1070
    %v1072 = vpop.f32.mrb[0].mxu0
    %v1073 = vadd.f32 0.0, %v1072
    %v1074 = vpop.f32.mrb[0].mxu0
    %v1075 = vadd.f32 0.0, %v1074
    %v1076 = vpop.f32.mrb[0].mxu0
    %v1077 = vadd.f32 0.0, %v1076
    %1078 = vdwg.mxu0
    %1079 = vmatprep.subr.bf16.mxu0 %v881
    %1080 = vmatpush1.bf16.msra.mxu0 %v880
    %1081 = vmatprep.subr.bf16.mxu0 %v885
    %1082 = vmatpush1.bf16.msra.mxu0 %v884
    %1083 = vmatprep.subr.bf16.mxu0 %v889
    %1084 = vmatpush1.bf16.msra.mxu0 %v888
    %1085 = vmatprep.subr.bf16.mxu0 %v893
    %1086 = vmatpush1.bf16.msra.mxu0 %v892
    %1087 = vmatprep.subr.bf16.mxu0 %v897
    %1088 = vmatpush1.bf16.msra.mxu0 %v896
    %1089 = vmatprep.subr.bf16.mxu0 %v901
    %1090 = vmatpush1.bf16.msra.mxu0 %v900
    %1091 = vmatprep.subr.bf16.mxu0 %v905
    %1092 = vmatpush1.bf16.msra.mxu0 %v904
    %1093 = vmatprep.subr.bf16.mxu0 %v909
    %1094 = vmatpush1.bf16.msra.mxu0 %v908
    %1095 = vmatprep.subr.bf16.mxu0 %v913
    %1096 = vmatpush1.bf16.msra.mxu0 %v912
    %1097 = vmatprep.subr.bf16.mxu0 %v917
    %1098 = vmatpush1.bf16.msra.mxu0 %v916
    %1099 = vmatprep.subr.bf16.mxu0 %v921
    %1100 = vmatpush1.bf16.msra.mxu0 %v920
    %1101 = vmatprep.subr.bf16.mxu0 %v925
    %1102 = vmatpush1.bf16.msra.mxu0 %v924
    %1103 = vmatprep.subr.bf16.mxu0 %v929
    %1104 = vmatpush1.bf16.msra.mxu0 %v928
    %1105 = vmatprep.subr.bf16.mxu0 %v933
    %1106 = vmatpush1.bf16.msra.mxu0 %v932
    %1107 = vmatprep.subr.bf16.mxu0 %v937
    %1108 = vmatpush1.bf16.msra.mxu0 %v936
    %1109 = vmatprep.subr.bf16.mxu0 %v941
    %1110 = vmatpush1.bf16.msra.mxu0 %v940
    %1111 = vmatprep.mubr.bf16.mxu0 %v615
    %1112 = vmatmul.mubr.bf16.gmra.mrb[0].mxu0 %v614
    %v1113 = vpop.f32.mrb[0].mxu0
    %v1114 = vadd.f32 0.0, %v1113
    %v1115 = vpop.f32.mrb[0].mxu0
    %v1116 = vadd.f32 0.0, %v1115
    %v1117 = vpop.f32.mrb[0].mxu0
    %v1118 = vadd.f32 0.0, %v1117
    %v1119 = vpop.f32.mrb[0].mxu0
    %v1120 = vadd.f32 0.0, %v1119
    %1121 = vmatprep.mubr.bf16.mxu0 %v617
    %1122 = vmatmul.mubr.bf16.gmra.mrb[0].mxu0 %v616
    %v1123 = vpop.f32.mrb[0].mxu0
    %v1124 = vadd.f32 0.0, %v1123
    %v1125 = vpop.f32.mrb[0].mxu0
    %v1126 = vadd.f32 0.0, %v1125
    %v1127 = vpop.f32.mrb[0].mxu0
    %v1128 = vadd.f32 0.0, %v1127
    %v1129 = vpop.f32.mrb[0].mxu0
    %v1130 = vadd.f32 0.0, %v1129
    %1131 = vmatprep.mubr.bf16.mxu0 %v619
    %1132 = vmatmul.mubr.bf16.gmra.mrb[0].mxu0 %v618
    %v1133 = vpop.f32.mrb[0].mxu0
    %v1134 = vadd.f32 0.0, %v1133
    %v1135 = vpop.f32.mrb[0].mxu0
    %v1136 = vadd.f32 0.0, %v1135
    %v1137 = vpop.f32.mrb[0].mxu0
    %v1138 = vadd.f32 0.0, %v1137
    %v1139 = vpop.f32.mrb[0].mxu0
    %v1140 = vadd.f32 0.0, %v1139
    %1141 = vmatprep.mubr.bf16.mxu0 %v621
    %1142 = vmatmul.mubr.bf16.gmra.mrb[0].mxu0 %v620
    %v1143 = vpop.f32.mrb[0].mxu0
    %v1144 = vadd.f32 0.0, %v1143
    %v1145 = vpop.f32.mrb[0].mxu0
    %v1146 = vadd.f32 0.0, %v1145
    %v1147 = vpop.f32.mrb[0].mxu0
    %v1148 = vadd.f32 0.0, %v1147
    %v1149 = vpop.f32.mrb[0].mxu0
    %v1150 = vadd.f32 0.0, %v1149
    %1151 = vdwg.mxu0
    %v1152 = vld [vmem:[%s7] sm:$0xf]
    %v1153 = vld [vmem:[%s8] sm:$0xf]
    %v1154 = vadd.f32 %v1041, %v1045
    %v1155 = vadd.f32 %v1154, %v1051
    %v1156 = vadd.f32 %v1155, %v1055
    %v1157 = vadd.f32 %v1156, %v1061
    %v1158 = vadd.f32 %v1157, %v1065
    %v1159 = vadd.f32 %v1158, %v1071
    %v1160 = vadd.f32 %v1159, %v1075
    %v1161 = vrot.slane %v1160, 4
    %v1162 = vadd.f32 %v1160, %v1161
    %v1163 = vrot.slane %v1162, 2
    %v1164 = vadd.f32 %v1162, %v1163
    %v1165 = vrot.slane %v1164, 1
    %v1166 = vadd.f32 %v1164, %v1165
    %v1167 = vadd.f32 %v1043, %v1047
    %v1168 = vadd.f32 %v1167, %v1053
    %v1169 = vadd.f32 %v1168, %v1057
    %v1170 = vadd.f32 %v1169, %v1063
    %v1171 = vadd.f32 %v1170, %v1067
    %v1172 = vadd.f32 %v1171, %v1073
    %v1173 = vadd.f32 %v1172, %v1077
    %v1174 = vrot.slane %v1173, 4
    %v1175 = vadd.f32 %v1173, %v1174
    %v1176 = vrot.slane %v1175, 2
    %v1177 = vadd.f32 %v1175, %v1176
    %v1178 = vrot.slane %v1177, 1
    %v1179 = vadd.f32 %v1177, %v1178
    %v1180 = vadd.f32 %v1114, %v1118
    %v1181 = vadd.f32 %v1180, %v1124
    %v1182 = vadd.f32 %v1181, %v1128
    %v1183 = vadd.f32 %v1182, %v1134
    %v1184 = vadd.f32 %v1183, %v1138
    %v1185 = vadd.f32 %v1184, %v1144
    %v1186 = vadd.f32 %v1185, %v1148
    %v1187 = vrot.slane %v1186, 4
    %v1188 = vadd.f32 %v1186, %v1187
    %v1189 = vrot.slane %v1188, 2
    %v1190 = vadd.f32 %v1188, %v1189
    %v1191 = vrot.slane %v1190, 1
    %v1192 = vadd.f32 %v1190, %v1191
    %v1193 = vadd.f32 %v1116, %v1120
    %v1194 = vadd.f32 %v1193, %v1126
    %v1195 = vadd.f32 %v1194, %v1130
    %v1196 = vadd.f32 %v1195, %v1136
    %v1197 = vadd.f32 %v1196, %v1140
    %v1198 = vadd.f32 %v1197, %v1146
    %v1199 = vadd.f32 %v1198, %v1150
    %v1200 = vrot.slane %v1199, 4
    %v1201 = vadd.f32 %v1199, %v1200
    %v1202 = vrot.slane %v1201, 2
    %v1203 = vadd.f32 %v1201, %v1202
    %v1204 = vrot.slane %v1203, 1
    %v1205 = vadd.f32 %v1203, %v1204
    %v1206 = vmul.f32 %v1166, %v435
    %v1207 = vmul.f32 %v1179, %v435
    %v1208 = vmul.f32 %v1192, %v435
    %v1209 = vmul.f32 %v1205, %v435
    %v1210 = vsub.f32 %v1041, %v1206
    %v1211 = vsub.f32 %v1043, %v1207
    %v1212 = vsub.f32 %v1114, %v1208
    %v1213 = vsub.f32 %v1116, %v1209
    %v1214 = vsub.f32 %v1045, %v1206
    %v1215 = vsub.f32 %v1047, %v1207
    %v1216 = vsub.f32 %v1118, %v1208
    %v1217 = vsub.f32 %v1120, %v1209
    %v1218 = vsub.f32 %v1051, %v1206
    %v1219 = vsub.f32 %v1053, %v1207
    %v1220 = vsub.f32 %v1124, %v1208
    %v1221 = vsub.f32 %v1126, %v1209
    %v1222 = vsub.f32 %v1055, %v1206
    %v1223 = vsub.f32 %v1057, %v1207
    %v1224 = vsub.f32 %v1128, %v1208
    %v1225 = vsub.f32 %v1130, %v1209
    %v1226 = vsub.f32 %v1061, %v1206
    %v1227 = vsub.f32 %v1063, %v1207
    %v1228 = vsub.f32 %v1134, %v1208
    %v1229 = vsub.f32 %v1136, %v1209
    %v1230 = vsub.f32 %v1065, %v1206
    %v1231 = vsub.f32 %v1067, %v1207
    %v1232 = vsub.f32 %v1138, %v1208
    %v1233 = vsub.f32 %v1140, %v1209
    %v1234 = vsub.f32 %v1071, %v1206
    %v1235 = vsub.f32 %v1073, %v1207
    %v1236 = vsub.f32 %v1144, %v1208
    %v1237 = vsub.f32 %v1146, %v1209
    %v1238 = vsub.f32 %v1075, %v1206
    %v1239 = vsub.f32 %v1077, %v1207
    %v1240 = vsub.f32 %v1148, %v1208
    %v1241 = vsub.f32 %v1150, %v1209
    %v1242 = vmul.f32 %v1210, %v1210
    %v1243 = vmul.f32 %v1211, %v1211
    %v1244 = vmul.f32 %v1212, %v1212
    %v1245 = vmul.f32 %v1213, %v1213
    %v1246 = vmul.f32 %v1214, %v1214
    %v1247 = vmul.f32 %v1215, %v1215
    %v1248 = vmul.f32 %v1216, %v1216
    %v1249 = vmul.f32 %v1217, %v1217
    %v1250 = vmul.f32 %v1218, %v1218
    %v1251 = vmul.f32 %v1219, %v1219
    %v1252 = vmul.f32 %v1220, %v1220
    %v1253 = vmul.f32 %v1221, %v1221
    %v1254 = vmul.f32 %v1222, %v1222
    %v1255 = vmul.f32 %v1223, %v1223
    %v1256 = vmul.f32 %v1224, %v1224
    %v1257 = vmul.f32 %v1225, %v1225
    %v1258 = vmul.f32 %v1226, %v1226
    %v1259 = vmul.f32 %v1227, %v1227
    %v1260 = vmul.f32 %v1228, %v1228
    %v1261 = vmul.f32 %v1229, %v1229
    %v1262 = vmul.f32 %v1230, %v1230
    %v1263 = vmul.f32 %v1231, %v1231
    %v1264 = vmul.f32 %v1232, %v1232
    %v1265 = vmul.f32 %v1233, %v1233
    %v1266 = vmul.f32 %v1234, %v1234
    %v1267 = vmul.f32 %v1235, %v1235
    %v1268 = vmul.f32 %v1236, %v1236
    %v1269 = vmul.f32 %v1237, %v1237
    %v1270 = vmul.f32 %v1238, %v1238
    %v1271 = vmul.f32 %v1239, %v1239
    %v1272 = vmul.f32 %v1240, %v1240
    %v1273 = vmul.f32 %v1241, %v1241
    %v1274 = vadd.f32 %v1242, %v1246
    %v1275 = vadd.f32 %v1274, %v1250
    %v1276 = vadd.f32 %v1275, %v1254
    %v1277 = vadd.f32 %v1276, %v1258
    %v1278 = vadd.f32 %v1277, %v1262
    %v1279 = vadd.f32 %v1278, %v1266
    %v1280 = vadd.f32 %v1279, %v1270
    %v1281 = vrot.slane %v1280, 4
    %v1282 = vadd.f32 %v1280, %v1281
    %v1283 = vrot.slane %v1282, 2
    %v1284 = vadd.f32 %v1282, %v1283
    %v1285 = vrot.slane %v1284, 1
    %v1286 = vadd.f32 %v1284, %v1285
    %v1287 = vadd.f32 %v1243, %v1247
    %v1288 = vadd.f32 %v1287, %v1251
    %v1289 = vadd.f32 %v1288, %v1255
    %v1290 = vadd.f32 %v1289, %v1259
    %v1291 = vadd.f32 %v1290, %v1263
    %v1292 = vadd.f32 %v1291, %v1267
    %v1293 = vadd.f32 %v1292, %v1271
    %v1294 = vrot.slane %v1293, 4
    %v1295 = vadd.f32 %v1293, %v1294
    %v1296 = vrot.slane %v1295, 2
    %v1297 = vadd.f32 %v1295, %v1296
    %v1298 = vrot.slane %v1297, 1
    %v1299 = vadd.f32 %v1297, %v1298
    %v1300 = vadd.f32 %v1244, %v1248
    %v1301 = vadd.f32 %v1300, %v1252
    %v1302 = vadd.f32 %v1301, %v1256
    %v1303 = vadd.f32 %v1302, %v1260
    %v1304 = vadd.f32 %v1303, %v1264
    %v1305 = vadd.f32 %v1304, %v1268
    %v1306 = vadd.f32 %v1305, %v1272
    %v1307 = vrot.slane %v1306, 4
    %v1308 = vadd.f32 %v1306, %v1307
    %v1309 = vrot.slane %v1308, 2
    %v1310 = vadd.f32 %v1308, %v1309
    %v1311 = vrot.slane %v1310, 1
    %v1312 = vadd.f32 %v1310, %v1311
    %v1313 = vadd.f32 %v1245, %v1249
    %v1314 = vadd.f32 %v1313, %v1253
    %v1315 = vadd.f32 %v1314, %v1257
    %v1316 = vadd.f32 %v1315, %v1261
    %v1317 = vadd.f32 %v1316, %v1265
    %v1318 = vadd.f32 %v1317, %v1269
    %v1319 = vadd.f32 %v1318, %v1273
    %v1320 = vrot.slane %v1319, 4
    %v1321 = vadd.f32 %v1319, %v1320
    %v1322 = vrot.slane %v1321, 2
    %v1323 = vadd.f32 %v1321, %v1322
    %v1324 = vrot.slane %v1323, 1
    %v1325 = vadd.f32 %v1323, %v1324
    %v1326 = vmul.f32 %v1286, %v435
    %v1327 = vmul.f32 %v1299, %v435
    %v1328 = vmul.f32 %v1312, %v435
    %v1329 = vmul.f32 %v1325, %v435
    %v1330 = vadd.f32 %v1326, 1e-05
    %v1331 = vadd.f32 %v1327, 1e-05
    %v1332 = vadd.f32 %v1328, 1e-05
    %v1333 = vadd.f32 %v1329, 1e-05
    %v1334 = vrsqrt.pop %v1330
    %v1335 = vrsqrt.pop %v1331
    %v1336 = vrsqrt.pop %v1332
    %v1337 = vrsqrt.pop %v1333
    %v1339 = vlaneseq
    %v1340 = vshrl.u32 %v1339, 7
    %v1341 = vsub.s32 0, %v1340
    %v1342 = vrot.slane %v1152, %v1341
    %v1343 = vlaneseq
    %v1344 = vshrl.u32 %v1343, 7
    %v1345 = vsub.s32 1, %v1344
    %v1346 = vrot.slane %v1152, %v1345
    %v1347 = vlaneseq
    %v1348 = vshrl.u32 %v1347, 7
    %v1349 = vsub.s32 2, %v1348
    %v1350 = vrot.slane %v1152, %v1349
    %v1351 = vlaneseq
    %v1352 = vshrl.u32 %v1351, 7
    %v1353 = vsub.s32 3, %v1352
    %v1354 = vrot.slane %v1152, %v1353
    %v1359 = vmul.f32 %v1334, %v1342
    %v1360 = vmul.f32 %v1335, %v1346
    %v1361 = vmul.f32 %v1336, %v1350
    %v1362 = vmul.f32 %v1337, %v1354
    %v1363 = vlaneseq
    %v1364 = vshrl.u32 %v1363, 7
    %v1365 = vsub.s32 0, %v1364
    %v1366 = vrot.slane %v1359, %v1365
    %v1367 = vlaneseq
    %v1368 = vshrl.u32 %v1367, 7
    %v1369 = vsub.s32 0, %v1368
    %v1370 = vrot.slane %v1360, %v1369
    %v1371 = vlaneseq
    %v1372 = vshrl.u32 %v1371, 7
    %v1373 = vsub.s32 0, %v1372
    %v1374 = vrot.slane %v1361, %v1373
    %v1375 = vlaneseq
    %v1376 = vshrl.u32 %v1375, 7
    %v1377 = vsub.s32 0, %v1376
    %v1378 = vrot.slane %v1362, %v1377
    %v1379 = vmul.f32 %v1210, %v1366
    %v1380 = vmul.f32 %v1211, %v1370
    %v1381 = vmul.f32 %v1212, %v1374
    %v1382 = vmul.f32 %v1213, %v1378
    %v1383 = vmul.f32 %v1214, %v1366
    %v1384 = vmul.f32 %v1215, %v1370
    %v1385 = vmul.f32 %v1216, %v1374
    %v1386 = vmul.f32 %v1217, %v1378
    %v1387 = vmul.f32 %v1218, %v1366
    %v1388 = vmul.f32 %v1219, %v1370
    %v1389 = vmul.f32 %v1220, %v1374
    %v1390 = vmul.f32 %v1221, %v1378
    %v1391 = vmul.f32 %v1222, %v1366
    %v1392 = vmul.f32 %v1223, %v1370
    %v1393 = vmul.f32 %v1224, %v1374
    %v1394 = vmul.f32 %v1225, %v1378
    %v1395 = vmul.f32 %v1226, %v1366
    %v1396 = vmul.f32 %v1227, %v1370
    %v1397 = vmul.f32 %v1228, %v1374
    %v1398 = vmul.f32 %v1229, %v1378
    %v1399 = vmul.f32 %v1230, %v1366
    %v1400 = vmul.f32 %v1231, %v1370
    %v1401 = vmul.f32 %v1232, %v1374
    %v1402 = vmul.f32 %v1233, %v1378
    %v1403 = vmul.f32 %v1234, %v1366
    %v1404 = vmul.f32 %v1235, %v1370
    %v1405 = vmul.f32 %v1236, %v1374
    %v1406 = vmul.f32 %v1237, %v1378
    %v1407 = vmul.f32 %v1238, %v1366
    %v1408 = vmul.f32 %v1239, %v1370
    %v1409 = vmul.f32 %v1240, %v1374
    %v1410 = vmul.f32 %v1241, %v1378
    %v1412 = vlaneseq
    %v1413 = vshrl.u32 %v1412, 7
    %v1414 = vsub.s32 0, %v1413
    %v1415 = vrot.slane %v1153, %v1414
    %v1416 = vlaneseq
    %v1417 = vshrl.u32 %v1416, 7
    %v1418 = vsub.s32 1, %v1417
    %v1419 = vrot.slane %v1153, %v1418
    %v1420 = vlaneseq
    %v1421 = vshrl.u32 %v1420, 7
    %v1422 = vsub.s32 2, %v1421
    %v1423 = vrot.slane %v1153, %v1422
    %v1424 = vlaneseq
    %v1425 = vshrl.u32 %v1424, 7
    %v1426 = vsub.s32 3, %v1425
    %v1427 = vrot.slane %v1153, %v1426
    %v1432 = vadd.f32 %v1379, %v1415
    %v1433 = vadd.f32 %v1380, %v1419
    %v1434 = vadd.f32 %v1381, %v1423
    %v1435 = vadd.f32 %v1382, %v1427
    %v1436 = vadd.f32 %v1383, %v1415
    %v1437 = vadd.f32 %v1384, %v1419
    %v1438 = vadd.f32 %v1385, %v1423
    %v1439 = vadd.f32 %v1386, %v1427
    %v1440 = vadd.f32 %v1387, %v1415
    %v1441 = vadd.f32 %v1388, %v1419
    %v1442 = vadd.f32 %v1389, %v1423
    %v1443 = vadd.f32 %v1390, %v1427
    %v1444 = vadd.f32 %v1391, %v1415
    %v1445 = vadd.f32 %v1392, %v1419
    %v1446 = vadd.f32 %v1393, %v1423
    %v1447 = vadd.f32 %v1394, %v1427
    %v1448 = vadd.f32 %v1395, %v1415
    %v1449 = vadd.f32 %v1396, %v1419
    %v1450 = vadd.f32 %v1397, %v1423
    %v1451 = vadd.f32 %v1398, %v1427
    %v1452 = vadd.f32 %v1399, %v1415
    %v1453 = vadd.f32 %v1400, %v1419
    %v1454 = vadd.f32 %v1401, %v1423
    %v1455 = vadd.f32 %v1402, %v1427
    %v1456 = vadd.f32 %v1403, %v1415
    %v1457 = vadd.f32 %v1404, %v1419
    %v1458 = vadd.f32 %v1405, %v1423
    %v1459 = vadd.f32 %v1406, %v1427
    %v1460 = vadd.f32 %v1407, %v1415
    %v1461 = vadd.f32 %v1408, %v1419
    %v1462 = vadd.f32 %v1409, %v1423
    %v1463 = vadd.f32 %v1410, %v1427
    %vm1464 = vcmp.gt.f32.partialorder %v1432, 0.0
    %vm1465 = vcmp.gt.f32.partialorder %v1433, 0.0
    %vm1466 = vcmp.gt.f32.partialorder %v1434, 0.0
    %vm1467 = vcmp.gt.f32.partialorder %v1435, 0.0
    %vm1468 = vcmp.gt.f32.partialorder %v1436, 0.0
    %vm1469 = vcmp.gt.f32.partialorder %v1437, 0.0
    %vm1470 = vcmp.gt.f32.partialorder %v1438, 0.0
    %vm1471 = vcmp.gt.f32.partialorder %v1439, 0.0
    %vm1472 = vcmp.gt.f32.partialorder %v1440, 0.0
    %vm1473 = vcmp.gt.f32.partialorder %v1441, 0.0
    %vm1474 = vcmp.gt.f32.partialorder %v1442, 0.0
    %vm1475 = vcmp.gt.f32.partialorder %v1443, 0.0
    %vm1476 = vcmp.gt.f32.partialorder %v1444, 0.0
    %vm1477 = vcmp.gt.f32.partialorder %v1445, 0.0
    %vm1478 = vcmp.gt.f32.partialorder %v1446, 0.0
    %vm1479 = vcmp.gt.f32.partialorder %v1447, 0.0
    %vm1480 = vcmp.gt.f32.partialorder %v1448, 0.0
    %vm1481 = vcmp.gt.f32.partialorder %v1449, 0.0
    %vm1482 = vcmp.gt.f32.partialorder %v1450, 0.0
    %vm1483 = vcmp.gt.f32.partialorder %v1451, 0.0
    %vm1484 = vcmp.gt.f32.partialorder %v1452, 0.0
    %vm1485 = vcmp.gt.f32.partialorder %v1453, 0.0
    %vm1486 = vcmp.gt.f32.partialorder %v1454, 0.0
    %vm1487 = vcmp.gt.f32.partialorder %v1455, 0.0
    %vm1488 = vcmp.gt.f32.partialorder %v1456, 0.0
    %vm1489 = vcmp.gt.f32.partialorder %v1457, 0.0
    %vm1490 = vcmp.gt.f32.partialorder %v1458, 0.0
    %vm1491 = vcmp.gt.f32.partialorder %v1459, 0.0
    %vm1492 = vcmp.gt.f32.partialorder %v1460, 0.0
    %vm1493 = vcmp.gt.f32.partialorder %v1461, 0.0
    %vm1494 = vcmp.gt.f32.partialorder %v1462, 0.0
    %vm1495 = vcmp.gt.f32.partialorder %v1463, 0.0
    %v1496 = vmul.f32 %v1432, 0.2
    %v1497 = vmul.f32 %v1433, 0.2
    %v1498 = vmul.f32 %v1434, 0.2
    %v1499 = vmul.f32 %v1435, 0.2
    %v1500 = vmul.f32 %v1436, 0.2
    %v1501 = vmul.f32 %v1437, 0.2
    %v1502 = vmul.f32 %v1438, 0.2
    %v1503 = vmul.f32 %v1439, 0.2
    %v1504 = vmul.f32 %v1440, 0.2
    %v1505 = vmul.f32 %v1441, 0.2
    %v1506 = vmul.f32 %v1442, 0.2
    %v1507 = vmul.f32 %v1443, 0.2
    %v1508 = vmul.f32 %v1444, 0.2
    %v1509 = vmul.f32 %v1445, 0.2
    %v1510 = vmul.f32 %v1446, 0.2
    %v1511 = vmul.f32 %v1447, 0.2
    %v1512 = vmul.f32 %v1448, 0.2
    %v1513 = vmul.f32 %v1449, 0.2
    %v1514 = vmul.f32 %v1450, 0.2
    %v1515 = vmul.f32 %v1451, 0.2
    %v1516 = vmul.f32 %v1452, 0.2
    %v1517 = vmul.f32 %v1453, 0.2
    %v1518 = vmul.f32 %v1454, 0.2
    %v1519 = vmul.f32 %v1455, 0.2
    %v1520 = vmul.f32 %v1456, 0.2
    %v1521 = vmul.f32 %v1457, 0.2
    %v1522 = vmul.f32 %v1458, 0.2
    %v1523 = vmul.f32 %v1459, 0.2
    %v1524 = vmul.f32 %v1460, 0.2
    %v1525 = vmul.f32 %v1461, 0.2
    %v1526 = vmul.f32 %v1462, 0.2
    %v1527 = vmul.f32 %v1463, 0.2
    %v1528 = vsel %vm1464, %v1432, %v1496
    %v1529 = vsel %vm1465, %v1433, %v1497
    %v1530 = vsel %vm1466, %v1434, %v1498
    %v1531 = vsel %vm1467, %v1435, %v1499
    %v1532 = vsel %vm1468, %v1436, %v1500
    %v1533 = vsel %vm1469, %v1437, %v1501
    %v1534 = vsel %vm1470, %v1438, %v1502
    %v1535 = vsel %vm1471, %v1439, %v1503
    %v1536 = vsel %vm1472, %v1440, %v1504
    %v1537 = vsel %vm1473, %v1441, %v1505
    %v1538 = vsel %vm1474, %v1442, %v1506
    %v1539 = vsel %vm1475, %v1443, %v1507
    %v1540 = vsel %vm1476, %v1444, %v1508
    %v1541 = vsel %vm1477, %v1445, %v1509
    %v1542 = vsel %vm1478, %v1446, %v1510
    %v1543 = vsel %vm1479, %v1447, %v1511
    %v1544 = vsel %vm1480, %v1448, %v1512
    %v1545 = vsel %vm1481, %v1449, %v1513
    %v1546 = vsel %vm1482, %v1450, %v1514
    %v1547 = vsel %vm1483, %v1451, %v1515
    %v1548 = vsel %vm1484, %v1452, %v1516
    %v1549 = vsel %vm1485, %v1453, %v1517
    %v1550 = vsel %vm1486, %v1454, %v1518
    %v1551 = vsel %vm1487, %v1455, %v1519
    %v1552 = vsel %vm1488, %v1456, %v1520
    %v1553 = vsel %vm1489, %v1457, %v1521
    %v1554 = vsel %vm1490, %v1458, %v1522
    %v1555 = vsel %vm1491, %v1459, %v1523
    %v1556 = vsel %vm1492, %v1460, %v1524
    %v1557 = vsel %vm1493, %v1461, %v1525
    %v1558 = vsel %vm1494, %v1462, %v1526
    %v1559 = vsel %vm1495, %v1463, %v1527
    %v1560 = vpack.c.bf16 %v1532, %v1528
    %v1561 = vpack.c.bf16 %v1533, %v1529
    %v1562 = vpack.c.bf16 %v1534, %v1530
    %v1563 = vpack.c.bf16 %v1535, %v1531
    %v1564 = vpack.c.bf16 %v1540, %v1536
    %v1565 = vpack.c.bf16 %v1541, %v1537
    %v1566 = vpack.c.bf16 %v1542, %v1538
    %v1567 = vpack.c.bf16 %v1543, %v1539
    %v1568 = vpack.c.bf16 %v1548, %v1544
    %v1569 = vpack.c.bf16 %v1549, %v1545
    %v1570 = vpack.c.bf16 %v1550, %v1546
    %v1571 = vpack.c.bf16 %v1551, %v1547
    %v1572 = vpack.c.bf16 %v1556, %v1552
    %v1573 = vpack.c.bf16 %v1557, %v1553
    %v1574 = vpack.c.bf16 %v1558, %v1554
    %v1575 = vpack.c.bf16 %v1559, %v1555
    %v1576 = vld [vmem:[%s9] sm:$0xff]
    %v1577 = vld [vmem:[%s9 + $0x8] sm:$0xff]
    %v1578 = vld [vmem:[%s9 + $0x10] sm:$0xff]
    %v1579 = vld [vmem:[%s9 + $0x18] sm:$0xff]
    %v1580 = vld [vmem:[%s9 + $0x20] sm:$0xff]
    %v1581 = vld [vmem:[%s9 + $0x28] sm:$0xff]
    %v1582 = vld [vmem:[%s9 + $0x30] sm:$0xff]
    %v1583 = vld [vmem:[%s9 + $0x38] sm:$0xff]
    %v1584 = vld [vmem:[%s9 + $0x40] sm:$0xff]
    %v1585 = vld [vmem:[%s9 + $0x48] sm:$0xff]
    %v1586 = vld [vmem:[%s9 + $0x50] sm:$0xff]
    %v1587 = vld [vmem:[%s9 + $0x58] sm:$0xff]
    %v1588 = vld [vmem:[%s9 + $0x60] sm:$0xff]
    %v1589 = vld [vmem:[%s9 + $0x68] sm:$0xff]
    %v1590 = vld [vmem:[%s9 + $0x70] sm:$0xff]
    %v1591 = vld [vmem:[%s9 + $0x78] sm:$0xff]
    %v1592 = vld [vmem:[%s9 + $0x80] sm:$0xff]
    %v1593 = vld [vmem:[%s9 + $0x88] sm:$0xff]
    %v1594 = vld [vmem:[%s9 + $0x90] sm:$0xff]
    %v1595 = vld [vmem:[%s9 + $0x98] sm:$0xff]
    %v1596 = vld [vmem:[%s9 + $0xa0] sm:$0xff]
    %v1597 = vld [vmem:[%s9 + $0xa8] sm:$0xff]
    %v1598 = vld [vmem:[%s9 + $0xb0] sm:$0xff]
    %v1599 = vld [vmem:[%s9 + $0xb8] sm:$0xff]
    %v1600 = vld [vmem:[%s9 + $0xc0] sm:$0xff]
    %v1601 = vld [vmem:[%s9 + $0xc8] sm:$0xff]
    %v1602 = vld [vmem:[%s9 + $0xd0] sm:$0xff]
    %v1603 = vld [vmem:[%s9 + $0xd8] sm:$0xff]
    %v1604 = vld [vmem:[%s9 + $0xe0] sm:$0xff]
    %v1605 = vld [vmem:[%s9 + $0xe8] sm:$0xff]
    %v1606 = vld [vmem:[%s9 + $0xf0] sm:$0xff]
    %v1607 = vld [vmem:[%s9 + $0xf8] sm:$0xff]
    %v1608 = vld [vmem:[%s9 + $0x100] sm:$0xff]
    %v1609 = vld [vmem:[%s9 + $0x108] sm:$0xff]
    %v1610 = vld [vmem:[%s9 + $0x110] sm:$0xff]
    %v1611 = vld [vmem:[%s9 + $0x118] sm:$0xff]
    %v1612 = vld [vmem:[%s9 + $0x120] sm:$0xff]
    %v1613 = vld [vmem:[%s9 + $0x128] sm:$0xff]
    %v1614 = vld [vmem:[%s9 + $0x130] sm:$0xff]
    %v1615 = vld [vmem:[%s9 + $0x138] sm:$0xff]
    %v1616 = vld [vmem:[%s9 + $0x140] sm:$0xff]
    %v1617 = vld [vmem:[%s9 + $0x148] sm:$0xff]
    %v1618 = vld [vmem:[%s9 + $0x150] sm:$0xff]
    %v1619 = vld [vmem:[%s9 + $0x158] sm:$0xff]
    %v1620 = vld [vmem:[%s9 + $0x160] sm:$0xff]
    %v1621 = vld [vmem:[%s9 + $0x168] sm:$0xff]
    %v1622 = vld [vmem:[%s9 + $0x170] sm:$0xff]
    %v1623 = vld [vmem:[%s9 + $0x178] sm:$0xff]
    %v1624 = vld [vmem:[%s9 + $0x180] sm:$0xff]
    %v1625 = vld [vmem:[%s9 + $0x188] sm:$0xff]
    %v1626 = vld [vmem:[%s9 + $0x190] sm:$0xff]
    %v1627 = vld [vmem:[%s9 + $0x198] sm:$0xff]
    %v1628 = vld [vmem:[%s9 + $0x1a0] sm:$0xff]
    %v1629 = vld [vmem:[%s9 + $0x1a8] sm:$0xff]
    %v1630 = vld [vmem:[%s9 + $0x1b0] sm:$0xff]
    %v1631 = vld [vmem:[%s9 + $0x1b8] sm:$0xff]
    %v1632 = vld [vmem:[%s9 + $0x1c0] sm:$0xff]
    %v1633 = vld [vmem:[%s9 + $0x1c8] sm:$0xff]
    %v1634 = vld [vmem:[%s9 + $0x1d0] sm:$0xff]
    %v1635 = vld [vmem:[%s9 + $0x1d8] sm:$0xff]
    %v1636 = vld [vmem:[%s9 + $0x1e0] sm:$0xff]
    %v1637 = vld [vmem:[%s9 + $0x1e8] sm:$0xff]
    %v1638 = vld [vmem:[%s9 + $0x1f0] sm:$0xff]
    %v1639 = vld [vmem:[%s9 + $0x1f8] sm:$0xff]
    %v1640 = vld [vmem:[%s9 + $0x200] sm:$0xff]
    %v1641 = vld [vmem:[%s9 + $0x208] sm:$0xff]
    %v1642 = vld [vmem:[%s9 + $0x210] sm:$0xff]
    %v1643 = vld [vmem:[%s9 + $0x218] sm:$0xff]
    %v1644 = vld [vmem:[%s9 + $0x220] sm:$0xff]
    %v1645 = vld [vmem:[%s9 + $0x228] sm:$0xff]
    %v1646 = vld [vmem:[%s9 + $0x230] sm:$0xff]
    %v1647 = vld [vmem:[%s9 + $0x238] sm:$0xff]
    %v1648 = vld [vmem:[%s9 + $0x240] sm:$0xff]
    %v1649 = vld [vmem:[%s9 + $0x248] sm:$0xff]
    %v1650 = vld [vmem:[%s9 + $0x250] sm:$0xff]
    %v1651 = vld [vmem:[%s9 + $0x258] sm:$0xff]
    %v1652 = vld [vmem:[%s9 + $0x260] sm:$0xff]
    %v1653 = vld [vmem:[%s9 + $0x268] sm:$0xff]
    %v1654 = vld [vmem:[%s9 + $0x270] sm:$0xff]
    %v1655 = vld [vmem:[%s9 + $0x278] sm:$0xff]
    %v1656 = vld [vmem:[%s9 + $0x280] sm:$0xff]
    %v1657 = vld [vmem:[%s9 + $0x288] sm:$0xff]
    %v1658 = vld [vmem:[%s9 + $0x290] sm:$0xff]
    %v1659 = vld [vmem:[%s9 + $0x298] sm:$0xff]
    %v1660 = vld [vmem:[%s9 + $0x2a0] sm:$0xff]
    %v1661 = vld [vmem:[%s9 + $0x2a8] sm:$0xff]
    %v1662 = vld [vmem:[%s9 + $0x2b0] sm:$0xff]
    %v1663 = vld [vmem:[%s9 + $0x2b8] sm:$0xff]
    %v1664 = vld [vmem:[%s9 + $0x2c0] sm:$0xff]
    %v1665 = vld [vmem:[%s9 + $0x2c8] sm:$0xff]
    %v1666 = vld [vmem:[%s9 + $0x2d0] sm:$0xff]
    %v1667 = vld [vmem:[%s9 + $0x2d8] sm:$0xff]
    %v1668 = vld [vmem:[%s9 + $0x2e0] sm:$0xff]
    %v1669 = vld [vmem:[%s9 + $0x2e8] sm:$0xff]
    %v1670 = vld [vmem:[%s9 + $0x2f0] sm:$0xff]
    %v1671 = vld [vmem:[%s9 + $0x2f8] sm:$0xff]
    %v1672 = vld [vmem:[%s9 + $0x300] sm:$0xff]
    %v1673 = vld [vmem:[%s9 + $0x308] sm:$0xff]
    %v1674 = vld [vmem:[%s9 + $0x310] sm:$0xff]
    %v1675 = vld [vmem:[%s9 + $0x318] sm:$0xff]
    %v1676 = vld [vmem:[%s9 + $0x320] sm:$0xff]
    %v1677 = vld [vmem:[%s9 + $0x328] sm:$0xff]
    %v1678 = vld [vmem:[%s9 + $0x330] sm:$0xff]
    %v1679 = vld [vmem:[%s9 + $0x338] sm:$0xff]
    %v1680 = vld [vmem:[%s9 + $0x340] sm:$0xff]
    %v1681 = vld [vmem:[%s9 + $0x348] sm:$0xff]
    %v1682 = vld [vmem:[%s9 + $0x350] sm:$0xff]
    %v1683 = vld [vmem:[%s9 + $0x358] sm:$0xff]
    %v1684 = vld [vmem:[%s9 + $0x360] sm:$0xff]
    %v1685 = vld [vmem:[%s9 + $0x368] sm:$0xff]
    %v1686 = vld [vmem:[%s9 + $0x370] sm:$0xff]
    %v1687 = vld [vmem:[%s9 + $0x378] sm:$0xff]
    %v1688 = vld [vmem:[%s9 + $0x380] sm:$0xff]
    %v1689 = vld [vmem:[%s9 + $0x388] sm:$0xff]
    %v1690 = vld [vmem:[%s9 + $0x390] sm:$0xff]
    %v1691 = vld [vmem:[%s9 + $0x398] sm:$0xff]
    %v1692 = vld [vmem:[%s9 + $0x3a0] sm:$0xff]
    %v1693 = vld [vmem:[%s9 + $0x3a8] sm:$0xff]
    %v1694 = vld [vmem:[%s9 + $0x3b0] sm:$0xff]
    %v1695 = vld [vmem:[%s9 + $0x3b8] sm:$0xff]
    %v1696 = vld [vmem:[%s9 + $0x3c0] sm:$0xff]
    %v1697 = vld [vmem:[%s9 + $0x3c8] sm:$0xff]
    %v1698 = vld [vmem:[%s9 + $0x3d0] sm:$0xff]
    %v1699 = vld [vmem:[%s9 + $0x3d8] sm:$0xff]
    %v1700 = vld [vmem:[%s9 + $0x3e0] sm:$0xff]
    %v1701 = vld [vmem:[%s9 + $0x3e8] sm:$0xff]
    %v1702 = vld [vmem:[%s9 + $0x3f0] sm:$0xff]
    %v1703 = vld [vmem:[%s9 + $0x3f8] sm:$0xff]
    %v1704 = vld [vmem:[%s9 + $0x400] sm:$0xff]
    %v1705 = vld [vmem:[%s9 + $0x408] sm:$0xff]
    %v1706 = vld [vmem:[%s9 + $0x410] sm:$0xff]
    %v1707 = vld [vmem:[%s9 + $0x418] sm:$0xff]
    %v1708 = vld [vmem:[%s9 + $0x420] sm:$0xff]
    %v1709 = vld [vmem:[%s9 + $0x428] sm:$0xff]
    %v1710 = vld [vmem:[%s9 + $0x430] sm:$0xff]
    %v1711 = vld [vmem:[%s9 + $0x438] sm:$0xff]
    %v1712 = vld [vmem:[%s9 + $0x440] sm:$0xff]
    %v1713 = vld [vmem:[%s9 + $0x448] sm:$0xff]
    %v1714 = vld [vmem:[%s9 + $0x450] sm:$0xff]
    %v1715 = vld [vmem:[%s9 + $0x458] sm:$0xff]
    %v1716 = vld [vmem:[%s9 + $0x460] sm:$0xff]
    %v1717 = vld [vmem:[%s9 + $0x468] sm:$0xff]
    %v1718 = vld [vmem:[%s9 + $0x470] sm:$0xff]
    %v1719 = vld [vmem:[%s9 + $0x478] sm:$0xff]
    %v1720 = vld [vmem:[%s9 + $0x480] sm:$0xff]
    %v1721 = vld [vmem:[%s9 + $0x488] sm:$0xff]
    %v1722 = vld [vmem:[%s9 + $0x490] sm:$0xff]
    %v1723 = vld [vmem:[%s9 + $0x498] sm:$0xff]
    %v1724 = vld [vmem:[%s9 + $0x4a0] sm:$0xff]
    %v1725 = vld [vmem:[%s9 + $0x4a8] sm:$0xff]
    %v1726 = vld [vmem:[%s9 + $0x4b0] sm:$0xff]
    %v1727 = vld [vmem:[%s9 + $0x4b8] sm:$0xff]
    %v1728 = vld [vmem:[%s9 + $0x4c0] sm:$0xff]
    %v1729 = vld [vmem:[%s9 + $0x4c8] sm:$0xff]
    %v1730 = vld [vmem:[%s9 + $0x4d0] sm:$0xff]
    %v1731 = vld [vmem:[%s9 + $0x4d8] sm:$0xff]
    %v1732 = vld [vmem:[%s9 + $0x4e0] sm:$0xff]
    %v1733 = vld [vmem:[%s9 + $0x4e8] sm:$0xff]
    %v1734 = vld [vmem:[%s9 + $0x4f0] sm:$0xff]
    %v1735 = vld [vmem:[%s9 + $0x4f8] sm:$0xff]
    %v1736 = vld [vmem:[%s9 + $0x500] sm:$0xff]
    %v1737 = vld [vmem:[%s9 + $0x508] sm:$0xff]
    %v1738 = vld [vmem:[%s9 + $0x510] sm:$0xff]
    %v1739 = vld [vmem:[%s9 + $0x518] sm:$0xff]
    %v1740 = vld [vmem:[%s9 + $0x520] sm:$0xff]
    %v1741 = vld [vmem:[%s9 + $0x528] sm:$0xff]
    %v1742 = vld [vmem:[%s9 + $0x530] sm:$0xff]
    %v1743 = vld [vmem:[%s9 + $0x538] sm:$0xff]
    %v1744 = vld [vmem:[%s9 + $0x540] sm:$0xff]
    %v1745 = vld [vmem:[%s9 + $0x548] sm:$0xff]
    %v1746 = vld [vmem:[%s9 + $0x550] sm:$0xff]
    %v1747 = vld [vmem:[%s9 + $0x558] sm:$0xff]
    %v1748 = vld [vmem:[%s9 + $0x560] sm:$0xff]
    %v1749 = vld [vmem:[%s9 + $0x568] sm:$0xff]
    %v1750 = vld [vmem:[%s9 + $0x570] sm:$0xff]
    %v1751 = vld [vmem:[%s9 + $0x578] sm:$0xff]
    %v1752 = vld [vmem:[%s9 + $0x580] sm:$0xff]
    %v1753 = vld [vmem:[%s9 + $0x588] sm:$0xff]
    %v1754 = vld [vmem:[%s9 + $0x590] sm:$0xff]
    %v1755 = vld [vmem:[%s9 + $0x598] sm:$0xff]
    %v1756 = vld [vmem:[%s9 + $0x5a0] sm:$0xff]
    %v1757 = vld [vmem:[%s9 + $0x5a8] sm:$0xff]
    %v1758 = vld [vmem:[%s9 + $0x5b0] sm:$0xff]
    %v1759 = vld [vmem:[%s9 + $0x5b8] sm:$0xff]
    %v1760 = vld [vmem:[%s9 + $0x5c0] sm:$0xff]
    %v1761 = vld [vmem:[%s9 + $0x5c8] sm:$0xff]
    %v1762 = vld [vmem:[%s9 + $0x5d0] sm:$0xff]
    %v1763 = vld [vmem:[%s9 + $0x5d8] sm:$0xff]
    %v1764 = vld [vmem:[%s9 + $0x5e0] sm:$0xff]
    %v1765 = vld [vmem:[%s9 + $0x5e8] sm:$0xff]
    %v1766 = vld [vmem:[%s9 + $0x5f0] sm:$0xff]
    %v1767 = vld [vmem:[%s9 + $0x5f8] sm:$0xff]
    %v1768 = vld [vmem:[%s9 + $0x600] sm:$0xff]
    %v1769 = vld [vmem:[%s9 + $0x608] sm:$0xff]
    %v1770 = vld [vmem:[%s9 + $0x610] sm:$0xff]
    %v1771 = vld [vmem:[%s9 + $0x618] sm:$0xff]
    %v1772 = vld [vmem:[%s9 + $0x620] sm:$0xff]
    %v1773 = vld [vmem:[%s9 + $0x628] sm:$0xff]
    %v1774 = vld [vmem:[%s9 + $0x630] sm:$0xff]
    %v1775 = vld [vmem:[%s9 + $0x638] sm:$0xff]
    %v1776 = vld [vmem:[%s9 + $0x640] sm:$0xff]
    %v1777 = vld [vmem:[%s9 + $0x648] sm:$0xff]
    %v1778 = vld [vmem:[%s9 + $0x650] sm:$0xff]
    %v1779 = vld [vmem:[%s9 + $0x658] sm:$0xff]
    %v1780 = vld [vmem:[%s9 + $0x660] sm:$0xff]
    %v1781 = vld [vmem:[%s9 + $0x668] sm:$0xff]
    %v1782 = vld [vmem:[%s9 + $0x670] sm:$0xff]
    %v1783 = vld [vmem:[%s9 + $0x678] sm:$0xff]
    %v1784 = vld [vmem:[%s9 + $0x680] sm:$0xff]
    %v1785 = vld [vmem:[%s9 + $0x688] sm:$0xff]
    %v1786 = vld [vmem:[%s9 + $0x690] sm:$0xff]
    %v1787 = vld [vmem:[%s9 + $0x698] sm:$0xff]
    %v1788 = vld [vmem:[%s9 + $0x6a0] sm:$0xff]
    %v1789 = vld [vmem:[%s9 + $0x6a8] sm:$0xff]
    %v1790 = vld [vmem:[%s9 + $0x6b0] sm:$0xff]
    %v1791 = vld [vmem:[%s9 + $0x6b8] sm:$0xff]
    %v1792 = vld [vmem:[%s9 + $0x6c0] sm:$0xff]
    %v1793 = vld [vmem:[%s9 + $0x6c8] sm:$0xff]
    %v1794 = vld [vmem:[%s9 + $0x6d0] sm:$0xff]
    %v1795 = vld [vmem:[%s9 + $0x6d8] sm:$0xff]
    %v1796 = vld [vmem:[%s9 + $0x6e0] sm:$0xff]
    %v1797 = vld [vmem:[%s9 + $0x6e8] sm:$0xff]
    %v1798 = vld [vmem:[%s9 + $0x6f0] sm:$0xff]
    %v1799 = vld [vmem:[%s9 + $0x6f8] sm:$0xff]
    %v1800 = vld [vmem:[%s9 + $0x700] sm:$0xff]
    %v1801 = vld [vmem:[%s9 + $0x708] sm:$0xff]
    %v1802 = vld [vmem:[%s9 + $0x710] sm:$0xff]
    %v1803 = vld [vmem:[%s9 + $0x718] sm:$0xff]
    %v1804 = vld [vmem:[%s9 + $0x720] sm:$0xff]
    %v1805 = vld [vmem:[%s9 + $0x728] sm:$0xff]
    %v1806 = vld [vmem:[%s9 + $0x730] sm:$0xff]
    %v1807 = vld [vmem:[%s9 + $0x738] sm:$0xff]
    %v1808 = vld [vmem:[%s9 + $0x740] sm:$0xff]
    %v1809 = vld [vmem:[%s9 + $0x748] sm:$0xff]
    %v1810 = vld [vmem:[%s9 + $0x750] sm:$0xff]
    %v1811 = vld [vmem:[%s9 + $0x758] sm:$0xff]
    %v1812 = vld [vmem:[%s9 + $0x760] sm:$0xff]
    %v1813 = vld [vmem:[%s9 + $0x768] sm:$0xff]
    %v1814 = vld [vmem:[%s9 + $0x770] sm:$0xff]
    %v1815 = vld [vmem:[%s9 + $0x778] sm:$0xff]
    %v1816 = vld [vmem:[%s9 + $0x780] sm:$0xff]
    %v1817 = vld [vmem:[%s9 + $0x788] sm:$0xff]
    %v1818 = vld [vmem:[%s9 + $0x790] sm:$0xff]
    %v1819 = vld [vmem:[%s9 + $0x798] sm:$0xff]
    %v1820 = vld [vmem:[%s9 + $0x7a0] sm:$0xff]
    %v1821 = vld [vmem:[%s9 + $0x7a8] sm:$0xff]
    %v1822 = vld [vmem:[%s9 + $0x7b0] sm:$0xff]
    %v1823 = vld [vmem:[%s9 + $0x7b8] sm:$0xff]
    %v1824 = vld [vmem:[%s9 + $0x7c0] sm:$0xff]
    %v1825 = vld [vmem:[%s9 + $0x7c8] sm:$0xff]
    %v1826 = vld [vmem:[%s9 + $0x7d0] sm:$0xff]
    %v1827 = vld [vmem:[%s9 + $0x7d8] sm:$0xff]
    %v1828 = vld [vmem:[%s9 + $0x7e0] sm:$0xff]
    %v1829 = vld [vmem:[%s9 + $0x7e8] sm:$0xff]
    %v1830 = vld [vmem:[%s9 + $0x7f0] sm:$0xff]
    %v1831 = vld [vmem:[%s9 + $0x7f8] sm:$0xff]
    %v2088 = vunpack.c.l.b16 %v1576
    %v2089 = vunpack.c.h.b16 %v1576
    %v2090 = vunpack.c.l.b16 %v1577
    %v2091 = vunpack.c.h.b16 %v1577
    %v2092 = vunpack.c.l.b16 %v1578
    %v2093 = vunpack.c.h.b16 %v1578
    %v2094 = vunpack.c.l.b16 %v1579
    %v2095 = vunpack.c.h.b16 %v1579
    %v2096 = vunpack.c.l.b16 %v1580
    %v2097 = vunpack.c.h.b16 %v1580
    %v2098 = vunpack.c.l.b16 %v1581
    %v2099 = vunpack.c.h.b16 %v1581
    %v2100 = vunpack.c.l.b16 %v1582
    %v2101 = vunpack.c.h.b16 %v1582
    %v2102 = vunpack.c.l.b16 %v1583
    %v2103 = vunpack.c.h.b16 %v1583
    %v2104 = vunpack.c.l.b16 %v1584
    %v2105 = vunpack.c.h.b16 %v1584
    %v2106 = vunpack.c.l.b16 %v1585
    %v2107 = vunpack.c.h.b16 %v1585
    %v2108 = vunpack.c.l.b16 %v1586
    %v2109 = vunpack.c.h.b16 %v1586
    %v2110 = vunpack.c.l.b16 %v1587
    %v2111 = vunpack.c.h.b16 %v1587
    %v2112 = vunpack.c.l.b16 %v1588
    %v2113 = vunpack.c.h.b16 %v1588
    %v2114 = vunpack.c.l.b16 %v1589
    %v2115 = vunpack.c.h.b16 %v1589
    %v2116 = vunpack.c.l.b16 %v1590
    %v2117 = vunpack.c.h.b16 %v1590
    %v2118 = vunpack.c.l.b16 %v1591
    %v2119 = vunpack.c.h.b16 %v1591
    %v2120 = vunpack.c.l.b16 %v1592
    %v2121 = vunpack.c.h.b16 %v1592
    %v2122 = vunpack.c.l.b16 %v1593
    %v2123 = vunpack.c.h.b16 %v1593
    %v2124 = vunpack.c.l.b16 %v1594
    %v2125 = vunpack.c.h.b16 %v1594
    %v2126 = vunpack.c.l.b16 %v1595
    %v2127 = vunpack.c.h.b16 %v1595
    %v2128 = vunpack.c.l.b16 %v1596
    %v2129 = vunpack.c.h.b16 %v1596
    %v2130 = vunpack.c.l.b16 %v1597
    %v2131 = vunpack.c.h.b16 %v1597
    %v2132 = vunpack.c.l.b16 %v1598
    %v2133 = vunpack.c.h.b16 %v1598
    %v2134 = vunpack.c.l.b16 %v1599
    %v2135 = vunpack.c.h.b16 %v1599
    %v2136 = vunpack.c.l.b16 %v1600
    %v2137 = vunpack.c.h.b16 %v1600
    %v2138 = vunpack.c.l.b16 %v1601
    %v2139 = vunpack.c.h.b16 %v1601
    %v2140 = vunpack.c.l.b16 %v1602
    %v2141 = vunpack.c.h.b16 %v1602
    %v2142 = vunpack.c.l.b16 %v1603
    %v2143 = vunpack.c.h.b16 %v1603
    %v2144 = vunpack.c.l.b16 %v1604
    %v2145 = vunpack.c.h.b16 %v1604
    %v2146 = vunpack.c.l.b16 %v1605
    %v2147 = vunpack.c.h.b16 %v1605
    %v2148 = vunpack.c.l.b16 %v1606
    %v2149 = vunpack.c.h.b16 %v1606
    %v2150 = vunpack.c.l.b16 %v1607
    %v2151 = vunpack.c.h.b16 %v1607
    %v2152 = vunpack.c.l.b16 %v1608
    %v2153 = vunpack.c.h.b16 %v1608
    %v2154 = vunpack.c.l.b16 %v1609
    %v2155 = vunpack.c.h.b16 %v1609
    %v2156 = vunpack.c.l.b16 %v1610
    %v2157 = vunpack.c.h.b16 %v1610
    %v2158 = vunpack.c.l.b16 %v1611
    %v2159 = vunpack.c.h.b16 %v1611
    %v2160 = vunpack.c.l.b16 %v1612
    %v2161 = vunpack.c.h.b16 %v1612
    %v2162 = vunpack.c.l.b16 %v1613
    %v2163 = vunpack.c.h.b16 %v1613
    %v2164 = vunpack.c.l.b16 %v1614
    %v2165 = vunpack.c.h.b16 %v1614
    %v2166 = vunpack.c.l.b16 %v1615
    %v2167 = vunpack.c.h.b16 %v1615
    %v2168 = vunpack.c.l.b16 %v1616
    %v2169 = vunpack.c.h.b16 %v1616
    %v2170 = vunpack.c.l.b16 %v1617
    %v2171 = vunpack.c.h.b16 %v1617
    %v2172 = vunpack.c.l.b16 %v1618
    %v2173 = vunpack.c.h.b16 %v1618
    %v2174 = vunpack.c.l.b16 %v1619
    %v2175 = vunpack.c.h.b16 %v1619
    %v2176 = vunpack.c.l.b16 %v1620
    %v2177 = vunpack.c.h.b16 %v1620
    %v2178 = vunpack.c.l.b16 %v1621
    %v2179 = vunpack.c.h.b16 %v1621
    %v2180 = vunpack.c.l.b16 %v1622
    %v2181 = vunpack.c.h.b16 %v1622
    %v2182 = vunpack.c.l.b16 %v1623
    %v2183 = vunpack.c.h.b16 %v1623
    %v2184 = vunpack.c.l.b16 %v1624
    %v2185 = vunpack.c.h.b16 %v1624
    %v2186 = vunpack.c.l.b16 %v1625
    %v2187 = vunpack.c.h.b16 %v1625
    %v2188 = vunpack.c.l.b16 %v1626
    %v2189 = vunpack.c.h.b16 %v1626
    %v2190 = vunpack.c.l.b16 %v1627
    %v2191 = vunpack.c.h.b16 %v1627
    %v2192 = vunpack.c.l.b16 %v1628
    %v2193 = vunpack.c.h.b16 %v1628
    %v2194 = vunpack.c.l.b16 %v1629
    %v2195 = vunpack.c.h.b16 %v1629
    %v2196 = vunpack.c.l.b16 %v1630
    %v2197 = vunpack.c.h.b16 %v1630
    %v2198 = vunpack.c.l.b16 %v1631
    %v2199 = vunpack.c.h.b16 %v1631
    %v2200 = vunpack.c.l.b16 %v1632
    %v2201 = vunpack.c.h.b16 %v1632
    %v2202 = vunpack.c.l.b16 %v1633
    %v2203 = vunpack.c.h.b16 %v1633
    %v2204 = vunpack.c.l.b16 %v1634
    %v2205 = vunpack.c.h.b16 %v1634
    %v2206 = vunpack.c.l.b16 %v1635
    %v2207 = vunpack.c.h.b16 %v1635
    %v2208 = vunpack.c.l.b16 %v1636
    %v2209 = vunpack.c.h.b16 %v1636
    %v2210 = vunpack.c.l.b16 %v1637
    %v2211 = vunpack.c.h.b16 %v1637
    %v2212 = vunpack.c.l.b16 %v1638
    %v2213 = vunpack.c.h.b16 %v1638
    %v2214 = vunpack.c.l.b16 %v1639
    %v2215 = vunpack.c.h.b16 %v1639
    %v2216 = vunpack.c.l.b16 %v1640
    %v2217 = vunpack.c.h.b16 %v1640
    %v2218 = vunpack.c.l.b16 %v1641
    %v2219 = vunpack.c.h.b16 %v1641
    %v2220 = vunpack.c.l.b16 %v1642
    %v2221 = vunpack.c.h.b16 %v1642
    %v2222 = vunpack.c.l.b16 %v1643
    %v2223 = vunpack.c.h.b16 %v1643
    %v2224 = vunpack.c.l.b16 %v1644
    %v2225 = vunpack.c.h.b16 %v1644
    %v2226 = vunpack.c.l.b16 %v1645
    %v2227 = vunpack.c.h.b16 %v1645
    %v2228 = vunpack.c.l.b16 %v1646
    %v2229 = vunpack.c.h.b16 %v1646
    %v2230 = vunpack.c.l.b16 %v1647
    %v2231 = vunpack.c.h.b16 %v1647
    %v2232 = vunpack.c.l.b16 %v1648
    %v2233 = vunpack.c.h.b16 %v1648
    %v2234 = vunpack.c.l.b16 %v1649
    %v2235 = vunpack.c.h.b16 %v1649
    %v2236 = vunpack.c.l.b16 %v1650
    %v2237 = vunpack.c.h.b16 %v1650
    %v2238 = vunpack.c.l.b16 %v1651
    %v2239 = vunpack.c.h.b16 %v1651
    %v2240 = vunpack.c.l.b16 %v1652
    %v2241 = vunpack.c.h.b16 %v1652
    %v2242 = vunpack.c.l.b16 %v1653
    %v2243 = vunpack.c.h.b16 %v1653
    %v2244 = vunpack.c.l.b16 %v1654
    %v2245 = vunpack.c.h.b16 %v1654
    %v2246 = vunpack.c.l.b16 %v1655
    %v2247 = vunpack.c.h.b16 %v1655
    %v2248 = vunpack.c.l.b16 %v1656
    %v2249 = vunpack.c.h.b16 %v1656
    %v2250 = vunpack.c.l.b16 %v1657
    %v2251 = vunpack.c.h.b16 %v1657
    %v2252 = vunpack.c.l.b16 %v1658
    %v2253 = vunpack.c.h.b16 %v1658
    %v2254 = vunpack.c.l.b16 %v1659
    %v2255 = vunpack.c.h.b16 %v1659
    %v2256 = vunpack.c.l.b16 %v1660
    %v2257 = vunpack.c.h.b16 %v1660
    %v2258 = vunpack.c.l.b16 %v1661
    %v2259 = vunpack.c.h.b16 %v1661
    %v2260 = vunpack.c.l.b16 %v1662
    %v2261 = vunpack.c.h.b16 %v1662
    %v2262 = vunpack.c.l.b16 %v1663
    %v2263 = vunpack.c.h.b16 %v1663
    %v2264 = vunpack.c.l.b16 %v1664
    %v2265 = vunpack.c.h.b16 %v1664
    %v2266 = vunpack.c.l.b16 %v1665
    %v2267 = vunpack.c.h.b16 %v1665
    %v2268 = vunpack.c.l.b16 %v1666
    %v2269 = vunpack.c.h.b16 %v1666
    %v2270 = vunpack.c.l.b16 %v1667
    %v2271 = vunpack.c.h.b16 %v1667
    %v2272 = vunpack.c.l.b16 %v1668
    %v2273 = vunpack.c.h.b16 %v1668
    %v2274 = vunpack.c.l.b16 %v1669
    %v2275 = vunpack.c.h.b16 %v1669
    %v2276 = vunpack.c.l.b16 %v1670
    %v2277 = vunpack.c.h.b16 %v1670
    %v2278 = vunpack.c.l.b16 %v1671
    %v2279 = vunpack.c.h.b16 %v1671
    %v2280 = vunpack.c.l.b16 %v1672
    %v2281 = vunpack.c.h.b16 %v1672
    %v2282 = vunpack.c.l.b16 %v1673
    %v2283 = vunpack.c.h.b16 %v1673
    %v2284 = vunpack.c.l.b16 %v1674
    %v2285 = vunpack.c.h.b16 %v1674
    %v2286 = vunpack.c.l.b16 %v1675
    %v2287 = vunpack.c.h.b16 %v1675
    %v2288 = vunpack.c.l.b16 %v1676
    %v2289 = vunpack.c.h.b16 %v1676
    %v2290 = vunpack.c.l.b16 %v1677
    %v2291 = vunpack.c.h.b16 %v1677
    %v2292 = vunpack.c.l.b16 %v1678
    %v2293 = vunpack.c.h.b16 %v1678
    %v2294 = vunpack.c.l.b16 %v1679
    %v2295 = vunpack.c.h.b16 %v1679
    %v2296 = vunpack.c.l.b16 %v1680
    %v2297 = vunpack.c.h.b16 %v1680
    %v2298 = vunpack.c.l.b16 %v1681
    %v2299 = vunpack.c.h.b16 %v1681
    %v2300 = vunpack.c.l.b16 %v1682
    %v2301 = vunpack.c.h.b16 %v1682
    %v2302 = vunpack.c.l.b16 %v1683
    %v2303 = vunpack.c.h.b16 %v1683
    %v2304 = vunpack.c.l.b16 %v1684
    %v2305 = vunpack.c.h.b16 %v1684
    %v2306 = vunpack.c.l.b16 %v1685
    %v2307 = vunpack.c.h.b16 %v1685
    %v2308 = vunpack.c.l.b16 %v1686
    %v2309 = vunpack.c.h.b16 %v1686
    %v2310 = vunpack.c.l.b16 %v1687
    %v2311 = vunpack.c.h.b16 %v1687
    %v2312 = vunpack.c.l.b16 %v1688
    %v2313 = vunpack.c.h.b16 %v1688
    %v2314 = vunpack.c.l.b16 %v1689
    %v2315 = vunpack.c.h.b16 %v1689
    %v2316 = vunpack.c.l.b16 %v1690
    %v2317 = vunpack.c.h.b16 %v1690
    %v2318 = vunpack.c.l.b16 %v1691
    %v2319 = vunpack.c.h.b16 %v1691
    %v2320 = vunpack.c.l.b16 %v1692
    %v2321 = vunpack.c.h.b16 %v1692
    %v2322 = vunpack.c.l.b16 %v1693
    %v2323 = vunpack.c.h.b16 %v1693
    %v2324 = vunpack.c.l.b16 %v1694
    %v2325 = vunpack.c.h.b16 %v1694
    %v2326 = vunpack.c.l.b16 %v1695
    %v2327 = vunpack.c.h.b16 %v1695
    %v2328 = vunpack.c.l.b16 %v1696
    %v2329 = vunpack.c.h.b16 %v1696
    %v2330 = vunpack.c.l.b16 %v1697
    %v2331 = vunpack.c.h.b16 %v1697
    %v2332 = vunpack.c.l.b16 %v1698
    %v2333 = vunpack.c.h.b16 %v1698
    %v2334 = vunpack.c.l.b16 %v1699
    %v2335 = vunpack.c.h.b16 %v1699
    %v2336 = vunpack.c.l.b16 %v1700
    %v2337 = vunpack.c.h.b16 %v1700
    %v2338 = vunpack.c.l.b16 %v1701
    %v2339 = vunpack.c.h.b16 %v1701
    %v2340 = vunpack.c.l.b16 %v1702
    %v2341 = vunpack.c.h.b16 %v1702
    %v2342 = vunpack.c.l.b16 %v1703
    %v2343 = vunpack.c.h.b16 %v1703
    %v2344 = vunpack.c.l.b16 %v1704
    %v2345 = vunpack.c.h.b16 %v1704
    %v2346 = vunpack.c.l.b16 %v1705
    %v2347 = vunpack.c.h.b16 %v1705
    %v2348 = vunpack.c.l.b16 %v1706
    %v2349 = vunpack.c.h.b16 %v1706
    %v2350 = vunpack.c.l.b16 %v1707
    %v2351 = vunpack.c.h.b16 %v1707
    %v2352 = vunpack.c.l.b16 %v1708
    %v2353 = vunpack.c.h.b16 %v1708
    %v2354 = vunpack.c.l.b16 %v1709
    %v2355 = vunpack.c.h.b16 %v1709
    %v2356 = vunpack.c.l.b16 %v1710
    %v2357 = vunpack.c.h.b16 %v1710
    %v2358 = vunpack.c.l.b16 %v1711
    %v2359 = vunpack.c.h.b16 %v1711
    %v2360 = vunpack.c.l.b16 %v1712
    %v2361 = vunpack.c.h.b16 %v1712
    %v2362 = vunpack.c.l.b16 %v1713
    %v2363 = vunpack.c.h.b16 %v1713
    %v2364 = vunpack.c.l.b16 %v1714
    %v2365 = vunpack.c.h.b16 %v1714
    %v2366 = vunpack.c.l.b16 %v1715
    %v2367 = vunpack.c.h.b16 %v1715
    %v2368 = vunpack.c.l.b16 %v1716
    %v2369 = vunpack.c.h.b16 %v1716
    %v2370 = vunpack.c.l.b16 %v1717
    %v2371 = vunpack.c.h.b16 %v1717
    %v2372 = vunpack.c.l.b16 %v1718
    %v2373 = vunpack.c.h.b16 %v1718
    %v2374 = vunpack.c.l.b16 %v1719
    %v2375 = vunpack.c.h.b16 %v1719
    %v2376 = vunpack.c.l.b16 %v1720
    %v2377 = vunpack.c.h.b16 %v1720
    %v2378 = vunpack.c.l.b16 %v1721
    %v2379 = vunpack.c.h.b16 %v1721
    %v2380 = vunpack.c.l.b16 %v1722
    %v2381 = vunpack.c.h.b16 %v1722
    %v2382 = vunpack.c.l.b16 %v1723
    %v2383 = vunpack.c.h.b16 %v1723
    %v2384 = vunpack.c.l.b16 %v1724
    %v2385 = vunpack.c.h.b16 %v1724
    %v2386 = vunpack.c.l.b16 %v1725
    %v2387 = vunpack.c.h.b16 %v1725
    %v2388 = vunpack.c.l.b16 %v1726
    %v2389 = vunpack.c.h.b16 %v1726
    %v2390 = vunpack.c.l.b16 %v1727
    %v2391 = vunpack.c.h.b16 %v1727
    %v2392 = vunpack.c.l.b16 %v1728
    %v2393 = vunpack.c.h.b16 %v1728
    %v2394 = vunpack.c.l.b16 %v1729
    %v2395 = vunpack.c.h.b16 %v1729
    %v2396 = vunpack.c.l.b16 %v1730
    %v2397 = vunpack.c.h.b16 %v1730
    %v2398 = vunpack.c.l.b16 %v1731
    %v2399 = vunpack.c.h.b16 %v1731
    %v2400 = vunpack.c.l.b16 %v1732
    %v2401 = vunpack.c.h.b16 %v1732
    %v2402 = vunpack.c.l.b16 %v1733
    %v2403 = vunpack.c.h.b16 %v1733
    %v2404 = vunpack.c.l.b16 %v1734
    %v2405 = vunpack.c.h.b16 %v1734
    %v2406 = vunpack.c.l.b16 %v1735
    %v2407 = vunpack.c.h.b16 %v1735
    %v2408 = vunpack.c.l.b16 %v1736
    %v2409 = vunpack.c.h.b16 %v1736
    %v2410 = vunpack.c.l.b16 %v1737
    %v2411 = vunpack.c.h.b16 %v1737
    %v2412 = vunpack.c.l.b16 %v1738
    %v2413 = vunpack.c.h.b16 %v1738
    %v2414 = vunpack.c.l.b16 %v1739
    %v2415 = vunpack.c.h.b16 %v1739
    %v2416 = vunpack.c.l.b16 %v1740
    %v2417 = vunpack.c.h.b16 %v1740
    %v2418 = vunpack.c.l.b16 %v1741
    %v2419 = vunpack.c.h.b16 %v1741
    %v2420 = vunpack.c.l.b16 %v1742
    %v2421 = vunpack.c.h.b16 %v1742
    %v2422 = vunpack.c.l.b16 %v1743
    %v2423 = vunpack.c.h.b16 %v1743
    %v2424 = vunpack.c.l.b16 %v1744
    %v2425 = vunpack.c.h.b16 %v1744
    %v2426 = vunpack.c.l.b16 %v1745
    %v2427 = vunpack.c.h.b16 %v1745
    %v2428 = vunpack.c.l.b16 %v1746
    %v2429 = vunpack.c.h.b16 %v1746
    %v2430 = vunpack.c.l.b16 %v1747
    %v2431 = vunpack.c.h.b16 %v1747
    %v2432 = vunpack.c.l.b16 %v1748
    %v2433 = vunpack.c.h.b16 %v1748
    %v2434 = vunpack.c.l.b16 %v1749
    %v2435 = vunpack.c.h.b16 %v1749
    %v2436 = vunpack.c.l.b16 %v1750
    %v2437 = vunpack.c.h.b16 %v1750
    %v2438 = vunpack.c.l.b16 %v1751
    %v2439 = vunpack.c.h.b16 %v1751
    %v2440 = vunpack.c.l.b16 %v1752
    %v2441 = vunpack.c.h.b16 %v1752
    %v2442 = vunpack.c.l.b16 %v1753
    %v2443 = vunpack.c.h.b16 %v1753
    %v2444 = vunpack.c.l.b16 %v1754
    %v2445 = vunpack.c.h.b16 %v1754
    %v2446 = vunpack.c.l.b16 %v1755
    %v2447 = vunpack.c.h.b16 %v1755
    %v2448 = vunpack.c.l.b16 %v1756
    %v2449 = vunpack.c.h.b16 %v1756
    %v2450 = vunpack.c.l.b16 %v1757
    %v2451 = vunpack.c.h.b16 %v1757
    %v2452 = vunpack.c.l.b16 %v1758
    %v2453 = vunpack.c.h.b16 %v1758
    %v2454 = vunpack.c.l.b16 %v1759
    %v2455 = vunpack.c.h.b16 %v1759
    %v2456 = vunpack.c.l.b16 %v1760
    %v2457 = vunpack.c.h.b16 %v1760
    %v2458 = vunpack.c.l.b16 %v1761
    %v2459 = vunpack.c.h.b16 %v1761
    %v2460 = vunpack.c.l.b16 %v1762
    %v2461 = vunpack.c.h.b16 %v1762
    %v2462 = vunpack.c.l.b16 %v1763
    %v2463 = vunpack.c.h.b16 %v1763
    %v2464 = vunpack.c.l.b16 %v1764
    %v2465 = vunpack.c.h.b16 %v1764
    %v2466 = vunpack.c.l.b16 %v1765
    %v2467 = vunpack.c.h.b16 %v1765
    %v2468 = vunpack.c.l.b16 %v1766
    %v2469 = vunpack.c.h.b16 %v1766
    %v2470 = vunpack.c.l.b16 %v1767
    %v2471 = vunpack.c.h.b16 %v1767
    %v2472 = vunpack.c.l.b16 %v1768
    %v2473 = vunpack.c.h.b16 %v1768
    %v2474 = vunpack.c.l.b16 %v1769
    %v2475 = vunpack.c.h.b16 %v1769
    %v2476 = vunpack.c.l.b16 %v1770
    %v2477 = vunpack.c.h.b16 %v1770
    %v2478 = vunpack.c.l.b16 %v1771
    %v2479 = vunpack.c.h.b16 %v1771
    %v2480 = vunpack.c.l.b16 %v1772
    %v2481 = vunpack.c.h.b16 %v1772
    %v2482 = vunpack.c.l.b16 %v1773
    %v2483 = vunpack.c.h.b16 %v1773
    %v2484 = vunpack.c.l.b16 %v1774
    %v2485 = vunpack.c.h.b16 %v1774
    %v2486 = vunpack.c.l.b16 %v1775
    %v2487 = vunpack.c.h.b16 %v1775
    %v2488 = vunpack.c.l.b16 %v1776
    %v2489 = vunpack.c.h.b16 %v1776
    %v2490 = vunpack.c.l.b16 %v1777
    %v2491 = vunpack.c.h.b16 %v1777
    %v2492 = vunpack.c.l.b16 %v1778
    %v2493 = vunpack.c.h.b16 %v1778
    %v2494 = vunpack.c.l.b16 %v1779
    %v2495 = vunpack.c.h.b16 %v1779
    %v2496 = vunpack.c.l.b16 %v1780
    %v2497 = vunpack.c.h.b16 %v1780
    %v2498 = vunpack.c.l.b16 %v1781
    %v2499 = vunpack.c.h.b16 %v1781
    %v2500 = vunpack.c.l.b16 %v1782
    %v2501 = vunpack.c.h.b16 %v1782
    %v2502 = vunpack.c.l.b16 %v1783
    %v2503 = vunpack.c.h.b16 %v1783
    %v2504 = vunpack.c.l.b16 %v1784
    %v2505 = vunpack.c.h.b16 %v1784
    %v2506 = vunpack.c.l.b16 %v1785
    %v2507 = vunpack.c.h.b16 %v1785
    %v2508 = vunpack.c.l.b16 %v1786
    %v2509 = vunpack.c.h.b16 %v1786
    %v2510 = vunpack.c.l.b16 %v1787
    %v2511 = vunpack.c.h.b16 %v1787
    %v2512 = vunpack.c.l.b16 %v1788
    %v2513 = vunpack.c.h.b16 %v1788
    %v2514 = vunpack.c.l.b16 %v1789
    %v2515 = vunpack.c.h.b16 %v1789
    %v2516 = vunpack.c.l.b16 %v1790
    %v2517 = vunpack.c.h.b16 %v1790
    %v2518 = vunpack.c.l.b16 %v1791
    %v2519 = vunpack.c.h.b16 %v1791
    %v2520 = vunpack.c.l.b16 %v1792
    %v2521 = vunpack.c.h.b16 %v1792
    %v2522 = vunpack.c.l.b16 %v1793
    %v2523 = vunpack.c.h.b16 %v1793
    %v2524 = vunpack.c.l.b16 %v1794
    %v2525 = vunpack.c.h.b16 %v1794
    %v2526 = vunpack.c.l.b16 %v1795
    %v2527 = vunpack.c.h.b16 %v1795
    %v2528 = vunpack.c.l.b16 %v1796
    %v2529 = vunpack.c.h.b16 %v1796
    %v2530 = vunpack.c.l.b16 %v1797
    %v2531 = vunpack.c.h.b16 %v1797
    %v2532 = vunpack.c.l.b16 %v1798
    %v2533 = vunpack.c.h.b16 %v1798
    %v2534 = vunpack.c.l.b16 %v1799
    %v2535 = vunpack.c.h.b16 %v1799
    %v2536 = vunpack.c.l.b16 %v1800
    %v2537 = vunpack.c.h.b16 %v1800
    %v2538 = vunpack.c.l.b16 %v1801
    %v2539 = vunpack.c.h.b16 %v1801
    %v2540 = vunpack.c.l.b16 %v1802
    %v2541 = vunpack.c.h.b16 %v1802
    %v2542 = vunpack.c.l.b16 %v1803
    %v2543 = vunpack.c.h.b16 %v1803
    %v2544 = vunpack.c.l.b16 %v1804
    %v2545 = vunpack.c.h.b16 %v1804
    %v2546 = vunpack.c.l.b16 %v1805
    %v2547 = vunpack.c.h.b16 %v1805
    %v2548 = vunpack.c.l.b16 %v1806
    %v2549 = vunpack.c.h.b16 %v1806
    %v2550 = vunpack.c.l.b16 %v1807
    %v2551 = vunpack.c.h.b16 %v1807
    %v2552 = vunpack.c.l.b16 %v1808
    %v2553 = vunpack.c.h.b16 %v1808
    %v2554 = vunpack.c.l.b16 %v1809
    %v2555 = vunpack.c.h.b16 %v1809
    %v2556 = vunpack.c.l.b16 %v1810
    %v2557 = vunpack.c.h.b16 %v1810
    %v2558 = vunpack.c.l.b16 %v1811
    %v2559 = vunpack.c.h.b16 %v1811
    %v2560 = vunpack.c.l.b16 %v1812
    %v2561 = vunpack.c.h.b16 %v1812
    %v2562 = vunpack.c.l.b16 %v1813
    %v2563 = vunpack.c.h.b16 %v1813
    %v2564 = vunpack.c.l.b16 %v1814
    %v2565 = vunpack.c.h.b16 %v1814
    %v2566 = vunpack.c.l.b16 %v1815
    %v2567 = vunpack.c.h.b16 %v1815
    %v2568 = vunpack.c.l.b16 %v1816
    %v2569 = vunpack.c.h.b16 %v1816
    %v2570 = vunpack.c.l.b16 %v1817
    %v2571 = vunpack.c.h.b16 %v1817
    %v2572 = vunpack.c.l.b16 %v1818
    %v2573 = vunpack.c.h.b16 %v1818
    %v2574 = vunpack.c.l.b16 %v1819
    %v2575 = vunpack.c.h.b16 %v1819
    %v2576 = vunpack.c.l.b16 %v1820
    %v2577 = vunpack.c.h.b16 %v1820
    %v2578 = vunpack.c.l.b16 %v1821
    %v2579 = vunpack.c.h.b16 %v1821
    %v2580 = vunpack.c.l.b16 %v1822
    %v2581 = vunpack.c.h.b16 %v1822
    %v2582 = vunpack.c.l.b16 %v1823
    %v2583 = vunpack.c.h.b16 %v1823
    %v2584 = vunpack.c.l.b16 %v1824
    %v2585 = vunpack.c.h.b16 %v1824
    %v2586 = vunpack.c.l.b16 %v1825
    %v2587 = vunpack.c.h.b16 %v1825
    %v2588 = vunpack.c.l.b16 %v1826
    %v2589 = vunpack.c.h.b16 %v1826
    %v2590 = vunpack.c.l.b16 %v1827
    %v2591 = vunpack.c.h.b16 %v1827
    %v2592 = vunpack.c.l.b16 %v1828
    %v2593 = vunpack.c.h.b16 %v1828
    %v2594 = vunpack.c.l.b16 %v1829
    %v2595 = vunpack.c.h.b16 %v1829
    %v2596 = vunpack.c.l.b16 %v1830
    %v2597 = vunpack.c.h.b16 %v1830
    %v2598 = vunpack.c.l.b16 %v1831
    %v2599 = vunpack.c.h.b16 %v1831
    %v2600 = vpack.c.b16 %v2096, %v2088
    %v2601 = vpack.c.b16 %v2097, %v2089
    %v2602 = vpack.c.b16 %v2098, %v2090
    %v2603 = vpack.c.b16 %v2099, %v2091
    %v2604 = vpack.c.b16 %v2100, %v2092
    %v2605 = vpack.c.b16 %v2101, %v2093
    %v2606 = vpack.c.b16 %v2102, %v2094
    %v2607 = vpack.c.b16 %v2103, %v2095
    %v2608 = vpack.c.b16 %v2112, %v2104
    %v2609 = vpack.c.b16 %v2113, %v2105
    %v2610 = vpack.c.b16 %v2114, %v2106
    %v2611 = vpack.c.b16 %v2115, %v2107
    %v2612 = vpack.c.b16 %v2116, %v2108
    %v2613 = vpack.c.b16 %v2117, %v2109
    %v2614 = vpack.c.b16 %v2118, %v2110
    %v2615 = vpack.c.b16 %v2119, %v2111
    %v2616 = vpack.c.b16 %v2128, %v2120
    %v2617 = vpack.c.b16 %v2129, %v2121
    %v2618 = vpack.c.b16 %v2130, %v2122
    %v2619 = vpack.c.b16 %v2131, %v2123
    %v2620 = vpack.c.b16 %v2132, %v2124
    %v2621 = vpack.c.b16 %v2133, %v2125
    %v2622 = vpack.c.b16 %v2134, %v2126
    %v2623 = vpack.c.b16 %v2135, %v2127
    %v2624 = vpack.c.b16 %v2144, %v2136
    %v2625 = vpack.c.b16 %v2145, %v2137
    %v2626 = vpack.c.b16 %v2146, %v2138
    %v2627 = vpack.c.b16 %v2147, %v2139
    %v2628 = vpack.c.b16 %v2148, %v2140
    %v2629 = vpack.c.b16 %v2149, %v2141
    %v2630 = vpack.c.b16 %v2150, %v2142
    %v2631 = vpack.c.b16 %v2151, %v2143
    %v2632 = vpack.c.b16 %v2160, %v2152
    %v2633 = vpack.c.b16 %v2161, %v2153
    %v2634 = vpack.c.b16 %v2162, %v2154
    %v2635 = vpack.c.b16 %v2163, %v2155
    %v2636 = vpack.c.b16 %v2164, %v2156
    %v2637 = vpack.c.b16 %v2165, %v2157
    %v2638 = vpack.c.b16 %v2166, %v2158
    %v2639 = vpack.c.b16 %v2167, %v2159
    %v2640 = vpack.c.b16 %v2176, %v2168
    %v2641 = vpack.c.b16 %v2177, %v2169
    %v2642 = vpack.c.b16 %v2178, %v2170
    %v2643 = vpack.c.b16 %v2179, %v2171
    %v2644 = vpack.c.b16 %v2180, %v2172
    %v2645 = vpack.c.b16 %v2181, %v2173
    %v2646 = vpack.c.b16 %v2182, %v2174
    %v2647 = vpack.c.b16 %v2183, %v2175
    %v2648 = vpack.c.b16 %v2192, %v2184
    %v2649 = vpack.c.b16 %v2193, %v2185
    %v2650 = vpack.c.b16 %v2194, %v2186
    %v2651 = vpack.c.b16 %v2195, %v2187
    %v2652 = vpack.c.b16 %v2196, %v2188
    %v2653 = vpack.c.b16 %v2197, %v2189
    %v2654 = vpack.c.b16 %v2198, %v2190
    %v2655 = vpack.c.b16 %v2199, %v2191
    %v2656 = vpack.c.b16 %v2208, %v2200
    %v2657 = vpack.c.b16 %v2209, %v2201
    %v2658 = vpack.c.b16 %v2210, %v2202
    %v2659 = vpack.c.b16 %v2211, %v2203
    %v2660 = vpack.c.b16 %v2212, %v2204
    %v2661 = vpack.c.b16 %v2213, %v2205
    %v2662 = vpack.c.b16 %v2214, %v2206
    %v2663 = vpack.c.b16 %v2215, %v2207
    %v2664 = vpack.c.b16 %v2224, %v2216
    %v2665 = vpack.c.b16 %v2225, %v2217
    %v2666 = vpack.c.b16 %v2226, %v2218
    %v2667 = vpack.c.b16 %v2227, %v2219
    %v2668 = vpack.c.b16 %v2228, %v2220
    %v2669 = vpack.c.b16 %v2229, %v2221
    %v2670 = vpack.c.b16 %v2230, %v2222
    %v2671 = vpack.c.b16 %v2231, %v2223
    %v2672 = vpack.c.b16 %v2240, %v2232
    %v2673 = vpack.c.b16 %v2241, %v2233
    %v2674 = vpack.c.b16 %v2242, %v2234
    %v2675 = vpack.c.b16 %v2243, %v2235
    %v2676 = vpack.c.b16 %v2244, %v2236
    %v2677 = vpack.c.b16 %v2245, %v2237
    %v2678 = vpack.c.b16 %v2246, %v2238
    %v2679 = vpack.c.b16 %v2247, %v2239
    %v2680 = vpack.c.b16 %v2256, %v2248
    %v2681 = vpack.c.b16 %v2257, %v2249
    %v2682 = vpack.c.b16 %v2258, %v2250
    %v2683 = vpack.c.b16 %v2259, %v2251
    %v2684 = vpack.c.b16 %v2260, %v2252
    %v2685 = vpack.c.b16 %v2261, %v2253
    %v2686 = vpack.c.b16 %v2262, %v2254
    %v2687 = vpack.c.b16 %v2263, %v2255
    %v2688 = vpack.c.b16 %v2272, %v2264
    %v2689 = vpack.c.b16 %v2273, %v2265
    %v2690 = vpack.c.b16 %v2274, %v2266
    %v2691 = vpack.c.b16 %v2275, %v2267
    %v2692 = vpack.c.b16 %v2276, %v2268
    %v2693 = vpack.c.b16 %v2277, %v2269
    %v2694 = vpack.c.b16 %v2278, %v2270
    %v2695 = vpack.c.b16 %v2279, %v2271
    %v2696 = vpack.c.b16 %v2288, %v2280
    %v2697 = vpack.c.b16 %v2289, %v2281
    %v2698 = vpack.c.b16 %v2290, %v2282
    %v2699 = vpack.c.b16 %v2291, %v2283
    %v2700 = vpack.c.b16 %v2292, %v2284
    %v2701 = vpack.c.b16 %v2293, %v2285
    %v2702 = vpack.c.b16 %v2294, %v2286
    %v2703 = vpack.c.b16 %v2295, %v2287
    %v2704 = vpack.c.b16 %v2304, %v2296
    %v2705 = vpack.c.b16 %v2305, %v2297
    %v2706 = vpack.c.b16 %v2306, %v2298
    %v2707 = vpack.c.b16 %v2307, %v2299
    %v2708 = vpack.c.b16 %v2308, %v2300
    %v2709 = vpack.c.b16 %v2309, %v2301
    %v2710 = vpack.c.b16 %v2310, %v2302
    %v2711 = vpack.c.b16 %v2311, %v2303
    %v2712 = vpack.c.b16 %v2320, %v2312
    %v2713 = vpack.c.b16 %v2321, %v2313
    %v2714 = vpack.c.b16 %v2322, %v2314
    %v2715 = vpack.c.b16 %v2323, %v2315
    %v2716 = vpack.c.b16 %v2324, %v2316
    %v2717 = vpack.c.b16 %v2325, %v2317
    %v2718 = vpack.c.b16 %v2326, %v2318
    %v2719 = vpack.c.b16 %v2327, %v2319
    %v2720 = vpack.c.b16 %v2336, %v2328
    %v2721 = vpack.c.b16 %v2337, %v2329
    %v2722 = vpack.c.b16 %v2338, %v2330
    %v2723 = vpack.c.b16 %v2339, %v2331
    %v2724 = vpack.c.b16 %v2340, %v2332
    %v2725 = vpack.c.b16 %v2341, %v2333
    %v2726 = vpack.c.b16 %v2342, %v2334
    %v2727 = vpack.c.b16 %v2343, %v2335
    %v2728 = vpack.c.b16 %v2352, %v2344
    %v2729 = vpack.c.b16 %v2353, %v2345
    %v2730 = vpack.c.b16 %v2354, %v2346
    %v2731 = vpack.c.b16 %v2355, %v2347
    %v2732 = vpack.c.b16 %v2356, %v2348
    %v2733 = vpack.c.b16 %v2357, %v2349
    %v2734 = vpack.c.b16 %v2358, %v2350
    %v2735 = vpack.c.b16 %v2359, %v2351
    %v2736 = vpack.c.b16 %v2368, %v2360
    %v2737 = vpack.c.b16 %v2369, %v2361
    %v2738 = vpack.c.b16 %v2370, %v2362
    %v2739 = vpack.c.b16 %v2371, %v2363
    %v2740 = vpack.c.b16 %v2372, %v2364
    %v2741 = vpack.c.b16 %v2373, %v2365
    %v2742 = vpack.c.b16 %v2374, %v2366
    %v2743 = vpack.c.b16 %v2375, %v2367
    %v2744 = vpack.c.b16 %v2384, %v2376
    %v2745 = vpack.c.b16 %v2385, %v2377
    %v2746 = vpack.c.b16 %v2386, %v2378
    %v2747 = vpack.c.b16 %v2387, %v2379
    %v2748 = vpack.c.b16 %v2388, %v2380
    %v2749 = vpack.c.b16 %v2389, %v2381
    %v2750 = vpack.c.b16 %v2390, %v2382
    %v2751 = vpack.c.b16 %v2391, %v2383
    %v2752 = vpack.c.b16 %v2400, %v2392
    %v2753 = vpack.c.b16 %v2401, %v2393
    %v2754 = vpack.c.b16 %v2402, %v2394
    %v2755 = vpack.c.b16 %v2403, %v2395
    %v2756 = vpack.c.b16 %v2404, %v2396
    %v2757 = vpack.c.b16 %v2405, %v2397
    %v2758 = vpack.c.b16 %v2406, %v2398
    %v2759 = vpack.c.b16 %v2407, %v2399
    %v2760 = vpack.c.b16 %v2416, %v2408
    %v2761 = vpack.c.b16 %v2417, %v2409
    %v2762 = vpack.c.b16 %v2418, %v2410
    %v2763 = vpack.c.b16 %v2419, %v2411
    %v2764 = vpack.c.b16 %v2420, %v2412
    %v2765 = vpack.c.b16 %v2421, %v2413
    %v2766 = vpack.c.b16 %v2422, %v2414
    %v2767 = vpack.c.b16 %v2423, %v2415
    %v2768 = vpack.c.b16 %v2432, %v2424
    %v2769 = vpack.c.b16 %v2433, %v2425
    %v2770 = vpack.c.b16 %v2434, %v2426
    %v2771 = vpack.c.b16 %v2435, %v2427
    %v2772 = vpack.c.b16 %v2436, %v2428
    %v2773 = vpack.c.b16 %v2437, %v2429
    %v2774 = vpack.c.b16 %v2438, %v2430
    %v2775 = vpack.c.b16 %v2439, %v2431
    %v2776 = vpack.c.b16 %v2448, %v2440
    %v2777 = vpack.c.b16 %v2449, %v2441
    %v2778 = vpack.c.b16 %v2450, %v2442
    %v2779 = vpack.c.b16 %v2451, %v2443
    %v2780 = vpack.c.b16 %v2452, %v2444
    %v2781 = vpack.c.b16 %v2453, %v2445
    %v2782 = vpack.c.b16 %v2454, %v2446
    %v2783 = vpack.c.b16 %v2455, %v2447
    %v2784 = vpack.c.b16 %v2464, %v2456
    %v2785 = vpack.c.b16 %v2465, %v2457
    %v2786 = vpack.c.b16 %v2466, %v2458
    %v2787 = vpack.c.b16 %v2467, %v2459
    %v2788 = vpack.c.b16 %v2468, %v2460
    %v2789 = vpack.c.b16 %v2469, %v2461
    %v2790 = vpack.c.b16 %v2470, %v2462
    %v2791 = vpack.c.b16 %v2471, %v2463
    %v2792 = vpack.c.b16 %v2480, %v2472
    %v2793 = vpack.c.b16 %v2481, %v2473
    %v2794 = vpack.c.b16 %v2482, %v2474
    %v2795 = vpack.c.b16 %v2483, %v2475
    %v2796 = vpack.c.b16 %v2484, %v2476
    %v2797 = vpack.c.b16 %v2485, %v2477
    %v2798 = vpack.c.b16 %v2486, %v2478
    %v2799 = vpack.c.b16 %v2487, %v2479
    %v2800 = vpack.c.b16 %v2496, %v2488
    %v2801 = vpack.c.b16 %v2497, %v2489
    %v2802 = vpack.c.b16 %v2498, %v2490
    %v2803 = vpack.c.b16 %v2499, %v2491
    %v2804 = vpack.c.b16 %v2500, %v2492
    %v2805 = vpack.c.b16 %v2501, %v2493
    %v2806 = vpack.c.b16 %v2502, %v2494
    %v2807 = vpack.c.b16 %v2503, %v2495
    %v2808 = vpack.c.b16 %v2512, %v2504
    %v2809 = vpack.c.b16 %v2513, %v2505
    %v2810 = vpack.c.b16 %v2514, %v2506
    %v2811 = vpack.c.b16 %v2515, %v2507
    %v2812 = vpack.c.b16 %v2516, %v2508
    %v2813 = vpack.c.b16 %v2517, %v2509
    %v2814 = vpack.c.b16 %v2518, %v2510
    %v2815 = vpack.c.b16 %v2519, %v2511
    %v2816 = vpack.c.b16 %v2528, %v2520
    %v2817 = vpack.c.b16 %v2529, %v2521
    %v2818 = vpack.c.b16 %v2530, %v2522
    %v2819 = vpack.c.b16 %v2531, %v2523
    %v2820 = vpack.c.b16 %v2532, %v2524
    %v2821 = vpack.c.b16 %v2533, %v2525
    %v2822 = vpack.c.b16 %v2534, %v2526
    %v2823 = vpack.c.b16 %v2535, %v2527
    %v2824 = vpack.c.b16 %v2544, %v2536
    %v2825 = vpack.c.b16 %v2545, %v2537
    %v2826 = vpack.c.b16 %v2546, %v2538
    %v2827 = vpack.c.b16 %v2547, %v2539
    %v2828 = vpack.c.b16 %v2548, %v2540
    %v2829 = vpack.c.b16 %v2549, %v2541
    %v2830 = vpack.c.b16 %v2550, %v2542
    %v2831 = vpack.c.b16 %v2551, %v2543
    %v2832 = vpack.c.b16 %v2560, %v2552
    %v2833 = vpack.c.b16 %v2561, %v2553
    %v2834 = vpack.c.b16 %v2562, %v2554
    %v2835 = vpack.c.b16 %v2563, %v2555
    %v2836 = vpack.c.b16 %v2564, %v2556
    %v2837 = vpack.c.b16 %v2565, %v2557
    %v2838 = vpack.c.b16 %v2566, %v2558
    %v2839 = vpack.c.b16 %v2567, %v2559
    %v2840 = vpack.c.b16 %v2576, %v2568
    %v2841 = vpack.c.b16 %v2577, %v2569
    %v2842 = vpack.c.b16 %v2578, %v2570
    %v2843 = vpack.c.b16 %v2579, %v2571
    %v2844 = vpack.c.b16 %v2580, %v2572
    %v2845 = vpack.c.b16 %v2581, %v2573
    %v2846 = vpack.c.b16 %v2582, %v2574
    %v2847 = vpack.c.b16 %v2583, %v2575
    %v2848 = vpack.c.b16 %v2592, %v2584
    %v2849 = vpack.c.b16 %v2593, %v2585
    %v2850 = vpack.c.b16 %v2594, %v2586
    %v2851 = vpack.c.b16 %v2595, %v2587
    %v2852 = vpack.c.b16 %v2596, %v2588
    %v2853 = vpack.c.b16 %v2597, %v2589
    %v2854 = vpack.c.b16 %v2598, %v2590
    %v2855 = vpack.c.b16 %v2599, %v2591
    %3112 = vmatprep.subr.bf16.mxu0 %v2601
    %3113 = vmatpush1.bf16.msra.mxu0 %v2600
    %3114 = vmatprep.subr.bf16.mxu0 %v2609
    %3115 = vmatpush1.bf16.msra.mxu0 %v2608
    %3116 = vmatprep.subr.bf16.mxu0 %v2617
    %3117 = vmatpush1.bf16.msra.mxu0 %v2616
    %3118 = vmatprep.subr.bf16.mxu0 %v2625
    %3119 = vmatpush1.bf16.msra.mxu0 %v2624
    %3120 = vmatprep.subr.bf16.mxu0 %v2633
    %3121 = vmatpush1.bf16.msra.mxu0 %v2632
    %3122 = vmatprep.subr.bf16.mxu0 %v2641
    %3123 = vmatpush1.bf16.msra.mxu0 %v2640
    %3124 = vmatprep.subr.bf16.mxu0 %v2649
    %3125 = vmatpush1.bf16.msra.mxu0 %v2648
    %3126 = vmatprep.subr.bf16.mxu0 %v2657
    %3127 = vmatpush1.bf16.msra.mxu0 %v2656
    %3128 = vmatprep.subr.bf16.mxu0 %v2665
    %3129 = vmatpush1.bf16.msra.mxu0 %v2664
    %3130 = vmatprep.subr.bf16.mxu0 %v2673
    %3131 = vmatpush1.bf16.msra.mxu0 %v2672
    %3132 = vmatprep.subr.bf16.mxu0 %v2681
    %3133 = vmatpush1.bf16.msra.mxu0 %v2680
    %3134 = vmatprep.subr.bf16.mxu0 %v2689
    %3135 = vmatpush1.bf16.msra.mxu0 %v2688
    %3136 = vmatprep.subr.bf16.mxu0 %v2697
    %3137 = vmatpush1.bf16.msra.mxu0 %v2696
    %3138 = vmatprep.subr.bf16.mxu0 %v2705
    %3139 = vmatpush1.bf16.msra.mxu0 %v2704
    %3140 = vmatprep.subr.bf16.mxu0 %v2713
    %3141 = vmatpush1.bf16.msra.mxu0 %v2712
    %3142 = vmatprep.subr.bf16.mxu0 %v2721
    %3143 = vmatpush1.bf16.msra.mxu0 %v2720
    %3144 = vmatprep.mubr.bf16.mxu0 %v1561
    %3145 = vmatmul.mubr.bf16.gmra.mrb[0].mxu0 %v1560
    %v3146 = vpop.f32.mrb[0].mxu0
    %v3147 = vadd.f32 0.0, %v3146
    %v3148 = vpop.f32.mrb[0].mxu0
    %v3149 = vadd.f32 0.0, %v3148
    %v3150 = vpop.f32.mrb[0].mxu0
    %v3151 = vadd.f32 0.0, %v3150
    %v3152 = vpop.f32.mrb[0].mxu0
    %v3153 = vadd.f32 0.0, %v3152
    %3154 = vmatprep.mubr.bf16.mxu0 %v1565
    %3155 = vmatmul.mubr.bf16.gmra.mrb[0].mxu0 %v1564
    %v3156 = vpop.f32.mrb[0].mxu0
    %v3157 = vadd.f32 0.0, %v3156
    %v3158 = vpop.f32.mrb[0].mxu0
    %v3159 = vadd.f32 0.0, %v3158
    %v3160 = vpop.f32.mrb[0].mxu0
    %v3161 = vadd.f32 0.0, %v3160
    %v3162 = vpop.f32.mrb[0].mxu0
    %v3163 = vadd.f32 0.0, %v3162
    %3164 = vmatprep.mubr.bf16.mxu0 %v1569
    %3165 = vmatmul.mubr.bf16.gmra.mrb[0].mxu0 %v1568
    %v3166 = vpop.f32.mrb[0].mxu0
    %v3167 = vadd.f32 0.0, %v3166
    %v3168 = vpop.f32.mrb[0].mxu0
    %v3169 = vadd.f32 0.0, %v3168
    %v3170 = vpop.f32.mrb[0].mxu0
    %v3171 = vadd.f32 0.0, %v3170
    %v3172 = vpop.f32.mrb[0].mxu0
    %v3173 = vadd.f32 0.0, %v3172
    %3174 = vmatprep.mubr.bf16.mxu0 %v1573
    %3175 = vmatmul.mubr.bf16.gmra.mrb[0].mxu0 %v1572
    %v3176 = vpop.f32.mrb[0].mxu0
    %v3177 = vadd.f32 0.0, %v3176
    %v3178 = vpop.f32.mrb[0].mxu0
    %v3179 = vadd.f32 0.0, %v3178
    %v3180 = vpop.f32.mrb[0].mxu0
    %v3181 = vadd.f32 0.0, %v3180
    %v3182 = vpop.f32.mrb[0].mxu0
    %v3183 = vadd.f32 0.0, %v3182
    %3184 = vdwg.mxu0
    %3185 = vmatprep.subr.bf16.mxu0 %v2729
    %3186 = vmatpush1.bf16.msra.mxu0 %v2728
    %3187 = vmatprep.subr.bf16.mxu0 %v2737
    %3188 = vmatpush1.bf16.msra.mxu0 %v2736
    %3189 = vmatprep.subr.bf16.mxu0 %v2745
    %3190 = vmatpush1.bf16.msra.mxu0 %v2744
    %3191 = vmatprep.subr.bf16.mxu0 %v2753
    %3192 = vmatpush1.bf16.msra.mxu0 %v2752
    %3193 = vmatprep.subr.bf16.mxu0 %v2761
    %3194 = vmatpush1.bf16.msra.mxu0 %v2760
    %3195 = vmatprep.subr.bf16.mxu0 %v2769
    %3196 = vmatpush1.bf16.msra.mxu0 %v2768
    %3197 = vmatprep.subr.bf16.mxu0 %v2777
    %3198 = vmatpush1.bf16.msra.mxu0 %v2776
    %3199 = vmatprep.subr.bf16.mxu0 %v2785
    %3200 = vmatpush1.bf16.msra.mxu0 %v2784
    %3201 = vmatprep.subr.bf16.mxu0 %v2793
    %3202 = vmatpush1.bf16.msra.mxu0 %v2792
    %3203 = vmatprep.subr.bf16.mxu0 %v2801
    %3204 = vmatpush1.bf16.msra.mxu0 %v2800
    %3205 = vmatprep.subr.bf16.mxu0 %v2809
    %3206 = vmatpush1.bf16.msra.mxu0 %v2808
    %3207 = vmatprep.subr.bf16.mxu0 %v2817
    %3208 = vmatpush1.bf16.msra.mxu0 %v2816
    %3209 = vmatprep.subr.bf16.mxu0 %v2825
    %3210 = vmatpush1.bf16.msra.mxu0 %v2824
    %3211 = vmatprep.subr.bf16.mxu0 %v2833
    %3212 = vmatpush1.bf16.msra.mxu0 %v2832
    %3213 = vmatprep.subr.bf16.mxu0 %v2841
    %3214 = vmatpush1.bf16.msra.mxu0 %v2840
    %3215 = vmatprep.subr.bf16.mxu0 %v2849
    %3216 = vmatpush1.bf16.msra.mxu0 %v2848
    %3217 = vmatprep.mubr.bf16.mxu0 %v1563
    %3218 = vmatmul.mubr.bf16.gmra.mrb[0].mxu0 %v1562
    %v3219 = vpop.f32.mrb[0].mxu0
    %v3220 = vadd.f32 %v3147, %v3219
    %v3221 = vpop.f32.mrb[0].mxu0
    %v3222 = vadd.f32 %v3149, %v3221
    %v3223 = vpop.f32.mrb[0].mxu0
    %v3224 = vadd.f32 %v3151, %v3223
    %v3225 = vpop.f32.mrb[0].mxu0
    %v3226 = vadd.f32 %v3153, %v3225
    %3227 = vmatprep.mubr.bf16.mxu0 %v1567
    %3228 = vmatmul.mubr.bf16.gmra.mrb[0].mxu0 %v1566
    %v3229 = vpop.f32.mrb[0].mxu0
    %v3230 = vadd.f32 %v3157, %v3229
    %v3231 = vpop.f32.mrb[0].mxu0
    %v3232 = vadd.f32 %v3159, %v3231
    %v3233 = vpop.f32.mrb[0].mxu0
    %v3234 = vadd.f32 %v3161, %v3233
    %v3235 = vpop.f32.mrb[0].mxu0
    %v3236 = vadd.f32 %v3163, %v3235
    %3237 = vmatprep.mubr.bf16.mxu0 %v1571
    %3238 = vmatmul.mubr.bf16.gmra.mrb[0].mxu0 %v1570
    %v3239 = vpop.f32.mrb[0].mxu0
    %v3240 = vadd.f32 %v3167, %v3239
    %v3241 = vpop.f32.mrb[0].mxu0
    %v3242 = vadd.f32 %v3169, %v3241
    %v3243 = vpop.f32.mrb[0].mxu0
    %v3244 = vadd.f32 %v3171, %v3243
    %v3245 = vpop.f32.mrb[0].mxu0
    %v3246 = vadd.f32 %v3173, %v3245
    %3247 = vmatprep.mubr.bf16.mxu0 %v1575
    %3248 = vmatmul.mubr.bf16.gmra.mrb[0].mxu0 %v1574
    %v3249 = vpop.f32.mrb[0].mxu0
    %v3250 = vadd.f32 %v3177, %v3249
    %v3251 = vpop.f32.mrb[0].mxu0
    %v3252 = vadd.f32 %v3179, %v3251
    %v3253 = vpop.f32.mrb[0].mxu0
    %v3254 = vadd.f32 %v3181, %v3253
    %v3255 = vpop.f32.mrb[0].mxu0
    %v3256 = vadd.f32 %v3183, %v3255
    %3257 = vdwg.mxu0
    %3258 = vmatprep.subr.bf16.mxu0 %v2603
    %3259 = vmatpush1.bf16.msra.mxu0 %v2602
    %3260 = vmatprep.subr.bf16.mxu0 %v2611
    %3261 = vmatpush1.bf16.msra.mxu0 %v2610
    %3262 = vmatprep.subr.bf16.mxu0 %v2619
    %3263 = vmatpush1.bf16.msra.mxu0 %v2618
    %3264 = vmatprep.subr.bf16.mxu0 %v2627
    %3265 = vmatpush1.bf16.msra.mxu0 %v2626
    %3266 = vmatprep.subr.bf16.mxu0 %v2635
    %3267 = vmatpush1.bf16.msra.mxu0 %v2634
    %3268 = vmatprep.subr.bf16.mxu0 %v2643
    %3269 = vmatpush1.bf16.msra.mxu0 %v2642
    %3270 = vmatprep.subr.bf16.mxu0 %v2651
    %3271 = vmatpush1.bf16.msra.mxu0 %v2650
    %3272 = vmatprep.subr.bf16.mxu0 %v2659
    %3273 = vmatpush1.bf16.msra.mxu0 %v2658
    %3274 = vmatprep.subr.bf16.mxu0 %v2667
    %3275 = vmatpush1.bf16.msra.mxu0 %v2666
    %3276 = vmatprep.subr.bf16.mxu0 %v2675
    %3277 = vmatpush1.bf16.msra.mxu0 %v2674
    %3278 = vmatprep.subr.bf16.mxu0 %v2683
    %3279 = vmatpush1.bf16.msra.mxu0 %v2682
    %3280 = vmatprep.subr.bf16.mxu0 %v2691
    %3281 = vmatpush1.bf16.msra.mxu0 %v2690
    %3282 = vmatprep.subr.bf16.mxu0 %v2699
    %3283 = vmatpush1.bf16.msra.mxu0 %v2698
    %3284 = vmatprep.subr.bf16.mxu0 %v2707
    %3285 = vmatpush1.bf16.msra.mxu0 %v2706
    %3286 = vmatprep.subr.bf16.mxu0 %v2715
    %3287 = vmatpush1.bf16.msra.mxu0 %v2714
    %3288 = vmatprep.subr.bf16.mxu0 %v2723
    %3289 = vmatpush1.bf16.msra.mxu0 %v2722
    %3290 = vmatprep.mubr.bf16.mxu0 %v1561
    %3291 = vmatmul.mubr.bf16.gmra.mrb[0].mxu0 %v1560
    %v3292 = vpop.f32.mrb[0].mxu0
    %v3293 = vadd.f32 0.0, %v3292
    %v3294 = vpop.f32.mrb[0].mxu0
    %v3295 = vadd.f32 0.0, %v3294
    %v3296 = vpop.f32.mrb[0].mxu0
    %v3297 = vadd.f32 0.0, %v3296
    %v3298 = vpop.f32.mrb[0].mxu0
    %v3299 = vadd.f32 0.0, %v3298
    %3300 = vmatprep.mubr.bf16.mxu0 %v1565
    %3301 = vmatmul.mubr.bf16.gmra.mrb[0].mxu0 %v1564
    %v3302 = vpop.f32.mrb[0].mxu0
    %v3303 = vadd.f32 0.0, %v3302
    %v3304 = vpop.f32.mrb[0].mxu0
    %v3305 = vadd.f32 0.0, %v3304
    %v3306 = vpop.f32.mrb[0].mxu0
    %v3307 = vadd.f32 0.0, %v3306
    %v3308 = vpop.f32.mrb[0].mxu0
    %v3309 = vadd.f32 0.0, %v3308
    %3310 = vmatprep.mubr.bf16.mxu0 %v1569
    %3311 = vmatmul.mubr.bf16.gmra.mrb[0].mxu0 %v1568
    %v3312 = vpop.f32.mrb[0].mxu0
    %v3313 = vadd.f32 0.0, %v3312
    %v3314 = vpop.f32.mrb[0].mxu0
    %v3315 = vadd.f32 0.0, %v3314
    %v3316 = vpop.f32.mrb[0].mxu0
    %v3317 = vadd.f32 0.0, %v3316
    %v3318 = vpop.f32.mrb[0].mxu0
    %v3319 = vadd.f32 0.0, %v3318
    %3320 = vmatprep.mubr.bf16.mxu0 %v1573
    %3321 = vmatmul.mubr.bf16.gmra.mrb[0].mxu0 %v1572
    %v3322 = vpop.f32.mrb[0].mxu0
    %v3323 = vadd.f32 0.0, %v3322
    %v3324 = vpop.f32.mrb[0].mxu0
    %v3325 = vadd.f32 0.0, %v3324
    %v3326 = vpop.f32.mrb[0].mxu0
    %v3327 = vadd.f32 0.0, %v3326
    %v3328 = vpop.f32.mrb[0].mxu0
    %v3329 = vadd.f32 0.0, %v3328
    %3330 = vdwg.mxu0
    %3331 = vmatprep.subr.bf16.mxu0 %v2731
    %3332 = vmatpush1.bf16.msra.mxu0 %v2730
    %3333 = vmatprep.subr.bf16.mxu0 %v2739
    %3334 = vmatpush1.bf16.msra.mxu0 %v2738
    %3335 = vmatprep.subr.bf16.mxu0 %v2747
    %3336 = vmatpush1.bf16.msra.mxu0 %v2746
    %3337 = vmatprep.subr.bf16.mxu0 %v2755
    %3338 = vmatpush1.bf16.msra.mxu0 %v2754
    %3339 = vmatprep.subr.bf16.mxu0 %v2763
    %3340 = vmatpush1.bf16.msra.mxu0 %v2762
    %3341 = vmatprep.subr.bf16.mxu0 %v2771
    %3342 = vmatpush1.bf16.msra.mxu0 %v2770
    %3343 = vmatprep.subr.bf16.mxu0 %v2779
    %3344 = vmatpush1.bf16.msra.mxu0 %v2778
    %3345 = vmatprep.subr.bf16.mxu0 %v2787
    %3346 = vmatpush1.bf16.msra.mxu0 %v2786
    %3347 = vmatprep.subr.bf16.mxu0 %v2795
    %3348 = vmatpush1.bf16.msra.mxu0 %v2794
    %3349 = vmatprep.subr.bf16.mxu0 %v2803
    %3350 = vmatpush1.bf16.msra.mxu0 %v2802
    %3351 = vmatprep.subr.bf16.mxu0 %v2811
    %3352 = vmatpush1.bf16.msra.mxu0 %v2810
    %3353 = vmatprep.subr.bf16.mxu0 %v2819
    %3354 = vmatpush1.bf16.msra.mxu0 %v2818
    %3355 = vmatprep.subr.bf16.mxu0 %v2827
    %3356 = vmatpush1.bf16.msra.mxu0 %v2826
    %3357 = vmatprep.subr.bf16.mxu0 %v2835
    %3358 = vmatpush1.bf16.msra.mxu0 %v2834
    %3359 = vmatprep.subr.bf16.mxu0 %v2843
    %3360 = vmatpush1.bf16.msra.mxu0 %v2842
    %3361 = vmatprep.subr.bf16.mxu0 %v2851
    %3362 = vmatpush1.bf16.msra.mxu0 %v2850
    %3363 = vmatprep.mubr.bf16.mxu0 %v1563
    %3364 = vmatmul.mubr.bf16.gmra.mrb[0].mxu0 %v1562
    %v3365 = vpop.f32.mrb[0].mxu0
    %v3366 = vadd.f32 %v3293, %v3365
    %v3367 = vpop.f32.mrb[0].mxu0
    %v3368 = vadd.f32 %v3295, %v3367
    %v3369 = vpop.f32.mrb[0].mxu0
    %v3370 = vadd.f32 %v3297, %v3369
    %v3371 = vpop.f32.mrb[0].mxu0
    %v3372 = vadd.f32 %v3299, %v3371
    %3373 = vmatprep.mubr.bf16.mxu0 %v1567
    %3374 = vmatmul.mubr.bf16.gmra.mrb[0].mxu0 %v1566
    %v3375 = vpop.f32.mrb[0].mxu0
    %v3376 = vadd.f32 %v3303, %v3375
    %v3377 = vpop.f32.mrb[0].mxu0
    %v3378 = vadd.f32 %v3305, %v3377
    %v3379 = vpop.f32.mrb[0].mxu0
    %v3380 = vadd.f32 %v3307, %v3379
    %v3381 = vpop.f32.mrb[0].mxu0
    %v3382 = vadd.f32 %v3309, %v3381
    %3383 = vmatprep.mubr.bf16.mxu0 %v1571
    %3384 = vmatmul.mubr.bf16.gmra.mrb[0].mxu0 %v1570
    %v3385 = vpop.f32.mrb[0].mxu0
    %v3386 = vadd.f32 %v3313, %v3385
    %v3387 = vpop.f32.mrb[0].mxu0
    %v3388 = vadd.f32 %v3315, %v3387
    %v3389 = vpop.f32.mrb[0].mxu0
    %v3390 = vadd.f32 %v3317, %v3389
    %v3391 = vpop.f32.mrb[0].mxu0
    %v3392 = vadd.f32 %v3319, %v3391
    %3393 = vmatprep.mubr.bf16.mxu0 %v1575
    %3394 = vmatmul.mubr.bf16.gmra.mrb[0].mxu0 %v1574
    %v3395 = vpop.f32.mrb[0].mxu0
    %v3396 = vadd.f32 %v3323, %v3395
    %v3397 = vpop.f32.mrb[0].mxu0
    %v3398 = vadd.f32 %v3325, %v3397
    %v3399 = vpop.f32.mrb[0].mxu0
    %v3400 = vadd.f32 %v3327, %v3399
    %v3401 = vpop.f32.mrb[0].mxu0
    %v3402 = vadd.f32 %v3329, %v3401
    %3403 = vdwg.mxu0
    %3404 = vmatprep.subr.bf16.mxu0 %v2605
    %3405 = vmatpush1.bf16.msra.mxu0 %v2604
    %3406 = vmatprep.subr.bf16.mxu0 %v2613
    %3407 = vmatpush1.bf16.msra.mxu0 %v2612
    %3408 = vmatprep.subr.bf16.mxu0 %v2621
    %3409 = vmatpush1.bf16.msra.mxu0 %v2620
    %3410 = vmatprep.subr.bf16.mxu0 %v2629
    %3411 = vmatpush1.bf16.msra.mxu0 %v2628
    %3412 = vmatprep.subr.bf16.mxu0 %v2637
    %3413 = vmatpush1.bf16.msra.mxu0 %v2636
    %3414 = vmatprep.subr.bf16.mxu0 %v2645
    %3415 = vmatpush1.bf16.msra.mxu0 %v2644
    %3416 = vmatprep.subr.bf16.mxu0 %v2653
    %3417 = vmatpush1.bf16.msra.mxu0 %v2652
    %3418 = vmatprep.subr.bf16.mxu0 %v2661
    %3419 = vmatpush1.bf16.msra.mxu0 %v2660
    %3420 = vmatprep.subr.bf16.mxu0 %v2669
    %3421 = vmatpush1.bf16.msra.mxu0 %v2668
    %3422 = vmatprep.subr.bf16.mxu0 %v2677
    %3423 = vmatpush1.bf16.msra.mxu0 %v2676
    %3424 = vmatprep.subr.bf16.mxu0 %v2685
    %3425 = vmatpush1.bf16.msra.mxu0 %v2684
    %3426 = vmatprep.subr.bf16.mxu0 %v2693
    %3427 = vmatpush1.bf16.msra.mxu0 %v2692
    %3428 = vmatprep.subr.bf16.mxu0 %v2701
    %3429 = vmatpush1.bf16.msra.mxu0 %v2700
    %3430 = vmatprep.subr.bf16.mxu0 %v2709
    %3431 = vmatpush1.bf16.msra.mxu0 %v2708
    %3432 = vmatprep.subr.bf16.mxu0 %v2717
    %3433 = vmatpush1.bf16.msra.mxu0 %v2716
    %3434 = vmatprep.subr.bf16.mxu0 %v2725
    %3435 = vmatpush1.bf16.msra.mxu0 %v2724
    %3436 = vmatprep.mubr.bf16.mxu0 %v1561
    %3437 = vmatmul.mubr.bf16.gmra.mrb[0].mxu0 %v1560
    %v3438 = vpop.f32.mrb[0].mxu0
    %v3439 = vadd.f32 0.0, %v3438
    %v3440 = vpop.f32.mrb[0].mxu0
    %v3441 = vadd.f32 0.0, %v3440
    %v3442 = vpop.f32.mrb[0].mxu0
    %v3443 = vadd.f32 0.0, %v3442
    %v3444 = vpop.f32.mrb[0].mxu0
    %v3445 = vadd.f32 0.0, %v3444
    %3446 = vmatprep.mubr.bf16.mxu0 %v1565
    %3447 = vmatmul.mubr.bf16.gmra.mrb[0].mxu0 %v1564
    %v3448 = vpop.f32.mrb[0].mxu0
    %v3449 = vadd.f32 0.0, %v3448
    %v3450 = vpop.f32.mrb[0].mxu0
    %v3451 = vadd.f32 0.0, %v3450
    %v3452 = vpop.f32.mrb[0].mxu0
    %v3453 = vadd.f32 0.0, %v3452
    %v3454 = vpop.f32.mrb[0].mxu0
    %v3455 = vadd.f32 0.0, %v3454
    %3456 = vmatprep.mubr.bf16.mxu0 %v1569
    %3457 = vmatmul.mubr.bf16.gmra.mrb[0].mxu0 %v1568
    %v3458 = vpop.f32.mrb[0].mxu0
    %v3459 = vadd.f32 0.0, %v3458
    %v3460 = vpop.f32.mrb[0].mxu0
    %v3461 = vadd.f32 0.0, %v3460
    %v3462 = vpop.f32.mrb[0].mxu0
    %v3463 = vadd.f32 0.0, %v3462
    %v3464 = vpop.f32.mrb[0].mxu0
    %v3465 = vadd.f32 0.0, %v3464
    %3466 = vmatprep.mubr.bf16.mxu0 %v1573
    %3467 = vmatmul.mubr.bf16.gmra.mrb[0].mxu0 %v1572
    %v3468 = vpop.f32.mrb[0].mxu0
    %v3469 = vadd.f32 0.0, %v3468
    %v3470 = vpop.f32.mrb[0].mxu0
    %v3471 = vadd.f32 0.0, %v3470
    %v3472 = vpop.f32.mrb[0].mxu0
    %v3473 = vadd.f32 0.0, %v3472
    %v3474 = vpop.f32.mrb[0].mxu0
    %v3475 = vadd.f32 0.0, %v3474
    %3476 = vdwg.mxu0
    %3477 = vmatprep.subr.bf16.mxu0 %v2733
    %3478 = vmatpush1.bf16.msra.mxu0 %v2732
    %3479 = vmatprep.subr.bf16.mxu0 %v2741
    %3480 = vmatpush1.bf16.msra.mxu0 %v2740
    %3481 = vmatprep.subr.bf16.mxu0 %v2749
    %3482 = vmatpush1.bf16.msra.mxu0 %v2748
    %3483 = vmatprep.subr.bf16.mxu0 %v2757
    %3484 = vmatpush1.bf16.msra.mxu0 %v2756
    %3485 = vmatprep.subr.bf16.mxu0 %v2765
    %3486 = vmatpush1.bf16.msra.mxu0 %v2764
    %3487 = vmatprep.subr.bf16.mxu0 %v2773
    %3488 = vmatpush1.bf16.msra.mxu0 %v2772
    %3489 = vmatprep.subr.bf16.mxu0 %v2781
    %3490 = vmatpush1.bf16.msra.mxu0 %v2780
    %3491 = vmatprep.subr.bf16.mxu0 %v2789
    %3492 = vmatpush1.bf16.msra.mxu0 %v2788
    %3493 = vmatprep.subr.bf16.mxu0 %v2797
    %3494 = vmatpush1.bf16.msra.mxu0 %v2796
    %3495 = vmatprep.subr.bf16.mxu0 %v2805
    %3496 = vmatpush1.bf16.msra.mxu0 %v2804
    %3497 = vmatprep.subr.bf16.mxu0 %v2813
    %3498 = vmatpush1.bf16.msra.mxu0 %v2812
    %3499 = vmatprep.subr.bf16.mxu0 %v2821
    %3500 = vmatpush1.bf16.msra.mxu0 %v2820
    %3501 = vmatprep.subr.bf16.mxu0 %v2829
    %3502 = vmatpush1.bf16.msra.mxu0 %v2828
    %3503 = vmatprep.subr.bf16.mxu0 %v2837
    %3504 = vmatpush1.bf16.msra.mxu0 %v2836
    %3505 = vmatprep.subr.bf16.mxu0 %v2845
    %3506 = vmatpush1.bf16.msra.mxu0 %v2844
    %3507 = vmatprep.subr.bf16.mxu0 %v2853
    %3508 = vmatpush1.bf16.msra.mxu0 %v2852
    %3509 = vmatprep.mubr.bf16.mxu0 %v1563
    %3510 = vmatmul.mubr.bf16.gmra.mrb[0].mxu0 %v1562
    %v3511 = vpop.f32.mrb[0].mxu0
    %v3512 = vadd.f32 %v3439, %v3511
    %v3513 = vpop.f32.mrb[0].mxu0
    %v3514 = vadd.f32 %v3441, %v3513
    %v3515 = vpop.f32.mrb[0].mxu0
    %v3516 = vadd.f32 %v3443, %v3515
    %v3517 = vpop.f32.mrb[0].mxu0
    %v3518 = vadd.f32 %v3445, %v3517
    %3519 = vmatprep.mubr.bf16.mxu0 %v1567
    %3520 = vmatmul.mubr.bf16.gmra.mrb[0].mxu0 %v1566
    %v3521 = vpop.f32.mrb[0].mxu0
    %v3522 = vadd.f32 %v3449, %v3521
    %v3523 = vpop.f32.mrb[0].mxu0
    %v3524 = vadd.f32 %v3451, %v3523
    %v3525 = vpop.f32.mrb[0].mxu0
    %v3526 = vadd.f32 %v3453, %v3525
    %v3527 = vpop.f32.mrb[0].mxu0
    %v3528 = vadd.f32 %v3455, %v3527
    %3529 = vmatprep.mubr.bf16.mxu0 %v1571
    %3530 = vmatmul.mubr.bf16.gmra.mrb[0].mxu0 %v1570
    %v3531 = vpop.f32.mrb[0].mxu0
    %v3532 = vadd.f32 %v3459, %v3531
    %v3533 = vpop.f32.mrb[0].mxu0
    %v3534 = vadd.f32 %v3461, %v3533
    %v3535 = vpop.f32.mrb[0].mxu0
    %v3536 = vadd.f32 %v3463, %v3535
    %v3537 = vpop.f32.mrb[0].mxu0
    %v3538 = vadd.f32 %v3465, %v3537
    %3539 = vmatprep.mubr.bf16.mxu0 %v1575
    %3540 = vmatmul.mubr.bf16.gmra.mrb[0].mxu0 %v1574
    %v3541 = vpop.f32.mrb[0].mxu0
    %v3542 = vadd.f32 %v3469, %v3541
    %v3543 = vpop.f32.mrb[0].mxu0
    %v3544 = vadd.f32 %v3471, %v3543
    %v3545 = vpop.f32.mrb[0].mxu0
    %v3546 = vadd.f32 %v3473, %v3545
    %v3547 = vpop.f32.mrb[0].mxu0
    %v3548 = vadd.f32 %v3475, %v3547
    %3549 = vdwg.mxu0
    %3550 = vmatprep.subr.bf16.mxu0 %v2607
    %3551 = vmatpush1.bf16.msra.mxu0 %v2606
    %3552 = vmatprep.subr.bf16.mxu0 %v2615
    %3553 = vmatpush1.bf16.msra.mxu0 %v2614
    %3554 = vmatprep.subr.bf16.mxu0 %v2623
    %3555 = vmatpush1.bf16.msra.mxu0 %v2622
    %3556 = vmatprep.subr.bf16.mxu0 %v2631
    %3557 = vmatpush1.bf16.msra.mxu0 %v2630
    %3558 = vmatprep.subr.bf16.mxu0 %v2639
    %3559 = vmatpush1.bf16.msra.mxu0 %v2638
    %3560 = vmatprep.subr.bf16.mxu0 %v2647
    %3561 = vmatpush1.bf16.msra.mxu0 %v2646
    %3562 = vmatprep.subr.bf16.mxu0 %v2655
    %3563 = vmatpush1.bf16.msra.mxu0 %v2654
    %3564 = vmatprep.subr.bf16.mxu0 %v2663
    %3565 = vmatpush1.bf16.msra.mxu0 %v2662
    %3566 = vmatprep.subr.bf16.mxu0 %v2671
    %3567 = vmatpush1.bf16.msra.mxu0 %v2670
    %3568 = vmatprep.subr.bf16.mxu0 %v2679
    %3569 = vmatpush1.bf16.msra.mxu0 %v2678
    %3570 = vmatprep.subr.bf16.mxu0 %v2687
    %3571 = vmatpush1.bf16.msra.mxu0 %v2686
    %3572 = vmatprep.subr.bf16.mxu0 %v2695
    %3573 = vmatpush1.bf16.msra.mxu0 %v2694
    %3574 = vmatprep.subr.bf16.mxu0 %v2703
    %3575 = vmatpush1.bf16.msra.mxu0 %v2702
    %3576 = vmatprep.subr.bf16.mxu0 %v2711
    %3577 = vmatpush1.bf16.msra.mxu0 %v2710
    %3578 = vmatprep.subr.bf16.mxu0 %v2719
    %3579 = vmatpush1.bf16.msra.mxu0 %v2718
    %3580 = vmatprep.subr.bf16.mxu0 %v2727
    %3581 = vmatpush1.bf16.msra.mxu0 %v2726
    %3582 = vmatprep.mubr.bf16.mxu0 %v1561
    %3583 = vmatmul.mubr.bf16.gmra.mrb[0].mxu0 %v1560
    %v3584 = vpop.f32.mrb[0].mxu0
    %v3585 = vadd.f32 0.0, %v3584
    %v3586 = vpop.f32.mrb[0].mxu0
    %v3587 = vadd.f32 0.0, %v3586
    %v3588 = vpop.f32.mrb[0].mxu0
    %v3589 = vadd.f32 0.0, %v3588
    %v3590 = vpop.f32.mrb[0].mxu0
    %v3591 = vadd.f32 0.0, %v3590
    %3592 = vmatprep.mubr.bf16.mxu0 %v1565
    %3593 = vmatmul.mubr.bf16.gmra.mrb[0].mxu0 %v1564
    %v3594 = vpop.f32.mrb[0].mxu0
    %v3595 = vadd.f32 0.0, %v3594
    %v3596 = vpop.f32.mrb[0].mxu0
    %v3597 = vadd.f32 0.0, %v3596
    %v3598 = vpop.f32.mrb[0].mxu0
    %v3599 = vadd.f32 0.0, %v3598
    %v3600 = vpop.f32.mrb[0].mxu0
    %v3601 = vadd.f32 0.0, %v3600
    %3602 = vmatprep.mubr.bf16.mxu0 %v1569
    %3603 = vmatmul.mubr.bf16.gmra.mrb[0].mxu0 %v1568
    %v3604 = vpop.f32.mrb[0].mxu0
    %v3605 = vadd.f32 0.0, %v3604
    %v3606 = vpop.f32.mrb[0].mxu0
    %v3607 = vadd.f32 0.0, %v3606
    %v3608 = vpop.f32.mrb[0].mxu0
    %v3609 = vadd.f32 0.0, %v3608
    %v3610 = vpop.f32.mrb[0].mxu0
    %v3611 = vadd.f32 0.0, %v3610
    %3612 = vmatprep.mubr.bf16.mxu0 %v1573
    %3613 = vmatmul.mubr.bf16.gmra.mrb[0].mxu0 %v1572
    %v3614 = vpop.f32.mrb[0].mxu0
    %v3615 = vadd.f32 0.0, %v3614
    %v3616 = vpop.f32.mrb[0].mxu0
    %v3617 = vadd.f32 0.0, %v3616
    %v3618 = vpop.f32.mrb[0].mxu0
    %v3619 = vadd.f32 0.0, %v3618
    %v3620 = vpop.f32.mrb[0].mxu0
    %v3621 = vadd.f32 0.0, %v3620
    %3622 = vdwg.mxu0
    %3623 = vmatprep.subr.bf16.mxu0 %v2735
    %3624 = vmatpush1.bf16.msra.mxu0 %v2734
    %3625 = vmatprep.subr.bf16.mxu0 %v2743
    %3626 = vmatpush1.bf16.msra.mxu0 %v2742
    %3627 = vmatprep.subr.bf16.mxu0 %v2751
    %3628 = vmatpush1.bf16.msra.mxu0 %v2750
    %3629 = vmatprep.subr.bf16.mxu0 %v2759
    %3630 = vmatpush1.bf16.msra.mxu0 %v2758
    %3631 = vmatprep.subr.bf16.mxu0 %v2767
    %3632 = vmatpush1.bf16.msra.mxu0 %v2766
    %3633 = vmatprep.subr.bf16.mxu0 %v2775
    %3634 = vmatpush1.bf16.msra.mxu0 %v2774
    %3635 = vmatprep.subr.bf16.mxu0 %v2783
    %3636 = vmatpush1.bf16.msra.mxu0 %v2782
    %3637 = vmatprep.subr.bf16.mxu0 %v2791
    %3638 = vmatpush1.bf16.msra.mxu0 %v2790
    %3639 = vmatprep.subr.bf16.mxu0 %v2799
    %3640 = vmatpush1.bf16.msra.mxu0 %v2798
    %3641 = vmatprep.subr.bf16.mxu0 %v2807
    %3642 = vmatpush1.bf16.msra.mxu0 %v2806
    %3643 = vmatprep.subr.bf16.mxu0 %v2815
    %3644 = vmatpush1.bf16.msra.mxu0 %v2814
    %3645 = vmatprep.subr.bf16.mxu0 %v2823
    %3646 = vmatpush1.bf16.msra.mxu0 %v2822
    %3647 = vmatprep.subr.bf16.mxu0 %v2831
    %3648 = vmatpush1.bf16.msra.mxu0 %v2830
    %3649 = vmatprep.subr.bf16.mxu0 %v2839
    %3650 = vmatpush1.bf16.msra.mxu0 %v2838
    %3651 = vmatprep.subr.bf16.mxu0 %v2847
    %3652 = vmatpush1.bf16.msra.mxu0 %v2846
    %3653 = vmatprep.subr.bf16.mxu0 %v2855
    %3654 = vmatpush1.bf16.msra.mxu0 %v2854
    %3655 = vmatprep.mubr.bf16.mxu0 %v1563
    %3656 = vmatmul.mubr.bf16.gmra.mrb[0].mxu0 %v1562
    %v3657 = vpop.f32.mrb[0].mxu0
    %v3658 = vadd.f32 %v3585, %v3657
    %v3659 = vpop.f32.mrb[0].mxu0
    %v3660 = vadd.f32 %v3587, %v3659
    %v3661 = vpop.f32.mrb[0].mxu0
    %v3662 = vadd.f32 %v3589, %v3661
    %v3663 = vpop.f32.mrb[0].mxu0
    %v3664 = vadd.f32 %v3591, %v3663
    %3665 = vmatprep.mubr.bf16.mxu0 %v1567
    %3666 = vmatmul.mubr.bf16.gmra.mrb[0].mxu0 %v1566
    %v3667 = vpop.f32.mrb[0].mxu0
    %v3668 = vadd.f32 %v3595, %v3667
    %v3669 = vpop.f32.mrb[0].mxu0
    %v3670 = vadd.f32 %v3597, %v3669
    %v3671 = vpop.f32.mrb[0].mxu0
    %v3672 = vadd.f32 %v3599, %v3671
    %v3673 = vpop.f32.mrb[0].mxu0
    %v3674 = vadd.f32 %v3601, %v3673
    %3675 = vmatprep.mubr.bf16.mxu0 %v1571
    %3676 = vmatmul.mubr.bf16.gmra.mrb[0].mxu0 %v1570
    %v3677 = vpop.f32.mrb[0].mxu0
    %v3678 = vadd.f32 %v3605, %v3677
    %v3679 = vpop.f32.mrb[0].mxu0
    %v3680 = vadd.f32 %v3607, %v3679
    %v3681 = vpop.f32.mrb[0].mxu0
    %v3682 = vadd.f32 %v3609, %v3681
    %v3683 = vpop.f32.mrb[0].mxu0
    %v3684 = vadd.f32 %v3611, %v3683
    %3685 = vmatprep.mubr.bf16.mxu0 %v1575
    %3686 = vmatmul.mubr.bf16.gmra.mrb[0].mxu0 %v1574
    %v3687 = vpop.f32.mrb[0].mxu0
    %v3688 = vadd.f32 %v3615, %v3687
    %v3689 = vpop.f32.mrb[0].mxu0
    %v3690 = vadd.f32 %v3617, %v3689
    %v3691 = vpop.f32.mrb[0].mxu0
    %v3692 = vadd.f32 %v3619, %v3691
    %v3693 = vpop.f32.mrb[0].mxu0
    %v3694 = vadd.f32 %v3621, %v3693
    %3695 = vdwg.mxu0
    %v3696 = vld [vmem:[%s10] sm:$0xff]
    %v3697 = vld [vmem:[%s11] sm:$0xff]
    %v3698 = vadd.f32 %v3220, %v3224
    %v3699 = vadd.f32 %v3698, %v3230
    %v3700 = vadd.f32 %v3699, %v3234
    %v3701 = vadd.f32 %v3700, %v3240
    %v3702 = vadd.f32 %v3701, %v3244
    %v3703 = vadd.f32 %v3702, %v3250
    %v3704 = vadd.f32 %v3703, %v3254
    %v3705 = vrot.slane %v3704, 4
    %v3706 = vadd.f32 %v3704, %v3705
    %v3707 = vrot.slane %v3706, 2
    %v3708 = vadd.f32 %v3706, %v3707
    %v3709 = vrot.slane %v3708, 1
    %v3710 = vadd.f32 %v3708, %v3709
    %v3711 = vadd.f32 %v3222, %v3226
    %v3712 = vadd.f32 %v3711, %v3232
    %v3713 = vadd.f32 %v3712, %v3236
    %v3714 = vadd.f32 %v3713, %v3242
    %v3715 = vadd.f32 %v3714, %v3246
    %v3716 = vadd.f32 %v3715, %v3252
    %v3717 = vadd.f32 %v3716, %v3256
    %v3718 = vrot.slane %v3717, 4
    %v3719 = vadd.f32 %v3717, %v3718
    %v3720 = vrot.slane %v3719, 2
    %v3721 = vadd.f32 %v3719, %v3720
    %v3722 = vrot.slane %v3721, 1
    %v3723 = vadd.f32 %v3721, %v3722
    %v3724 = vadd.f32 %v3366, %v3370
    %v3725 = vadd.f32 %v3724, %v3376
    %v3726 = vadd.f32 %v3725, %v3380
    %v3727 = vadd.f32 %v3726, %v3386
    %v3728 = vadd.f32 %v3727, %v3390
    %v3729 = vadd.f32 %v3728, %v3396
    %v3730 = vadd.f32 %v3729, %v3400
    %v3731 = vrot.slane %v3730, 4
    %v3732 = vadd.f32 %v3730, %v3731
    %v3733 = vrot.slane %v3732, 2
    %v3734 = vadd.f32 %v3732, %v3733
    %v3735 = vrot.slane %v3734, 1
    %v3736 = vadd.f32 %v3734, %v3735
    %v3737 = vadd.f32 %v3368, %v3372
    %v3738 = vadd.f32 %v3737, %v3378
    %v3739 = vadd.f32 %v3738, %v3382
    %v3740 = vadd.f32 %v3739, %v3388
    %v3741 = vadd.f32 %v3740, %v3392
    %v3742 = vadd.f32 %v3741, %v3398
    %v3743 = vadd.f32 %v3742, %v3402
    %v3744 = vrot.slane %v3743, 4
    %v3745 = vadd.f32 %v3743, %v3744
    %v3746 = vrot.slane %v3745, 2
    %v3747 = vadd.f32 %v3745, %v3746
    %v3748 = vrot.slane %v3747, 1
    %v3749 = vadd.f32 %v3747, %v3748
    %v3750 = vadd.f32 %v3512, %v3516
    %v3751 = vadd.f32 %v3750, %v3522
    %v3752 = vadd.f32 %v3751, %v3526
    %v3753 = vadd.f32 %v3752, %v3532
    %v3754 = vadd.f32 %v3753, %v3536
    %v3755 = vadd.f32 %v3754, %v3542
    %v3756 = vadd.f32 %v3755, %v3546
    %v3757 = vrot.slane %v3756, 4
    %v3758 = vadd.f32 %v3756, %v3757
    %v3759 = vrot.slane %v3758, 2
    %v3760 = vadd.f32 %v3758, %v3759
    %v3761 = vrot.slane %v3760, 1
    %v3762 = vadd.f32 %v3760, %v3761
    %v3763 = vadd.f32 %v3514, %v3518
    %v3764 = vadd.f32 %v3763, %v3524
    %v3765 = vadd.f32 %v3764, %v3528
    %v3766 = vadd.f32 %v3765, %v3534
    %v3767 = vadd.f32 %v3766, %v3538
    %v3768 = vadd.f32 %v3767, %v3544
    %v3769 = vadd.f32 %v3768, %v3548
    %v3770 = vrot.slane %v3769, 4
    %v3771 = vadd.f32 %v3769, %v3770
    %v3772 = vrot.slane %v3771, 2
    %v3773 = vadd.f32 %v3771, %v3772
    %v3774 = vrot.slane %v3773, 1
    %v3775 = vadd.f32 %v3773, %v3774
    %v3776 = vadd.f32 %v3658, %v3662
    %v3777 = vadd.f32 %v3776, %v3668
    %v3778 = vadd.f32 %v3777, %v3672
    %v3779 = vadd.f32 %v3778, %v3678
    %v3780 = vadd.f32 %v3779, %v3682
    %v3781 = vadd.f32 %v3780, %v3688
    %v3782 = vadd.f32 %v3781, %v3692
    %v3783 = vrot.slane %v3782, 4
    %v3784 = vadd.f32 %v3782, %v3783
    %v3785 = vrot.slane %v3784, 2
    %v3786 = vadd.f32 %v3784, %v3785
    %v3787 = vrot.slane %v3786, 1
    %v3788 = vadd.f32 %v3786, %v3787
    %v3789 = vadd.f32 %v3660, %v3664
    %v3790 = vadd.f32 %v3789, %v3670
    %v3791 = vadd.f32 %v3790, %v3674
    %v3792 = vadd.f32 %v3791, %v3680
    %v3793 = vadd.f32 %v3792, %v3684
    %v3794 = vadd.f32 %v3793, %v3690
    %v3795 = vadd.f32 %v3794, %v3694
    %v3796 = vrot.slane %v3795, 4
    %v3797 = vadd.f32 %v3795, %v3796
    %v3798 = vrot.slane %v3797, 2
    %v3799 = vadd.f32 %v3797, %v3798
    %v3800 = vrot.slane %v3799, 1
    %v3801 = vadd.f32 %v3799, %v3800
    %v3802 = vmul.f32 %v3710, %v435
    %v3803 = vmul.f32 %v3723, %v435
    %v3804 = vmul.f32 %v3736, %v435
    %v3805 = vmul.f32 %v3749, %v435
    %v3806 = vmul.f32 %v3762, %v435
    %v3807 = vmul.f32 %v3775, %v435
    %v3808 = vmul.f32 %v3788, %v435
    %v3809 = vmul.f32 %v3801, %v435
    %v3810 = vsub.f32 %v3220, %v3802
    %v3811 = vsub.f32 %v3222, %v3803
    %v3812 = vsub.f32 %v3366, %v3804
    %v3813 = vsub.f32 %v3368, %v3805
    %v3814 = vsub.f32 %v3512, %v3806
    %v3815 = vsub.f32 %v3514, %v3807
    %v3816 = vsub.f32 %v3658, %v3808
    %v3817 = vsub.f32 %v3660, %v3809
    %v3818 = vsub.f32 %v3224, %v3802
    %v3819 = vsub.f32 %v3226, %v3803
    %v3820 = vsub.f32 %v3370, %v3804
    %v3821 = vsub.f32 %v3372, %v3805
    %v3822 = vsub.f32 %v3516, %v3806
    %v3823 = vsub.f32 %v3518, %v3807
    %v3824 = vsub.f32 %v3662, %v3808
    %v3825 = vsub.f32 %v3664, %v3809
    %v3826 = vsub.f32 %v3230, %v3802
    %v3827 = vsub.f32 %v3232, %v3803
    %v3828 = vsub.f32 %v3376, %v3804
    %v3829 = vsub.f32 %v3378, %v3805
    %v3830 = vsub.f32 %v3522, %v3806
    %v3831 = vsub.f32 %v3524, %v3807
    %v3832 = vsub.f32 %v3668, %v3808
    %v3833 = vsub.f32 %v3670, %v3809
    %v3834 = vsub.f32 %v3234, %v3802
    %v3835 = vsub.f32 %v3236, %v3803
    %v3836 = vsub.f32 %v3380, %v3804
    %v3837 = vsub.f32 %v3382, %v3805
    %v3838 = vsub.f32 %v3526, %v3806
    %v3839 = vsub.f32 %v3528, %v3807
    %v3840 = vsub.f32 %v3672, %v3808
    %v3841 = vsub.f32 %v3674, %v3809
    %v3842 = vsub.f32 %v3240, %v3802
    %v3843 = vsub.f32 %v3242, %v3803
    %v3844 = vsub.f32 %v3386, %v3804
    %v3845 = vsub.f32 %v3388, %v3805
    %v3846 = vsub.f32 %v3532, %v3806
    %v3847 = vsub.f32 %v3534, %v3807
    %v3848 = vsub.f32 %v3678, %v3808
    %v3849 = vsub.f32 %v3680, %v3809
    %v3850 = vsub.f32 %v3244, %v3802
    %v3851 = vsub.f32 %v3246, %v3803
    %v3852 = vsub.f32 %v3390, %v3804
    %v3853 = vsub.f32 %v3392, %v3805
    %v3854 = vsub.f32 %v3536, %v3806
    %v3855 = vsub.f32 %v3538, %v3807
    %v3856 = vsub.f32 %v3682, %v3808
    %v3857 = vsub.f32 %v3684, %v3809
    %v3858 = vsub.f32 %v3250, %v3802
    %v3859 = vsub.f32 %v3252, %v3803
    %v3860 = vsub.f32 %v3396, %v3804
    %v3861 = vsub.f32 %v3398, %v3805
    %v3862 = vsub.f32 %v3542, %v3806
    %v3863 = vsub.f32 %v3544, %v3807
    %v3864 = vsub.f32 %v3688, %v3808
    %v3865 = vsub.f32 %v3690, %v3809
    %v3866 = vsub.f32 %v3254, %v3802
    %v3867 = vsub.f32 %v3256, %v3803
    %v3868 = vsub.f32 %v3400, %v3804
    %v3869 = vsub.f32 %v3402, %v3805
    %v3870 = vsub.f32 %v3546, %v3806
    %v3871 = vsub.f32 %v3548, %v3807
    %v3872 = vsub.f32 %v3692, %v3808
    %v3873 = vsub.f32 %v3694, %v3809
    %v3874 = vmul.f32 %v3810, %v3810
    %v3875 = vmul.f32 %v3811, %v3811
    %v3876 = vmul.f32 %v3812, %v3812
    %v3877 = vmul.f32 %v3813, %v3813
    %v3878 = vmul.f32 %v3814, %v3814
    %v3879 = vmul.f32 %v3815, %v3815
    %v3880 = vmul.f32 %v3816, %v3816
    %v3881 = vmul.f32 %v3817, %v3817
    %v3882 = vmul.f32 %v3818, %v3818
    %v3883 = vmul.f32 %v3819, %v3819
    %v3884 = vmul.f32 %v3820, %v3820
    %v3885 = vmul.f32 %v3821, %v3821
    %v3886 = vmul.f32 %v3822, %v3822
    %v3887 = vmul.f32 %v3823, %v3823
    %v3888 = vmul.f32 %v3824, %v3824
    %v3889 = vmul.f32 %v3825, %v3825
    %v3890 = vmul.f32 %v3826, %v3826
    %v3891 = vmul.f32 %v3827, %v3827
    %v3892 = vmul.f32 %v3828, %v3828
    %v3893 = vmul.f32 %v3829, %v3829
    %v3894 = vmul.f32 %v3830, %v3830
    %v3895 = vmul.f32 %v3831, %v3831
    %v3896 = vmul.f32 %v3832, %v3832
    %v3897 = vmul.f32 %v3833, %v3833
    %v3898 = vmul.f32 %v3834, %v3834
    %v3899 = vmul.f32 %v3835, %v3835
    %v3900 = vmul.f32 %v3836, %v3836
    %v3901 = vmul.f32 %v3837, %v3837
    %v3902 = vmul.f32 %v3838, %v3838
    %v3903 = vmul.f32 %v3839, %v3839
    %v3904 = vmul.f32 %v3840, %v3840
    %v3905 = vmul.f32 %v3841, %v3841
    %v3906 = vmul.f32 %v3842, %v3842
    %v3907 = vmul.f32 %v3843, %v3843
    %v3908 = vmul.f32 %v3844, %v3844
    %v3909 = vmul.f32 %v3845, %v3845
    %v3910 = vmul.f32 %v3846, %v3846
    %v3911 = vmul.f32 %v3847, %v3847
    %v3912 = vmul.f32 %v3848, %v3848
    %v3913 = vmul.f32 %v3849, %v3849
    %v3914 = vmul.f32 %v3850, %v3850
    %v3915 = vmul.f32 %v3851, %v3851
    %v3916 = vmul.f32 %v3852, %v3852
    %v3917 = vmul.f32 %v3853, %v3853
    %v3918 = vmul.f32 %v3854, %v3854
    %v3919 = vmul.f32 %v3855, %v3855
    %v3920 = vmul.f32 %v3856, %v3856
    %v3921 = vmul.f32 %v3857, %v3857
    %v3922 = vmul.f32 %v3858, %v3858
    %v3923 = vmul.f32 %v3859, %v3859
    %v3924 = vmul.f32 %v3860, %v3860
    %v3925 = vmul.f32 %v3861, %v3861
    %v3926 = vmul.f32 %v3862, %v3862
    %v3927 = vmul.f32 %v3863, %v3863
    %v3928 = vmul.f32 %v3864, %v3864
    %v3929 = vmul.f32 %v3865, %v3865
    %v3930 = vmul.f32 %v3866, %v3866
    %v3931 = vmul.f32 %v3867, %v3867
    %v3932 = vmul.f32 %v3868, %v3868
    %v3933 = vmul.f32 %v3869, %v3869
    %v3934 = vmul.f32 %v3870, %v3870
    %v3935 = vmul.f32 %v3871, %v3871
    %v3936 = vmul.f32 %v3872, %v3872
    %v3937 = vmul.f32 %v3873, %v3873
    %v3938 = vadd.f32 %v3874, %v3882
    %v3939 = vadd.f32 %v3938, %v3890
    %v3940 = vadd.f32 %v3939, %v3898
    %v3941 = vadd.f32 %v3940, %v3906
    %v3942 = vadd.f32 %v3941, %v3914
    %v3943 = vadd.f32 %v3942, %v3922
    %v3944 = vadd.f32 %v3943, %v3930
    %v3945 = vrot.slane %v3944, 4
    %v3946 = vadd.f32 %v3944, %v3945
    %v3947 = vrot.slane %v3946, 2
    %v3948 = vadd.f32 %v3946, %v3947
    %v3949 = vrot.slane %v3948, 1
    %v3950 = vadd.f32 %v3948, %v3949
    %v3951 = vadd.f32 %v3875, %v3883
    %v3952 = vadd.f32 %v3951, %v3891
    %v3953 = vadd.f32 %v3952, %v3899
    %v3954 = vadd.f32 %v3953, %v3907
    %v3955 = vadd.f32 %v3954, %v3915
    %v3956 = vadd.f32 %v3955, %v3923
    %v3957 = vadd.f32 %v3956, %v3931
    %v3958 = vrot.slane %v3957, 4
    %v3959 = vadd.f32 %v3957, %v3958
    %v3960 = vrot.slane %v3959, 2
    %v3961 = vadd.f32 %v3959, %v3960
    %v3962 = vrot.slane %v3961, 1
    %v3963 = vadd.f32 %v3961, %v3962
    %v3964 = vadd.f32 %v3876, %v3884
    %v3965 = vadd.f32 %v3964, %v3892
    %v3966 = vadd.f32 %v3965, %v3900
    %v3967 = vadd.f32 %v3966, %v3908
    %v3968 = vadd.f32 %v3967, %v3916
    %v3969 = vadd.f32 %v3968, %v3924
    %v3970 = vadd.f32 %v3969, %v3932
    %v3971 = vrot.slane %v3970, 4
    %v3972 = vadd.f32 %v3970, %v3971
    %v3973 = vrot.slane %v3972, 2
    %v3974 = vadd.f32 %v3972, %v3973
    %v3975 = vrot.slane %v3974, 1
    %v3976 = vadd.f32 %v3974, %v3975
    %v3977 = vadd.f32 %v3877, %v3885
    %v3978 = vadd.f32 %v3977, %v3893
    %v3979 = vadd.f32 %v3978, %v3901
    %v3980 = vadd.f32 %v3979, %v3909
    %v3981 = vadd.f32 %v3980, %v3917
    %v3982 = vadd.f32 %v3981, %v3925
    %v3983 = vadd.f32 %v3982, %v3933
    %v3984 = vrot.slane %v3983, 4
    %v3985 = vadd.f32 %v3983, %v3984
    %v3986 = vrot.slane %v3985, 2
    %v3987 = vadd.f32 %v3985, %v3986
    %v3988 = vrot.slane %v3987, 1
    %v3989 = vadd.f32 %v3987, %v3988
    %v3990 = vadd.f32 %v3878, %v3886
    %v3991 = vadd.f32 %v3990, %v3894
    %v3992 = vadd.f32 %v3991, %v3902
    %v3993 = vadd.f32 %v3992, %v3910
    %v3994 = vadd.f32 %v3993, %v3918
    %v3995 = vadd.f32 %v3994, %v3926
    %v3996 = vadd.f32 %v3995, %v3934
    %v3997 = vrot.slane %v3996, 4
    %v3998 = vadd.f32 %v3996, %v3997
    %v3999 = vrot.slane %v3998, 2
    %v4000 = vadd.f32 %v3998, %v3999
    %v4001 = vrot.slane %v4000, 1
    %v4002 = vadd.f32 %v4000, %v4001
    %v4003 = vadd.f32 %v3879, %v3887
    %v4004 = vadd.f32 %v4003, %v3895
    %v4005 = vadd.f32 %v4004, %v3903
    %v4006 = vadd.f32 %v4005, %v3911
    %v4007 = vadd.f32 %v4006, %v3919
    %v4008 = vadd.f32 %v4007, %v3927
    %v4009 = vadd.f32 %v4008, %v3935
    %v4010 = vrot.slane %v4009, 4
    %v4011 = vadd.f32 %v4009, %v4010
    %v4012 = vrot.slane %v4011, 2
    %v4013 = vadd.f32 %v4011, %v4012
    %v4014 = vrot.slane %v4013, 1
    %v4015 = vadd.f32 %v4013, %v4014
    %v4016 = vadd.f32 %v3880, %v3888
    %v4017 = vadd.f32 %v4016, %v3896
    %v4018 = vadd.f32 %v4017, %v3904
    %v4019 = vadd.f32 %v4018, %v3912
    %v4020 = vadd.f32 %v4019, %v3920
    %v4021 = vadd.f32 %v4020, %v3928
    %v4022 = vadd.f32 %v4021, %v3936
    %v4023 = vrot.slane %v4022, 4
    %v4024 = vadd.f32 %v4022, %v4023
    %v4025 = vrot.slane %v4024, 2
    %v4026 = vadd.f32 %v4024, %v4025
    %v4027 = vrot.slane %v4026, 1
    %v4028 = vadd.f32 %v4026, %v4027
    %v4029 = vadd.f32 %v3881, %v3889
    %v4030 = vadd.f32 %v4029, %v3897
    %v4031 = vadd.f32 %v4030, %v3905
    %v4032 = vadd.f32 %v4031, %v3913
    %v4033 = vadd.f32 %v4032, %v3921
    %v4034 = vadd.f32 %v4033, %v3929
    %v4035 = vadd.f32 %v4034, %v3937
    %v4036 = vrot.slane %v4035, 4
    %v4037 = vadd.f32 %v4035, %v4036
    %v4038 = vrot.slane %v4037, 2
    %v4039 = vadd.f32 %v4037, %v4038
    %v4040 = vrot.slane %v4039, 1
    %v4041 = vadd.f32 %v4039, %v4040
    %v4042 = vmul.f32 %v3950, %v435
    %v4043 = vmul.f32 %v3963, %v435
    %v4044 = vmul.f32 %v3976, %v435
    %v4045 = vmul.f32 %v3989, %v435
    %v4046 = vmul.f32 %v4002, %v435
    %v4047 = vmul.f32 %v4015, %v435
    %v4048 = vmul.f32 %v4028, %v435
    %v4049 = vmul.f32 %v4041, %v435
    %v4050 = vadd.f32 %v4042, 1e-05
    %v4051 = vadd.f32 %v4043, 1e-05
    %v4052 = vadd.f32 %v4044, 1e-05
    %v4053 = vadd.f32 %v4045, 1e-05
    %v4054 = vadd.f32 %v4046, 1e-05
    %v4055 = vadd.f32 %v4047, 1e-05
    %v4056 = vadd.f32 %v4048, 1e-05
    %v4057 = vadd.f32 %v4049, 1e-05
    %v4058 = vrsqrt.pop %v4050
    %v4059 = vrsqrt.pop %v4051
    %v4060 = vrsqrt.pop %v4052
    %v4061 = vrsqrt.pop %v4053
    %v4062 = vrsqrt.pop %v4054
    %v4063 = vrsqrt.pop %v4055
    %v4064 = vrsqrt.pop %v4056
    %v4065 = vrsqrt.pop %v4057
    %v4067 = vlaneseq
    %v4068 = vshrl.u32 %v4067, 7
    %v4069 = vsub.s32 0, %v4068
    %v4070 = vrot.slane %v3696, %v4069
    %v4071 = vlaneseq
    %v4072 = vshrl.u32 %v4071, 7
    %v4073 = vsub.s32 1, %v4072
    %v4074 = vrot.slane %v3696, %v4073
    %v4075 = vlaneseq
    %v4076 = vshrl.u32 %v4075, 7
    %v4077 = vsub.s32 2, %v4076
    %v4078 = vrot.slane %v3696, %v4077
    %v4079 = vlaneseq
    %v4080 = vshrl.u32 %v4079, 7
    %v4081 = vsub.s32 3, %v4080
    %v4082 = vrot.slane %v3696, %v4081
    %v4083 = vlaneseq
    %v4084 = vshrl.u32 %v4083, 7
    %v4085 = vsub.s32 4, %v4084
    %v4086 = vrot.slane %v3696, %v4085
    %v4087 = vlaneseq
    %v4088 = vshrl.u32 %v4087, 7
    %v4089 = vsub.s32 5, %v4088
    %v4090 = vrot.slane %v3696, %v4089
    %v4091 = vlaneseq
    %v4092 = vshrl.u32 %v4091, 7
    %v4093 = vsub.s32 6, %v4092
    %v4094 = vrot.slane %v3696, %v4093
    %v4095 = vlaneseq
    %v4096 = vshrl.u32 %v4095, 7
    %v4097 = vsub.s32 7, %v4096
    %v4098 = vrot.slane %v3696, %v4097
    %v4107 = vmul.f32 %v4058, %v4070
    %v4108 = vmul.f32 %v4059, %v4074
    %v4109 = vmul.f32 %v4060, %v4078
    %v4110 = vmul.f32 %v4061, %v4082
    %v4111 = vmul.f32 %v4062, %v4086
    %v4112 = vmul.f32 %v4063, %v4090
    %v4113 = vmul.f32 %v4064, %v4094
    %v4114 = vmul.f32 %v4065, %v4098
    %v4115 = vlaneseq
    %v4116 = vshrl.u32 %v4115, 7
    %v4117 = vsub.s32 0, %v4116
    %v4118 = vrot.slane %v4107, %v4117
    %v4119 = vlaneseq
    %v4120 = vshrl.u32 %v4119, 7
    %v4121 = vsub.s32 0, %v4120
    %v4122 = vrot.slane %v4108, %v4121
    %v4123 = vlaneseq
    %v4124 = vshrl.u32 %v4123, 7
    %v4125 = vsub.s32 0, %v4124
    %v4126 = vrot.slane %v4109, %v4125
    %v4127 = vlaneseq
    %v4128 = vshrl.u32 %v4127, 7
    %v4129 = vsub.s32 0, %v4128
    %v4130 = vrot.slane %v4110, %v4129
    %v4131 = vlaneseq
    %v4132 = vshrl.u32 %v4131, 7
    %v4133 = vsub.s32 0, %v4132
    %v4134 = vrot.slane %v4111, %v4133
    %v4135 = vlaneseq
    %v4136 = vshrl.u32 %v4135, 7
    %v4137 = vsub.s32 0, %v4136
    %v4138 = vrot.slane %v4112, %v4137
    %v4139 = vlaneseq
    %v4140 = vshrl.u32 %v4139, 7
    %v4141 = vsub.s32 0, %v4140
    %v4142 = vrot.slane %v4113, %v4141
    %v4143 = vlaneseq
    %v4144 = vshrl.u32 %v4143, 7
    %v4145 = vsub.s32 0, %v4144
    %v4146 = vrot.slane %v4114, %v4145
    %v4147 = vmul.f32 %v3810, %v4118
    %v4148 = vmul.f32 %v3811, %v4122
    %v4149 = vmul.f32 %v3812, %v4126
    %v4150 = vmul.f32 %v3813, %v4130
    %v4151 = vmul.f32 %v3814, %v4134
    %v4152 = vmul.f32 %v3815, %v4138
    %v4153 = vmul.f32 %v3816, %v4142
    %v4154 = vmul.f32 %v3817, %v4146
    %v4155 = vmul.f32 %v3818, %v4118
    %v4156 = vmul.f32 %v3819, %v4122
    %v4157 = vmul.f32 %v3820, %v4126
    %v4158 = vmul.f32 %v3821, %v4130
    %v4159 = vmul.f32 %v3822, %v4134
    %v4160 = vmul.f32 %v3823, %v4138
    %v4161 = vmul.f32 %v3824, %v4142
    %v4162 = vmul.f32 %v3825, %v4146
    %v4163 = vmul.f32 %v3826, %v4118
    %v4164 = vmul.f32 %v3827, %v4122
    %v4165 = vmul.f32 %v3828, %v4126
    %v4166 = vmul.f32 %v3829, %v4130
    %v4167 = vmul.f32 %v3830, %v4134
    %v4168 = vmul.f32 %v3831, %v4138
    %v4169 = vmul.f32 %v3832, %v4142
    %v4170 = vmul.f32 %v3833, %v4146
    %v4171 = vmul.f32 %v3834, %v4118
    %v4172 = vmul.f32 %v3835, %v4122
    %v4173 = vmul.f32 %v3836, %v4126
    %v4174 = vmul.f32 %v3837, %v4130
    %v4175 = vmul.f32 %v3838, %v4134
    %v4176 = vmul.f32 %v3839, %v4138
    %v4177 = vmul.f32 %v3840, %v4142
    %v4178 = vmul.f32 %v3841, %v4146
    %v4179 = vmul.f32 %v3842, %v4118
    %v4180 = vmul.f32 %v3843, %v4122
    %v4181 = vmul.f32 %v3844, %v4126
    %v4182 = vmul.f32 %v3845, %v4130
    %v4183 = vmul.f32 %v3846, %v4134
    %v4184 = vmul.f32 %v3847, %v4138
    %v4185 = vmul.f32 %v3848, %v4142
    %v4186 = vmul.f32 %v3849, %v4146
    %v4187 = vmul.f32 %v3850, %v4118
    %v4188 = vmul.f32 %v3851, %v4122
    %v4189 = vmul.f32 %v3852, %v4126
    %v4190 = vmul.f32 %v3853, %v4130
    %v4191 = vmul.f32 %v3854, %v4134
    %v4192 = vmul.f32 %v3855, %v4138
    %v4193 = vmul.f32 %v3856, %v4142
    %v4194 = vmul.f32 %v3857, %v4146
    %v4195 = vmul.f32 %v3858, %v4118
    %v4196 = vmul.f32 %v3859, %v4122
    %v4197 = vmul.f32 %v3860, %v4126
    %v4198 = vmul.f32 %v3861, %v4130
    %v4199 = vmul.f32 %v3862, %v4134
    %v4200 = vmul.f32 %v3863, %v4138
    %v4201 = vmul.f32 %v3864, %v4142
    %v4202 = vmul.f32 %v3865, %v4146
    %v4203 = vmul.f32 %v3866, %v4118
    %v4204 = vmul.f32 %v3867, %v4122
    %v4205 = vmul.f32 %v3868, %v4126
    %v4206 = vmul.f32 %v3869, %v4130
    %v4207 = vmul.f32 %v3870, %v4134
    %v4208 = vmul.f32 %v3871, %v4138
    %v4209 = vmul.f32 %v3872, %v4142
    %v4210 = vmul.f32 %v3873, %v4146
    %v4212 = vlaneseq
    %v4213 = vshrl.u32 %v4212, 7
    %v4214 = vsub.s32 0, %v4213
    %v4215 = vrot.slane %v3697, %v4214
    %v4216 = vlaneseq
    %v4217 = vshrl.u32 %v4216, 7
    %v4218 = vsub.s32 1, %v4217
    %v4219 = vrot.slane %v3697, %v4218
    %v4220 = vlaneseq
    %v4221 = vshrl.u32 %v4220, 7
    %v4222 = vsub.s32 2, %v4221
    %v4223 = vrot.slane %v3697, %v4222
    %v4224 = vlaneseq
    %v4225 = vshrl.u32 %v4224, 7
    %v4226 = vsub.s32 3, %v4225
    %v4227 = vrot.slane %v3697, %v4226
    %v4228 = vlaneseq
    %v4229 = vshrl.u32 %v4228, 7
    %v4230 = vsub.s32 4, %v4229
    %v4231 = vrot.slane %v3697, %v4230
    %v4232 = vlaneseq
    %v4233 = vshrl.u32 %v4232, 7
    %v4234 = vsub.s32 5, %v4233
    %v4235 = vrot.slane %v3697, %v4234
    %v4236 = vlaneseq
    %v4237 = vshrl.u32 %v4236, 7
    %v4238 = vsub.s32 6, %v4237
    %v4239 = vrot.slane %v3697, %v4238
    %v4240 = vlaneseq
    %v4241 = vshrl.u32 %v4240, 7
    %v4242 = vsub.s32 7, %v4241
    %v4243 = vrot.slane %v3697, %v4242
    %v4252 = vadd.f32 %v4147, %v4215
    %v4253 = vadd.f32 %v4148, %v4219
    %v4254 = vadd.f32 %v4149, %v4223
    %v4255 = vadd.f32 %v4150, %v4227
    %v4256 = vadd.f32 %v4151, %v4231
    %v4257 = vadd.f32 %v4152, %v4235
    %v4258 = vadd.f32 %v4153, %v4239
    %v4259 = vadd.f32 %v4154, %v4243
    %v4260 = vadd.f32 %v4155, %v4215
    %v4261 = vadd.f32 %v4156, %v4219
    %v4262 = vadd.f32 %v4157, %v4223
    %v4263 = vadd.f32 %v4158, %v4227
    %v4264 = vadd.f32 %v4159, %v4231
    %v4265 = vadd.f32 %v4160, %v4235
    %v4266 = vadd.f32 %v4161, %v4239
    %v4267 = vadd.f32 %v4162, %v4243
    %v4268 = vadd.f32 %v4163, %v4215
    %v4269 = vadd.f32 %v4164, %v4219
    %v4270 = vadd.f32 %v4165, %v4223
    %v4271 = vadd.f32 %v4166, %v4227
    %v4272 = vadd.f32 %v4167, %v4231
    %v4273 = vadd.f32 %v4168, %v4235
    %v4274 = vadd.f32 %v4169, %v4239
    %v4275 = vadd.f32 %v4170, %v4243
    %v4276 = vadd.f32 %v4171, %v4215
    %v4277 = vadd.f32 %v4172, %v4219
    %v4278 = vadd.f32 %v4173, %v4223
    %v4279 = vadd.f32 %v4174, %v4227
    %v4280 = vadd.f32 %v4175, %v4231
    %v4281 = vadd.f32 %v4176, %v4235
    %v4282 = vadd.f32 %v4177, %v4239
    %v4283 = vadd.f32 %v4178, %v4243
    %v4284 = vadd.f32 %v4179, %v4215
    %v4285 = vadd.f32 %v4180, %v4219
    %v4286 = vadd.f32 %v4181, %v4223
    %v4287 = vadd.f32 %v4182, %v4227
    %v4288 = vadd.f32 %v4183, %v4231
    %v4289 = vadd.f32 %v4184, %v4235
    %v4290 = vadd.f32 %v4185, %v4239
    %v4291 = vadd.f32 %v4186, %v4243
    %v4292 = vadd.f32 %v4187, %v4215
    %v4293 = vadd.f32 %v4188, %v4219
    %v4294 = vadd.f32 %v4189, %v4223
    %v4295 = vadd.f32 %v4190, %v4227
    %v4296 = vadd.f32 %v4191, %v4231
    %v4297 = vadd.f32 %v4192, %v4235
    %v4298 = vadd.f32 %v4193, %v4239
    %v4299 = vadd.f32 %v4194, %v4243
    %v4300 = vadd.f32 %v4195, %v4215
    %v4301 = vadd.f32 %v4196, %v4219
    %v4302 = vadd.f32 %v4197, %v4223
    %v4303 = vadd.f32 %v4198, %v4227
    %v4304 = vadd.f32 %v4199, %v4231
    %v4305 = vadd.f32 %v4200, %v4235
    %v4306 = vadd.f32 %v4201, %v4239
    %v4307 = vadd.f32 %v4202, %v4243
    %v4308 = vadd.f32 %v4203, %v4215
    %v4309 = vadd.f32 %v4204, %v4219
    %v4310 = vadd.f32 %v4205, %v4223
    %v4311 = vadd.f32 %v4206, %v4227
    %v4312 = vadd.f32 %v4207, %v4231
    %v4313 = vadd.f32 %v4208, %v4235
    %v4314 = vadd.f32 %v4209, %v4239
    %v4315 = vadd.f32 %v4210, %v4243
    %vm4316 = vcmp.gt.f32.partialorder %v4252, 0.0
    %vm4317 = vcmp.gt.f32.partialorder %v4253, 0.0
    %vm4318 = vcmp.gt.f32.partialorder %v4254, 0.0
    %vm4319 = vcmp.gt.f32.partialorder %v4255, 0.0
    %vm4320 = vcmp.gt.f32.partialorder %v4256, 0.0
    %vm4321 = vcmp.gt.f32.partialorder %v4257, 0.0
    %vm4322 = vcmp.gt.f32.partialorder %v4258, 0.0
    %vm4323 = vcmp.gt.f32.partialorder %v4259, 0.0
    %vm4324 = vcmp.gt.f32.partialorder %v4260, 0.0
    %vm4325 = vcmp.gt.f32.partialorder %v4261, 0.0
    %vm4326 = vcmp.gt.f32.partialorder %v4262, 0.0
    %vm4327 = vcmp.gt.f32.partialorder %v4263, 0.0
    %vm4328 = vcmp.gt.f32.partialorder %v4264, 0.0
    %vm4329 = vcmp.gt.f32.partialorder %v4265, 0.0
    %vm4330 = vcmp.gt.f32.partialorder %v4266, 0.0
    %vm4331 = vcmp.gt.f32.partialorder %v4267, 0.0
    %vm4332 = vcmp.gt.f32.partialorder %v4268, 0.0
    %vm4333 = vcmp.gt.f32.partialorder %v4269, 0.0
    %vm4334 = vcmp.gt.f32.partialorder %v4270, 0.0
    %vm4335 = vcmp.gt.f32.partialorder %v4271, 0.0
    %vm4336 = vcmp.gt.f32.partialorder %v4272, 0.0
    %vm4337 = vcmp.gt.f32.partialorder %v4273, 0.0
    %vm4338 = vcmp.gt.f32.partialorder %v4274, 0.0
    %vm4339 = vcmp.gt.f32.partialorder %v4275, 0.0
    %vm4340 = vcmp.gt.f32.partialorder %v4276, 0.0
    %vm4341 = vcmp.gt.f32.partialorder %v4277, 0.0
    %vm4342 = vcmp.gt.f32.partialorder %v4278, 0.0
    %vm4343 = vcmp.gt.f32.partialorder %v4279, 0.0
    %vm4344 = vcmp.gt.f32.partialorder %v4280, 0.0
    %vm4345 = vcmp.gt.f32.partialorder %v4281, 0.0
    %vm4346 = vcmp.gt.f32.partialorder %v4282, 0.0
    %vm4347 = vcmp.gt.f32.partialorder %v4283, 0.0
    %vm4348 = vcmp.gt.f32.partialorder %v4284, 0.0
    %vm4349 = vcmp.gt.f32.partialorder %v4285, 0.0
    %vm4350 = vcmp.gt.f32.partialorder %v4286, 0.0
    %vm4351 = vcmp.gt.f32.partialorder %v4287, 0.0
    %vm4352 = vcmp.gt.f32.partialorder %v4288, 0.0
    %vm4353 = vcmp.gt.f32.partialorder %v4289, 0.0
    %vm4354 = vcmp.gt.f32.partialorder %v4290, 0.0
    %vm4355 = vcmp.gt.f32.partialorder %v4291, 0.0
    %vm4356 = vcmp.gt.f32.partialorder %v4292, 0.0
    %vm4357 = vcmp.gt.f32.partialorder %v4293, 0.0
    %vm4358 = vcmp.gt.f32.partialorder %v4294, 0.0
    %vm4359 = vcmp.gt.f32.partialorder %v4295, 0.0
    %vm4360 = vcmp.gt.f32.partialorder %v4296, 0.0
    %vm4361 = vcmp.gt.f32.partialorder %v4297, 0.0
    %vm4362 = vcmp.gt.f32.partialorder %v4298, 0.0
    %vm4363 = vcmp.gt.f32.partialorder %v4299, 0.0
    %vm4364 = vcmp.gt.f32.partialorder %v4300, 0.0
    %vm4365 = vcmp.gt.f32.partialorder %v4301, 0.0
    %vm4366 = vcmp.gt.f32.partialorder %v4302, 0.0
    %vm4367 = vcmp.gt.f32.partialorder %v4303, 0.0
    %vm4368 = vcmp.gt.f32.partialorder %v4304, 0.0
    %vm4369 = vcmp.gt.f32.partialorder %v4305, 0.0
    %vm4370 = vcmp.gt.f32.partialorder %v4306, 0.0
    %vm4371 = vcmp.gt.f32.partialorder %v4307, 0.0
    %vm4372 = vcmp.gt.f32.partialorder %v4308, 0.0
    %vm4373 = vcmp.gt.f32.partialorder %v4309, 0.0
    %vm4374 = vcmp.gt.f32.partialorder %v4310, 0.0
    %vm4375 = vcmp.gt.f32.partialorder %v4311, 0.0
    %vm4376 = vcmp.gt.f32.partialorder %v4312, 0.0
    %vm4377 = vcmp.gt.f32.partialorder %v4313, 0.0
    %vm4378 = vcmp.gt.f32.partialorder %v4314, 0.0
    %vm4379 = vcmp.gt.f32.partialorder %v4315, 0.0
    %v4380 = vmul.f32 %v4252, 0.2
    %v4381 = vmul.f32 %v4253, 0.2
    %v4382 = vmul.f32 %v4254, 0.2
    %v4383 = vmul.f32 %v4255, 0.2
    %v4384 = vmul.f32 %v4256, 0.2
    %v4385 = vmul.f32 %v4257, 0.2
    %v4386 = vmul.f32 %v4258, 0.2
    %v4387 = vmul.f32 %v4259, 0.2
    %v4388 = vmul.f32 %v4260, 0.2
    %v4389 = vmul.f32 %v4261, 0.2
    %v4390 = vmul.f32 %v4262, 0.2
    %v4391 = vmul.f32 %v4263, 0.2
    %v4392 = vmul.f32 %v4264, 0.2
    %v4393 = vmul.f32 %v4265, 0.2
    %v4394 = vmul.f32 %v4266, 0.2
    %v4395 = vmul.f32 %v4267, 0.2
    %v4396 = vmul.f32 %v4268, 0.2
    %v4397 = vmul.f32 %v4269, 0.2
    %v4398 = vmul.f32 %v4270, 0.2
    %v4399 = vmul.f32 %v4271, 0.2
    %v4400 = vmul.f32 %v4272, 0.2
    %v4401 = vmul.f32 %v4273, 0.2
    %v4402 = vmul.f32 %v4274, 0.2
    %v4403 = vmul.f32 %v4275, 0.2
    %v4404 = vmul.f32 %v4276, 0.2
    %v4405 = vmul.f32 %v4277, 0.2
    %v4406 = vmul.f32 %v4278, 0.2
    %v4407 = vmul.f32 %v4279, 0.2
    %v4408 = vmul.f32 %v4280, 0.2
    %v4409 = vmul.f32 %v4281, 0.2
    %v4410 = vmul.f32 %v4282, 0.2
    %v4411 = vmul.f32 %v4283, 0.2
    %v4412 = vmul.f32 %v4284, 0.2
    %v4413 = vmul.f32 %v4285, 0.2
    %v4414 = vmul.f32 %v4286, 0.2
    %v4415 = vmul.f32 %v4287, 0.2
    %v4416 = vmul.f32 %v4288, 0.2
    %v4417 = vmul.f32 %v4289, 0.2
    %v4418 = vmul.f32 %v4290, 0.2
    %v4419 = vmul.f32 %v4291, 0.2
    %v4420 = vmul.f32 %v4292, 0.2
    %v4421 = vmul.f32 %v4293, 0.2
    %v4422 = vmul.f32 %v4294, 0.2
    %v4423 = vmul.f32 %v4295, 0.2
    %v4424 = vmul.f32 %v4296, 0.2
    %v4425 = vmul.f32 %v4297, 0.2
    %v4426 = vmul.f32 %v4298, 0.2
    %v4427 = vmul.f32 %v4299, 0.2
    %v4428 = vmul.f32 %v4300, 0.2
    %v4429 = vmul.f32 %v4301, 0.2
    %v4430 = vmul.f32 %v4302, 0.2
    %v4431 = vmul.f32 %v4303, 0.2
    %v4432 = vmul.f32 %v4304, 0.2
    %v4433 = vmul.f32 %v4305, 0.2
    %v4434 = vmul.f32 %v4306, 0.2
    %v4435 = vmul.f32 %v4307, 0.2
    %v4436 = vmul.f32 %v4308, 0.2
    %v4437 = vmul.f32 %v4309, 0.2
    %v4438 = vmul.f32 %v4310, 0.2
    %v4439 = vmul.f32 %v4311, 0.2
    %v4440 = vmul.f32 %v4312, 0.2
    %v4441 = vmul.f32 %v4313, 0.2
    %v4442 = vmul.f32 %v4314, 0.2
    %v4443 = vmul.f32 %v4315, 0.2
    %v4444 = vsel %vm4316, %v4252, %v4380
    %v4445 = vsel %vm4317, %v4253, %v4381
    %v4446 = vsel %vm4318, %v4254, %v4382
    %v4447 = vsel %vm4319, %v4255, %v4383
    %v4448 = vsel %vm4320, %v4256, %v4384
    %v4449 = vsel %vm4321, %v4257, %v4385
    %v4450 = vsel %vm4322, %v4258, %v4386
    %v4451 = vsel %vm4323, %v4259, %v4387
    %v4452 = vsel %vm4324, %v4260, %v4388
    %v4453 = vsel %vm4325, %v4261, %v4389
    %v4454 = vsel %vm4326, %v4262, %v4390
    %v4455 = vsel %vm4327, %v4263, %v4391
    %v4456 = vsel %vm4328, %v4264, %v4392
    %v4457 = vsel %vm4329, %v4265, %v4393
    %v4458 = vsel %vm4330, %v4266, %v4394
    %v4459 = vsel %vm4331, %v4267, %v4395
    %v4460 = vsel %vm4332, %v4268, %v4396
    %v4461 = vsel %vm4333, %v4269, %v4397
    %v4462 = vsel %vm4334, %v4270, %v4398
    %v4463 = vsel %vm4335, %v4271, %v4399
    %v4464 = vsel %vm4336, %v4272, %v4400
    %v4465 = vsel %vm4337, %v4273, %v4401
    %v4466 = vsel %vm4338, %v4274, %v4402
    %v4467 = vsel %vm4339, %v4275, %v4403
    %v4468 = vsel %vm4340, %v4276, %v4404
    %v4469 = vsel %vm4341, %v4277, %v4405
    %v4470 = vsel %vm4342, %v4278, %v4406
    %v4471 = vsel %vm4343, %v4279, %v4407
    %v4472 = vsel %vm4344, %v4280, %v4408
    %v4473 = vsel %vm4345, %v4281, %v4409
    %v4474 = vsel %vm4346, %v4282, %v4410
    %v4475 = vsel %vm4347, %v4283, %v4411
    %v4476 = vsel %vm4348, %v4284, %v4412
    %v4477 = vsel %vm4349, %v4285, %v4413
    %v4478 = vsel %vm4350, %v4286, %v4414
    %v4479 = vsel %vm4351, %v4287, %v4415
    %v4480 = vsel %vm4352, %v4288, %v4416
    %v4481 = vsel %vm4353, %v4289, %v4417
    %v4482 = vsel %vm4354, %v4290, %v4418
    %v4483 = vsel %vm4355, %v4291, %v4419
    %v4484 = vsel %vm4356, %v4292, %v4420
    %v4485 = vsel %vm4357, %v4293, %v4421
    %v4486 = vsel %vm4358, %v4294, %v4422
    %v4487 = vsel %vm4359, %v4295, %v4423
    %v4488 = vsel %vm4360, %v4296, %v4424
    %v4489 = vsel %vm4361, %v4297, %v4425
    %v4490 = vsel %vm4362, %v4298, %v4426
    %v4491 = vsel %vm4363, %v4299, %v4427
    %v4492 = vsel %vm4364, %v4300, %v4428
    %v4493 = vsel %vm4365, %v4301, %v4429
    %v4494 = vsel %vm4366, %v4302, %v4430
    %v4495 = vsel %vm4367, %v4303, %v4431
    %v4496 = vsel %vm4368, %v4304, %v4432
    %v4497 = vsel %vm4369, %v4305, %v4433
    %v4498 = vsel %vm4370, %v4306, %v4434
    %v4499 = vsel %vm4371, %v4307, %v4435
    %v4500 = vsel %vm4372, %v4308, %v4436
    %v4501 = vsel %vm4373, %v4309, %v4437
    %v4502 = vsel %vm4374, %v4310, %v4438
    %v4503 = vsel %vm4375, %v4311, %v4439
    %v4504 = vsel %vm4376, %v4312, %v4440
    %v4505 = vsel %vm4377, %v4313, %v4441
    %v4506 = vsel %vm4378, %v4314, %v4442
    %v4507 = vsel %vm4379, %v4315, %v4443
    %v4508 = vpack.c.bf16 %v4452, %v4444
    %v4509 = vpack.c.bf16 %v4453, %v4445
    %v4510 = vpack.c.bf16 %v4454, %v4446
    %v4511 = vpack.c.bf16 %v4455, %v4447
    %v4512 = vpack.c.bf16 %v4456, %v4448
    %v4513 = vpack.c.bf16 %v4457, %v4449
    %v4514 = vpack.c.bf16 %v4458, %v4450
    %v4515 = vpack.c.bf16 %v4459, %v4451
    %v4516 = vpack.c.bf16 %v4468, %v4460
    %v4517 = vpack.c.bf16 %v4469, %v4461
    %v4518 = vpack.c.bf16 %v4470, %v4462
    %v4519 = vpack.c.bf16 %v4471, %v4463
    %v4520 = vpack.c.bf16 %v4472, %v4464
    %v4521 = vpack.c.bf16 %v4473, %v4465
    %v4522 = vpack.c.bf16 %v4474, %v4466
    %v4523 = vpack.c.bf16 %v4475, %v4467
    %v4524 = vpack.c.bf16 %v4484, %v4476
    %v4525 = vpack.c.bf16 %v4485, %v4477
    %v4526 = vpack.c.bf16 %v4486, %v4478
    %v4527 = vpack.c.bf16 %v4487, %v4479
    %v4528 = vpack.c.bf16 %v4488, %v4480
    %v4529 = vpack.c.bf16 %v4489, %v4481
    %v4530 = vpack.c.bf16 %v4490, %v4482
    %v4531 = vpack.c.bf16 %v4491, %v4483
    %v4532 = vpack.c.bf16 %v4500, %v4492
    %v4533 = vpack.c.bf16 %v4501, %v4493
    %v4534 = vpack.c.bf16 %v4502, %v4494
    %v4535 = vpack.c.bf16 %v4503, %v4495
    %v4536 = vpack.c.bf16 %v4504, %v4496
    %v4537 = vpack.c.bf16 %v4505, %v4497
    %v4538 = vpack.c.bf16 %v4506, %v4498
    %v4539 = vpack.c.bf16 %v4507, %v4499
    %v4540 = vld [vmem:[%s12] sm:$0xff]
    %v4541 = vld [vmem:[%s12 + $0x8] sm:$0xff]
    %v4542 = vld [vmem:[%s12 + $0x10] sm:$0xff]
    %v4543 = vld [vmem:[%s12 + $0x18] sm:$0xf]
    %v4544 = vld [vmem:[%s12 + $0x1c] sm:$0xff]
    %v4545 = vld [vmem:[%s12 + $0x24] sm:$0xff]
    %v4546 = vld [vmem:[%s12 + $0x2c] sm:$0xff]
    %v4547 = vld [vmem:[%s12 + $0x34] sm:$0xf]
    %v4548 = vld [vmem:[%s12 + $0x38] sm:$0xff]
    %v4549 = vld [vmem:[%s12 + $0x40] sm:$0xff]
    %v4550 = vld [vmem:[%s12 + $0x48] sm:$0xff]
    %v4551 = vld [vmem:[%s12 + $0x50] sm:$0xf]
    %v4552 = vld [vmem:[%s12 + $0x54] sm:$0xff]
    %v4553 = vld [vmem:[%s12 + $0x5c] sm:$0xff]
    %v4554 = vld [vmem:[%s12 + $0x64] sm:$0xff]
    %v4555 = vld [vmem:[%s12 + $0x6c] sm:$0xf]
    %v4556 = vld [vmem:[%s12 + $0x70] sm:$0xff]
    %v4557 = vld [vmem:[%s12 + $0x78] sm:$0xff]
    %v4558 = vld [vmem:[%s12 + $0x80] sm:$0xff]
    %v4559 = vld [vmem:[%s12 + $0x88] sm:$0xf]
    %v4560 = vld [vmem:[%s12 + $0x8c] sm:$0xff]
    %v4561 = vld [vmem:[%s12 + $0x94] sm:$0xff]
    %v4562 = vld [vmem:[%s12 + $0x9c] sm:$0xff]
    %v4563 = vld [vmem:[%s12 + $0xa4] sm:$0xf]
    %v4564 = vld [vmem:[%s12 + $0xa8] sm:$0xff]
    %v4565 = vld [vmem:[%s12 + $0xb0] sm:$0xff]
    %v4566 = vld [vmem:[%s12 + $0xb8] sm:$0xff]
    %v4567 = vld [vmem:[%s12 + $0xc0] sm:$0xf]
    %v4568 = vld [vmem:[%s12 + $0xc4] sm:$0xff]
    %v4569 = vld [vmem:[%s12 + $0xcc] sm:$0xff]
    %v4570 = vld [vmem:[%s12 + $0xd4] sm:$0xff]
    %v4571 = vld [vmem:[%s12 + $0xdc] sm:$0xf]
    %v4572 = vld [vmem:[%s12 + $0xe0] sm:$0xff]
    %v4573 = vld [vmem:[%s12 + $0xe8] sm:$0xff]
    %v4574 = vld [vmem:[%s12 + $0xf0] sm:$0xff]
    %v4575 = vld [vmem:[%s12 + $0xf8] sm:$0xf]
    %v4576 = vld [vmem:[%s12 + $0xfc] sm:$0xff]
    %v4577 = vld [vmem:[%s12 + $0x104] sm:$0xff]
    %v4578 = vld [vmem:[%s12 + $0x10c] sm:$0xff]
    %v4579 = vld [vmem:[%s12 + $0x114] sm:$0xf]
    %v4580 = vld [vmem:[%s12 + $0x118] sm:$0xff]
    %v4581 = vld [vmem:[%s12 + $0x120] sm:$0xff]
    %v4582 = vld [vmem:[%s12 + $0x128] sm:$0xff]
    %v4583 = vld [vmem:[%s12 + $0x130] sm:$0xf]
    %v4584 = vld [vmem:[%s12 + $0x134] sm:$0xff]
    %v4585 = vld [vmem:[%s12 + $0x13c] sm:$0xff]
    %v4586 = vld [vmem:[%s12 + $0x144] sm:$0xff]
    %v4587 = vld [vmem:[%s12 + $0x14c] sm:$0xf]
    %v4588 = vld [vmem:[%s12 + $0x150] sm:$0xff]
    %v4589 = vld [vmem:[%s12 + $0x158] sm:$0xff]
    %v4590 = vld [vmem:[%s12 + $0x160] sm:$0xff]
    %v4591 = vld [vmem:[%s12 + $0x168] sm:$0xf]
    %v4592 = vld [vmem:[%s12 + $0x16c] sm:$0xff]
    %v4593 = vld [vmem:[%s12 + $0x174] sm:$0xff]
    %v4594 = vld [vmem:[%s12 + $0x17c] sm:$0xff]
    %v4595 = vld [vmem:[%s12 + $0x184] sm:$0xf]
    %v4596 = vld [vmem:[%s12 + $0x188] sm:$0xff]
    %v4597 = vld [vmem:[%s12 + $0x190] sm:$0xff]
    %v4598 = vld [vmem:[%s12 + $0x198] sm:$0xff]
    %v4599 = vld [vmem:[%s12 + $0x1a0] sm:$0xf]
    %v4600 = vld [vmem:[%s12 + $0x1a4] sm:$0xff]
    %v4601 = vld [vmem:[%s12 + $0x1ac] sm:$0xff]
    %v4602 = vld [vmem:[%s12 + $0x1b4] sm:$0xff]
    %v4603 = vld [vmem:[%s12 + $0x1bc] sm:$0xf]
    %v4604 = vld [vmem:[%s12 + $0x1c0] sm:$0xff]
    %v4605 = vld [vmem:[%s12 + $0x1c8] sm:$0xff]
    %v4606 = vld [vmem:[%s12 + $0x1d0] sm:$0xff]
    %v4607 = vld [vmem:[%s12 + $0x1d8] sm:$0xf]
    %v4608 = vld [vmem:[%s12 + $0x1dc] sm:$0xff]
    %v4609 = vld [vmem:[%s12 + $0x1e4] sm:$0xff]
    %v4610 = vld [vmem:[%s12 + $0x1ec] sm:$0xff]
    %v4611 = vld [vmem:[%s12 + $0x1f4] sm:$0xf]
    %v4612 = vld [vmem:[%s12 + $0x1f8] sm:$0xff]
    %v4613 = vld [vmem:[%s12 + $0x200] sm:$0xff]
    %v4614 = vld [vmem:[%s12 + $0x208] sm:$0xff]
    %v4615 = vld [vmem:[%s12 + $0x210] sm:$0xf]
    %v4616 = vld [vmem:[%s12 + $0x214] sm:$0xff]
    %v4617 = vld [vmem:[%s12 + $0x21c] sm:$0xff]
    %v4618 = vld [vmem:[%s12 + $0x224] sm:$0xff]
    %v4619 = vld [vmem:[%s12 + $0x22c] sm:$0xf]
    %v4620 = vld [vmem:[%s12 + $0x230] sm:$0xff]
    %v4621 = vld [vmem:[%s12 + $0x238] sm:$0xff]
    %v4622 = vld [vmem:[%s12 + $0x240] sm:$0xff]
    %v4623 = vld [vmem:[%s12 + $0x248] sm:$0xf]
    %v4624 = vld [vmem:[%s12 + $0x24c] sm:$0xff]
    %v4625 = vld [vmem:[%s12 + $0x254] sm:$0xff]
    %v4626 = vld [vmem:[%s12 + $0x25c] sm:$0xff]
    %v4627 = vld [vmem:[%s12 + $0x264] sm:$0xf]
    %v4628 = vld [vmem:[%s12 + $0x268] sm:$0xff]
    %v4629 = vld [vmem:[%s12 + $0x270] sm:$0xff]
    %v4630 = vld [vmem:[%s12 + $0x278] sm:$0xff]
    %v4631 = vld [vmem:[%s12 + $0x280] sm:$0xf]
    %v4632 = vld [vmem:[%s12 + $0x284] sm:$0xff]
    %v4633 = vld [vmem:[%s12 + $0x28c] sm:$0xff]
    %v4634 = vld [vmem:[%s12 + $0x294] sm:$0xff]
    %v4635 = vld [vmem:[%s12 + $0x29c] sm:$0xf]
    %v4636 = vld [vmem:[%s12 + $0x2a0] sm:$0xff]
    %v4637 = vld [vmem:[%s12 + $0x2a8] sm:$0xff]
    %v4638 = vld [vmem:[%s12 + $0x2b0] sm:$0xff]
    %v4639 = vld [vmem:[%s12 + $0x2b8] sm:$0xf]
    %v4640 = vld [vmem:[%s12 + $0x2bc] sm:$0xff]
    %v4641 = vld [vmem:[%s12 + $0x2c4] sm:$0xff]
    %v4642 = vld [vmem:[%s12 + $0x2cc] sm:$0xff]
    %v4643 = vld [vmem:[%s12 + $0x2d4] sm:$0xf]
    %v4644 = vld [vmem:[%s12 + $0x2d8] sm:$0xff]
    %v4645 = vld [vmem:[%s12 + $0x2e0] sm:$0xff]
    %v4646 = vld [vmem:[%s12 + $0x2e8] sm:$0xff]
    %v4647 = vld [vmem:[%s12 + $0x2f0] sm:$0xf]
    %v4648 = vld [vmem:[%s12 + $0x2f4] sm:$0xff]
    %v4649 = vld [vmem:[%s12 + $0x2fc] sm:$0xff]
    %v4650 = vld [vmem:[%s12 + $0x304] sm:$0xff]
    %v4651 = vld [vmem:[%s12 + $0x30c] sm:$0xf]
    %v4652 = vld [vmem:[%s12 + $0x310] sm:$0xff]
    %v4653 = vld [vmem:[%s12 + $0x318] sm:$0xff]
    %v4654 = vld [vmem:[%s12 + $0x320] sm:$0xff]
    %v4655 = vld [vmem:[%s12 + $0x328] sm:$0xf]
    %v4656 = vld [vmem:[%s12 + $0x32c] sm:$0xff]
    %v4657 = vld [vmem:[%s12 + $0x334] sm:$0xff]
    %v4658 = vld [vmem:[%s12 + $0x33c] sm:$0xff]
    %v4659 = vld [vmem:[%s12 + $0x344] sm:$0xf]
    %v4660 = vld [vmem:[%s12 + $0x348] sm:$0xff]
    %v4661 = vld [vmem:[%s12 + $0x350] sm:$0xff]
    %v4662 = vld [vmem:[%s12 + $0x358] sm:$0xff]
    %v4663 = vld [vmem:[%s12 + $0x360] sm:$0xf]
    %v4664 = vld [vmem:[%s12 + $0x364] sm:$0xff]
    %v4665 = vld [vmem:[%s12 + $0x36c] sm:$0xff]
    %v4666 = vld [vmem:[%s12 + $0x374] sm:$0xff]
    %v4667 = vld [vmem:[%s12 + $0x37c] sm:$0xf]
    %v4668 = vld [vmem:[%s12 + $0x380] sm:$0xff]
    %v4669 = vld [vmem:[%s12 + $0x388] sm:$0xff]
    %v4670 = vld [vmem:[%s12 + $0x390] sm:$0xff]
    %v4671 = vld [vmem:[%s12 + $0x398] sm:$0xf]
    %v4672 = vld [vmem:[%s12 + $0x39c] sm:$0xff]
    %v4673 = vld [vmem:[%s12 + $0x3a4] sm:$0xff]
    %v4674 = vld [vmem:[%s12 + $0x3ac] sm:$0xff]
    %v4675 = vld [vmem:[%s12 + $0x3b4] sm:$0xf]
    %v4676 = vld [vmem:[%s12 + $0x3b8] sm:$0xff]
    %v4677 = vld [vmem:[%s12 + $0x3c0] sm:$0xff]
    %v4678 = vld [vmem:[%s12 + $0x3c8] sm:$0xff]
    %v4679 = vld [vmem:[%s12 + $0x3d0] sm:$0xf]
    %v4680 = vld [vmem:[%s12 + $0x3d4] sm:$0xff]
    %v4681 = vld [vmem:[%s12 + $0x3dc] sm:$0xff]
    %v4682 = vld [vmem:[%s12 + $0x3e4] sm:$0xff]
    %v4683 = vld [vmem:[%s12 + $0x3ec] sm:$0xf]
    %v4684 = vld [vmem:[%s12 + $0x3f0] sm:$0xff]
    %v4685 = vld [vmem:[%s12 + $0x3f8] sm:$0xff]
    %v4686 = vld [vmem:[%s12 + $0x400] sm:$0xff]
    %v4687 = vld [vmem:[%s12 + $0x408] sm:$0xf]
    %v4688 = vld [vmem:[%s12 + $0x40c] sm:$0xff]
    %v4689 = vld [vmem:[%s12 + $0x414] sm:$0xff]
    %v4690 = vld [vmem:[%s12 + $0x41c] sm:$0xff]
    %v4691 = vld [vmem:[%s12 + $0x424] sm:$0xf]
    %v4692 = vld [vmem:[%s12 + $0x428] sm:$0xff]
    %v4693 = vld [vmem:[%s12 + $0x430] sm:$0xff]
    %v4694 = vld [vmem:[%s12 + $0x438] sm:$0xff]
    %v4695 = vld [vmem:[%s12 + $0x440] sm:$0xf]
    %v4696 = vld [vmem:[%s12 + $0x444] sm:$0xff]
    %v4697 = vld [vmem:[%s12 + $0x44c] sm:$0xff]
    %v4698 = vld [vmem:[%s12 + $0x454] sm:$0xff]
    %v4699 = vld [vmem:[%s12 + $0x45c] sm:$0xf]
    %v4700 = vld [vmem:[%s12 + $0x460] sm:$0xff]
    %v4701 = vld [vmem:[%s12 + $0x468] sm:$0xff]
    %v4702 = vld [vmem:[%s12 + $0x470] sm:$0xff]
    %v4703 = vld [vmem:[%s12 + $0x478] sm:$0xf]
    %v4704 = vld [vmem:[%s12 + $0x47c] sm:$0xff]
    %v4705 = vld [vmem:[%s12 + $0x484] sm:$0xff]
    %v4706 = vld [vmem:[%s12 + $0x48c] sm:$0xff]
    %v4707 = vld [vmem:[%s12 + $0x494] sm:$0xf]
    %v4708 = vld [vmem:[%s12 + $0x498] sm:$0xff]
    %v4709 = vld [vmem:[%s12 + $0x4a0] sm:$0xff]
    %v4710 = vld [vmem:[%s12 + $0x4a8] sm:$0xff]
    %v4711 = vld [vmem:[%s12 + $0x4b0] sm:$0xf]
    %v4712 = vld [vmem:[%s12 + $0x4b4] sm:$0xff]
    %v4713 = vld [vmem:[%s12 + $0x4bc] sm:$0xff]
    %v4714 = vld [vmem:[%s12 + $0x4c4] sm:$0xff]
    %v4715 = vld [vmem:[%s12 + $0x4cc] sm:$0xf]
    %v4716 = vld [vmem:[%s12 + $0x4d0] sm:$0xff]
    %v4717 = vld [vmem:[%s12 + $0x4d8] sm:$0xff]
    %v4718 = vld [vmem:[%s12 + $0x4e0] sm:$0xff]
    %v4719 = vld [vmem:[%s12 + $0x4e8] sm:$0xf]
    %v4720 = vld [vmem:[%s12 + $0x4ec] sm:$0xff]
    %v4721 = vld [vmem:[%s12 + $0x4f4] sm:$0xff]
    %v4722 = vld [vmem:[%s12 + $0x4fc] sm:$0xff]
    %v4723 = vld [vmem:[%s12 + $0x504] sm:$0xf]
    %v4724 = vld [vmem:[%s12 + $0x508] sm:$0xff]
    %v4725 = vld [vmem:[%s12 + $0x510] sm:$0xff]
    %v4726 = vld [vmem:[%s12 + $0x518] sm:$0xff]
    %v4727 = vld [vmem:[%s12 + $0x520] sm:$0xf]
    %v4728 = vld [vmem:[%s12 + $0x524] sm:$0xff]
    %v4729 = vld [vmem:[%s12 + $0x52c] sm:$0xff]
    %v4730 = vld [vmem:[%s12 + $0x534] sm:$0xff]
    %v4731 = vld [vmem:[%s12 + $0x53c] sm:$0xf]
    %v4732 = vld [vmem:[%s12 + $0x540] sm:$0xff]
    %v4733 = vld [vmem:[%s12 + $0x548] sm:$0xff]
    %v4734 = vld [vmem:[%s12 + $0x550] sm:$0xff]
    %v4735 = vld [vmem:[%s12 + $0x558] sm:$0xf]
    %v4736 = vld [vmem:[%s12 + $0x55c] sm:$0xff]
    %v4737 = vld [vmem:[%s12 + $0x564] sm:$0xff]
    %v4738 = vld [vmem:[%s12 + $0x56c] sm:$0xff]
    %v4739 = vld [vmem:[%s12 + $0x574] sm:$0xf]
    %v4740 = vld [vmem:[%s12 + $0x578] sm:$0xff]
    %v4741 = vld [vmem:[%s12 + $0x580] sm:$0xff]
    %v4742 = vld [vmem:[%s12 + $0x588] sm:$0xff]
    %v4743 = vld [vmem:[%s12 + $0x590] sm:$0xf]
    %v4744 = vld [vmem:[%s12 + $0x594] sm:$0xff]
    %v4745 = vld [vmem:[%s12 + $0x59c] sm:$0xff]
    %v4746 = vld [vmem:[%s12 + $0x5a4] sm:$0xff]
    %v4747 = vld [vmem:[%s12 + $0x5ac] sm:$0xf]
    %v4748 = vld [vmem:[%s12 + $0x5b0] sm:$0xff]
    %v4749 = vld [vmem:[%s12 + $0x5b8] sm:$0xff]
    %v4750 = vld [vmem:[%s12 + $0x5c0] sm:$0xff]
    %v4751 = vld [vmem:[%s12 + $0x5c8] sm:$0xf]
    %v4752 = vld [vmem:[%s12 + $0x5cc] sm:$0xff]
    %v4753 = vld [vmem:[%s12 + $0x5d4] sm:$0xff]
    %v4754 = vld [vmem:[%s12 + $0x5dc] sm:$0xff]
    %v4755 = vld [vmem:[%s12 + $0x5e4] sm:$0xf]
    %v4756 = vld [vmem:[%s12 + $0x5e8] sm:$0xff]
    %v4757 = vld [vmem:[%s12 + $0x5f0] sm:$0xff]
    %v4758 = vld [vmem:[%s12 + $0x5f8] sm:$0xff]
    %v4759 = vld [vmem:[%s12 + $0x600] sm:$0xf]
    %v4760 = vld [vmem:[%s12 + $0x604] sm:$0xff]
    %v4761 = vld [vmem:[%s12 + $0x60c] sm:$0xff]
    %v4762 = vld [vmem:[%s12 + $0x614] sm:$0xff]
    %v4763 = vld [vmem:[%s12 + $0x61c] sm:$0xf]
    %v4764 = vld [vmem:[%s12 + $0x620] sm:$0xff]
    %v4765 = vld [vmem:[%s12 + $0x628] sm:$0xff]
    %v4766 = vld [vmem:[%s12 + $0x630] sm:$0xff]
    %v4767 = vld [vmem:[%s12 + $0x638] sm:$0xf]
    %v4768 = vld [vmem:[%s12 + $0x63c] sm:$0xff]
    %v4769 = vld [vmem:[%s12 + $0x644] sm:$0xff]
    %v4770 = vld [vmem:[%s12 + $0x64c] sm:$0xff]
    %v4771 = vld [vmem:[%s12 + $0x654] sm:$0xf]
    %v4772 = vld [vmem:[%s12 + $0x658] sm:$0xff]
    %v4773 = vld [vmem:[%s12 + $0x660] sm:$0xff]
    %v4774 = vld [vmem:[%s12 + $0x668] sm:$0xff]
    %v4775 = vld [vmem:[%s12 + $0x670] sm:$0xf]
    %v4776 = vld [vmem:[%s12 + $0x674] sm:$0xff]
    %v4777 = vld [vmem:[%s12 + $0x67c] sm:$0xff]
    %v4778 = vld [vmem:[%s12 + $0x684] sm:$0xff]
    %v4779 = vld [vmem:[%s12 + $0x68c] sm:$0xf]
    %v4780 = vld [vmem:[%s12 + $0x690] sm:$0xff]
    %v4781 = vld [vmem:[%s12 + $0x698] sm:$0xff]
    %v4782 = vld [vmem:[%s12 + $0x6a0] sm:$0xff]
    %v4783 = vld [vmem:[%s12 + $0x6a8] sm:$0xf]
    %v4784 = vld [vmem:[%s12 + $0x6ac] sm:$0xff]
    %v4785 = vld [vmem:[%s12 + $0x6b4] sm:$0xff]
    %v4786 = vld [vmem:[%s12 + $0x6bc] sm:$0xff]
    %v4787 = vld [vmem:[%s12 + $0x6c4] sm:$0xf]
    %v4788 = vld [vmem:[%s12 + $0x6c8] sm:$0xff]
    %v4789 = vld [vmem:[%s12 + $0x6d0] sm:$0xff]
    %v4790 = vld [vmem:[%s12 + $0x6d8] sm:$0xff]
    %v4791 = vld [vmem:[%s12 + $0x6e0] sm:$0xf]
    %v4792 = vld [vmem:[%s12 + $0x6e4] sm:$0xff]
    %v4793 = vld [vmem:[%s12 + $0x6ec] sm:$0xff]
    %v4794 = vld [vmem:[%s12 + $0x6f4] sm:$0xff]
    %v4795 = vld [vmem:[%s12 + $0x6fc] sm:$0xf]
    %v4796 = vld [vmem:[%s12 + $0x700] sm:$0xff]
    %v4797 = vld [vmem:[%s12 + $0x708] sm:$0xff]
    %v4798 = vld [vmem:[%s12 + $0x710] sm:$0xff]
    %v4799 = vld [vmem:[%s12 + $0x718] sm:$0xf]
    %v4800 = vld [vmem:[%s12 + $0x71c] sm:$0xff]
    %v4801 = vld [vmem:[%s12 + $0x724] sm:$0xff]
    %v4802 = vld [vmem:[%s12 + $0x72c] sm:$0xff]
    %v4803 = vld [vmem:[%s12 + $0x734] sm:$0xf]
    %v4804 = vld [vmem:[%s12 + $0x738] sm:$0xff]
    %v4805 = vld [vmem:[%s12 + $0x740] sm:$0xff]
    %v4806 = vld [vmem:[%s12 + $0x748] sm:$0xff]
    %v4807 = vld [vmem:[%s12 + $0x750] sm:$0xf]
    %v4808 = vld [vmem:[%s12 + $0x754] sm:$0xff]
    %v4809 = vld [vmem:[%s12 + $0x75c] sm:$0xff]
    %v4810 = vld [vmem:[%s12 + $0x764] sm:$0xff]
    %v4811 = vld [vmem:[%s12 + $0x76c] sm:$0xf]
    %v4812 = vld [vmem:[%s12 + $0x770] sm:$0xff]
    %v4813 = vld [vmem:[%s12 + $0x778] sm:$0xff]
    %v4814 = vld [vmem:[%s12 + $0x780] sm:$0xff]
    %v4815 = vld [vmem:[%s12 + $0x788] sm:$0xf]
    %v4816 = vld [vmem:[%s12 + $0x78c] sm:$0xff]
    %v4817 = vld [vmem:[%s12 + $0x794] sm:$0xff]
    %v4818 = vld [vmem:[%s12 + $0x79c] sm:$0xff]
    %v4819 = vld [vmem:[%s12 + $0x7a4] sm:$0xf]
    %v4820 = vld [vmem:[%s12 + $0x7a8] sm:$0xff]
    %v4821 = vld [vmem:[%s12 + $0x7b0] sm:$0xff]
    %v4822 = vld [vmem:[%s12 + $0x7b8] sm:$0xff]
    %v4823 = vld [vmem:[%s12 + $0x7c0] sm:$0xf]
    %v4824 = vld [vmem:[%s12 + $0x7c4] sm:$0xff]
    %v4825 = vld [vmem:[%s12 + $0x7cc] sm:$0xff]
    %v4826 = vld [vmem:[%s12 + $0x7d4] sm:$0xff]
    %v4827 = vld [vmem:[%s12 + $0x7dc] sm:$0xf]
    %v4828 = vld [vmem:[%s12 + $0x7e0] sm:$0xff]
    %v4829 = vld [vmem:[%s12 + $0x7e8] sm:$0xff]
    %v4830 = vld [vmem:[%s12 + $0x7f0] sm:$0xff]
    %v4831 = vld [vmem:[%s12 + $0x7f8] sm:$0xf]
    %v4832 = vld [vmem:[%s12 + $0x7fc] sm:$0xff]
    %v4833 = vld [vmem:[%s12 + $0x804] sm:$0xff]
    %v4834 = vld [vmem:[%s12 + $0x80c] sm:$0xff]
    %v4835 = vld [vmem:[%s12 + $0x814] sm:$0xf]
    %v4836 = vld [vmem:[%s12 + $0x818] sm:$0xff]
    %v4837 = vld [vmem:[%s12 + $0x820] sm:$0xff]
    %v4838 = vld [vmem:[%s12 + $0x828] sm:$0xff]
    %v4839 = vld [vmem:[%s12 + $0x830] sm:$0xf]
    %v4840 = vld [vmem:[%s12 + $0x834] sm:$0xff]
    %v4841 = vld [vmem:[%s12 + $0x83c] sm:$0xff]
    %v4842 = vld [vmem:[%s12 + $0x844] sm:$0xff]
    %v4843 = vld [vmem:[%s12 + $0x84c] sm:$0xf]
    %v4844 = vld [vmem:[%s12 + $0x850] sm:$0xff]
    %v4845 = vld [vmem:[%s12 + $0x858] sm:$0xff]
    %v4846 = vld [vmem:[%s12 + $0x860] sm:$0xff]
    %v4847 = vld [vmem:[%s12 + $0x868] sm:$0xf]
    %v4848 = vld [vmem:[%s12 + $0x86c] sm:$0xff]
    %v4849 = vld [vmem:[%s12 + $0x874] sm:$0xff]
    %v4850 = vld [vmem:[%s12 + $0x87c] sm:$0xff]
    %v4851 = vld [vmem:[%s12 + $0x884] sm:$0xf]
    %v4852 = vld [vmem:[%s12 + $0x888] sm:$0xff]
    %v4853 = vld [vmem:[%s12 + $0x890] sm:$0xff]
    %v4854 = vld [vmem:[%s12 + $0x898] sm:$0xff]
    %v4855 = vld [vmem:[%s12 + $0x8a0] sm:$0xf]
    %v4856 = vld [vmem:[%s12 + $0x8a4] sm:$0xff]
    %v4857 = vld [vmem:[%s12 + $0x8ac] sm:$0xff]
    %v4858 = vld [vmem:[%s12 + $0x8b4] sm:$0xff]
    %v4859 = vld [vmem:[%s12 + $0x8bc] sm:$0xf]
    %v4860 = vld [vmem:[%s12 + $0x8c0] sm:$0xff]
    %v4861 = vld [vmem:[%s12 + $0x8c8] sm:$0xff]
    %v4862 = vld [vmem:[%s12 + $0x8d0] sm:$0xff]
    %v4863 = vld [vmem:[%s12 + $0x8d8] sm:$0xf]
    %v4864 = vld [vmem:[%s12 + $0x8dc] sm:$0xff]
    %v4865 = vld [vmem:[%s12 + $0x8e4] sm:$0xff]
    %v4866 = vld [vmem:[%s12 + $0x8ec] sm:$0xff]
    %v4867 = vld [vmem:[%s12 + $0x8f4] sm:$0xf]
    %v4868 = vld [vmem:[%s12 + $0x8f8] sm:$0xff]
    %v4869 = vld [vmem:[%s12 + $0x900] sm:$0xff]
    %v4870 = vld [vmem:[%s12 + $0x908] sm:$0xff]
    %v4871 = vld [vmem:[%s12 + $0x910] sm:$0xf]
    %v4872 = vld [vmem:[%s12 + $0x914] sm:$0xff]
    %v4873 = vld [vmem:[%s12 + $0x91c] sm:$0xff]
    %v4874 = vld [vmem:[%s12 + $0x924] sm:$0xff]
    %v4875 = vld [vmem:[%s12 + $0x92c] sm:$0xf]
    %v4876 = vld [vmem:[%s12 + $0x930] sm:$0xff]
    %v4877 = vld [vmem:[%s12 + $0x938] sm:$0xff]
    %v4878 = vld [vmem:[%s12 + $0x940] sm:$0xff]
    %v4879 = vld [vmem:[%s12 + $0x948] sm:$0xf]
    %v4880 = vld [vmem:[%s12 + $0x94c] sm:$0xff]
    %v4881 = vld [vmem:[%s12 + $0x954] sm:$0xff]
    %v4882 = vld [vmem:[%s12 + $0x95c] sm:$0xff]
    %v4883 = vld [vmem:[%s12 + $0x964] sm:$0xf]
    %v4884 = vld [vmem:[%s12 + $0x968] sm:$0xff]
    %v4885 = vld [vmem:[%s12 + $0x970] sm:$0xff]
    %v4886 = vld [vmem:[%s12 + $0x978] sm:$0xff]
    %v4887 = vld [vmem:[%s12 + $0x980] sm:$0xf]
    %v4888 = vld [vmem:[%s12 + $0x984] sm:$0xff]
    %v4889 = vld [vmem:[%s12 + $0x98c] sm:$0xff]
    %v4890 = vld [vmem:[%s12 + $0x994] sm:$0xff]
    %v4891 = vld [vmem:[%s12 + $0x99c] sm:$0xf]
    %v4892 = vld [vmem:[%s12 + $0x9a0] sm:$0xff]
    %v4893 = vld [vmem:[%s12 + $0x9a8] sm:$0xff]
    %v4894 = vld [vmem:[%s12 + $0x9b0] sm:$0xff]
    %v4895 = vld [vmem:[%s12 + $0x9b8] sm:$0xf]
    %v4896 = vld [vmem:[%s12 + $0x9bc] sm:$0xff]
    %v4897 = vld [vmem:[%s12 + $0x9c4] sm:$0xff]
    %v4898 = vld [vmem:[%s12 + $0x9cc] sm:$0xff]
    %v4899 = vld [vmem:[%s12 + $0x9d4] sm:$0xf]
    %v4900 = vld [vmem:[%s12 + $0x9d8] sm:$0xff]
    %v4901 = vld [vmem:[%s12 + $0x9e0] sm:$0xff]
    %v4902 = vld [vmem:[%s12 + $0x9e8] sm:$0xff]
    %v4903 = vld [vmem:[%s12 + $0x9f0] sm:$0xf]
    %v4904 = vld [vmem:[%s12 + $0x9f4] sm:$0xff]
    %v4905 = vld [vmem:[%s12 + $0x9fc] sm:$0xff]
    %v4906 = vld [vmem:[%s12 + $0xa04] sm:$0xff]
    %v4907 = vld [vmem:[%s12 + $0xa0c] sm:$0xf]
    %v4908 = vld [vmem:[%s12 + $0xa10] sm:$0xff]
    %v4909 = vld [vmem:[%s12 + $0xa18] sm:$0xff]
    %v4910 = vld [vmem:[%s12 + $0xa20] sm:$0xff]
    %v4911 = vld [vmem:[%s12 + $0xa28] sm:$0xf]
    %v4912 = vld [vmem:[%s12 + $0xa2c] sm:$0xff]
    %v4913 = vld [vmem:[%s12 + $0xa34] sm:$0xff]
    %v4914 = vld [vmem:[%s12 + $0xa3c] sm:$0xff]
    %v4915 = vld [vmem:[%s12 + $0xa44] sm:$0xf]
    %v4916 = vld [vmem:[%s12 + $0xa48] sm:$0xff]
    %v4917 = vld [vmem:[%s12 + $0xa50] sm:$0xff]
    %v4918 = vld [vmem:[%s12 + $0xa58] sm:$0xff]
    %v4919 = vld [vmem:[%s12 + $0xa60] sm:$0xf]
    %v4920 = vld [vmem:[%s12 + $0xa64] sm:$0xff]
    %v4921 = vld [vmem:[%s12 + $0xa6c] sm:$0xff]
    %v4922 = vld [vmem:[%s12 + $0xa74] sm:$0xff]
    %v4923 = vld [vmem:[%s12 + $0xa7c] sm:$0xf]
    %v4924 = vld [vmem:[%s12 + $0xa80] sm:$0xff]
    %v4925 = vld [vmem:[%s12 + $0xa88] sm:$0xff]
    %v4926 = vld [vmem:[%s12 + $0xa90] sm:$0xff]
    %v4927 = vld [vmem:[%s12 + $0xa98] sm:$0xf]
    %v4928 = vld [vmem:[%s12 + $0xa9c] sm:$0xff]
    %v4929 = vld [vmem:[%s12 + $0xaa4] sm:$0xff]
    %v4930 = vld [vmem:[%s12 + $0xaac] sm:$0xff]
    %v4931 = vld [vmem:[%s12 + $0xab4] sm:$0xf]
    %v4932 = vld [vmem:[%s12 + $0xab8] sm:$0xff]
    %v4933 = vld [vmem:[%s12 + $0xac0] sm:$0xff]
    %v4934 = vld [vmem:[%s12 + $0xac8] sm:$0xff]
    %v4935 = vld [vmem:[%s12 + $0xad0] sm:$0xf]
    %v4936 = vld [vmem:[%s12 + $0xad4] sm:$0xff]
    %v4937 = vld [vmem:[%s12 + $0xadc] sm:$0xff]
    %v4938 = vld [vmem:[%s12 + $0xae4] sm:$0xff]
    %v4939 = vld [vmem:[%s12 + $0xaec] sm:$0xf]
    %v4940 = vld [vmem:[%s12 + $0xaf0] sm:$0xff]
    %v4941 = vld [vmem:[%s12 + $0xaf8] sm:$0xff]
    %v4942 = vld [vmem:[%s12 + $0xb00] sm:$0xff]
    %v4943 = vld [vmem:[%s12 + $0xb08] sm:$0xf]
    %v4944 = vld [vmem:[%s12 + $0xb0c] sm:$0xff]
    %v4945 = vld [vmem:[%s12 + $0xb14] sm:$0xff]
    %v4946 = vld [vmem:[%s12 + $0xb1c] sm:$0xff]
    %v4947 = vld [vmem:[%s12 + $0xb24] sm:$0xf]
    %v4948 = vld [vmem:[%s12 + $0xb28] sm:$0xff]
    %v4949 = vld [vmem:[%s12 + $0xb30] sm:$0xff]
    %v4950 = vld [vmem:[%s12 + $0xb38] sm:$0xff]
    %v4951 = vld [vmem:[%s12 + $0xb40] sm:$0xf]
    %v4952 = vld [vmem:[%s12 + $0xb44] sm:$0xff]
    %v4953 = vld [vmem:[%s12 + $0xb4c] sm:$0xff]
    %v4954 = vld [vmem:[%s12 + $0xb54] sm:$0xff]
    %v4955 = vld [vmem:[%s12 + $0xb5c] sm:$0xf]
    %v4956 = vld [vmem:[%s12 + $0xb60] sm:$0xff]
    %v4957 = vld [vmem:[%s12 + $0xb68] sm:$0xff]
    %v4958 = vld [vmem:[%s12 + $0xb70] sm:$0xff]
    %v4959 = vld [vmem:[%s12 + $0xb78] sm:$0xf]
    %v4960 = vld [vmem:[%s12 + $0xb7c] sm:$0xff]
    %v4961 = vld [vmem:[%s12 + $0xb84] sm:$0xff]
    %v4962 = vld [vmem:[%s12 + $0xb8c] sm:$0xff]
    %v4963 = vld [vmem:[%s12 + $0xb94] sm:$0xf]
    %v4964 = vld [vmem:[%s12 + $0xb98] sm:$0xff]
    %v4965 = vld [vmem:[%s12 + $0xba0] sm:$0xff]
    %v4966 = vld [vmem:[%s12 + $0xba8] sm:$0xff]
    %v4967 = vld [vmem:[%s12 + $0xbb0] sm:$0xf]
    %v4968 = vld [vmem:[%s12 + $0xbb4] sm:$0xff]
    %v4969 = vld [vmem:[%s12 + $0xbbc] sm:$0xff]
    %v4970 = vld [vmem:[%s12 + $0xbc4] sm:$0xff]
    %v4971 = vld [vmem:[%s12 + $0xbcc] sm:$0xf]
    %v4972 = vld [vmem:[%s12 + $0xbd0] sm:$0xff]
    %v4973 = vld [vmem:[%s12 + $0xbd8] sm:$0xff]
    %v4974 = vld [vmem:[%s12 + $0xbe0] sm:$0xff]
    %v4975 = vld [vmem:[%s12 + $0xbe8] sm:$0xf]
    %v4976 = vld [vmem:[%s12 + $0xbec] sm:$0xff]
    %v4977 = vld [vmem:[%s12 + $0xbf4] sm:$0xff]
    %v4978 = vld [vmem:[%s12 + $0xbfc] sm:$0xff]
    %v4979 = vld [vmem:[%s12 + $0xc04] sm:$0xf]
    %v4980 = vld [vmem:[%s12 + $0xc08] sm:$0xff]
    %v4981 = vld [vmem:[%s12 + $0xc10] sm:$0xff]
    %v4982 = vld [vmem:[%s12 + $0xc18] sm:$0xff]
    %v4983 = vld [vmem:[%s12 + $0xc20] sm:$0xf]
    %v4984 = vld [vmem:[%s12 + $0xc24] sm:$0xff]
    %v4985 = vld [vmem:[%s12 + $0xc2c] sm:$0xff]
    %v4986 = vld [vmem:[%s12 + $0xc34] sm:$0xff]
    %v4987 = vld [vmem:[%s12 + $0xc3c] sm:$0xf]
    %v4988 = vld [vmem:[%s12 + $0xc40] sm:$0xff]
    %v4989 = vld [vmem:[%s12 + $0xc48] sm:$0xff]
    %v4990 = vld [vmem:[%s12 + $0xc50] sm:$0xff]
    %v4991 = vld [vmem:[%s12 + $0xc58] sm:$0xf]
    %v4992 = vld [vmem:[%s12 + $0xc5c] sm:$0xff]
    %v4993 = vld [vmem:[%s12 + $0xc64] sm:$0xff]
    %v4994 = vld [vmem:[%s12 + $0xc6c] sm:$0xff]
    %v4995 = vld [vmem:[%s12 + $0xc74] sm:$0xf]
    %v4996 = vld [vmem:[%s12 + $0xc78] sm:$0xff]
    %v4997 = vld [vmem:[%s12 + $0xc80] sm:$0xff]
    %v4998 = vld [vmem:[%s12 + $0xc88] sm:$0xff]
    %v4999 = vld [vmem:[%s12 + $0xc90] sm:$0xf]
    %v5000 = vld [vmem:[%s12 + $0xc94] sm:$0xff]
    %v5001 = vld [vmem:[%s12 + $0xc9c] sm:$0xff]
    %v5002 = vld [vmem:[%s12 + $0xca4] sm:$0xff]
    %v5003 = vld [vmem:[%s12 + $0xcac] sm:$0xf]
    %v5004 = vld [vmem:[%s12 + $0xcb0] sm:$0xff]
    %v5005 = vld [vmem:[%s12 + $0xcb8] sm:$0xff]
    %v5006 = vld [vmem:[%s12 + $0xcc0] sm:$0xff]
    %v5007 = vld [vmem:[%s12 + $0xcc8] sm:$0xf]
    %v5008 = vld [vmem:[%s12 + $0xccc] sm:$0xff]
    %v5009 = vld [vmem:[%s12 + $0xcd4] sm:$0xff]
    %v5010 = vld [vmem:[%s12 + $0xcdc] sm:$0xff]
    %v5011 = vld [vmem:[%s12 + $0xce4] sm:$0xf]
    %v5012 = vld [vmem:[%s12 + $0xce8] sm:$0xff]
    %v5013 = vld [vmem:[%s12 + $0xcf0] sm:$0xff]
    %v5014 = vld [vmem:[%s12 + $0xcf8] sm:$0xff]
    %v5015 = vld [vmem:[%s12 + $0xd00] sm:$0xf]
    %v5016 = vld [vmem:[%s12 + $0xd04] sm:$0xff]
    %v5017 = vld [vmem:[%s12 + $0xd0c] sm:$0xff]
    %v5018 = vld [vmem:[%s12 + $0xd14] sm:$0xff]
    %v5019 = vld [vmem:[%s12 + $0xd1c] sm:$0xf]
    %v5020 = vld [vmem:[%s12 + $0xd20] sm:$0xff]
    %v5021 = vld [vmem:[%s12 + $0xd28] sm:$0xff]
    %v5022 = vld [vmem:[%s12 + $0xd30] sm:$0xff]
    %v5023 = vld [vmem:[%s12 + $0xd38] sm:$0xf]
    %v5024 = vld [vmem:[%s12 + $0xd3c] sm:$0xff]
    %v5025 = vld [vmem:[%s12 + $0xd44] sm:$0xff]
    %v5026 = vld [vmem:[%s12 + $0xd4c] sm:$0xff]
    %v5027 = vld [vmem:[%s12 + $0xd54] sm:$0xf]
    %v5028 = vld [vmem:[%s12 + $0xd58] sm:$0xff]
    %v5029 = vld [vmem:[%s12 + $0xd60] sm:$0xff]
    %v5030 = vld [vmem:[%s12 + $0xd68] sm:$0xff]
    %v5031 = vld [vmem:[%s12 + $0xd70] sm:$0xf]
    %v5032 = vld [vmem:[%s12 + $0xd74] sm:$0xff]
    %v5033 = vld [vmem:[%s12 + $0xd7c] sm:$0xff]
    %v5034 = vld [vmem:[%s12 + $0xd84] sm:$0xff]
    %v5035 = vld [vmem:[%s12 + $0xd8c] sm:$0xf]
    %v5036 = vld [vmem:[%s12 + $0xd90] sm:$0xff]
    %v5037 = vld [vmem:[%s12 + $0xd98] sm:$0xff]
    %v5038 = vld [vmem:[%s12 + $0xda0] sm:$0xff]
    %v5039 = vld [vmem:[%s12 + $0xda8] sm:$0xf]
    %v5040 = vld [vmem:[%s12 + $0xdac] sm:$0xff]
    %v5041 = vld [vmem:[%s12 + $0xdb4] sm:$0xff]
    %v5042 = vld [vmem:[%s12 + $0xdbc] sm:$0xff]
    %v5043 = vld [vmem:[%s12 + $0xdc4] sm:$0xf]
    %v5044 = vld [vmem:[%s12 + $0xdc8] sm:$0xff]
    %v5045 = vld [vmem:[%s12 + $0xdd0] sm:$0xff]
    %v5046 = vld [vmem:[%s12 + $0xdd8] sm:$0xff]
    %v5047 = vld [vmem:[%s12 + $0xde0] sm:$0xf]
    %v5048 = vld [vmem:[%s12 + $0xde4] sm:$0xff]
    %v5049 = vld [vmem:[%s12 + $0xdec] sm:$0xff]
    %v5050 = vld [vmem:[%s12 + $0xdf4] sm:$0xff]
    %v5051 = vld [vmem:[%s12 + $0xdfc] sm:$0xf]
    %v5052 = vld [vmem:[%s13] sm:$0x7f]
    %v5054 = vlaneseq
    %v5055 = vshrl.u32 %v5054, 7
    %v5056 = vsub.s32 0, %v5055
    %v5057 = vrot.slane %v5052, %v5056
    %v5058 = vlaneseq
    %v5059 = vshrl.u32 %v5058, 7
    %v5060 = vsub.s32 1, %v5059
    %v5061 = vrot.slane %v5052, %v5060
    %v5062 = vlaneseq
    %v5063 = vshrl.u32 %v5062, 7
    %v5064 = vsub.s32 2, %v5063
    %v5065 = vrot.slane %v5052, %v5064
    %v5066 = vlaneseq
    %v5067 = vshrl.u32 %v5066, 7
    %v5068 = vsub.s32 3, %v5067
    %v5069 = vrot.slane %v5052, %v5068
    %v5070 = vlaneseq
    %v5071 = vshrl.u32 %v5070, 7
    %v5072 = vsub.s32 4, %v5071
    %v5073 = vrot.slane %v5052, %v5072
    %v5074 = vlaneseq
    %v5075 = vshrl.u32 %v5074, 7
    %v5076 = vsub.s32 5, %v5075
    %v5077 = vrot.slane %v5052, %v5076
    %v5078 = vlaneseq
    %v5079 = vshrl.u32 %v5078, 7
    %v5080 = vsub.s32 6, %v5079
    %v5081 = vrot.slane %v5052, %v5080
    %v5601 = vunpack.c.l.b16 %v4540
    %v5602 = vunpack.c.h.b16 %v4540
    %v5603 = vunpack.c.l.b16 %v4541
    %v5604 = vunpack.c.h.b16 %v4541
    %v5605 = vunpack.c.l.b16 %v4542
    %v5606 = vunpack.c.h.b16 %v4542
    %v5607 = vunpack.c.l.b16 %v4543
    %v5608 = vunpack.c.l.b16 %v4544
    %v5609 = vunpack.c.h.b16 %v4544
    %v5610 = vunpack.c.l.b16 %v4545
    %v5611 = vunpack.c.h.b16 %v4545
    %v5612 = vunpack.c.l.b16 %v4546
    %v5613 = vunpack.c.h.b16 %v4546
    %v5614 = vunpack.c.l.b16 %v4547
    %v5615 = vunpack.c.l.b16 %v4548
    %v5616 = vunpack.c.h.b16 %v4548
    %v5617 = vunpack.c.l.b16 %v4549
    %v5618 = vunpack.c.h.b16 %v4549
    %v5619 = vunpack.c.l.b16 %v4550
    %v5620 = vunpack.c.h.b16 %v4550
    %v5621 = vunpack.c.l.b16 %v4551
    %v5622 = vunpack.c.l.b16 %v4552
    %v5623 = vunpack.c.h.b16 %v4552
    %v5624 = vunpack.c.l.b16 %v4553
    %v5625 = vunpack.c.h.b16 %v4553
    %v5626 = vunpack.c.l.b16 %v4554
    %v5627 = vunpack.c.h.b16 %v4554
    %v5628 = vunpack.c.l.b16 %v4555
    %v5629 = vunpack.c.l.b16 %v4556
    %v5630 = vunpack.c.h.b16 %v4556
    %v5631 = vunpack.c.l.b16 %v4557
    %v5632 = vunpack.c.h.b16 %v4557
    %v5633 = vunpack.c.l.b16 %v4558
    %v5634 = vunpack.c.h.b16 %v4558
    %v5635 = vunpack.c.l.b16 %v4559
    %v5636 = vunpack.c.l.b16 %v4560
    %v5637 = vunpack.c.h.b16 %v4560
    %v5638 = vunpack.c.l.b16 %v4561
    %v5639 = vunpack.c.h.b16 %v4561
    %v5640 = vunpack.c.l.b16 %v4562
    %v5641 = vunpack.c.h.b16 %v4562
    %v5642 = vunpack.c.l.b16 %v4563
    %v5643 = vunpack.c.l.b16 %v4564
    %v5644 = vunpack.c.h.b16 %v4564
    %v5645 = vunpack.c.l.b16 %v4565
    %v5646 = vunpack.c.h.b16 %v4565
    %v5647 = vunpack.c.l.b16 %v4566
    %v5648 = vunpack.c.h.b16 %v4566
    %v5649 = vunpack.c.l.b16 %v4567
    %v5650 = vunpack.c.l.b16 %v4568
    %v5651 = vunpack.c.h.b16 %v4568
    %v5652 = vunpack.c.l.b16 %v4569
    %v5653 = vunpack.c.h.b16 %v4569
    %v5654 = vunpack.c.l.b16 %v4570
    %v5655 = vunpack.c.h.b16 %v4570
    %v5656 = vunpack.c.l.b16 %v4571
    %v5657 = vunpack.c.l.b16 %v4572
    %v5658 = vunpack.c.h.b16 %v4572
    %v5659 = vunpack.c.l.b16 %v4573
    %v5660 = vunpack.c.h.b16 %v4573
    %v5661 = vunpack.c.l.b16 %v4574
    %v5662 = vunpack.c.h.b16 %v4574
    %v5663 = vunpack.c.l.b16 %v4575
    %v5664 = vunpack.c.l.b16 %v4576
    %v5665 = vunpack.c.h.b16 %v4576
    %v5666 = vunpack.c.l.b16 %v4577
    %v5667 = vunpack.c.h.b16 %v4577
    %v5668 = vunpack.c.l.b16 %v4578
    %v5669 = vunpack.c.h.b16 %v4578
    %v5670 = vunpack.c.l.b16 %v4579
    %v5671 = vunpack.c.l.b16 %v4580
    %v5672 = vunpack.c.h.b16 %v4580
    %v5673 = vunpack.c.l.b16 %v4581
    %v5674 = vunpack.c.h.b16 %v4581
    %v5675 = vunpack.c.l.b16 %v4582
    %v5676 = vunpack.c.h.b16 %v4582
    %v5677 = vunpack.c.l.b16 %v4583
    %v5678 = vunpack.c.l.b16 %v4584
    %v5679 = vunpack.c.h.b16 %v4584
    %v5680 = vunpack.c.l.b16 %v4585
    %v5681 = vunpack.c.h.b16 %v4585
    %v5682 = vunpack.c.l.b16 %v4586
    %v5683 = vunpack.c.h.b16 %v4586
    %v5684 = vunpack.c.l.b16 %v4587
    %v5685 = vunpack.c.l.b16 %v4588
    %v5686 = vunpack.c.h.b16 %v4588
    %v5687 = vunpack.c.l.b16 %v4589
    %v5688 = vunpack.c.h.b16 %v4589
    %v5689 = vunpack.c.l.b16 %v4590
    %v5690 = vunpack.c.h.b16 %v4590
    %v5691 = vunpack.c.l.b16 %v4591
    %v5692 = vunpack.c.l.b16 %v4592
    %v5693 = vunpack.c.h.b16 %v4592
    %v5694 = vunpack.c.l.b16 %v4593
    %v5695 = vunpack.c.h.b16 %v4593
    %v5696 = vunpack.c.l.b16 %v4594
    %v5697 = vunpack.c.h.b16 %v4594
    %v5698 = vunpack.c.l.b16 %v4595
    %v5699 = vunpack.c.l.b16 %v4596
    %v5700 = vunpack.c.h.b16 %v4596
    %v5701 = vunpack.c.l.b16 %v4597
    %v5702 = vunpack.c.h.b16 %v4597
    %v5703 = vunpack.c.l.b16 %v4598
    %v5704 = vunpack.c.h.b16 %v4598
    %v5705 = vunpack.c.l.b16 %v4599
    %v5706 = vunpack.c.l.b16 %v4600
    %v5707 = vunpack.c.h.b16 %v4600
    %v5708 = vunpack.c.l.b16 %v4601
    %v5709 = vunpack.c.h.b16 %v4601
    %v5710 = vunpack.c.l.b16 %v4602
    %v5711 = vunpack.c.h.b16 %v4602
    %v5712 = vunpack.c.l.b16 %v4603
    %v5713 = vunpack.c.l.b16 %v4604
    %v5714 = vunpack.c.h.b16 %v4604
    %v5715 = vunpack.c.l.b16 %v4605
    %v5716 = vunpack.c.h.b16 %v4605
    %v5717 = vunpack.c.l.b16 %v4606
    %v5718 = vunpack.c.h.b16 %v4606
    %v5719 = vunpack.c.l.b16 %v4607
    %v5720 = vunpack.c.l.b16 %v4608
    %v5721 = vunpack.c.h.b16 %v4608
    %v5722 = vunpack.c.l.b16 %v4609
    %v5723 = vunpack.c.h.b16 %v4609
    %v5724 = vunpack.c.l.b16 %v4610
    %v5725 = vunpack.c.h.b16 %v4610
    %v5726 = vunpack.c.l.b16 %v4611
    %v5727 = vunpack.c.l.b16 %v4612
    %v5728 = vunpack.c.h.b16 %v4612
    %v5729 = vunpack.c.l.b16 %v4613
    %v5730 = vunpack.c.h.b16 %v4613
    %v5731 = vunpack.c.l.b16 %v4614
    %v5732 = vunpack.c.h.b16 %v4614
    %v5733 = vunpack.c.l.b16 %v4615
    %v5734 = vunpack.c.l.b16 %v4616
    %v5735 = vunpack.c.h.b16 %v4616
    %v5736 = vunpack.c.l.b16 %v4617
    %v5737 = vunpack.c.h.b16 %v4617
    %v5738 = vunpack.c.l.b16 %v4618
    %v5739 = vunpack.c.h.b16 %v4618
    %v5740 = vunpack.c.l.b16 %v4619
    %v5741 = vunpack.c.l.b16 %v4620
    %v5742 = vunpack.c.h.b16 %v4620
    %v5743 = vunpack.c.l.b16 %v4621
    %v5744 = vunpack.c.h.b16 %v4621
    %v5745 = vunpack.c.l.b16 %v4622
    %v5746 = vunpack.c.h.b16 %v4622
    %v5747 = vunpack.c.l.b16 %v4623
    %v5748 = vunpack.c.l.b16 %v4624
    %v5749 = vunpack.c.h.b16 %v4624
    %v5750 = vunpack.c.l.b16 %v4625
    %v5751 = vunpack.c.h.b16 %v4625
    %v5752 = vunpack.c.l.b16 %v4626
    %v5753 = vunpack.c.h.b16 %v4626
    %v5754 = vunpack.c.l.b16 %v4627
    %v5755 = vunpack.c.l.b16 %v4628
    %v5756 = vunpack.c.h.b16 %v4628
    %v5757 = vunpack.c.l.b16 %v4629
    %v5758 = vunpack.c.h.b16 %v4629
    %v5759 = vunpack.c.l.b16 %v4630
    %v5760 = vunpack.c.h.b16 %v4630
    %v5761 = vunpack.c.l.b16 %v4631
    %v5762 = vunpack.c.l.b16 %v4632
    %v5763 = vunpack.c.h.b16 %v4632
    %v5764 = vunpack.c.l.b16 %v4633
    %v5765 = vunpack.c.h.b16 %v4633
    %v5766 = vunpack.c.l.b16 %v4634
    %v5767 = vunpack.c.h.b16 %v4634
    %v5768 = vunpack.c.l.b16 %v4635
    %v5769 = vunpack.c.l.b16 %v4636
    %v5770 = vunpack.c.h.b16 %v4636
    %v5771 = vunpack.c.l.b16 %v4637
    %v5772 = vunpack.c.h.b16 %v4637
    %v5773 = vunpack.c.l.b16 %v4638
    %v5774 = vunpack.c.h.b16 %v4638
    %v5775 = vunpack.c.l.b16 %v4639
    %v5776 = vunpack.c.l.b16 %v4640
    %v5777 = vunpack.c.h.b16 %v4640
    %v5778 = vunpack.c.l.b16 %v4641
    %v5779 = vunpack.c.h.b16 %v4641
    %v5780 = vunpack.c.l.b16 %v4642
    %v5781 = vunpack.c.h.b16 %v4642
    %v5782 = vunpack.c.l.b16 %v4643
    %v5783 = vunpack.c.l.b16 %v4644
    %v5784 = vunpack.c.h.b16 %v4644
    %v5785 = vunpack.c.l.b16 %v4645
    %v5786 = vunpack.c.h.b16 %v4645
    %v5787 = vunpack.c.l.b16 %v4646
    %v5788 = vunpack.c.h.b16 %v4646
    %v5789 = vunpack.c.l.b16 %v4647
    %v5790 = vunpack.c.l.b16 %v4648
    %v5791 = vunpack.c.h.b16 %v4648
    %v5792 = vunpack.c.l.b16 %v4649
    %v5793 = vunpack.c.h.b16 %v4649
    %v5794 = vunpack.c.l.b16 %v4650
    %v5795 = vunpack.c.h.b16 %v4650
    %v5796 = vunpack.c.l.b16 %v4651
    %v5797 = vunpack.c.l.b16 %v4652
    %v5798 = vunpack.c.h.b16 %v4652
    %v5799 = vunpack.c.l.b16 %v4653
    %v5800 = vunpack.c.h.b16 %v4653
    %v5801 = vunpack.c.l.b16 %v4654
    %v5802 = vunpack.c.h.b16 %v4654
    %v5803 = vunpack.c.l.b16 %v4655
    %v5804 = vunpack.c.l.b16 %v4656
    %v5805 = vunpack.c.h.b16 %v4656
    %v5806 = vunpack.c.l.b16 %v4657
    %v5807 = vunpack.c.h.b16 %v4657
    %v5808 = vunpack.c.l.b16 %v4658
    %v5809 = vunpack.c.h.b16 %v4658
    %v5810 = vunpack.c.l.b16 %v4659
    %v5811 = vunpack.c.l.b16 %v4660
    %v5812 = vunpack.c.h.b16 %v4660
    %v5813 = vunpack.c.l.b16 %v4661
    %v5814 = vunpack.c.h.b16 %v4661
    %v5815 = vunpack.c.l.b16 %v4662
    %v5816 = vunpack.c.h.b16 %v4662
    %v5817 = vunpack.c.l.b16 %v4663
    %v5818 = vunpack.c.l.b16 %v4664
    %v5819 = vunpack.c.h.b16 %v4664
    %v5820 = vunpack.c.l.b16 %v4665
    %v5821 = vunpack.c.h.b16 %v4665
    %v5822 = vunpack.c.l.b16 %v4666
    %v5823 = vunpack.c.h.b16 %v4666
    %v5824 = vunpack.c.l.b16 %v4667
    %v5825 = vunpack.c.l.b16 %v4668
    %v5826 = vunpack.c.h.b16 %v4668
    %v5827 = vunpack.c.l.b16 %v4669
    %v5828 = vunpack.c.h.b16 %v4669
    %v5829 = vunpack.c.l.b16 %v4670
    %v5830 = vunpack.c.h.b16 %v4670
    %v5831 = vunpack.c.l.b16 %v4671
    %v5832 = vunpack.c.l.b16 %v4672
    %v5833 = vunpack.c.h.b16 %v4672
    %v5834 = vunpack.c.l.b16 %v4673
    %v5835 = vunpack.c.h.b16 %v4673
    %v5836 = vunpack.c.l.b16 %v4674
    %v5837 = vunpack.c.h.b16 %v4674
    %v5838 = vunpack.c.l.b16 %v4675
    %v5839 = vunpack.c.l.b16 %v4676
    %v5840 = vunpack.c.h.b16 %v4676
    %v5841 = vunpack.c.l.b16 %v4677
    %v5842 = vunpack.c.h.b16 %v4677
    %v5843 = vunpack.c.l.b16 %v4678
    %v5844 = vunpack.c.h.b16 %v4678
    %v5845 = vunpack.c.l.b16 %v4679
    %v5846 = vunpack.c.l.b16 %v4680
    %v5847 = vunpack.c.h.b16 %v4680
    %v5848 = vunpack.c.l.b16 %v4681
    %v5849 = vunpack.c.h.b16 %v4681
    %v5850 = vunpack.c.l.b16 %v4682
    %v5851 = vunpack.c.h.b16 %v4682
    %v5852 = vunpack.c.l.b16 %v4683
    %v5853 = vunpack.c.l.b16 %v4684
    %v5854 = vunpack.c.h.b16 %v4684
    %v5855 = vunpack.c.l.b16 %v4685
    %v5856 = vunpack.c.h.b16 %v4685
    %v5857 = vunpack.c.l.b16 %v4686
    %v5858 = vunpack.c.h.b16 %v4686
    %v5859 = vunpack.c.l.b16 %v4687
    %v5860 = vunpack.c.l.b16 %v4688
    %v5861 = vunpack.c.h.b16 %v4688
    %v5862 = vunpack.c.l.b16 %v4689
    %v5863 = vunpack.c.h.b16 %v4689
    %v5864 = vunpack.c.l.b16 %v4690
    %v5865 = vunpack.c.h.b16 %v4690
    %v5866 = vunpack.c.l.b16 %v4691
    %v5867 = vunpack.c.l.b16 %v4692
    %v5868 = vunpack.c.h.b16 %v4692
    %v5869 = vunpack.c.l.b16 %v4693
    %v5870 = vunpack.c.h.b16 %v4693
    %v5871 = vunpack.c.l.b16 %v4694
    %v5872 = vunpack.c.h.b16 %v4694
    %v5873 = vunpack.c.l.b16 %v4695
    %v5874 = vunpack.c.l.b16 %v4696
    %v5875 = vunpack.c.h.b16 %v4696
    %v5876 = vunpack.c.l.b16 %v4697
    %v5877 = vunpack.c.h.b16 %v4697
    %v5878 = vunpack.c.l.b16 %v4698
    %v5879 = vunpack.c.h.b16 %v4698
    %v5880 = vunpack.c.l.b16 %v4699
    %v5881 = vunpack.c.l.b16 %v4700
    %v5882 = vunpack.c.h.b16 %v4700
    %v5883 = vunpack.c.l.b16 %v4701
    %v5884 = vunpack.c.h.b16 %v4701
    %v5885 = vunpack.c.l.b16 %v4702
    %v5886 = vunpack.c.h.b16 %v4702
    %v5887 = vunpack.c.l.b16 %v4703
    %v5888 = vunpack.c.l.b16 %v4704
    %v5889 = vunpack.c.h.b16 %v4704
    %v5890 = vunpack.c.l.b16 %v4705
    %v5891 = vunpack.c.h.b16 %v4705
    %v5892 = vunpack.c.l.b16 %v4706
    %v5893 = vunpack.c.h.b16 %v4706
    %v5894 = vunpack.c.l.b16 %v4707
    %v5895 = vunpack.c.l.b16 %v4708
    %v5896 = vunpack.c.h.b16 %v4708
    %v5897 = vunpack.c.l.b16 %v4709
    %v5898 = vunpack.c.h.b16 %v4709
    %v5899 = vunpack.c.l.b16 %v4710
    %v5900 = vunpack.c.h.b16 %v4710
    %v5901 = vunpack.c.l.b16 %v4711
    %v5902 = vunpack.c.l.b16 %v4712
    %v5903 = vunpack.c.h.b16 %v4712
    %v5904 = vunpack.c.l.b16 %v4713
    %v5905 = vunpack.c.h.b16 %v4713
    %v5906 = vunpack.c.l.b16 %v4714
    %v5907 = vunpack.c.h.b16 %v4714
    %v5908 = vunpack.c.l.b16 %v4715
    %v5909 = vunpack.c.l.b16 %v4716
    %v5910 = vunpack.c.h.b16 %v4716
    %v5911 = vunpack.c.l.b16 %v4717
    %v5912 = vunpack.c.h.b16 %v4717
    %v5913 = vunpack.c.l.b16 %v4718
    %v5914 = vunpack.c.h.b16 %v4718
    %v5915 = vunpack.c.l.b16 %v4719
    %v5916 = vunpack.c.l.b16 %v4720
    %v5917 = vunpack.c.h.b16 %v4720
    %v5918 = vunpack.c.l.b16 %v4721
    %v5919 = vunpack.c.h.b16 %v4721
    %v5920 = vunpack.c.l.b16 %v4722
    %v5921 = vunpack.c.h.b16 %v4722
    %v5922 = vunpack.c.l.b16 %v4723
    %v5923 = vunpack.c.l.b16 %v4724
    %v5924 = vunpack.c.h.b16 %v4724
    %v5925 = vunpack.c.l.b16 %v4725
    %v5926 = vunpack.c.h.b16 %v4725
    %v5927 = vunpack.c.l.b16 %v4726
    %v5928 = vunpack.c.h.b16 %v4726
    %v5929 = vunpack.c.l.b16 %v4727
    %v5930 = vunpack.c.l.b16 %v4728
    %v5931 = vunpack.c.h.b16 %v4728
    %v5932 = vunpack.c.l.b16 %v4729
    %v5933 = vunpack.c.h.b16 %v4729
    %v5934 = vunpack.c.l.b16 %v4730
    %v5935 = vunpack.c.h.b16 %v4730
    %v5936 = vunpack.c.l.b16 %v4731
    %v5937 = vunpack.c.l.b16 %v4732
    %v5938 = vunpack.c.h.b16 %v4732
    %v5939 = vunpack.c.l.b16 %v4733
    %v5940 = vunpack.c.h.b16 %v4733
    %v5941 = vunpack.c.l.b16 %v4734
    %v5942 = vunpack.c.h.b16 %v4734
    %v5943 = vunpack.c.l.b16 %v4735
    %v5944 = vunpack.c.l.b16 %v4736
    %v5945 = vunpack.c.h.b16 %v4736
    %v5946 = vunpack.c.l.b16 %v4737
    %v5947 = vunpack.c.h.b16 %v4737
    %v5948 = vunpack.c.l.b16 %v4738
    %v5949 = vunpack.c.h.b16 %v4738
    %v5950 = vunpack.c.l.b16 %v4739
    %v5951 = vunpack.c.l.b16 %v4740
    %v5952 = vunpack.c.h.b16 %v4740
    %v5953 = vunpack.c.l.b16 %v4741
    %v5954 = vunpack.c.h.b16 %v4741
    %v5955 = vunpack.c.l.b16 %v4742
    %v5956 = vunpack.c.h.b16 %v4742
    %v5957 = vunpack.c.l.b16 %v4743
    %v5958 = vunpack.c.l.b16 %v4744
    %v5959 = vunpack.c.h.b16 %v4744
    %v5960 = vunpack.c.l.b16 %v4745
    %v5961 = vunpack.c.h.b16 %v4745
    %v5962 = vunpack.c.l.b16 %v4746
    %v5963 = vunpack.c.h.b16 %v4746
    %v5964 = vunpack.c.l.b16 %v4747
    %v5965 = vunpack.c.l.b16 %v4748
    %v5966 = vunpack.c.h.b16 %v4748
    %v5967 = vunpack.c.l.b16 %v4749
    %v5968 = vunpack.c.h.b16 %v4749
    %v5969 = vunpack.c.l.b16 %v4750
    %v5970 = vunpack.c.h.b16 %v4750
    %v5971 = vunpack.c.l.b16 %v4751
    %v5972 = vunpack.c.l.b16 %v4752
    %v5973 = vunpack.c.h.b16 %v4752
    %v5974 = vunpack.c.l.b16 %v4753
    %v5975 = vunpack.c.h.b16 %v4753
    %v5976 = vunpack.c.l.b16 %v4754
    %v5977 = vunpack.c.h.b16 %v4754
    %v5978 = vunpack.c.l.b16 %v4755
    %v5979 = vunpack.c.l.b16 %v4756
    %v5980 = vunpack.c.h.b16 %v4756
    %v5981 = vunpack.c.l.b16 %v4757
    %v5982 = vunpack.c.h.b16 %v4757
    %v5983 = vunpack.c.l.b16 %v4758
    %v5984 = vunpack.c.h.b16 %v4758
    %v5985 = vunpack.c.l.b16 %v4759
    %v5986 = vunpack.c.l.b16 %v4760
    %v5987 = vunpack.c.h.b16 %v4760
    %v5988 = vunpack.c.l.b16 %v4761
    %v5989 = vunpack.c.h.b16 %v4761
    %v5990 = vunpack.c.l.b16 %v4762
    %v5991 = vunpack.c.h.b16 %v4762
    %v5992 = vunpack.c.l.b16 %v4763
    %v5993 = vunpack.c.l.b16 %v4764
    %v5994 = vunpack.c.h.b16 %v4764
    %v5995 = vunpack.c.l.b16 %v4765
    %v5996 = vunpack.c.h.b16 %v4765
    %v5997 = vunpack.c.l.b16 %v4766
    %v5998 = vunpack.c.h.b16 %v4766
    %v5999 = vunpack.c.l.b16 %v4767
    %v6000 = vunpack.c.l.b16 %v4768
    %v6001 = vunpack.c.h.b16 %v4768
    %v6002 = vunpack.c.l.b16 %v4769
    %v6003 = vunpack.c.h.b16 %v4769
    %v6004 = vunpack.c.l.b16 %v4770
    %v6005 = vunpack.c.h.b16 %v4770
    %v6006 = vunpack.c.l.b16 %v4771
    %v6007 = vunpack.c.l.b16 %v4772
    %v6008 = vunpack.c.h.b16 %v4772
    %v6009 = vunpack.c.l.b16 %v4773
    %v6010 = vunpack.c.h.b16 %v4773
    %v6011 = vunpack.c.l.b16 %v4774
    %v6012 = vunpack.c.h.b16 %v4774
    %v6013 = vunpack.c.l.b16 %v4775
    %v6014 = vunpack.c.l.b16 %v4776
    %v6015 = vunpack.c.h.b16 %v4776
    %v6016 = vunpack.c.l.b16 %v4777
    %v6017 = vunpack.c.h.b16 %v4777
    %v6018 = vunpack.c.l.b16 %v4778
    %v6019 = vunpack.c.h.b16 %v4778
    %v6020 = vunpack.c.l.b16 %v4779
    %v6021 = vunpack.c.l.b16 %v4780
    %v6022 = vunpack.c.h.b16 %v4780
    %v6023 = vunpack.c.l.b16 %v4781
    %v6024 = vunpack.c.h.b16 %v4781
    %v6025 = vunpack.c.l.b16 %v4782
    %v6026 = vunpack.c.h.b16 %v4782
    %v6027 = vunpack.c.l.b16 %v4783
    %v6028 = vunpack.c.l.b16 %v4784
    %v6029 = vunpack.c.h.b16 %v4784
    %v6030 = vunpack.c.l.b16 %v4785
    %v6031 = vunpack.c.h.b16 %v4785
    %v6032 = vunpack.c.l.b16 %v4786
    %v6033 = vunpack.c.h.b16 %v4786
    %v6034 = vunpack.c.l.b16 %v4787
    %v6035 = vunpack.c.l.b16 %v4788
    %v6036 = vunpack.c.h.b16 %v4788
    %v6037 = vunpack.c.l.b16 %v4789
    %v6038 = vunpack.c.h.b16 %v4789
    %v6039 = vunpack.c.l.b16 %v4790
    %v6040 = vunpack.c.h.b16 %v4790
    %v6041 = vunpack.c.l.b16 %v4791
    %v6042 = vunpack.c.l.b16 %v4792
    %v6043 = vunpack.c.h.b16 %v4792
    %v6044 = vunpack.c.l.b16 %v4793
    %v6045 = vunpack.c.h.b16 %v4793
    %v6046 = vunpack.c.l.b16 %v4794
    %v6047 = vunpack.c.h.b16 %v4794
    %v6048 = vunpack.c.l.b16 %v4795
    %v6049 = vunpack.c.l.b16 %v4796
    %v6050 = vunpack.c.h.b16 %v4796
    %v6051 = vunpack.c.l.b16 %v4797
    %v6052 = vunpack.c.h.b16 %v4797
    %v6053 = vunpack.c.l.b16 %v4798
    %v6054 = vunpack.c.h.b16 %v4798
    %v6055 = vunpack.c.l.b16 %v4799
    %v6056 = vunpack.c.l.b16 %v4800
    %v6057 = vunpack.c.h.b16 %v4800
    %v6058 = vunpack.c.l.b16 %v4801
    %v6059 = vunpack.c.h.b16 %v4801
    %v6060 = vunpack.c.l.b16 %v4802
    %v6061 = vunpack.c.h.b16 %v4802
    %v6062 = vunpack.c.l.b16 %v4803
    %v6063 = vunpack.c.l.b16 %v4804
    %v6064 = vunpack.c.h.b16 %v4804
    %v6065 = vunpack.c.l.b16 %v4805
    %v6066 = vunpack.c.h.b16 %v4805
    %v6067 = vunpack.c.l.b16 %v4806
    %v6068 = vunpack.c.h.b16 %v4806
    %v6069 = vunpack.c.l.b16 %v4807
    %v6070 = vunpack.c.l.b16 %v4808
    %v6071 = vunpack.c.h.b16 %v4808
    %v6072 = vunpack.c.l.b16 %v4809
    %v6073 = vunpack.c.h.b16 %v4809
    %v6074 = vunpack.c.l.b16 %v4810
    %v6075 = vunpack.c.h.b16 %v4810
    %v6076 = vunpack.c.l.b16 %v4811
    %v6077 = vunpack.c.l.b16 %v4812
    %v6078 = vunpack.c.h.b16 %v4812
    %v6079 = vunpack.c.l.b16 %v4813
    %v6080 = vunpack.c.h.b16 %v4813
    %v6081 = vunpack.c.l.b16 %v4814
    %v6082 = vunpack.c.h.b16 %v4814
    %v6083 = vunpack.c.l.b16 %v4815
    %v6084 = vunpack.c.l.b16 %v4816
    %v6085 = vunpack.c.h.b16 %v4816
    %v6086 = vunpack.c.l.b16 %v4817
    %v6087 = vunpack.c.h.b16 %v4817
    %v6088 = vunpack.c.l.b16 %v4818
    %v6089 = vunpack.c.h.b16 %v4818
    %v6090 = vunpack.c.l.b16 %v4819
    %v6091 = vunpack.c.l.b16 %v4820
    %v6092 = vunpack.c.h.b16 %v4820
    %v6093 = vunpack.c.l.b16 %v4821
    %v6094 = vunpack.c.h.b16 %v4821
    %v6095 = vunpack.c.l.b16 %v4822
    %v6096 = vunpack.c.h.b16 %v4822
    %v6097 = vunpack.c.l.b16 %v4823
    %v6098 = vunpack.c.l.b16 %v4824
    %v6099 = vunpack.c.h.b16 %v4824
    %v6100 = vunpack.c.l.b16 %v4825
    %v6101 = vunpack.c.h.b16 %v4825
    %v6102 = vunpack.c.l.b16 %v4826
    %v6103 = vunpack.c.h.b16 %v4826
    %v6104 = vunpack.c.l.b16 %v4827
    %v6105 = vunpack.c.l.b16 %v4828
    %v6106 = vunpack.c.h.b16 %v4828
    %v6107 = vunpack.c.l.b16 %v4829
    %v6108 = vunpack.c.h.b16 %v4829
    %v6109 = vunpack.c.l.b16 %v4830
    %v6110 = vunpack.c.h.b16 %v4830
    %v6111 = vunpack.c.l.b16 %v4831
    %v6112 = vunpack.c.l.b16 %v4832
    %v6113 = vunpack.c.h.b16 %v4832
    %v6114 = vunpack.c.l.b16 %v4833
    %v6115 = vunpack.c.h.b16 %v4833
    %v6116 = vunpack.c.l.b16 %v4834
    %v6117 = vunpack.c.h.b16 %v4834
    %v6118 = vunpack.c.l.b16 %v4835
    %v6119 = vunpack.c.l.b16 %v4836
    %v6120 = vunpack.c.h.b16 %v4836
    %v6121 = vunpack.c.l.b16 %v4837
    %v6122 = vunpack.c.h.b16 %v4837
    %v6123 = vunpack.c.l.b16 %v4838
    %v6124 = vunpack.c.h.b16 %v4838
    %v6125 = vunpack.c.l.b16 %v4839
    %v6126 = vunpack.c.l.b16 %v4840
    %v6127 = vunpack.c.h.b16 %v4840
    %v6128 = vunpack.c.l.b16 %v4841
    %v6129 = vunpack.c.h.b16 %v4841
    %v6130 = vunpack.c.l.b16 %v4842
    %v6131 = vunpack.c.h.b16 %v4842
    %v6132 = vunpack.c.l.b16 %v4843
    %v6133 = vunpack.c.l.b16 %v4844
    %v6134 = vunpack.c.h.b16 %v4844
    %v6135 = vunpack.c.l.b16 %v4845
    %v6136 = vunpack.c.h.b16 %v4845
    %v6137 = vunpack.c.l.b16 %v4846
    %v6138 = vunpack.c.h.b16 %v4846
    %v6139 = vunpack.c.l.b16 %v4847
    %v6140 = vunpack.c.l.b16 %v4848
    %v6141 = vunpack.c.h.b16 %v4848
    %v6142 = vunpack.c.l.b16 %v4849
    %v6143 = vunpack.c.h.b16 %v4849
    %v6144 = vunpack.c.l.b16 %v4850
    %v6145 = vunpack.c.h.b16 %v4850
    %v6146 = vunpack.c.l.b16 %v4851
    %v6147 = vunpack.c.l.b16 %v4852
    %v6148 = vunpack.c.h.b16 %v4852
    %v6149 = vunpack.c.l.b16 %v4853
    %v6150 = vunpack.c.h.b16 %v4853
    %v6151 = vunpack.c.l.b16 %v4854
    %v6152 = vunpack.c.h.b16 %v4854
    %v6153 = vunpack.c.l.b16 %v4855
    %v6154 = vunpack.c.l.b16 %v4856
    %v6155 = vunpack.c.h.b16 %v4856
    %v6156 = vunpack.c.l.b16 %v4857
    %v6157 = vunpack.c.h.b16 %v4857
    %v6158 = vunpack.c.l.b16 %v4858
    %v6159 = vunpack.c.h.b16 %v4858
    %v6160 = vunpack.c.l.b16 %v4859
    %v6161 = vunpack.c.l.b16 %v4860
    %v6162 = vunpack.c.h.b16 %v4860
    %v6163 = vunpack.c.l.b16 %v4861
    %v6164 = vunpack.c.h.b16 %v4861
    %v6165 = vunpack.c.l.b16 %v4862
    %v6166 = vunpack.c.h.b16 %v4862
    %v6167 = vunpack.c.l.b16 %v4863
    %v6168 = vunpack.c.l.b16 %v4864
    %v6169 = vunpack.c.h.b16 %v4864
    %v6170 = vunpack.c.l.b16 %v4865
    %v6171 = vunpack.c.h.b16 %v4865
    %v6172 = vunpack.c.l.b16 %v4866
    %v6173 = vunpack.c.h.b16 %v4866
    %v6174 = vunpack.c.l.b16 %v4867
    %v6175 = vunpack.c.l.b16 %v4868
    %v6176 = vunpack.c.h.b16 %v4868
    %v6177 = vunpack.c.l.b16 %v4869
    %v6178 = vunpack.c.h.b16 %v4869
    %v6179 = vunpack.c.l.b16 %v4870
    %v6180 = vunpack.c.h.b16 %v4870
    %v6181 = vunpack.c.l.b16 %v4871
    %v6182 = vunpack.c.l.b16 %v4872
    %v6183 = vunpack.c.h.b16 %v4872
    %v6184 = vunpack.c.l.b16 %v4873
    %v6185 = vunpack.c.h.b16 %v4873
    %v6186 = vunpack.c.l.b16 %v4874
    %v6187 = vunpack.c.h.b16 %v4874
    %v6188 = vunpack.c.l.b16 %v4875
    %v6189 = vunpack.c.l.b16 %v4876
    %v6190 = vunpack.c.h.b16 %v4876
    %v6191 = vunpack.c.l.b16 %v4877
    %v6192 = vunpack.c.h.b16 %v4877
    %v6193 = vunpack.c.l.b16 %v4878
    %v6194 = vunpack.c.h.b16 %v4878
    %v6195 = vunpack.c.l.b16 %v4879
    %v6196 = vunpack.c.l.b16 %v4880
    %v6197 = vunpack.c.h.b16 %v4880
    %v6198 = vunpack.c.l.b16 %v4881
    %v6199 = vunpack.c.h.b16 %v4881
    %v6200 = vunpack.c.l.b16 %v4882
    %v6201 = vunpack.c.h.b16 %v4882
    %v6202 = vunpack.c.l.b16 %v4883
    %v6203 = vunpack.c.l.b16 %v4884
    %v6204 = vunpack.c.h.b16 %v4884
    %v6205 = vunpack.c.l.b16 %v4885
    %v6206 = vunpack.c.h.b16 %v4885
    %v6207 = vunpack.c.l.b16 %v4886
    %v6208 = vunpack.c.h.b16 %v4886
    %v6209 = vunpack.c.l.b16 %v4887
    %v6210 = vunpack.c.l.b16 %v4888
    %v6211 = vunpack.c.h.b16 %v4888
    %v6212 = vunpack.c.l.b16 %v4889
    %v6213 = vunpack.c.h.b16 %v4889
    %v6214 = vunpack.c.l.b16 %v4890
    %v6215 = vunpack.c.h.b16 %v4890
    %v6216 = vunpack.c.l.b16 %v4891
    %v6217 = vunpack.c.l.b16 %v4892
    %v6218 = vunpack.c.h.b16 %v4892
    %v6219 = vunpack.c.l.b16 %v4893
    %v6220 = vunpack.c.h.b16 %v4893
    %v6221 = vunpack.c.l.b16 %v4894
    %v6222 = vunpack.c.h.b16 %v4894
    %v6223 = vunpack.c.l.b16 %v4895
    %v6224 = vunpack.c.l.b16 %v4896
    %v6225 = vunpack.c.h.b16 %v4896
    %v6226 = vunpack.c.l.b16 %v4897
    %v6227 = vunpack.c.h.b16 %v4897
    %v6228 = vunpack.c.l.b16 %v4898
    %v6229 = vunpack.c.h.b16 %v4898
    %v6230 = vunpack.c.l.b16 %v4899
    %v6231 = vunpack.c.l.b16 %v4900
    %v6232 = vunpack.c.h.b16 %v4900
    %v6233 = vunpack.c.l.b16 %v4901
    %v6234 = vunpack.c.h.b16 %v4901
    %v6235 = vunpack.c.l.b16 %v4902
    %v6236 = vunpack.c.h.b16 %v4902
    %v6237 = vunpack.c.l.b16 %v4903
    %v6238 = vunpack.c.l.b16 %v4904
    %v6239 = vunpack.c.h.b16 %v4904
    %v6240 = vunpack.c.l.b16 %v4905
    %v6241 = vunpack.c.h.b16 %v4905
    %v6242 = vunpack.c.l.b16 %v4906
    %v6243 = vunpack.c.h.b16 %v4906
    %v6244 = vunpack.c.l.b16 %v4907
    %v6245 = vunpack.c.l.b16 %v4908
    %v6246 = vunpack.c.h.b16 %v4908
    %v6247 = vunpack.c.l.b16 %v4909
    %v6248 = vunpack.c.h.b16 %v4909
    %v6249 = vunpack.c.l.b16 %v4910
    %v6250 = vunpack.c.h.b16 %v4910
    %v6251 = vunpack.c.l.b16 %v4911
    %v6252 = vunpack.c.l.b16 %v4912
    %v6253 = vunpack.c.h.b16 %v4912
    %v6254 = vunpack.c.l.b16 %v4913
    %v6255 = vunpack.c.h.b16 %v4913
    %v6256 = vunpack.c.l.b16 %v4914
    %v6257 = vunpack.c.h.b16 %v4914
    %v6258 = vunpack.c.l.b16 %v4915
    %v6259 = vunpack.c.l.b16 %v4916
    %v6260 = vunpack.c.h.b16 %v4916
    %v6261 = vunpack.c.l.b16 %v4917
    %v6262 = vunpack.c.h.b16 %v4917
    %v6263 = vunpack.c.l.b16 %v4918
    %v6264 = vunpack.c.h.b16 %v4918
    %v6265 = vunpack.c.l.b16 %v4919
    %v6266 = vunpack.c.l.b16 %v4920
    %v6267 = vunpack.c.h.b16 %v4920
    %v6268 = vunpack.c.l.b16 %v4921
    %v6269 = vunpack.c.h.b16 %v4921
    %v6270 = vunpack.c.l.b16 %v4922
    %v6271 = vunpack.c.h.b16 %v4922
    %v6272 = vunpack.c.l.b16 %v4923
    %v6273 = vunpack.c.l.b16 %v4924
    %v6274 = vunpack.c.h.b16 %v4924
    %v6275 = vunpack.c.l.b16 %v4925
    %v6276 = vunpack.c.h.b16 %v4925
    %v6277 = vunpack.c.l.b16 %v4926
    %v6278 = vunpack.c.h.b16 %v4926
    %v6279 = vunpack.c.l.b16 %v4927
    %v6280 = vunpack.c.l.b16 %v4928
    %v6281 = vunpack.c.h.b16 %v4928
    %v6282 = vunpack.c.l.b16 %v4929
    %v6283 = vunpack.c.h.b16 %v4929
    %v6284 = vunpack.c.l.b16 %v4930
    %v6285 = vunpack.c.h.b16 %v4930
    %v6286 = vunpack.c.l.b16 %v4931
    %v6287 = vunpack.c.l.b16 %v4932
    %v6288 = vunpack.c.h.b16 %v4932
    %v6289 = vunpack.c.l.b16 %v4933
    %v6290 = vunpack.c.h.b16 %v4933
    %v6291 = vunpack.c.l.b16 %v4934
    %v6292 = vunpack.c.h.b16 %v4934
    %v6293 = vunpack.c.l.b16 %v4935
    %v6294 = vunpack.c.l.b16 %v4936
    %v6295 = vunpack.c.h.b16 %v4936
    %v6296 = vunpack.c.l.b16 %v4937
    %v6297 = vunpack.c.h.b16 %v4937
    %v6298 = vunpack.c.l.b16 %v4938
    %v6299 = vunpack.c.h.b16 %v4938
    %v6300 = vunpack.c.l.b16 %v4939
    %v6301 = vunpack.c.l.b16 %v4940
    %v6302 = vunpack.c.h.b16 %v4940
    %v6303 = vunpack.c.l.b16 %v4941
    %v6304 = vunpack.c.h.b16 %v4941
    %v6305 = vunpack.c.l.b16 %v4942
    %v6306 = vunpack.c.h.b16 %v4942
    %v6307 = vunpack.c.l.b16 %v4943
    %v6308 = vunpack.c.l.b16 %v4944
    %v6309 = vunpack.c.h.b16 %v4944
    %v6310 = vunpack.c.l.b16 %v4945
    %v6311 = vunpack.c.h.b16 %v4945
    %v6312 = vunpack.c.l.b16 %v4946
    %v6313 = vunpack.c.h.b16 %v4946
    %v6314 = vunpack.c.l.b16 %v4947
    %v6315 = vunpack.c.l.b16 %v4948
    %v6316 = vunpack.c.h.b16 %v4948
    %v6317 = vunpack.c.l.b16 %v4949
    %v6318 = vunpack.c.h.b16 %v4949
    %v6319 = vunpack.c.l.b16 %v4950
    %v6320 = vunpack.c.h.b16 %v4950
    %v6321 = vunpack.c.l.b16 %v4951
    %v6322 = vunpack.c.l.b16 %v4952
    %v6323 = vunpack.c.h.b16 %v4952
    %v6324 = vunpack.c.l.b16 %v4953
    %v6325 = vunpack.c.h.b16 %v4953
    %v6326 = vunpack.c.l.b16 %v4954
    %v6327 = vunpack.c.h.b16 %v4954
    %v6328 = vunpack.c.l.b16 %v4955
    %v6329 = vunpack.c.l.b16 %v4956
    %v6330 = vunpack.c.h.b16 %v4956
    %v6331 = vunpack.c.l.b16 %v4957
    %v6332 = vunpack.c.h.b16 %v4957
    %v6333 = vunpack.c.l.b16 %v4958
    %v6334 = vunpack.c.h.b16 %v4958
    %v6335 = vunpack.c.l.b16 %v4959
    %v6336 = vunpack.c.l.b16 %v4960
    %v6337 = vunpack.c.h.b16 %v4960
    %v6338 = vunpack.c.l.b16 %v4961
    %v6339 = vunpack.c.h.b16 %v4961
    %v6340 = vunpack.c.l.b16 %v4962
    %v6341 = vunpack.c.h.b16 %v4962
    %v6342 = vunpack.c.l.b16 %v4963
    %v6343 = vunpack.c.l.b16 %v4964
    %v6344 = vunpack.c.h.b16 %v4964
    %v6345 = vunpack.c.l.b16 %v4965
    %v6346 = vunpack.c.h.b16 %v4965
    %v6347 = vunpack.c.l.b16 %v4966
    %v6348 = vunpack.c.h.b16 %v4966
    %v6349 = vunpack.c.l.b16 %v4967
    %v6350 = vunpack.c.l.b16 %v4968
    %v6351 = vunpack.c.h.b16 %v4968
    %v6352 = vunpack.c.l.b16 %v4969
    %v6353 = vunpack.c.h.b16 %v4969
    %v6354 = vunpack.c.l.b16 %v4970
    %v6355 = vunpack.c.h.b16 %v4970
    %v6356 = vunpack.c.l.b16 %v4971
    %v6357 = vunpack.c.l.b16 %v4972
    %v6358 = vunpack.c.h.b16 %v4972
    %v6359 = vunpack.c.l.b16 %v4973
    %v6360 = vunpack.c.h.b16 %v4973
    %v6361 = vunpack.c.l.b16 %v4974
    %v6362 = vunpack.c.h.b16 %v4974
    %v6363 = vunpack.c.l.b16 %v4975
    %v6364 = vunpack.c.l.b16 %v4976
    %v6365 = vunpack.c.h.b16 %v4976
    %v6366 = vunpack.c.l.b16 %v4977
    %v6367 = vunpack.c.h.b16 %v4977
    %v6368 = vunpack.c.l.b16 %v4978
    %v6369 = vunpack.c.h.b16 %v4978
    %v6370 = vunpack.c.l.b16 %v4979
    %v6371 = vunpack.c.l.b16 %v4980
    %v6372 = vunpack.c.h.b16 %v4980
    %v6373 = vunpack.c.l.b16 %v4981
    %v6374 = vunpack.c.h.b16 %v4981
    %v6375 = vunpack.c.l.b16 %v4982
    %v6376 = vunpack.c.h.b16 %v4982
    %v6377 = vunpack.c.l.b16 %v4983
    %v6378 = vunpack.c.l.b16 %v4984
    %v6379 = vunpack.c.h.b16 %v4984
    %v6380 = vunpack.c.l.b16 %v4985
    %v6381 = vunpack.c.h.b16 %v4985
    %v6382 = vunpack.c.l.b16 %v4986
    %v6383 = vunpack.c.h.b16 %v4986
    %v6384 = vunpack.c.l.b16 %v4987
    %v6385 = vunpack.c.l.b16 %v4988
    %v6386 = vunpack.c.h.b16 %v4988
    %v6387 = vunpack.c.l.b16 %v4989
    %v6388 = vunpack.c.h.b16 %v4989
    %v6389 = vunpack.c.l.b16 %v4990
    %v6390 = vunpack.c.h.b16 %v4990
    %v6391 = vunpack.c.l.b16 %v4991
    %v6392 = vunpack.c.l.b16 %v4992
    %v6393 = vunpack.c.h.b16 %v4992
    %v6394 = vunpack.c.l.b16 %v4993
    %v6395 = vunpack.c.h.b16 %v4993
    %v6396 = vunpack.c.l.b16 %v4994
    %v6397 = vunpack.c.h.b16 %v4994
    %v6398 = vunpack.c.l.b16 %v4995
    %v6399 = vunpack.c.l.b16 %v4996
    %v6400 = vunpack.c.h.b16 %v4996
    %v6401 = vunpack.c.l.b16 %v4997
    %v6402 = vunpack.c.h.b16 %v4997
    %v6403 = vunpack.c.l.b16 %v4998
    %v6404 = vunpack.c.h.b16 %v4998
    %v6405 = vunpack.c.l.b16 %v4999
    %v6406 = vunpack.c.l.b16 %v5000
    %v6407 = vunpack.c.h.b16 %v5000
    %v6408 = vunpack.c.l.b16 %v5001
    %v6409 = vunpack.c.h.b16 %v5001
    %v6410 = vunpack.c.l.b16 %v5002
    %v6411 = vunpack.c.h.b16 %v5002
    %v6412 = vunpack.c.l.b16 %v5003
    %v6413 = vunpack.c.l.b16 %v5004
    %v6414 = vunpack.c.h.b16 %v5004
    %v6415 = vunpack.c.l.b16 %v5005
    %v6416 = vunpack.c.h.b16 %v5005
    %v6417 = vunpack.c.l.b16 %v5006
    %v6418 = vunpack.c.h.b16 %v5006
    %v6419 = vunpack.c.l.b16 %v5007
    %v6420 = vunpack.c.l.b16 %v5008
    %v6421 = vunpack.c.h.b16 %v5008
    %v6422 = vunpack.c.l.b16 %v5009
    %v6423 = vunpack.c.h.b16 %v5009
    %v6424 = vunpack.c.l.b16 %v5010
    %v6425 = vunpack.c.h.b16 %v5010
    %v6426 = vunpack.c.l.b16 %v5011
    %v6427 = vunpack.c.l.b16 %v5012
    %v6428 = vunpack.c.h.b16 %v5012
    %v6429 = vunpack.c.l.b16 %v5013
    %v6430 = vunpack.c.h.b16 %v5013
    %v6431 = vunpack.c.l.b16 %v5014
    %v6432 = vunpack.c.h.b16 %v5014
    %v6433 = vunpack.c.l.b16 %v5015
    %v6434 = vunpack.c.l.b16 %v5016
    %v6435 = vunpack.c.h.b16 %v5016
    %v6436 = vunpack.c.l.b16 %v5017
    %v6437 = vunpack.c.h.b16 %v5017
    %v6438 = vunpack.c.l.b16 %v5018
    %v6439 = vunpack.c.h.b16 %v5018
    %v6440 = vunpack.c.l.b16 %v5019
    %v6441 = vunpack.c.l.b16 %v5020
    %v6442 = vunpack.c.h.b16 %v5020
    %v6443 = vunpack.c.l.b16 %v5021
    %v6444 = vunpack.c.h.b16 %v5021
    %v6445 = vunpack.c.l.b16 %v5022
    %v6446 = vunpack.c.h.b16 %v5022
    %v6447 = vunpack.c.l.b16 %v5023
    %v6448 = vunpack.c.l.b16 %v5024
    %v6449 = vunpack.c.h.b16 %v5024
    %v6450 = vunpack.c.l.b16 %v5025
    %v6451 = vunpack.c.h.b16 %v5025
    %v6452 = vunpack.c.l.b16 %v5026
    %v6453 = vunpack.c.h.b16 %v5026
    %v6454 = vunpack.c.l.b16 %v5027
    %v6455 = vunpack.c.l.b16 %v5028
    %v6456 = vunpack.c.h.b16 %v5028
    %v6457 = vunpack.c.l.b16 %v5029
    %v6458 = vunpack.c.h.b16 %v5029
    %v6459 = vunpack.c.l.b16 %v5030
    %v6460 = vunpack.c.h.b16 %v5030
    %v6461 = vunpack.c.l.b16 %v5031
    %v6462 = vunpack.c.l.b16 %v5032
    %v6463 = vunpack.c.h.b16 %v5032
    %v6464 = vunpack.c.l.b16 %v5033
    %v6465 = vunpack.c.h.b16 %v5033
    %v6466 = vunpack.c.l.b16 %v5034
    %v6467 = vunpack.c.h.b16 %v5034
    %v6468 = vunpack.c.l.b16 %v5035
    %v6469 = vunpack.c.l.b16 %v5036
    %v6470 = vunpack.c.h.b16 %v5036
    %v6471 = vunpack.c.l.b16 %v5037
    %v6472 = vunpack.c.h.b16 %v5037
    %v6473 = vunpack.c.l.b16 %v5038
    %v6474 = vunpack.c.h.b16 %v5038
    %v6475 = vunpack.c.l.b16 %v5039
    %v6476 = vunpack.c.l.b16 %v5040
    %v6477 = vunpack.c.h.b16 %v5040
    %v6478 = vunpack.c.l.b16 %v5041
    %v6479 = vunpack.c.h.b16 %v5041
    %v6480 = vunpack.c.l.b16 %v5042
    %v6481 = vunpack.c.h.b16 %v5042
    %v6482 = vunpack.c.l.b16 %v5043
    %v6483 = vunpack.c.l.b16 %v5044
    %v6484 = vunpack.c.h.b16 %v5044
    %v6485 = vunpack.c.l.b16 %v5045
    %v6486 = vunpack.c.h.b16 %v5045
    %v6487 = vunpack.c.l.b16 %v5046
    %v6488 = vunpack.c.h.b16 %v5046
    %v6489 = vunpack.c.l.b16 %v5047
    %v6490 = vunpack.c.l.b16 %v5048
    %v6491 = vunpack.c.h.b16 %v5048
    %v6492 = vunpack.c.l.b16 %v5049
    %v6493 = vunpack.c.h.b16 %v5049
    %v6494 = vunpack.c.l.b16 %v5050
    %v6495 = vunpack.c.h.b16 %v5050
    %v6496 = vunpack.c.l.b16 %v5051
    %v6497 = vpack.c.b16 %v5608, %v5601
    %v6498 = vpack.c.b16 %v5609, %v5602
    %v6499 = vpack.c.b16 %v5610, %v5603
    %v6500 = vpack.c.b16 %v5611, %v5604
    %v6501 = vpack.c.b16 %v5612, %v5605
    %v6502 = vpack.c.b16 %v5613, %v5606
    %v6503 = vpack.c.b16 %v5614, %v5607
    %v6504 = vpack.c.b16 %v5622, %v5615
    %v6505 = vpack.c.b16 %v5623, %v5616
    %v6506 = vpack.c.b16 %v5624, %v5617
    %v6507 = vpack.c.b16 %v5625, %v5618
    %v6508 = vpack.c.b16 %v5626, %v5619
    %v6509 = vpack.c.b16 %v5627, %v5620
    %v6510 = vpack.c.b16 %v5628, %v5621
    %v6511 = vpack.c.b16 %v5636, %v5629
    %v6512 = vpack.c.b16 %v5637, %v5630
    %v6513 = vpack.c.b16 %v5638, %v5631
    %v6514 = vpack.c.b16 %v5639, %v5632
    %v6515 = vpack.c.b16 %v5640, %v5633
    %v6516 = vpack.c.b16 %v5641, %v5634
    %v6517 = vpack.c.b16 %v5642, %v5635
    %v6518 = vpack.c.b16 %v5650, %v5643
    %v6519 = vpack.c.b16 %v5651, %v5644
    %v6520 = vpack.c.b16 %v5652, %v5645
    %v6521 = vpack.c.b16 %v5653, %v5646
    %v6522 = vpack.c.b16 %v5654, %v5647
    %v6523 = vpack.c.b16 %v5655, %v5648
    %v6524 = vpack.c.b16 %v5656, %v5649
    %v6525 = vpack.c.b16 %v5664, %v5657
    %v6526 = vpack.c.b16 %v5665, %v5658
    %v6527 = vpack.c.b16 %v5666, %v5659
    %v6528 = vpack.c.b16 %v5667, %v5660
    %v6529 = vpack.c.b16 %v5668, %v5661
    %v6530 = vpack.c.b16 %v5669, %v5662
    %v6531 = vpack.c.b16 %v5670, %v5663
    %v6532 = vpack.c.b16 %v5678, %v5671
    %v6533 = vpack.c.b16 %v5679, %v5672
    %v6534 = vpack.c.b16 %v5680, %v5673
    %v6535 = vpack.c.b16 %v5681, %v5674
    %v6536 = vpack.c.b16 %v5682, %v5675
    %v6537 = vpack.c.b16 %v5683, %v5676
    %v6538 = vpack.c.b16 %v5684, %v5677
    %v6539 = vpack.c.b16 %v5692, %v5685
    %v6540 = vpack.c.b16 %v5693, %v5686
    %v6541 = vpack.c.b16 %v5694, %v5687
    %v6542 = vpack.c.b16 %v5695, %v5688
    %v6543 = vpack.c.b16 %v5696, %v5689
    %v6544 = vpack.c.b16 %v5697, %v5690
    %v6545 = vpack.c.b16 %v5698, %v5691
    %v6546 = vpack.c.b16 %v5706, %v5699
    %v6547 = vpack.c.b16 %v5707, %v5700
    %v6548 = vpack.c.b16 %v5708, %v5701
    %v6549 = vpack.c.b16 %v5709, %v5702
    %v6550 = vpack.c.b16 %v5710, %v5703
    %v6551 = vpack.c.b16 %v5711, %v5704
    %v6552 = vpack.c.b16 %v5712, %v5705
    %v6553 = vpack.c.b16 %v5720, %v5713
    %v6554 = vpack.c.b16 %v5721, %v5714
    %v6555 = vpack.c.b16 %v5722, %v5715
    %v6556 = vpack.c.b16 %v5723, %v5716
    %v6557 = vpack.c.b16 %v5724, %v5717
    %v6558 = vpack.c.b16 %v5725, %v5718
    %v6559 = vpack.c.b16 %v5726, %v5719
    %v6560 = vpack.c.b16 %v5734, %v5727
    %v6561 = vpack.c.b16 %v5735, %v5728
    %v6562 = vpack.c.b16 %v5736, %v5729
    %v6563 = vpack.c.b16 %v5737, %v5730
    %v6564 = vpack.c.b16 %v5738, %v5731
    %v6565 = vpack.c.b16 %v5739, %v5732
    %v6566 = vpack.c.b16 %v5740, %v5733
    %v6567 = vpack.c.b16 %v5748, %v5741
    %v6568 = vpack.c.b16 %v5749, %v5742
    %v6569 = vpack.c.b16 %v5750, %v5743
    %v6570 = vpack.c.b16 %v5751, %v5744
    %v6571 = vpack.c.b16 %v5752, %v5745
    %v6572 = vpack.c.b16 %v5753, %v5746
    %v6573 = vpack.c.b16 %v5754, %v5747
    %v6574 = vpack.c.b16 %v5762, %v5755
    %v6575 = vpack.c.b16 %v5763, %v5756
    %v6576 = vpack.c.b16 %v5764, %v5757
    %v6577 = vpack.c.b16 %v5765, %v5758
    %v6578 = vpack.c.b16 %v5766, %v5759
    %v6579 = vpack.c.b16 %v5767, %v5760
    %v6580 = vpack.c.b16 %v5768, %v5761
    %v6581 = vpack.c.b16 %v5776, %v5769
    %v6582 = vpack.c.b16 %v5777, %v5770
    %v6583 = vpack.c.b16 %v5778, %v5771
    %v6584 = vpack.c.b16 %v5779, %v5772
    %v6585 = vpack.c.b16 %v5780, %v5773
    %v6586 = vpack.c.b16 %v5781, %v5774
    %v6587 = vpack.c.b16 %v5782, %v5775
    %v6588 = vpack.c.b16 %v5790, %v5783
    %v6589 = vpack.c.b16 %v5791, %v5784
    %v6590 = vpack.c.b16 %v5792, %v5785
    %v6591 = vpack.c.b16 %v5793, %v5786
    %v6592 = vpack.c.b16 %v5794, %v5787
    %v6593 = vpack.c.b16 %v5795, %v5788
    %v6594 = vpack.c.b16 %v5796, %v5789
    %v6595 = vpack.c.b16 %v5804, %v5797
    %v6596 = vpack.c.b16 %v5805, %v5798
    %v6597 = vpack.c.b16 %v5806, %v5799
    %v6598 = vpack.c.b16 %v5807, %v5800
    %v6599 = vpack.c.b16 %v5808, %v5801
    %v6600 = vpack.c.b16 %v5809, %v5802
    %v6601 = vpack.c.b16 %v5810, %v5803
    %v6602 = vpack.c.b16 %v5818, %v5811
    %v6603 = vpack.c.b16 %v5819, %v5812
    %v6604 = vpack.c.b16 %v5820, %v5813
    %v6605 = vpack.c.b16 %v5821, %v5814
    %v6606 = vpack.c.b16 %v5822, %v5815
    %v6607 = vpack.c.b16 %v5823, %v5816
    %v6608 = vpack.c.b16 %v5824, %v5817
    %v6609 = vpack.c.b16 %v5832, %v5825
    %v6610 = vpack.c.b16 %v5833, %v5826
    %v6611 = vpack.c.b16 %v5834, %v5827
    %v6612 = vpack.c.b16 %v5835, %v5828
    %v6613 = vpack.c.b16 %v5836, %v5829
    %v6614 = vpack.c.b16 %v5837, %v5830
    %v6615 = vpack.c.b16 %v5838, %v5831
    %v6616 = vpack.c.b16 %v5846, %v5839
    %v6617 = vpack.c.b16 %v5847, %v5840
    %v6618 = vpack.c.b16 %v5848, %v5841
    %v6619 = vpack.c.b16 %v5849, %v5842
    %v6620 = vpack.c.b16 %v5850, %v5843
    %v6621 = vpack.c.b16 %v5851, %v5844
    %v6622 = vpack.c.b16 %v5852, %v5845
    %v6623 = vpack.c.b16 %v5860, %v5853
    %v6624 = vpack.c.b16 %v5861, %v5854
    %v6625 = vpack.c.b16 %v5862, %v5855
    %v6626 = vpack.c.b16 %v5863, %v5856
    %v6627 = vpack.c.b16 %v5864, %v5857
    %v6628 = vpack.c.b16 %v5865, %v5858
    %v6629 = vpack.c.b16 %v5866, %v5859
    %v6630 = vpack.c.b16 %v5874, %v5867
    %v6631 = vpack.c.b16 %v5875, %v5868
    %v6632 = vpack.c.b16 %v5876, %v5869
    %v6633 = vpack.c.b16 %v5877, %v5870
    %v6634 = vpack.c.b16 %v5878, %v5871
    %v6635 = vpack.c.b16 %v5879, %v5872
    %v6636 = vpack.c.b16 %v5880, %v5873
    %v6637 = vpack.c.b16 %v5888, %v5881
    %v6638 = vpack.c.b16 %v5889, %v5882
    %v6639 = vpack.c.b16 %v5890, %v5883
    %v6640 = vpack.c.b16 %v5891, %v5884
    %v6641 = vpack.c.b16 %v5892, %v5885
    %v6642 = vpack.c.b16 %v5893, %v5886
    %v6643 = vpack.c.b16 %v5894, %v5887
    %v6644 = vpack.c.b16 %v5902, %v5895
    %v6645 = vpack.c.b16 %v5903, %v5896
    %v6646 = vpack.c.b16 %v5904, %v5897
    %v6647 = vpack.c.b16 %v5905, %v5898
    %v6648 = vpack.c.b16 %v5906, %v5899
    %v6649 = vpack.c.b16 %v5907, %v5900
    %v6650 = vpack.c.b16 %v5908, %v5901
    %v6651 = vpack.c.b16 %v5916, %v5909
    %v6652 = vpack.c.b16 %v5917, %v5910
    %v6653 = vpack.c.b16 %v5918, %v5911
    %v6654 = vpack.c.b16 %v5919, %v5912
    %v6655 = vpack.c.b16 %v5920, %v5913
    %v6656 = vpack.c.b16 %v5921, %v5914
    %v6657 = vpack.c.b16 %v5922, %v5915
    %v6658 = vpack.c.b16 %v5930, %v5923
    %v6659 = vpack.c.b16 %v5931, %v5924
    %v6660 = vpack.c.b16 %v5932, %v5925
    %v6661 = vpack.c.b16 %v5933, %v5926
    %v6662 = vpack.c.b16 %v5934, %v5927
    %v6663 = vpack.c.b16 %v5935, %v5928
    %v6664 = vpack.c.b16 %v5936, %v5929
    %v6665 = vpack.c.b16 %v5944, %v5937
    %v6666 = vpack.c.b16 %v5945, %v5938
    %v6667 = vpack.c.b16 %v5946, %v5939
    %v6668 = vpack.c.b16 %v5947, %v5940
    %v6669 = vpack.c.b16 %v5948, %v5941
    %v6670 = vpack.c.b16 %v5949, %v5942
    %v6671 = vpack.c.b16 %v5950, %v5943
    %v6672 = vpack.c.b16 %v5958, %v5951
    %v6673 = vpack.c.b16 %v5959, %v5952
    %v6674 = vpack.c.b16 %v5960, %v5953
    %v6675 = vpack.c.b16 %v5961, %v5954
    %v6676 = vpack.c.b16 %v5962, %v5955
    %v6677 = vpack.c.b16 %v5963, %v5956
    %v6678 = vpack.c.b16 %v5964, %v5957
    %v6679 = vpack.c.b16 %v5972, %v5965
    %v6680 = vpack.c.b16 %v5973, %v5966
    %v6681 = vpack.c.b16 %v5974, %v5967
    %v6682 = vpack.c.b16 %v5975, %v5968
    %v6683 = vpack.c.b16 %v5976, %v5969
    %v6684 = vpack.c.b16 %v5977, %v5970
    %v6685 = vpack.c.b16 %v5978, %v5971
    %v6686 = vpack.c.b16 %v5986, %v5979
    %v6687 = vpack.c.b16 %v5987, %v5980
    %v6688 = vpack.c.b16 %v5988, %v5981
    %v6689 = vpack.c.b16 %v5989, %v5982
    %v6690 = vpack.c.b16 %v5990, %v5983
    %v6691 = vpack.c.b16 %v5991, %v5984
    %v6692 = vpack.c.b16 %v5992, %v5985
    %v6693 = vpack.c.b16 %v6000, %v5993
    %v6694 = vpack.c.b16 %v6001, %v5994
    %v6695 = vpack.c.b16 %v6002, %v5995
    %v6696 = vpack.c.b16 %v6003, %v5996
    %v6697 = vpack.c.b16 %v6004, %v5997
    %v6698 = vpack.c.b16 %v6005, %v5998
    %v6699 = vpack.c.b16 %v6006, %v5999
    %v6700 = vpack.c.b16 %v6014, %v6007
    %v6701 = vpack.c.b16 %v6015, %v6008
    %v6702 = vpack.c.b16 %v6016, %v6009
    %v6703 = vpack.c.b16 %v6017, %v6010
    %v6704 = vpack.c.b16 %v6018, %v6011
    %v6705 = vpack.c.b16 %v6019, %v6012
    %v6706 = vpack.c.b16 %v6020, %v6013
    %v6707 = vpack.c.b16 %v6028, %v6021
    %v6708 = vpack.c.b16 %v6029, %v6022
    %v6709 = vpack.c.b16 %v6030, %v6023
    %v6710 = vpack.c.b16 %v6031, %v6024
    %v6711 = vpack.c.b16 %v6032, %v6025
    %v6712 = vpack.c.b16 %v6033, %v6026
    %v6713 = vpack.c.b16 %v6034, %v6027
    %v6714 = vpack.c.b16 %v6042, %v6035
    %v6715 = vpack.c.b16 %v6043, %v6036
    %v6716 = vpack.c.b16 %v6044, %v6037
    %v6717 = vpack.c.b16 %v6045, %v6038
    %v6718 = vpack.c.b16 %v6046, %v6039
    %v6719 = vpack.c.b16 %v6047, %v6040
    %v6720 = vpack.c.b16 %v6048, %v6041
    %v6721 = vpack.c.b16 %v6056, %v6049
    %v6722 = vpack.c.b16 %v6057, %v6050
    %v6723 = vpack.c.b16 %v6058, %v6051
    %v6724 = vpack.c.b16 %v6059, %v6052
    %v6725 = vpack.c.b16 %v6060, %v6053
    %v6726 = vpack.c.b16 %v6061, %v6054
    %v6727 = vpack.c.b16 %v6062, %v6055
    %v6728 = vpack.c.b16 %v6070, %v6063
    %v6729 = vpack.c.b16 %v6071, %v6064
    %v6730 = vpack.c.b16 %v6072, %v6065
    %v6731 = vpack.c.b16 %v6073, %v6066
    %v6732 = vpack.c.b16 %v6074, %v6067
    %v6733 = vpack.c.b16 %v6075, %v6068
    %v6734 = vpack.c.b16 %v6076, %v6069
    %v6735 = vpack.c.b16 %v6084, %v6077
    %v6736 = vpack.c.b16 %v6085, %v6078
    %v6737 = vpack.c.b16 %v6086, %v6079
    %v6738 = vpack.c.b16 %v6087, %v6080
    %v6739 = vpack.c.b16 %v6088, %v6081
    %v6740 = vpack.c.b16 %v6089, %v6082
    %v6741 = vpack.c.b16 %v6090, %v6083
    %v6742 = vpack.c.b16 %v6098, %v6091
    %v6743 = vpack.c.b16 %v6099, %v6092
    %v6744 = vpack.c.b16 %v6100, %v6093
    %v6745 = vpack.c.b16 %v6101, %v6094
    %v6746 = vpack.c.b16 %v6102, %v6095
    %v6747 = vpack.c.b16 %v6103, %v6096
    %v6748 = vpack.c.b16 %v6104, %v6097
    %v6749 = vpack.c.b16 %v6112, %v6105
    %v6750 = vpack.c.b16 %v6113, %v6106
    %v6751 = vpack.c.b16 %v6114, %v6107
    %v6752 = vpack.c.b16 %v6115, %v6108
    %v6753 = vpack.c.b16 %v6116, %v6109
    %v6754 = vpack.c.b16 %v6117, %v6110
    %v6755 = vpack.c.b16 %v6118, %v6111
    %v6756 = vpack.c.b16 %v6126, %v6119
    %v6757 = vpack.c.b16 %v6127, %v6120
    %v6758 = vpack.c.b16 %v6128, %v6121
    %v6759 = vpack.c.b16 %v6129, %v6122
    %v6760 = vpack.c.b16 %v6130, %v6123
    %v6761 = vpack.c.b16 %v6131, %v6124
    %v6762 = vpack.c.b16 %v6132, %v6125
    %v6763 = vpack.c.b16 %v6140, %v6133
    %v6764 = vpack.c.b16 %v6141, %v6134
    %v6765 = vpack.c.b16 %v6142, %v6135
    %v6766 = vpack.c.b16 %v6143, %v6136
    %v6767 = vpack.c.b16 %v6144, %v6137
    %v6768 = vpack.c.b16 %v6145, %v6138
    %v6769 = vpack.c.b16 %v6146, %v6139
    %v6770 = vpack.c.b16 %v6154, %v6147
    %v6771 = vpack.c.b16 %v6155, %v6148
    %v6772 = vpack.c.b16 %v6156, %v6149
    %v6773 = vpack.c.b16 %v6157, %v6150
    %v6774 = vpack.c.b16 %v6158, %v6151
    %v6775 = vpack.c.b16 %v6159, %v6152
    %v6776 = vpack.c.b16 %v6160, %v6153
    %v6777 = vpack.c.b16 %v6168, %v6161
    %v6778 = vpack.c.b16 %v6169, %v6162
    %v6779 = vpack.c.b16 %v6170, %v6163
    %v6780 = vpack.c.b16 %v6171, %v6164
    %v6781 = vpack.c.b16 %v6172, %v6165
    %v6782 = vpack.c.b16 %v6173, %v6166
    %v6783 = vpack.c.b16 %v6174, %v6167
    %v6784 = vpack.c.b16 %v6182, %v6175
    %v6785 = vpack.c.b16 %v6183, %v6176
    %v6786 = vpack.c.b16 %v6184, %v6177
    %v6787 = vpack.c.b16 %v6185, %v6178
    %v6788 = vpack.c.b16 %v6186, %v6179
    %v6789 = vpack.c.b16 %v6187, %v6180
    %v6790 = vpack.c.b16 %v6188, %v6181
    %v6791 = vpack.c.b16 %v6196, %v6189
    %v6792 = vpack.c.b16 %v6197, %v6190
    %v6793 = vpack.c.b16 %v6198, %v6191
    %v6794 = vpack.c.b16 %v6199, %v6192
    %v6795 = vpack.c.b16 %v6200, %v6193
    %v6796 = vpack.c.b16 %v6201, %v6194
    %v6797 = vpack.c.b16 %v6202, %v6195
    %v6798 = vpack.c.b16 %v6210, %v6203
    %v6799 = vpack.c.b16 %v6211, %v6204
    %v6800 = vpack.c.b16 %v6212, %v6205
    %v6801 = vpack.c.b16 %v6213, %v6206
    %v6802 = vpack.c.b16 %v6214, %v6207
    %v6803 = vpack.c.b16 %v6215, %v6208
    %v6804 = vpack.c.b16 %v6216, %v6209
    %v6805 = vpack.c.b16 %v6224, %v6217
    %v6806 = vpack.c.b16 %v6225, %v6218
    %v6807 = vpack.c.b16 %v6226, %v6219
    %v6808 = vpack.c.b16 %v6227, %v6220
    %v6809 = vpack.c.b16 %v6228, %v6221
    %v6810 = vpack.c.b16 %v6229, %v6222
    %v6811 = vpack.c.b16 %v6230, %v6223
    %v6812 = vpack.c.b16 %v6238, %v6231
    %v6813 = vpack.c.b16 %v6239, %v6232
    %v6814 = vpack.c.b16 %v6240, %v6233
    %v6815 = vpack.c.b16 %v6241, %v6234
    %v6816 = vpack.c.b16 %v6242, %v6235
    %v6817 = vpack.c.b16 %v6243, %v6236
    %v6818 = vpack.c.b16 %v6244, %v6237
    %v6819 = vpack.c.b16 %v6252, %v6245
    %v6820 = vpack.c.b16 %v6253, %v6246
    %v6821 = vpack.c.b16 %v6254, %v6247
    %v6822 = vpack.c.b16 %v6255, %v6248
    %v6823 = vpack.c.b16 %v6256, %v6249
    %v6824 = vpack.c.b16 %v6257, %v6250
    %v6825 = vpack.c.b16 %v6258, %v6251
    %v6826 = vpack.c.b16 %v6266, %v6259
    %v6827 = vpack.c.b16 %v6267, %v6260
    %v6828 = vpack.c.b16 %v6268, %v6261
    %v6829 = vpack.c.b16 %v6269, %v6262
    %v6830 = vpack.c.b16 %v6270, %v6263
    %v6831 = vpack.c.b16 %v6271, %v6264
    %v6832 = vpack.c.b16 %v6272, %v6265
    %v6833 = vpack.c.b16 %v6280, %v6273
    %v6834 = vpack.c.b16 %v6281, %v6274
    %v6835 = vpack.c.b16 %v6282, %v6275
    %v6836 = vpack.c.b16 %v6283, %v6276
    %v6837 = vpack.c.b16 %v6284, %v6277
    %v6838 = vpack.c.b16 %v6285, %v6278
    %v6839 = vpack.c.b16 %v6286, %v6279
    %v6840 = vpack.c.b16 %v6294, %v6287
    %v6841 = vpack.c.b16 %v6295, %v6288
    %v6842 = vpack.c.b16 %v6296, %v6289
    %v6843 = vpack.c.b16 %v6297, %v6290
    %v6844 = vpack.c.b16 %v6298, %v6291
    %v6845 = vpack.c.b16 %v6299, %v6292
    %v6846 = vpack.c.b16 %v6300, %v6293
    %v6847 = vpack.c.b16 %v6308, %v6301
    %v6848 = vpack.c.b16 %v6309, %v6302
    %v6849 = vpack.c.b16 %v6310, %v6303
    %v6850 = vpack.c.b16 %v6311, %v6304
    %v6851 = vpack.c.b16 %v6312, %v6305
    %v6852 = vpack.c.b16 %v6313, %v6306
    %v6853 = vpack.c.b16 %v6314, %v6307
    %v6854 = vpack.c.b16 %v6322, %v6315
    %v6855 = vpack.c.b16 %v6323, %v6316
    %v6856 = vpack.c.b16 %v6324, %v6317
    %v6857 = vpack.c.b16 %v6325, %v6318
    %v6858 = vpack.c.b16 %v6326, %v6319
    %v6859 = vpack.c.b16 %v6327, %v6320
    %v6860 = vpack.c.b16 %v6328, %v6321
    %v6861 = vpack.c.b16 %v6336, %v6329
    %v6862 = vpack.c.b16 %v6337, %v6330
    %v6863 = vpack.c.b16 %v6338, %v6331
    %v6864 = vpack.c.b16 %v6339, %v6332
    %v6865 = vpack.c.b16 %v6340, %v6333
    %v6866 = vpack.c.b16 %v6341, %v6334
    %v6867 = vpack.c.b16 %v6342, %v6335
    %v6868 = vpack.c.b16 %v6350, %v6343
    %v6869 = vpack.c.b16 %v6351, %v6344
    %v6870 = vpack.c.b16 %v6352, %v6345
    %v6871 = vpack.c.b16 %v6353, %v6346
    %v6872 = vpack.c.b16 %v6354, %v6347
    %v6873 = vpack.c.b16 %v6355, %v6348
    %v6874 = vpack.c.b16 %v6356, %v6349
    %v6875 = vpack.c.b16 %v6364, %v6357
    %v6876 = vpack.c.b16 %v6365, %v6358
    %v6877 = vpack.c.b16 %v6366, %v6359
    %v6878 = vpack.c.b16 %v6367, %v6360
    %v6879 = vpack.c.b16 %v6368, %v6361
    %v6880 = vpack.c.b16 %v6369, %v6362
    %v6881 = vpack.c.b16 %v6370, %v6363
    %v6882 = vpack.c.b16 %v6378, %v6371
    %v6883 = vpack.c.b16 %v6379, %v6372
    %v6884 = vpack.c.b16 %v6380, %v6373
    %v6885 = vpack.c.b16 %v6381, %v6374
    %v6886 = vpack.c.b16 %v6382, %v6375
    %v6887 = vpack.c.b16 %v6383, %v6376
    %v6888 = vpack.c.b16 %v6384, %v6377
    %v6889 = vpack.c.b16 %v6392, %v6385
    %v6890 = vpack.c.b16 %v6393, %v6386
    %v6891 = vpack.c.b16 %v6394, %v6387
    %v6892 = vpack.c.b16 %v6395, %v6388
    %v6893 = vpack.c.b16 %v6396, %v6389
    %v6894 = vpack.c.b16 %v6397, %v6390
    %v6895 = vpack.c.b16 %v6398, %v6391
    %v6896 = vpack.c.b16 %v6406, %v6399
    %v6897 = vpack.c.b16 %v6407, %v6400
    %v6898 = vpack.c.b16 %v6408, %v6401
    %v6899 = vpack.c.b16 %v6409, %v6402
    %v6900 = vpack.c.b16 %v6410, %v6403
    %v6901 = vpack.c.b16 %v6411, %v6404
    %v6902 = vpack.c.b16 %v6412, %v6405
    %v6903 = vpack.c.b16 %v6420, %v6413
    %v6904 = vpack.c.b16 %v6421, %v6414
    %v6905 = vpack.c.b16 %v6422, %v6415
    %v6906 = vpack.c.b16 %v6423, %v6416
    %v6907 = vpack.c.b16 %v6424, %v6417
    %v6908 = vpack.c.b16 %v6425, %v6418
    %v6909 = vpack.c.b16 %v6426, %v6419
    %v6910 = vpack.c.b16 %v6434, %v6427
    %v6911 = vpack.c.b16 %v6435, %v6428
    %v6912 = vpack.c.b16 %v6436, %v6429
    %v6913 = vpack.c.b16 %v6437, %v6430
    %v6914 = vpack.c.b16 %v6438, %v6431
    %v6915 = vpack.c.b16 %v6439, %v6432
    %v6916 = vpack.c.b16 %v6440, %v6433
    %v6917 = vpack.c.b16 %v6448, %v6441
    %v6918 = vpack.c.b16 %v6449, %v6442
    %v6919 = vpack.c.b16 %v6450, %v6443
    %v6920 = vpack.c.b16 %v6451, %v6444
    %v6921 = vpack.c.b16 %v6452, %v6445
    %v6922 = vpack.c.b16 %v6453, %v6446
    %v6923 = vpack.c.b16 %v6454, %v6447
    %v6924 = vpack.c.b16 %v6462, %v6455
    %v6925 = vpack.c.b16 %v6463, %v6456
    %v6926 = vpack.c.b16 %v6464, %v6457
    %v6927 = vpack.c.b16 %v6465, %v6458
    %v6928 = vpack.c.b16 %v6466, %v6459
    %v6929 = vpack.c.b16 %v6467, %v6460
    %v6930 = vpack.c.b16 %v6468, %v6461
    %v6931 = vpack.c.b16 %v6476, %v6469
    %v6932 = vpack.c.b16 %v6477, %v6470
    %v6933 = vpack.c.b16 %v6478, %v6471
    %v6934 = vpack.c.b16 %v6479, %v6472
    %v6935 = vpack.c.b16 %v6480, %v6473
    %v6936 = vpack.c.b16 %v6481, %v6474
    %v6937 = vpack.c.b16 %v6482, %v6475
    %v6938 = vpack.c.b16 %v6490, %v6483
    %v6939 = vpack.c.b16 %v6491, %v6484
    %v6940 = vpack.c.b16 %v6492, %v6485
    %v6941 = vpack.c.b16 %v6493, %v6486
    %v6942 = vpack.c.b16 %v6494, %v6487
    %v6943 = vpack.c.b16 %v6495, %v6488
    %v6944 = vpack.c.b16 %v6496, %v6489
    %7393 = vmatprep.subr.bf16.mxu0 %v6498
    %7394 = vmatpush1.bf16.msra.mxu0 %v6497
    %7395 = vmatprep.subr.bf16.mxu0 %v6505
    %7396 = vmatpush1.bf16.msra.mxu0 %v6504
    %7397 = vmatprep.subr.bf16.mxu0 %v6512
    %7398 = vmatpush1.bf16.msra.mxu0 %v6511
    %7399 = vmatprep.subr.bf16.mxu0 %v6519
    %7400 = vmatpush1.bf16.msra.mxu0 %v6518
    %7401 = vmatprep.subr.bf16.mxu0 %v6526
    %7402 = vmatpush1.bf16.msra.mxu0 %v6525
    %7403 = vmatprep.subr.bf16.mxu0 %v6533
    %7404 = vmatpush1.bf16.msra.mxu0 %v6532
    %7405 = vmatprep.subr.bf16.mxu0 %v6540
    %7406 = vmatpush1.bf16.msra.mxu0 %v6539
    %7407 = vmatprep.subr.bf16.mxu0 %v6547
    %7408 = vmatpush1.bf16.msra.mxu0 %v6546
    %7409 = vmatprep.subr.bf16.mxu0 %v6554
    %7410 = vmatpush1.bf16.msra.mxu0 %v6553
    %7411 = vmatprep.subr.bf16.mxu0 %v6561
    %7412 = vmatpush1.bf16.msra.mxu0 %v6560
    %7413 = vmatprep.subr.bf16.mxu0 %v6568
    %7414 = vmatpush1.bf16.msra.mxu0 %v6567
    %7415 = vmatprep.subr.bf16.mxu0 %v6575
    %7416 = vmatpush1.bf16.msra.mxu0 %v6574
    %7417 = vmatprep.subr.bf16.mxu0 %v6582
    %7418 = vmatpush1.bf16.msra.mxu0 %v6581
    %7419 = vmatprep.subr.bf16.mxu0 %v6589
    %7420 = vmatpush1.bf16.msra.mxu0 %v6588
    %7421 = vmatprep.subr.bf16.mxu0 %v6596
    %7422 = vmatpush1.bf16.msra.mxu0 %v6595
    %7423 = vmatprep.subr.bf16.mxu0 %v6603
    %7424 = vmatpush1.bf16.msra.mxu0 %v6602
    %7425 = vmatprep.mubr.bf16.mxu0 %v4509
    %7426 = vmatmul.mubr.bf16.gmra.mrb[0].mxu0 %v4508
    %v7427 = vpop.f32.mrb[0].mxu0
    %v7428 = vadd.f32 %v5057, %v7427
    %v7429 = vpop.f32.mrb[0].mxu0
    %v7430 = vadd.f32 %v5061, %v7429
    %v7431 = vpop.f32.mrb[0].mxu0
    %v7432 = vadd.f32 %v5057, %v7431
    %v7433 = vpop.f32.mrb[0].mxu0
    %v7434 = vadd.f32 %v5061, %v7433
    %7435 = vmatprep.mubr.bf16.mxu0 %v4517
    %7436 = vmatmul.mubr.bf16.gmra.mrb[0].mxu0 %v4516
    %v7437 = vpop.f32.mrb[0].mxu0
    %v7438 = vadd.f32 %v5057, %v7437
    %v7439 = vpop.f32.mrb[0].mxu0
    %v7440 = vadd.f32 %v5061, %v7439
    %v7441 = vpop.f32.mrb[0].mxu0
    %v7442 = vadd.f32 %v5057, %v7441
    %v7443 = vpop.f32.mrb[0].mxu0
    %v7444 = vadd.f32 %v5061, %v7443
    %7445 = vmatprep.mubr.bf16.mxu0 %v4525
    %7446 = vmatmul.mubr.bf16.gmra.mrb[0].mxu0 %v4524
    %v7447 = vpop.f32.mrb[0].mxu0
    %v7448 = vadd.f32 %v5057, %v7447
    %v7449 = vpop.f32.mrb[0].mxu0
    %v7450 = vadd.f32 %v5061, %v7449
    %v7451 = vpop.f32.mrb[0].mxu0
    %v7452 = vadd.f32 %v5057, %v7451
    %v7453 = vpop.f32.mrb[0].mxu0
    %v7454 = vadd.f32 %v5061, %v7453
    %7455 = vmatprep.mubr.bf16.mxu0 %v4533
    %7456 = vmatmul.mubr.bf16.gmra.mrb[0].mxu0 %v4532
    %v7457 = vpop.f32.mrb[0].mxu0
    %v7458 = vadd.f32 %v5057, %v7457
    %v7459 = vpop.f32.mrb[0].mxu0
    %v7460 = vadd.f32 %v5061, %v7459
    %v7461 = vpop.f32.mrb[0].mxu0
    %v7462 = vadd.f32 %v5057, %v7461
    %v7463 = vpop.f32.mrb[0].mxu0
    %v7464 = vadd.f32 %v5061, %v7463
    %7465 = vdwg.mxu0
    %7466 = vmatprep.subr.bf16.mxu0 %v6610
    %7467 = vmatpush1.bf16.msra.mxu0 %v6609
    %7468 = vmatprep.subr.bf16.mxu0 %v6617
    %7469 = vmatpush1.bf16.msra.mxu0 %v6616
    %7470 = vmatprep.subr.bf16.mxu0 %v6624
    %7471 = vmatpush1.bf16.msra.mxu0 %v6623
    %7472 = vmatprep.subr.bf16.mxu0 %v6631
    %7473 = vmatpush1.bf16.msra.mxu0 %v6630
    %7474 = vmatprep.subr.bf16.mxu0 %v6638
    %7475 = vmatpush1.bf16.msra.mxu0 %v6637
    %7476 = vmatprep.subr.bf16.mxu0 %v6645
    %7477 = vmatpush1.bf16.msra.mxu0 %v6644
    %7478 = vmatprep.subr.bf16.mxu0 %v6652
    %7479 = vmatpush1.bf16.msra.mxu0 %v6651
    %7480 = vmatprep.subr.bf16.mxu0 %v6659
    %7481 = vmatpush1.bf16.msra.mxu0 %v6658
    %7482 = vmatprep.subr.bf16.mxu0 %v6666
    %7483 = vmatpush1.bf16.msra.mxu0 %v6665
    %7484 = vmatprep.subr.bf16.mxu0 %v6673
    %7485 = vmatpush1.bf16.msra.mxu0 %v6672
    %7486 = vmatprep.subr.bf16.mxu0 %v6680
    %7487 = vmatpush1.bf16.msra.mxu0 %v6679
    %7488 = vmatprep.subr.bf16.mxu0 %v6687
    %7489 = vmatpush1.bf16.msra.mxu0 %v6686
    %7490 = vmatprep.subr.bf16.mxu0 %v6694
    %7491 = vmatpush1.bf16.msra.mxu0 %v6693
    %7492 = vmatprep.subr.bf16.mxu0 %v6701
    %7493 = vmatpush1.bf16.msra.mxu0 %v6700
    %7494 = vmatprep.subr.bf16.mxu0 %v6708
    %7495 = vmatpush1.bf16.msra.mxu0 %v6707
    %7496 = vmatprep.subr.bf16.mxu0 %v6715
    %7497 = vmatpush1.bf16.msra.mxu0 %v6714
    %7498 = vmatprep.mubr.bf16.mxu0 %v4511
    %7499 = vmatmul.mubr.bf16.gmra.mrb[0].mxu0 %v4510
    %v7500 = vpop.f32.mrb[0].mxu0
    %v7501 = vadd.f32 %v7428, %v7500
    %v7502 = vpop.f32.mrb[0].mxu0
    %v7503 = vadd.f32 %v7430, %v7502
    %v7504 = vpop.f32.mrb[0].mxu0
    %v7505 = vadd.f32 %v7432, %v7504
    %v7506 = vpop.f32.mrb[0].mxu0
    %v7507 = vadd.f32 %v7434, %v7506
    %7508 = vmatprep.mubr.bf16.mxu0 %v4519
    %7509 = vmatmul.mubr.bf16.gmra.mrb[0].mxu0 %v4518
    %v7510 = vpop.f32.mrb[0].mxu0
    %v7511 = vadd.f32 %v7438, %v7510
    %v7512 = vpop.f32.mrb[0].mxu0
    %v7513 = vadd.f32 %v7440, %v7512
    %v7514 = vpop.f32.mrb[0].mxu0
    %v7515 = vadd.f32 %v7442, %v7514
    %v7516 = vpop.f32.mrb[0].mxu0
    %v7517 = vadd.f32 %v7444, %v7516
    %7518 = vmatprep.mubr.bf16.mxu0 %v4527
    %7519 = vmatmul.mubr.bf16.gmra.mrb[0].mxu0 %v4526
    %v7520 = vpop.f32.mrb[0].mxu0
    %v7521 = vadd.f32 %v7448, %v7520
    %v7522 = vpop.f32.mrb[0].mxu0
    %v7523 = vadd.f32 %v7450, %v7522
    %v7524 = vpop.f32.mrb[0].mxu0
    %v7525 = vadd.f32 %v7452, %v7524
    %v7526 = vpop.f32.mrb[0].mxu0
    %v7527 = vadd.f32 %v7454, %v7526
    %7528 = vmatprep.mubr.bf16.mxu0 %v4535
    %7529 = vmatmul.mubr.bf16.gmra.mrb[0].mxu0 %v4534
    %v7530 = vpop.f32.mrb[0].mxu0
    %v7531 = vadd.f32 %v7458, %v7530
    %v7532 = vpop.f32.mrb[0].mxu0
    %v7533 = vadd.f32 %v7460, %v7532
    %v7534 = vpop.f32.mrb[0].mxu0
    %v7535 = vadd.f32 %v7462, %v7534
    %v7536 = vpop.f32.mrb[0].mxu0
    %v7537 = vadd.f32 %v7464, %v7536
    %7538 = vdwg.mxu0
    %7539 = vmatprep.subr.bf16.mxu0 %v6722
    %7540 = vmatpush1.bf16.msra.mxu0 %v6721
    %7541 = vmatprep.subr.bf16.mxu0 %v6729
    %7542 = vmatpush1.bf16.msra.mxu0 %v6728
    %7543 = vmatprep.subr.bf16.mxu0 %v6736
    %7544 = vmatpush1.bf16.msra.mxu0 %v6735
    %7545 = vmatprep.subr.bf16.mxu0 %v6743
    %7546 = vmatpush1.bf16.msra.mxu0 %v6742
    %7547 = vmatprep.subr.bf16.mxu0 %v6750
    %7548 = vmatpush1.bf16.msra.mxu0 %v6749
    %7549 = vmatprep.subr.bf16.mxu0 %v6757
    %7550 = vmatpush1.bf16.msra.mxu0 %v6756
    %7551 = vmatprep.subr.bf16.mxu0 %v6764
    %7552 = vmatpush1.bf16.msra.mxu0 %v6763
    %7553 = vmatprep.subr.bf16.mxu0 %v6771
    %7554 = vmatpush1.bf16.msra.mxu0 %v6770
    %7555 = vmatprep.subr.bf16.mxu0 %v6778
    %7556 = vmatpush1.bf16.msra.mxu0 %v6777
    %7557 = vmatprep.subr.bf16.mxu0 %v6785
    %7558 = vmatpush1.bf16.msra.mxu0 %v6784
    %7559 = vmatprep.subr.bf16.mxu0 %v6792
    %7560 = vmatpush1.bf16.msra.mxu0 %v6791
    %7561 = vmatprep.subr.bf16.mxu0 %v6799
    %7562 = vmatpush1.bf16.msra.mxu0 %v6798
    %7563 = vmatprep.subr.bf16.mxu0 %v6806
    %7564 = vmatpush1.bf16.msra.mxu0 %v6805
    %7565 = vmatprep.subr.bf16.mxu0 %v6813
    %7566 = vmatpush1.bf16.msra.mxu0 %v6812
    %7567 = vmatprep.subr.bf16.mxu0 %v6820
    %7568 = vmatpush1.bf16.msra.mxu0 %v6819
    %7569 = vmatprep.subr.bf16.mxu0 %v6827
    %7570 = vmatpush1.bf16.msra.mxu0 %v6826
    %7571 = vmatprep.mubr.bf16.mxu0 %v4513
    %7572 = vmatmul.mubr.bf16.gmra.mrb[0].mxu0 %v4512
    %v7573 = vpop.f32.mrb[0].mxu0
    %v7574 = vadd.f32 %v7501, %v7573
    %v7575 = vpop.f32.mrb[0].mxu0
    %v7576 = vadd.f32 %v7503, %v7575
    %v7577 = vpop.f32.mrb[0].mxu0
    %v7578 = vadd.f32 %v7505, %v7577
    %v7579 = vpop.f32.mrb[0].mxu0
    %v7580 = vadd.f32 %v7507, %v7579
    %7581 = vmatprep.mubr.bf16.mxu0 %v4521
    %7582 = vmatmul.mubr.bf16.gmra.mrb[0].mxu0 %v4520
    %v7583 = vpop.f32.mrb[0].mxu0
    %v7584 = vadd.f32 %v7511, %v7583
    %v7585 = vpop.f32.mrb[0].mxu0
    %v7586 = vadd.f32 %v7513, %v7585
    %v7587 = vpop.f32.mrb[0].mxu0
    %v7588 = vadd.f32 %v7515, %v7587
    %v7589 = vpop.f32.mrb[0].mxu0
    %v7590 = vadd.f32 %v7517, %v7589
    %7591 = vmatprep.mubr.bf16.mxu0 %v4529
    %7592 = vmatmul.mubr.bf16.gmra.mrb[0].mxu0 %v4528
    %v7593 = vpop.f32.mrb[0].mxu0
    %v7594 = vadd.f32 %v7521, %v7593
    %v7595 = vpop.f32.mrb[0].mxu0
    %v7596 = vadd.f32 %v7523, %v7595
    %v7597 = vpop.f32.mrb[0].mxu0
    %v7598 = vadd.f32 %v7525, %v7597
    %v7599 = vpop.f32.mrb[0].mxu0
    %v7600 = vadd.f32 %v7527, %v7599
    %7601 = vmatprep.mubr.bf16.mxu0 %v4537
    %7602 = vmatmul.mubr.bf16.gmra.mrb[0].mxu0 %v4536
    %v7603 = vpop.f32.mrb[0].mxu0
    %v7604 = vadd.f32 %v7531, %v7603
    %v7605 = vpop.f32.mrb[0].mxu0
    %v7606 = vadd.f32 %v7533, %v7605
    %v7607 = vpop.f32.mrb[0].mxu0
    %v7608 = vadd.f32 %v7535, %v7607
    %v7609 = vpop.f32.mrb[0].mxu0
    %v7610 = vadd.f32 %v7537, %v7609
    %7611 = vdwg.mxu0
    %7612 = vmatprep.subr.bf16.mxu0 %v6834
    %7613 = vmatpush1.bf16.msra.mxu0 %v6833
    %7614 = vmatprep.subr.bf16.mxu0 %v6841
    %7615 = vmatpush1.bf16.msra.mxu0 %v6840
    %7616 = vmatprep.subr.bf16.mxu0 %v6848
    %7617 = vmatpush1.bf16.msra.mxu0 %v6847
    %7618 = vmatprep.subr.bf16.mxu0 %v6855
    %7619 = vmatpush1.bf16.msra.mxu0 %v6854
    %7620 = vmatprep.subr.bf16.mxu0 %v6862
    %7621 = vmatpush1.bf16.msra.mxu0 %v6861
    %7622 = vmatprep.subr.bf16.mxu0 %v6869
    %7623 = vmatpush1.bf16.msra.mxu0 %v6868
    %7624 = vmatprep.subr.bf16.mxu0 %v6876
    %7625 = vmatpush1.bf16.msra.mxu0 %v6875
    %7626 = vmatprep.subr.bf16.mxu0 %v6883
    %7627 = vmatpush1.bf16.msra.mxu0 %v6882
    %7628 = vmatprep.subr.bf16.mxu0 %v6890
    %7629 = vmatpush1.bf16.msra.mxu0 %v6889
    %7630 = vmatprep.subr.bf16.mxu0 %v6897
    %7631 = vmatpush1.bf16.msra.mxu0 %v6896
    %7632 = vmatprep.subr.bf16.mxu0 %v6904
    %7633 = vmatpush1.bf16.msra.mxu0 %v6903
    %7634 = vmatprep.subr.bf16.mxu0 %v6911
    %7635 = vmatpush1.bf16.msra.mxu0 %v6910
    %7636 = vmatprep.subr.bf16.mxu0 %v6918
    %7637 = vmatpush1.bf16.msra.mxu0 %v6917
    %7638 = vmatprep.subr.bf16.mxu0 %v6925
    %7639 = vmatpush1.bf16.msra.mxu0 %v6924
    %7640 = vmatprep.subr.bf16.mxu0 %v6932
    %7641 = vmatpush1.bf16.msra.mxu0 %v6931
    %7642 = vmatprep.subr.bf16.mxu0 %v6939
    %7643 = vmatpush1.bf16.msra.mxu0 %v6938
    %7644 = vmatprep.mubr.bf16.mxu0 %v4515
    %7645 = vmatmul.mubr.bf16.gmra.mrb[0].mxu0 %v4514
    %v7646 = vpop.f32.mrb[0].mxu0
    %v7647 = vadd.f32 %v7574, %v7646
    %v7648 = vpop.f32.mrb[0].mxu0
    %v7649 = vadd.f32 %v7576, %v7648
    %v7650 = vpop.f32.mrb[0].mxu0
    %v7651 = vadd.f32 %v7578, %v7650
    %v7652 = vpop.f32.mrb[0].mxu0
    %v7653 = vadd.f32 %v7580, %v7652
    %7654 = vmatprep.mubr.bf16.mxu0 %v4523
    %7655 = vmatmul.mubr.bf16.gmra.mrb[0].mxu0 %v4522
    %v7656 = vpop.f32.mrb[0].mxu0
    %v7657 = vadd.f32 %v7584, %v7656
    %v7658 = vpop.f32.mrb[0].mxu0
    %v7659 = vadd.f32 %v7586, %v7658
    %v7660 = vpop.f32.mrb[0].mxu0
    %v7661 = vadd.f32 %v7588, %v7660
    %v7662 = vpop.f32.mrb[0].mxu0
    %v7663 = vadd.f32 %v7590, %v7662
    %7664 = vmatprep.mubr.bf16.mxu0 %v4531
    %7665 = vmatmul.mubr.bf16.gmra.mrb[0].mxu0 %v4530
    %v7666 = vpop.f32.mrb[0].mxu0
    %v7667 = vadd.f32 %v7594, %v7666
    %v7668 = vpop.f32.mrb[0].mxu0
    %v7669 = vadd.f32 %v7596, %v7668
    %v7670 = vpop.f32.mrb[0].mxu0
    %v7671 = vadd.f32 %v7598, %v7670
    %v7672 = vpop.f32.mrb[0].mxu0
    %v7673 = vadd.f32 %v7600, %v7672
    %7674 = vmatprep.mubr.bf16.mxu0 %v4539
    %7675 = vmatmul.mubr.bf16.gmra.mrb[0].mxu0 %v4538
    %v7676 = vpop.f32.mrb[0].mxu0
    %v7677 = vadd.f32 %v7604, %v7676
    %v7678 = vpop.f32.mrb[0].mxu0
    %v7679 = vadd.f32 %v7606, %v7678
    %v7680 = vpop.f32.mrb[0].mxu0
    %v7681 = vadd.f32 %v7608, %v7680
    %v7682 = vpop.f32.mrb[0].mxu0
    %v7683 = vadd.f32 %v7610, %v7682
    %7684 = vdwg.mxu0
    %7685 = vmatprep.subr.bf16.mxu0 %v6500
    %7686 = vmatpush1.bf16.msra.mxu0 %v6499
    %7687 = vmatprep.subr.bf16.mxu0 %v6507
    %7688 = vmatpush1.bf16.msra.mxu0 %v6506
    %7689 = vmatprep.subr.bf16.mxu0 %v6514
    %7690 = vmatpush1.bf16.msra.mxu0 %v6513
    %7691 = vmatprep.subr.bf16.mxu0 %v6521
    %7692 = vmatpush1.bf16.msra.mxu0 %v6520
    %7693 = vmatprep.subr.bf16.mxu0 %v6528
    %7694 = vmatpush1.bf16.msra.mxu0 %v6527
    %7695 = vmatprep.subr.bf16.mxu0 %v6535
    %7696 = vmatpush1.bf16.msra.mxu0 %v6534
    %7697 = vmatprep.subr.bf16.mxu0 %v6542
    %7698 = vmatpush1.bf16.msra.mxu0 %v6541
    %7699 = vmatprep.subr.bf16.mxu0 %v6549
    %7700 = vmatpush1.bf16.msra.mxu0 %v6548
    %7701 = vmatprep.subr.bf16.mxu0 %v6556
    %7702 = vmatpush1.bf16.msra.mxu0 %v6555
    %7703 = vmatprep.subr.bf16.mxu0 %v6563
    %7704 = vmatpush1.bf16.msra.mxu0 %v6562
    %7705 = vmatprep.subr.bf16.mxu0 %v6570
    %7706 = vmatpush1.bf16.msra.mxu0 %v6569
    %7707 = vmatprep.subr.bf16.mxu0 %v6577
    %7708 = vmatpush1.bf16.msra.mxu0 %v6576
    %7709 = vmatprep.subr.bf16.mxu0 %v6584
    %7710 = vmatpush1.bf16.msra.mxu0 %v6583
    %7711 = vmatprep.subr.bf16.mxu0 %v6591
    %7712 = vmatpush1.bf16.msra.mxu0 %v6590
    %7713 = vmatprep.subr.bf16.mxu0 %v6598
    %7714 = vmatpush1.bf16.msra.mxu0 %v6597
    %7715 = vmatprep.subr.bf16.mxu0 %v6605
    %7716 = vmatpush1.bf16.msra.mxu0 %v6604
    %7717 = vmatprep.mubr.bf16.mxu0 %v4509
    %7718 = vmatmul.mubr.bf16.gmra.mrb[0].mxu0 %v4508
    %v7719 = vpop.f32.mrb[0].mxu0
    %v7720 = vadd.f32 %v5065, %v7719
    %v7721 = vpop.f32.mrb[0].mxu0
    %v7722 = vadd.f32 %v5069, %v7721
    %v7723 = vpop.f32.mrb[0].mxu0
    %v7724 = vadd.f32 %v5065, %v7723
    %v7725 = vpop.f32.mrb[0].mxu0
    %v7726 = vadd.f32 %v5069, %v7725
    %7727 = vmatprep.mubr.bf16.mxu0 %v4517
    %7728 = vmatmul.mubr.bf16.gmra.mrb[0].mxu0 %v4516
    %v7729 = vpop.f32.mrb[0].mxu0
    %v7730 = vadd.f32 %v5065, %v7729
    %v7731 = vpop.f32.mrb[0].mxu0
    %v7732 = vadd.f32 %v5069, %v7731
    %v7733 = vpop.f32.mrb[0].mxu0
    %v7734 = vadd.f32 %v5065, %v7733
    %v7735 = vpop.f32.mrb[0].mxu0
    %v7736 = vadd.f32 %v5069, %v7735
    %7737 = vmatprep.mubr.bf16.mxu0 %v4525
    %7738 = vmatmul.mubr.bf16.gmra.mrb[0].mxu0 %v4524
    %v7739 = vpop.f32.mrb[0].mxu0
    %v7740 = vadd.f32 %v5065, %v7739
    %v7741 = vpop.f32.mrb[0].mxu0
    %v7742 = vadd.f32 %v5069, %v7741
    %v7743 = vpop.f32.mrb[0].mxu0
    %v7744 = vadd.f32 %v5065, %v7743
    %v7745 = vpop.f32.mrb[0].mxu0
    %v7746 = vadd.f32 %v5069, %v7745
    %7747 = vmatprep.mubr.bf16.mxu0 %v4533
    %7748 = vmatmul.mubr.bf16.gmra.mrb[0].mxu0 %v4532
    %v7749 = vpop.f32.mrb[0].mxu0
    %v7750 = vadd.f32 %v5065, %v7749
    %v7751 = vpop.f32.mrb[0].mxu0
    %v7752 = vadd.f32 %v5069, %v7751
    %v7753 = vpop.f32.mrb[0].mxu0
    %v7754 = vadd.f32 %v5065, %v7753
    %v7755 = vpop.f32.mrb[0].mxu0
    %v7756 = vadd.f32 %v5069, %v7755
    %7757 = vdwg.mxu0
    %7758 = vmatprep.subr.bf16.mxu0 %v6612
    %7759 = vmatpush1.bf16.msra.mxu0 %v6611
    %7760 = vmatprep.subr.bf16.mxu0 %v6619
    %7761 = vmatpush1.bf16.msra.mxu0 %v6618
    %7762 = vmatprep.subr.bf16.mxu0 %v6626
    %7763 = vmatpush1.bf16.msra.mxu0 %v6625
    %7764 = vmatprep.subr.bf16.mxu0 %v6633
    %7765 = vmatpush1.bf16.msra.mxu0 %v6632
    %7766 = vmatprep.subr.bf16.mxu0 %v6640
    %7767 = vmatpush1.bf16.msra.mxu0 %v6639
    %7768 = vmatprep.subr.bf16.mxu0 %v6647
    %7769 = vmatpush1.bf16.msra.mxu0 %v6646
    %7770 = vmatprep.subr.bf16.mxu0 %v6654
    %7771 = vmatpush1.bf16.msra.mxu0 %v6653
    %7772 = vmatprep.subr.bf16.mxu0 %v6661
    %7773 = vmatpush1.bf16.msra.mxu0 %v6660
    %7774 = vmatprep.subr.bf16.mxu0 %v6668
    %7775 = vmatpush1.bf16.msra.mxu0 %v6667
    %7776 = vmatprep.subr.bf16.mxu0 %v6675
    %7777 = vmatpush1.bf16.msra.mxu0 %v6674
    %7778 = vmatprep.subr.bf16.mxu0 %v6682
    %7779 = vmatpush1.bf16.msra.mxu0 %v6681
    %7780 = vmatprep.subr.bf16.mxu0 %v6689
    %7781 = vmatpush1.bf16.msra.mxu0 %v6688
    %7782 = vmatprep.subr.bf16.mxu0 %v6696
    %7783 = vmatpush1.bf16.msra.mxu0 %v6695
    %7784 = vmatprep.subr.bf16.mxu0 %v6703
    %7785 = vmatpush1.bf16.msra.mxu0 %v6702
    %7786 = vmatprep.subr.bf16.mxu0 %v6710
    %7787 = vmatpush1.bf16.msra.mxu0 %v6709
    %7788 = vmatprep.subr.bf16.mxu0 %v6717
    %7789 = vmatpush1.bf16.msra.mxu0 %v6716
    %7790 = vmatprep.mubr.bf16.mxu0 %v4511
    %7791 = vmatmul.mubr.bf16.gmra.mrb[0].mxu0 %v4510
    %v7792 = vpop.f32.mrb[0].mxu0
    %v7793 = vadd.f32 %v7720, %v7792
    %v7794 = vpop.f32.mrb[0].mxu0
    %v7795 = vadd.f32 %v7722, %v7794
    %v7796 = vpop.f32.mrb[0].mxu0
    %v7797 = vadd.f32 %v7724, %v7796
    %v7798 = vpop.f32.mrb[0].mxu0
    %v7799 = vadd.f32 %v7726, %v7798
    %7800 = vmatprep.mubr.bf16.mxu0 %v4519
    %7801 = vmatmul.mubr.bf16.gmra.mrb[0].mxu0 %v4518
    %v7802 = vpop.f32.mrb[0].mxu0
    %v7803 = vadd.f32 %v7730, %v7802
    %v7804 = vpop.f32.mrb[0].mxu0
    %v7805 = vadd.f32 %v7732, %v7804
    %v7806 = vpop.f32.mrb[0].mxu0
    %v7807 = vadd.f32 %v7734, %v7806
    %v7808 = vpop.f32.mrb[0].mxu0
    %v7809 = vadd.f32 %v7736, %v7808
    %7810 = vmatprep.mubr.bf16.mxu0 %v4527
    %7811 = vmatmul.mubr.bf16.gmra.mrb[0].mxu0 %v4526
    %v7812 = vpop.f32.mrb[0].mxu0
    %v7813 = vadd.f32 %v7740, %v7812
    %v7814 = vpop.f32.mrb[0].mxu0
    %v7815 = vadd.f32 %v7742, %v7814
    %v7816 = vpop.f32.mrb[0].mxu0
    %v7817 = vadd.f32 %v7744, %v7816
    %v7818 = vpop.f32.mrb[0].mxu0
    %v7819 = vadd.f32 %v7746, %v7818
    %7820 = vmatprep.mubr.bf16.mxu0 %v4535
    %7821 = vmatmul.mubr.bf16.gmra.mrb[0].mxu0 %v4534
    %v7822 = vpop.f32.mrb[0].mxu0
    %v7823 = vadd.f32 %v7750, %v7822
    %v7824 = vpop.f32.mrb[0].mxu0
    %v7825 = vadd.f32 %v7752, %v7824
    %v7826 = vpop.f32.mrb[0].mxu0
    %v7827 = vadd.f32 %v7754, %v7826
    %v7828 = vpop.f32.mrb[0].mxu0
    %v7829 = vadd.f32 %v7756, %v7828
    %7830 = vdwg.mxu0
    %7831 = vmatprep.subr.bf16.mxu0 %v6724
    %7832 = vmatpush1.bf16.msra.mxu0 %v6723
    %7833 = vmatprep.subr.bf16.mxu0 %v6731
    %7834 = vmatpush1.bf16.msra.mxu0 %v6730
    %7835 = vmatprep.subr.bf16.mxu0 %v6738
    %7836 = vmatpush1.bf16.msra.mxu0 %v6737
    %7837 = vmatprep.subr.bf16.mxu0 %v6745
    %7838 = vmatpush1.bf16.msra.mxu0 %v6744
    %7839 = vmatprep.subr.bf16.mxu0 %v6752
    %7840 = vmatpush1.bf16.msra.mxu0 %v6751
    %7841 = vmatprep.subr.bf16.mxu0 %v6759
    %7842 = vmatpush1.bf16.msra.mxu0 %v6758
    %7843 = vmatprep.subr.bf16.mxu0 %v6766
    %7844 = vmatpush1.bf16.msra.mxu0 %v6765
    %7845 = vmatprep.subr.bf16.mxu0 %v6773
    %7846 = vmatpush1.bf16.msra.mxu0 %v6772
    %7847 = vmatprep.subr.bf16.mxu0 %v6780
    %7848 = vmatpush1.bf16.msra.mxu0 %v6779
    %7849 = vmatprep.subr.bf16.mxu0 %v6787
    %7850 = vmatpush1.bf16.msra.mxu0 %v6786
    %7851 = vmatprep.subr.bf16.mxu0 %v6794
    %7852 = vmatpush1.bf16.msra.mxu0 %v6793
    %7853 = vmatprep.subr.bf16.mxu0 %v6801
    %7854 = vmatpush1.bf16.msra.mxu0 %v6800
    %7855 = vmatprep.subr.bf16.mxu0 %v6808
    %7856 = vmatpush1.bf16.msra.mxu0 %v6807
    %7857 = vmatprep.subr.bf16.mxu0 %v6815
    %7858 = vmatpush1.bf16.msra.mxu0 %v6814
    %7859 = vmatprep.subr.bf16.mxu0 %v6822
    %7860 = vmatpush1.bf16.msra.mxu0 %v6821
    %7861 = vmatprep.subr.bf16.mxu0 %v6829
    %7862 = vmatpush1.bf16.msra.mxu0 %v6828
    %7863 = vmatprep.mubr.bf16.mxu0 %v4513
    %7864 = vmatmul.mubr.bf16.gmra.mrb[0].mxu0 %v4512
    %v7865 = vpop.f32.mrb[0].mxu0
    %v7866 = vadd.f32 %v7793, %v7865
    %v7867 = vpop.f32.mrb[0].mxu0
    %v7868 = vadd.f32 %v7795, %v7867
    %v7869 = vpop.f32.mrb[0].mxu0
    %v7870 = vadd.f32 %v7797, %v7869
    %v7871 = vpop.f32.mrb[0].mxu0
    %v7872 = vadd.f32 %v7799, %v7871
    %7873 = vmatprep.mubr.bf16.mxu0 %v4521
    %7874 = vmatmul.mubr.bf16.gmra.mrb[0].mxu0 %v4520
    %v7875 = vpop.f32.mrb[0].mxu0
    %v7876 = vadd.f32 %v7803, %v7875
    %v7877 = vpop.f32.mrb[0].mxu0
    %v7878 = vadd.f32 %v7805, %v7877
    %v7879 = vpop.f32.mrb[0].mxu0
    %v7880 = vadd.f32 %v7807, %v7879
    %v7881 = vpop.f32.mrb[0].mxu0
    %v7882 = vadd.f32 %v7809, %v7881
    %7883 = vmatprep.mubr.bf16.mxu0 %v4529
    %7884 = vmatmul.mubr.bf16.gmra.mrb[0].mxu0 %v4528
    %v7885 = vpop.f32.mrb[0].mxu0
    %v7886 = vadd.f32 %v7813, %v7885
    %v7887 = vpop.f32.mrb[0].mxu0
    %v7888 = vadd.f32 %v7815, %v7887
    %v7889 = vpop.f32.mrb[0].mxu0
    %v7890 = vadd.f32 %v7817, %v7889
    %v7891 = vpop.f32.mrb[0].mxu0
    %v7892 = vadd.f32 %v7819, %v7891
    %7893 = vmatprep.mubr.bf16.mxu0 %v4537
    %7894 = vmatmul.mubr.bf16.gmra.mrb[0].mxu0 %v4536
    %v7895 = vpop.f32.mrb[0].mxu0
    %v7896 = vadd.f32 %v7823, %v7895
    %v7897 = vpop.f32.mrb[0].mxu0
    %v7898 = vadd.f32 %v7825, %v7897
    %v7899 = vpop.f32.mrb[0].mxu0
    %v7900 = vadd.f32 %v7827, %v7899
    %v7901 = vpop.f32.mrb[0].mxu0
    %v7902 = vadd.f32 %v7829, %v7901
    %7903 = vdwg.mxu0
    %7904 = vmatprep.subr.bf16.mxu0 %v6836
    %7905 = vmatpush1.bf16.msra.mxu0 %v6835
    %7906 = vmatprep.subr.bf16.mxu0 %v6843
    %7907 = vmatpush1.bf16.msra.mxu0 %v6842
    %7908 = vmatprep.subr.bf16.mxu0 %v6850
    %7909 = vmatpush1.bf16.msra.mxu0 %v6849
    %7910 = vmatprep.subr.bf16.mxu0 %v6857
    %7911 = vmatpush1.bf16.msra.mxu0 %v6856
    %7912 = vmatprep.subr.bf16.mxu0 %v6864
    %7913 = vmatpush1.bf16.msra.mxu0 %v6863
    %7914 = vmatprep.subr.bf16.mxu0 %v6871
    %7915 = vmatpush1.bf16.msra.mxu0 %v6870
    %7916 = vmatprep.subr.bf16.mxu0 %v6878
    %7917 = vmatpush1.bf16.msra.mxu0 %v6877
    %7918 = vmatprep.subr.bf16.mxu0 %v6885
    %7919 = vmatpush1.bf16.msra.mxu0 %v6884
    %7920 = vmatprep.subr.bf16.mxu0 %v6892
    %7921 = vmatpush1.bf16.msra.mxu0 %v6891
    %7922 = vmatprep.subr.bf16.mxu0 %v6899
    %7923 = vmatpush1.bf16.msra.mxu0 %v6898
    %7924 = vmatprep.subr.bf16.mxu0 %v6906
    %7925 = vmatpush1.bf16.msra.mxu0 %v6905
    %7926 = vmatprep.subr.bf16.mxu0 %v6913
    %7927 = vmatpush1.bf16.msra.mxu0 %v6912
    %7928 = vmatprep.subr.bf16.mxu0 %v6920
    %7929 = vmatpush1.bf16.msra.mxu0 %v6919
    %7930 = vmatprep.subr.bf16.mxu0 %v6927
    %7931 = vmatpush1.bf16.msra.mxu0 %v6926
    %7932 = vmatprep.subr.bf16.mxu0 %v6934
    %7933 = vmatpush1.bf16.msra.mxu0 %v6933
    %7934 = vmatprep.subr.bf16.mxu0 %v6941
    %7935 = vmatpush1.bf16.msra.mxu0 %v6940
    %7936 = vmatprep.mubr.bf16.mxu0 %v4515
    %7937 = vmatmul.mubr.bf16.gmra.mrb[0].mxu0 %v4514
    %v7938 = vpop.f32.mrb[0].mxu0
    %v7939 = vadd.f32 %v7866, %v7938
    %v7940 = vpop.f32.mrb[0].mxu0
    %v7941 = vadd.f32 %v7868, %v7940
    %v7942 = vpop.f32.mrb[0].mxu0
    %v7943 = vadd.f32 %v7870, %v7942
    %v7944 = vpop.f32.mrb[0].mxu0
    %v7945 = vadd.f32 %v7872, %v7944
    %7946 = vmatprep.mubr.bf16.mxu0 %v4523
    %7947 = vmatmul.mubr.bf16.gmra.mrb[0].mxu0 %v4522
    %v7948 = vpop.f32.mrb[0].mxu0
    %v7949 = vadd.f32 %v7876, %v7948
    %v7950 = vpop.f32.mrb[0].mxu0
    %v7951 = vadd.f32 %v7878, %v7950
    %v7952 = vpop.f32.mrb[0].mxu0
    %v7953 = vadd.f32 %v7880, %v7952
    %v7954 = vpop.f32.mrb[0].mxu0
    %v7955 = vadd.f32 %v7882, %v7954
    %7956 = vmatprep.mubr.bf16.mxu0 %v4531
    %7957 = vmatmul.mubr.bf16.gmra.mrb[0].mxu0 %v4530
    %v7958 = vpop.f32.mrb[0].mxu0
    %v7959 = vadd.f32 %v7886, %v7958
    %v7960 = vpop.f32.mrb[0].mxu0
    %v7961 = vadd.f32 %v7888, %v7960
    %v7962 = vpop.f32.mrb[0].mxu0
    %v7963 = vadd.f32 %v7890, %v7962
    %v7964 = vpop.f32.mrb[0].mxu0
    %v7965 = vadd.f32 %v7892, %v7964
    %7966 = vmatprep.mubr.bf16.mxu0 %v4539
    %7967 = vmatmul.mubr.bf16.gmra.mrb[0].mxu0 %v4538
    %v7968 = vpop.f32.mrb[0].mxu0
    %v7969 = vadd.f32 %v7896, %v7968
    %v7970 = vpop.f32.mrb[0].mxu0
    %v7971 = vadd.f32 %v7898, %v7970
    %v7972 = vpop.f32.mrb[0].mxu0
    %v7973 = vadd.f32 %v7900, %v7972
    %v7974 = vpop.f32.mrb[0].mxu0
    %v7975 = vadd.f32 %v7902, %v7974
    %7976 = vdwg.mxu0
    %7977 = vmatprep.subr.bf16.mxu0 %v6502
    %7978 = vmatpush1.bf16.msra.mxu0 %v6501
    %7979 = vmatprep.subr.bf16.mxu0 %v6509
    %7980 = vmatpush1.bf16.msra.mxu0 %v6508
    %7981 = vmatprep.subr.bf16.mxu0 %v6516
    %7982 = vmatpush1.bf16.msra.mxu0 %v6515
    %7983 = vmatprep.subr.bf16.mxu0 %v6523
    %7984 = vmatpush1.bf16.msra.mxu0 %v6522
    %7985 = vmatprep.subr.bf16.mxu0 %v6530
    %7986 = vmatpush1.bf16.msra.mxu0 %v6529
    %7987 = vmatprep.subr.bf16.mxu0 %v6537
    %7988 = vmatpush1.bf16.msra.mxu0 %v6536
    %7989 = vmatprep.subr.bf16.mxu0 %v6544
    %7990 = vmatpush1.bf16.msra.mxu0 %v6543
    %7991 = vmatprep.subr.bf16.mxu0 %v6551
    %7992 = vmatpush1.bf16.msra.mxu0 %v6550
    %7993 = vmatprep.subr.bf16.mxu0 %v6558
    %7994 = vmatpush1.bf16.msra.mxu0 %v6557
    %7995 = vmatprep.subr.bf16.mxu0 %v6565
    %7996 = vmatpush1.bf16.msra.mxu0 %v6564
    %7997 = vmatprep.subr.bf16.mxu0 %v6572
    %7998 = vmatpush1.bf16.msra.mxu0 %v6571
    %7999 = vmatprep.subr.bf16.mxu0 %v6579
    %8000 = vmatpush1.bf16.msra.mxu0 %v6578
    %8001 = vmatprep.subr.bf16.mxu0 %v6586
    %8002 = vmatpush1.bf16.msra.mxu0 %v6585
    %8003 = vmatprep.subr.bf16.mxu0 %v6593
    %8004 = vmatpush1.bf16.msra.mxu0 %v6592
    %8005 = vmatprep.subr.bf16.mxu0 %v6600
    %8006 = vmatpush1.bf16.msra.mxu0 %v6599
    %8007 = vmatprep.subr.bf16.mxu0 %v6607
    %8008 = vmatpush1.bf16.msra.mxu0 %v6606
    %8009 = vmatprep.mubr.bf16.mxu0 %v4509
    %8010 = vmatmul.mubr.bf16.gmra.mrb[0].mxu0 %v4508
    %v8011 = vpop.f32.mrb[0].mxu0
    %v8012 = vadd.f32 %v5073, %v8011
    %v8013 = vpop.f32.mrb[0].mxu0
    %v8014 = vadd.f32 %v5077, %v8013
    %v8015 = vpop.f32.mrb[0].mxu0
    %v8016 = vadd.f32 %v5073, %v8015
    %v8017 = vpop.f32.mrb[0].mxu0
    %v8018 = vadd.f32 %v5077, %v8017
    %8019 = vmatprep.mubr.bf16.mxu0 %v4517
    %8020 = vmatmul.mubr.bf16.gmra.mrb[0].mxu0 %v4516
    %v8021 = vpop.f32.mrb[0].mxu0
    %v8022 = vadd.f32 %v5073, %v8021
    %v8023 = vpop.f32.mrb[0].mxu0
    %v8024 = vadd.f32 %v5077, %v8023
    %v8025 = vpop.f32.mrb[0].mxu0
    %v8026 = vadd.f32 %v5073, %v8025
    %v8027 = vpop.f32.mrb[0].mxu0
    %v8028 = vadd.f32 %v5077, %v8027
    %8029 = vmatprep.mubr.bf16.mxu0 %v4525
    %8030 = vmatmul.mubr.bf16.gmra.mrb[0].mxu0 %v4524
    %v8031 = vpop.f32.mrb[0].mxu0
    %v8032 = vadd.f32 %v5073, %v8031
    %v8033 = vpop.f32.mrb[0].mxu0
    %v8034 = vadd.f32 %v5077, %v8033
    %v8035 = vpop.f32.mrb[0].mxu0
    %v8036 = vadd.f32 %v5073, %v8035
    %v8037 = vpop.f32.mrb[0].mxu0
    %v8038 = vadd.f32 %v5077, %v8037
    %8039 = vmatprep.mubr.bf16.mxu0 %v4533
    %8040 = vmatmul.mubr.bf16.gmra.mrb[0].mxu0 %v4532
    %v8041 = vpop.f32.mrb[0].mxu0
    %v8042 = vadd.f32 %v5073, %v8041
    %v8043 = vpop.f32.mrb[0].mxu0
    %v8044 = vadd.f32 %v5077, %v8043
    %v8045 = vpop.f32.mrb[0].mxu0
    %v8046 = vadd.f32 %v5073, %v8045
    %v8047 = vpop.f32.mrb[0].mxu0
    %v8048 = vadd.f32 %v5077, %v8047
    %8049 = vdwg.mxu0
    %8050 = vmatprep.subr.bf16.mxu0 %v6614
    %8051 = vmatpush1.bf16.msra.mxu0 %v6613
    %8052 = vmatprep.subr.bf16.mxu0 %v6621
    %8053 = vmatpush1.bf16.msra.mxu0 %v6620
    %8054 = vmatprep.subr.bf16.mxu0 %v6628
    %8055 = vmatpush1.bf16.msra.mxu0 %v6627
    %8056 = vmatprep.subr.bf16.mxu0 %v6635
    %8057 = vmatpush1.bf16.msra.mxu0 %v6634
    %8058 = vmatprep.subr.bf16.mxu0 %v6642
    %8059 = vmatpush1.bf16.msra.mxu0 %v6641
    %8060 = vmatprep.subr.bf16.mxu0 %v6649
    %8061 = vmatpush1.bf16.msra.mxu0 %v6648
    %8062 = vmatprep.subr.bf16.mxu0 %v6656
    %8063 = vmatpush1.bf16.msra.mxu0 %v6655
    %8064 = vmatprep.subr.bf16.mxu0 %v6663
    %8065 = vmatpush1.bf16.msra.mxu0 %v6662
    %8066 = vmatprep.subr.bf16.mxu0 %v6670
    %8067 = vmatpush1.bf16.msra.mxu0 %v6669
    %8068 = vmatprep.subr.bf16.mxu0 %v6677
    %8069 = vmatpush1.bf16.msra.mxu0 %v6676
    %8070 = vmatprep.subr.bf16.mxu0 %v6684
    %8071 = vmatpush1.bf16.msra.mxu0 %v6683
    %8072 = vmatprep.subr.bf16.mxu0 %v6691
    %8073 = vmatpush1.bf16.msra.mxu0 %v6690
    %8074 = vmatprep.subr.bf16.mxu0 %v6698
    %8075 = vmatpush1.bf16.msra.mxu0 %v6697
    %8076 = vmatprep.subr.bf16.mxu0 %v6705
    %8077 = vmatpush1.bf16.msra.mxu0 %v6704
    %8078 = vmatprep.subr.bf16.mxu0 %v6712
    %8079 = vmatpush1.bf16.msra.mxu0 %v6711
    %8080 = vmatprep.subr.bf16.mxu0 %v6719
    %8081 = vmatpush1.bf16.msra.mxu0 %v6718
    %8082 = vmatprep.mubr.bf16.mxu0 %v4511
    %8083 = vmatmul.mubr.bf16.gmra.mrb[0].mxu0 %v4510
    %v8084 = vpop.f32.mrb[0].mxu0
    %v8085 = vadd.f32 %v8012, %v8084
    %v8086 = vpop.f32.mrb[0].mxu0
    %v8087 = vadd.f32 %v8014, %v8086
    %v8088 = vpop.f32.mrb[0].mxu0
    %v8089 = vadd.f32 %v8016, %v8088
    %v8090 = vpop.f32.mrb[0].mxu0
    %v8091 = vadd.f32 %v8018, %v8090
    %8092 = vmatprep.mubr.bf16.mxu0 %v4519
    %8093 = vmatmul.mubr.bf16.gmra.mrb[0].mxu0 %v4518
    %v8094 = vpop.f32.mrb[0].mxu0
    %v8095 = vadd.f32 %v8022, %v8094
    %v8096 = vpop.f32.mrb[0].mxu0
    %v8097 = vadd.f32 %v8024, %v8096
    %v8098 = vpop.f32.mrb[0].mxu0
    %v8099 = vadd.f32 %v8026, %v8098
    %v8100 = vpop.f32.mrb[0].mxu0
    %v8101 = vadd.f32 %v8028, %v8100
    %8102 = vmatprep.mubr.bf16.mxu0 %v4527
    %8103 = vmatmul.mubr.bf16.gmra.mrb[0].mxu0 %v4526
    %v8104 = vpop.f32.mrb[0].mxu0
    %v8105 = vadd.f32 %v8032, %v8104
    %v8106 = vpop.f32.mrb[0].mxu0
    %v8107 = vadd.f32 %v8034, %v8106
    %v8108 = vpop.f32.mrb[0].mxu0
    %v8109 = vadd.f32 %v8036, %v8108
    %v8110 = vpop.f32.mrb[0].mxu0
    %v8111 = vadd.f32 %v8038, %v8110
    %8112 = vmatprep.mubr.bf16.mxu0 %v4535
    %8113 = vmatmul.mubr.bf16.gmra.mrb[0].mxu0 %v4534
    %v8114 = vpop.f32.mrb[0].mxu0
    %v8115 = vadd.f32 %v8042, %v8114
    %v8116 = vpop.f32.mrb[0].mxu0
    %v8117 = vadd.f32 %v8044, %v8116
    %v8118 = vpop.f32.mrb[0].mxu0
    %v8119 = vadd.f32 %v8046, %v8118
    %v8120 = vpop.f32.mrb[0].mxu0
    %v8121 = vadd.f32 %v8048, %v8120
    %8122 = vdwg.mxu0
    %8123 = vmatprep.subr.bf16.mxu0 %v6726
    %8124 = vmatpush1.bf16.msra.mxu0 %v6725
    %8125 = vmatprep.subr.bf16.mxu0 %v6733
    %8126 = vmatpush1.bf16.msra.mxu0 %v6732
    %8127 = vmatprep.subr.bf16.mxu0 %v6740
    %8128 = vmatpush1.bf16.msra.mxu0 %v6739
    %8129 = vmatprep.subr.bf16.mxu0 %v6747
    %8130 = vmatpush1.bf16.msra.mxu0 %v6746
    %8131 = vmatprep.subr.bf16.mxu0 %v6754
    %8132 = vmatpush1.bf16.msra.mxu0 %v6753
    %8133 = vmatprep.subr.bf16.mxu0 %v6761
    %8134 = vmatpush1.bf16.msra.mxu0 %v6760
    %8135 = vmatprep.subr.bf16.mxu0 %v6768
    %8136 = vmatpush1.bf16.msra.mxu0 %v6767
    %8137 = vmatprep.subr.bf16.mxu0 %v6775
    %8138 = vmatpush1.bf16.msra.mxu0 %v6774
    %8139 = vmatprep.subr.bf16.mxu0 %v6782
    %8140 = vmatpush1.bf16.msra.mxu0 %v6781
    %8141 = vmatprep.subr.bf16.mxu0 %v6789
    %8142 = vmatpush1.bf16.msra.mxu0 %v6788
    %8143 = vmatprep.subr.bf16.mxu0 %v6796
    %8144 = vmatpush1.bf16.msra.mxu0 %v6795
    %8145 = vmatprep.subr.bf16.mxu0 %v6803
    %8146 = vmatpush1.bf16.msra.mxu0 %v6802
    %8147 = vmatprep.subr.bf16.mxu0 %v6810
    %8148 = vmatpush1.bf16.msra.mxu0 %v6809
    %8149 = vmatprep.subr.bf16.mxu0 %v6817
    %8150 = vmatpush1.bf16.msra.mxu0 %v6816
    %8151 = vmatprep.subr.bf16.mxu0 %v6824
    %8152 = vmatpush1.bf16.msra.mxu0 %v6823
    %8153 = vmatprep.subr.bf16.mxu0 %v6831
    %8154 = vmatpush1.bf16.msra.mxu0 %v6830
    %8155 = vmatprep.mubr.bf16.mxu0 %v4513
    %8156 = vmatmul.mubr.bf16.gmra.mrb[0].mxu0 %v4512
    %v8157 = vpop.f32.mrb[0].mxu0
    %v8158 = vadd.f32 %v8085, %v8157
    %v8159 = vpop.f32.mrb[0].mxu0
    %v8160 = vadd.f32 %v8087, %v8159
    %v8161 = vpop.f32.mrb[0].mxu0
    %v8162 = vadd.f32 %v8089, %v8161
    %v8163 = vpop.f32.mrb[0].mxu0
    %v8164 = vadd.f32 %v8091, %v8163
    %8165 = vmatprep.mubr.bf16.mxu0 %v4521
    %8166 = vmatmul.mubr.bf16.gmra.mrb[0].mxu0 %v4520
    %v8167 = vpop.f32.mrb[0].mxu0
    %v8168 = vadd.f32 %v8095, %v8167
    %v8169 = vpop.f32.mrb[0].mxu0
    %v8170 = vadd.f32 %v8097, %v8169
    %v8171 = vpop.f32.mrb[0].mxu0
    %v8172 = vadd.f32 %v8099, %v8171
    %v8173 = vpop.f32.mrb[0].mxu0
    %v8174 = vadd.f32 %v8101, %v8173
    %8175 = vmatprep.mubr.bf16.mxu0 %v4529
    %8176 = vmatmul.mubr.bf16.gmra.mrb[0].mxu0 %v4528
    %v8177 = vpop.f32.mrb[0].mxu0
    %v8178 = vadd.f32 %v8105, %v8177
    %v8179 = vpop.f32.mrb[0].mxu0
    %v8180 = vadd.f32 %v8107, %v8179
    %v8181 = vpop.f32.mrb[0].mxu0
    %v8182 = vadd.f32 %v8109, %v8181
    %v8183 = vpop.f32.mrb[0].mxu0
    %v8184 = vadd.f32 %v8111, %v8183
    %8185 = vmatprep.mubr.bf16.mxu0 %v4537
    %8186 = vmatmul.mubr.bf16.gmra.mrb[0].mxu0 %v4536
    %v8187 = vpop.f32.mrb[0].mxu0
    %v8188 = vadd.f32 %v8115, %v8187
    %v8189 = vpop.f32.mrb[0].mxu0
    %v8190 = vadd.f32 %v8117, %v8189
    %v8191 = vpop.f32.mrb[0].mxu0
    %v8192 = vadd.f32 %v8119, %v8191
    %v8193 = vpop.f32.mrb[0].mxu0
    %v8194 = vadd.f32 %v8121, %v8193
    %8195 = vdwg.mxu0
    %8196 = vmatprep.subr.bf16.mxu0 %v6838
    %8197 = vmatpush1.bf16.msra.mxu0 %v6837
    %8198 = vmatprep.subr.bf16.mxu0 %v6845
    %8199 = vmatpush1.bf16.msra.mxu0 %v6844
    %8200 = vmatprep.subr.bf16.mxu0 %v6852
    %8201 = vmatpush1.bf16.msra.mxu0 %v6851
    %8202 = vmatprep.subr.bf16.mxu0 %v6859
    %8203 = vmatpush1.bf16.msra.mxu0 %v6858
    %8204 = vmatprep.subr.bf16.mxu0 %v6866
    %8205 = vmatpush1.bf16.msra.mxu0 %v6865
    %8206 = vmatprep.subr.bf16.mxu0 %v6873
    %8207 = vmatpush1.bf16.msra.mxu0 %v6872
    %8208 = vmatprep.subr.bf16.mxu0 %v6880
    %8209 = vmatpush1.bf16.msra.mxu0 %v6879
    %8210 = vmatprep.subr.bf16.mxu0 %v6887
    %8211 = vmatpush1.bf16.msra.mxu0 %v6886
    %8212 = vmatprep.subr.bf16.mxu0 %v6894
    %8213 = vmatpush1.bf16.msra.mxu0 %v6893
    %8214 = vmatprep.subr.bf16.mxu0 %v6901
    %8215 = vmatpush1.bf16.msra.mxu0 %v6900
    %8216 = vmatprep.subr.bf16.mxu0 %v6908
    %8217 = vmatpush1.bf16.msra.mxu0 %v6907
    %8218 = vmatprep.subr.bf16.mxu0 %v6915
    %8219 = vmatpush1.bf16.msra.mxu0 %v6914
    %8220 = vmatprep.subr.bf16.mxu0 %v6922
    %8221 = vmatpush1.bf16.msra.mxu0 %v6921
    %8222 = vmatprep.subr.bf16.mxu0 %v6929
    %8223 = vmatpush1.bf16.msra.mxu0 %v6928
    %8224 = vmatprep.subr.bf16.mxu0 %v6936
    %8225 = vmatpush1.bf16.msra.mxu0 %v6935
    %8226 = vmatprep.subr.bf16.mxu0 %v6943
    %8227 = vmatpush1.bf16.msra.mxu0 %v6942
    %8228 = vmatprep.mubr.bf16.mxu0 %v4515
    %8229 = vmatmul.mubr.bf16.gmra.mrb[0].mxu0 %v4514
    %v8230 = vpop.f32.mrb[0].mxu0
    %v8231 = vadd.f32 %v8158, %v8230
    %v8232 = vpop.f32.mrb[0].mxu0
    %v8233 = vadd.f32 %v8160, %v8232
    %v8234 = vpop.f32.mrb[0].mxu0
    %v8235 = vadd.f32 %v8162, %v8234
    %v8236 = vpop.f32.mrb[0].mxu0
    %v8237 = vadd.f32 %v8164, %v8236
    %8238 = vmatprep.mubr.bf16.mxu0 %v4523
    %8239 = vmatmul.mubr.bf16.gmra.mrb[0].mxu0 %v4522
    %v8240 = vpop.f32.mrb[0].mxu0
    %v8241 = vadd.f32 %v8168, %v8240
    %v8242 = vpop.f32.mrb[0].mxu0
    %v8243 = vadd.f32 %v8170, %v8242
    %v8244 = vpop.f32.mrb[0].mxu0
    %v8245 = vadd.f32 %v8172, %v8244
    %v8246 = vpop.f32.mrb[0].mxu0
    %v8247 = vadd.f32 %v8174, %v8246
    %8248 = vmatprep.mubr.bf16.mxu0 %v4531
    %8249 = vmatmul.mubr.bf16.gmra.mrb[0].mxu0 %v4530
    %v8250 = vpop.f32.mrb[0].mxu0
    %v8251 = vadd.f32 %v8178, %v8250
    %v8252 = vpop.f32.mrb[0].mxu0
    %v8253 = vadd.f32 %v8180, %v8252
    %v8254 = vpop.f32.mrb[0].mxu0
    %v8255 = vadd.f32 %v8182, %v8254
    %v8256 = vpop.f32.mrb[0].mxu0
    %v8257 = vadd.f32 %v8184, %v8256
    %8258 = vmatprep.mubr.bf16.mxu0 %v4539
    %8259 = vmatmul.mubr.bf16.gmra.mrb[0].mxu0 %v4538
    %v8260 = vpop.f32.mrb[0].mxu0
    %v8261 = vadd.f32 %v8188, %v8260
    %v8262 = vpop.f32.mrb[0].mxu0
    %v8263 = vadd.f32 %v8190, %v8262
    %v8264 = vpop.f32.mrb[0].mxu0
    %v8265 = vadd.f32 %v8192, %v8264
    %v8266 = vpop.f32.mrb[0].mxu0
    %v8267 = vadd.f32 %v8194, %v8266
    %8268 = vdwg.mxu0
    %8269 = vmatprep.subr.bf16.mxu0 0
    %8270 = vmatpush1.bf16.msra.mxu0 %v6503
    %8271 = vmatprep.subr.bf16.mxu0 0
    %8272 = vmatpush1.bf16.msra.mxu0 %v6510
    %8273 = vmatprep.subr.bf16.mxu0 0
    %8274 = vmatpush1.bf16.msra.mxu0 %v6517
    %8275 = vmatprep.subr.bf16.mxu0 0
    %8276 = vmatpush1.bf16.msra.mxu0 %v6524
    %8277 = vmatprep.subr.bf16.mxu0 0
    %8278 = vmatpush1.bf16.msra.mxu0 %v6531
    %8279 = vmatprep.subr.bf16.mxu0 0
    %8280 = vmatpush1.bf16.msra.mxu0 %v6538
    %8281 = vmatprep.subr.bf16.mxu0 0
    %8282 = vmatpush1.bf16.msra.mxu0 %v6545
    %8283 = vmatprep.subr.bf16.mxu0 0
    %8284 = vmatpush1.bf16.msra.mxu0 %v6552
    %8285 = vmatprep.subr.bf16.mxu0 0
    %8286 = vmatpush1.bf16.msra.mxu0 %v6559
    %8287 = vmatprep.subr.bf16.mxu0 0
    %8288 = vmatpush1.bf16.msra.mxu0 %v6566
    %8289 = vmatprep.subr.bf16.mxu0 0
    %8290 = vmatpush1.bf16.msra.mxu0 %v6573
    %8291 = vmatprep.subr.bf16.mxu0 0
    %8292 = vmatpush1.bf16.msra.mxu0 %v6580
    %8293 = vmatprep.subr.bf16.mxu0 0
    %8294 = vmatpush1.bf16.msra.mxu0 %v6587
    %8295 = vmatprep.subr.bf16.mxu0 0
    %8296 = vmatpush1.bf16.msra.mxu0 %v6594
    %8297 = vmatprep.subr.bf16.mxu0 0
    %8298 = vmatpush1.bf16.msra.mxu0 %v6601
    %8299 = vmatprep.subr.bf16.mxu0 0
    %8300 = vmatpush1.bf16.msra.mxu0 %v6608
    %8301 = vmatprep.mubr.bf16.mxu0 %v4509
    %8302 = vmatmul.mubr.bf16.gmra.mrb[0].mxu0 %v4508
    %v8303 = vpop.f32.mrb[0].mxu0
    %v8304 = vadd.f32 %v5081, %v8303
    %v8305 = vpop.f32.mrb[0].mxu0
    %v8306 = vpop.f32.mrb[0].mxu0
    %v8307 = vadd.f32 %v5081, %v8306
    %v8308 = vpop.f32.mrb[0].mxu0
    %8309 = vmatprep.mubr.bf16.mxu0 %v4517
    %8310 = vmatmul.mubr.bf16.gmra.mrb[0].mxu0 %v4516
    %v8311 = vpop.f32.mrb[0].mxu0
    %v8312 = vadd.f32 %v5081, %v8311
    %v8313 = vpop.f32.mrb[0].mxu0
    %v8314 = vpop.f32.mrb[0].mxu0
    %v8315 = vadd.f32 %v5081, %v8314
    %v8316 = vpop.f32.mrb[0].mxu0
    %8317 = vmatprep.mubr.bf16.mxu0 %v4525
    %8318 = vmatmul.mubr.bf16.gmra.mrb[0].mxu0 %v4524
    %v8319 = vpop.f32.mrb[0].mxu0
    %v8320 = vadd.f32 %v5081, %v8319
    %v8321 = vpop.f32.mrb[0].mxu0
    %v8322 = vpop.f32.mrb[0].mxu0
    %v8323 = vadd.f32 %v5081, %v8322
    %v8324 = vpop.f32.mrb[0].mxu0
    %8325 = vmatprep.mubr.bf16.mxu0 %v4533
    %8326 = vmatmul.mubr.bf16.gmra.mrb[0].mxu0 %v4532
    %v8327 = vpop.f32.mrb[0].mxu0
    %v8328 = vadd.f32 %v5081, %v8327
    %v8329 = vpop.f32.mrb[0].mxu0
    %v8330 = vpop.f32.mrb[0].mxu0
    %v8331 = vadd.f32 %v5081, %v8330
    %v8332 = vpop.f32.mrb[0].mxu0
    %8333 = vdwg.mxu0
    %8334 = vmatprep.subr.bf16.mxu0 0
    %8335 = vmatpush1.bf16.msra.mxu0 %v6615
    %8336 = vmatprep.subr.bf16.mxu0 0
    %8337 = vmatpush1.bf16.msra.mxu0 %v6622
    %8338 = vmatprep.subr.bf16.mxu0 0
    %8339 = vmatpush1.bf16.msra.mxu0 %v6629
    %8340 = vmatprep.subr.bf16.mxu0 0
    %8341 = vmatpush1.bf16.msra.mxu0 %v6636
    %8342 = vmatprep.subr.bf16.mxu0 0
    %8343 = vmatpush1.bf16.msra.mxu0 %v6643
    %8344 = vmatprep.subr.bf16.mxu0 0
    %8345 = vmatpush1.bf16.msra.mxu0 %v6650
    %8346 = vmatprep.subr.bf16.mxu0 0
    %8347 = vmatpush1.bf16.msra.mxu0 %v6657
    %8348 = vmatprep.subr.bf16.mxu0 0
    %8349 = vmatpush1.bf16.msra.mxu0 %v6664
    %8350 = vmatprep.subr.bf16.mxu0 0
    %8351 = vmatpush1.bf16.msra.mxu0 %v6671
    %8352 = vmatprep.subr.bf16.mxu0 0
    %8353 = vmatpush1.bf16.msra.mxu0 %v6678
    %8354 = vmatprep.subr.bf16.mxu0 0
    %8355 = vmatpush1.bf16.msra.mxu0 %v6685
    %8356 = vmatprep.subr.bf16.mxu0 0
    %8357 = vmatpush1.bf16.msra.mxu0 %v6692
    %8358 = vmatprep.subr.bf16.mxu0 0
    %8359 = vmatpush1.bf16.msra.mxu0 %v6699
    %8360 = vmatprep.subr.bf16.mxu0 0
    %8361 = vmatpush1.bf16.msra.mxu0 %v6706
    %8362 = vmatprep.subr.bf16.mxu0 0
    %8363 = vmatpush1.bf16.msra.mxu0 %v6713
    %8364 = vmatprep.subr.bf16.mxu0 0
    %8365 = vmatpush1.bf16.msra.mxu0 %v6720
    %8366 = vmatprep.mubr.bf16.mxu0 %v4511
    %8367 = vmatmul.mubr.bf16.gmra.mrb[0].mxu0 %v4510
    %v8368 = vpop.f32.mrb[0].mxu0
    %v8369 = vadd.f32 %v8304, %v8368
    %v8370 = vpop.f32.mrb[0].mxu0
    %v8371 = vpop.f32.mrb[0].mxu0
    %v8372 = vadd.f32 %v8307, %v8371
    %v8373 = vpop.f32.mrb[0].mxu0
    %8374 = vmatprep.mubr.bf16.mxu0 %v4519
    %8375 = vmatmul.mubr.bf16.gmra.mrb[0].mxu0 %v4518
    %v8376 = vpop.f32.mrb[0].mxu0
    %v8377 = vadd.f32 %v8312, %v8376
    %v8378 = vpop.f32.mrb[0].mxu0
    %v8379 = vpop.f32.mrb[0].mxu0
    %v8380 = vadd.f32 %v8315, %v8379
    %v8381 = vpop.f32.mrb[0].mxu0
    %8382 = vmatprep.mubr.bf16.mxu0 %v4527
    %8383 = vmatmul.mubr.bf16.gmra.mrb[0].mxu0 %v4526
    %v8384 = vpop.f32.mrb[0].mxu0
    %v8385 = vadd.f32 %v8320, %v8384
    %v8386 = vpop.f32.mrb[0].mxu0
    %v8387 = vpop.f32.mrb[0].mxu0
    %v8388 = vadd.f32 %v8323, %v8387
    %v8389 = vpop.f32.mrb[0].mxu0
    %8390 = vmatprep.mubr.bf16.mxu0 %v4535
    %8391 = vmatmul.mubr.bf16.gmra.mrb[0].mxu0 %v4534
    %v8392 = vpop.f32.mrb[0].mxu0
    %v8393 = vadd.f32 %v8328, %v8392
    %v8394 = vpop.f32.mrb[0].mxu0
    %v8395 = vpop.f32.mrb[0].mxu0
    %v8396 = vadd.f32 %v8331, %v8395
    %v8397 = vpop.f32.mrb[0].mxu0
    %8398 = vdwg.mxu0
    %8399 = vmatprep.subr.bf16.mxu0 0
    %8400 = vmatpush1.bf16.msra.mxu0 %v6727
    %8401 = vmatprep.subr.bf16.mxu0 0
    %8402 = vmatpush1.bf16.msra.mxu0 %v6734
    %8403 = vmatprep.subr.bf16.mxu0 0
    %8404 = vmatpush1.bf16.msra.mxu0 %v6741
    %8405 = vmatprep.subr.bf16.mxu0 0
    %8406 = vmatpush1.bf16.msra.mxu0 %v6748
    %8407 = vmatprep.subr.bf16.mxu0 0
    %8408 = vmatpush1.bf16.msra.mxu0 %v6755
    %8409 = vmatprep.subr.bf16.mxu0 0
    %8410 = vmatpush1.bf16.msra.mxu0 %v6762
    %8411 = vmatprep.subr.bf16.mxu0 0
    %8412 = vmatpush1.bf16.msra.mxu0 %v6769
    %8413 = vmatprep.subr.bf16.mxu0 0
    %8414 = vmatpush1.bf16.msra.mxu0 %v6776
    %8415 = vmatprep.subr.bf16.mxu0 0
    %8416 = vmatpush1.bf16.msra.mxu0 %v6783
    %8417 = vmatprep.subr.bf16.mxu0 0
    %8418 = vmatpush1.bf16.msra.mxu0 %v6790
    %8419 = vmatprep.subr.bf16.mxu0 0
    %8420 = vmatpush1.bf16.msra.mxu0 %v6797
    %8421 = vmatprep.subr.bf16.mxu0 0
    %8422 = vmatpush1.bf16.msra.mxu0 %v6804
    %8423 = vmatprep.subr.bf16.mxu0 0
    %8424 = vmatpush1.bf16.msra.mxu0 %v6811
    %8425 = vmatprep.subr.bf16.mxu0 0
    %8426 = vmatpush1.bf16.msra.mxu0 %v6818
    %8427 = vmatprep.subr.bf16.mxu0 0
    %8428 = vmatpush1.bf16.msra.mxu0 %v6825
    %8429 = vmatprep.subr.bf16.mxu0 0
    %8430 = vmatpush1.bf16.msra.mxu0 %v6832
    %8431 = vmatprep.mubr.bf16.mxu0 %v4513
    %8432 = vmatmul.mubr.bf16.gmra.mrb[0].mxu0 %v4512
    %v8433 = vpop.f32.mrb[0].mxu0
    %v8434 = vadd.f32 %v8369, %v8433
    %v8435 = vpop.f32.mrb[0].mxu0
    %v8436 = vpop.f32.mrb[0].mxu0
    %v8437 = vadd.f32 %v8372, %v8436
    %v8438 = vpop.f32.mrb[0].mxu0
    %8439 = vmatprep.mubr.bf16.mxu0 %v4521
    %8440 = vmatmul.mubr.bf16.gmra.mrb[0].mxu0 %v4520
    %v8441 = vpop.f32.mrb[0].mxu0
    %v8442 = vadd.f32 %v8377, %v8441
    %v8443 = vpop.f32.mrb[0].mxu0
    %v8444 = vpop.f32.mrb[0].mxu0
    %v8445 = vadd.f32 %v8380, %v8444
    %v8446 = vpop.f32.mrb[0].mxu0
    %8447 = vmatprep.mubr.bf16.mxu0 %v4529
    %8448 = vmatmul.mubr.bf16.gmra.mrb[0].mxu0 %v4528
    %v8449 = vpop.f32.mrb[0].mxu0
    %v8450 = vadd.f32 %v8385, %v8449
    %v8451 = vpop.f32.mrb[0].mxu0
    %v8452 = vpop.f32.mrb[0].mxu0
    %v8453 = vadd.f32 %v8388, %v8452
    %v8454 = vpop.f32.mrb[0].mxu0
    %8455 = vmatprep.mubr.bf16.mxu0 %v4537
    %8456 = vmatmul.mubr.bf16.gmra.mrb[0].mxu0 %v4536
    %v8457 = vpop.f32.mrb[0].mxu0
    %v8458 = vadd.f32 %v8393, %v8457
    %v8459 = vpop.f32.mrb[0].mxu0
    %v8460 = vpop.f32.mrb[0].mxu0
    %v8461 = vadd.f32 %v8396, %v8460
    %v8462 = vpop.f32.mrb[0].mxu0
    %8463 = vdwg.mxu0
    %8464 = vmatprep.subr.bf16.mxu0 0
    %8465 = vmatpush1.bf16.msra.mxu0 %v6839
    %8466 = vmatprep.subr.bf16.mxu0 0
    %8467 = vmatpush1.bf16.msra.mxu0 %v6846
    %8468 = vmatprep.subr.bf16.mxu0 0
    %8469 = vmatpush1.bf16.msra.mxu0 %v6853
    %8470 = vmatprep.subr.bf16.mxu0 0
    %8471 = vmatpush1.bf16.msra.mxu0 %v6860
    %8472 = vmatprep.subr.bf16.mxu0 0
    %8473 = vmatpush1.bf16.msra.mxu0 %v6867
    %8474 = vmatprep.subr.bf16.mxu0 0
    %8475 = vmatpush1.bf16.msra.mxu0 %v6874
    %8476 = vmatprep.subr.bf16.mxu0 0
    %8477 = vmatpush1.bf16.msra.mxu0 %v6881
    %8478 = vmatprep.subr.bf16.mxu0 0
    %8479 = vmatpush1.bf16.msra.mxu0 %v6888
    %8480 = vmatprep.subr.bf16.mxu0 0
    %8481 = vmatpush1.bf16.msra.mxu0 %v6895
    %8482 = vmatprep.subr.bf16.mxu0 0
    %8483 = vmatpush1.bf16.msra.mxu0 %v6902
    %8484 = vmatprep.subr.bf16.mxu0 0
    %8485 = vmatpush1.bf16.msra.mxu0 %v6909
    %8486 = vmatprep.subr.bf16.mxu0 0
    %8487 = vmatpush1.bf16.msra.mxu0 %v6916
    %8488 = vmatprep.subr.bf16.mxu0 0
    %8489 = vmatpush1.bf16.msra.mxu0 %v6923
    %8490 = vmatprep.subr.bf16.mxu0 0
    %8491 = vmatpush1.bf16.msra.mxu0 %v6930
    %8492 = vmatprep.subr.bf16.mxu0 0
    %8493 = vmatpush1.bf16.msra.mxu0 %v6937
    %8494 = vmatprep.subr.bf16.mxu0 0
    %8495 = vmatpush1.bf16.msra.mxu0 %v6944
    %8496 = vmatprep.mubr.bf16.mxu0 %v4515
    %8497 = vmatmul.mubr.bf16.gmra.mrb[0].mxu0 %v4514
    %v8498 = vpop.f32.mrb[0].mxu0
    %v8499 = vadd.f32 %v8434, %v8498
    %v8500 = vpop.f32.mrb[0].mxu0
    %v8501 = vpop.f32.mrb[0].mxu0
    %v8502 = vadd.f32 %v8437, %v8501
    %v8503 = vpop.f32.mrb[0].mxu0
    %8504 = vmatprep.mubr.bf16.mxu0 %v4523
    %8505 = vmatmul.mubr.bf16.gmra.mrb[0].mxu0 %v4522
    %v8506 = vpop.f32.mrb[0].mxu0
    %v8507 = vadd.f32 %v8442, %v8506
    %v8508 = vpop.f32.mrb[0].mxu0
    %v8509 = vpop.f32.mrb[0].mxu0
    %v8510 = vadd.f32 %v8445, %v8509
    %v8511 = vpop.f32.mrb[0].mxu0
    %8512 = vmatprep.mubr.bf16.mxu0 %v4531
    %8513 = vmatmul.mubr.bf16.gmra.mrb[0].mxu0 %v4530
    %v8514 = vpop.f32.mrb[0].mxu0
    %v8515 = vadd.f32 %v8450, %v8514
    %v8516 = vpop.f32.mrb[0].mxu0
    %v8517 = vpop.f32.mrb[0].mxu0
    %v8518 = vadd.f32 %v8453, %v8517
    %v8519 = vpop.f32.mrb[0].mxu0
    %8520 = vmatprep.mubr.bf16.mxu0 %v4539
    %8521 = vmatmul.mubr.bf16.gmra.mrb[0].mxu0 %v4538
    %v8522 = vpop.f32.mrb[0].mxu0
    %v8523 = vadd.f32 %v8458, %v8522
    %v8524 = vpop.f32.mrb[0].mxu0
    %v8525 = vpop.f32.mrb[0].mxu0
    %v8526 = vadd.f32 %v8461, %v8525
    %v8527 = vpop.f32.mrb[0].mxu0
    %8528 = vdwg.mxu0
    %v8529 = vtanh.pop %v7647
    %v8530 = vtanh.pop %v7649
    %v8531 = vtanh.pop %v7939
    %v8532 = vtanh.pop %v7941
    %v8533 = vtanh.pop %v8231
    %v8534 = vtanh.pop %v8233
    %v8535 = vtanh.pop %v8499
    %v8536 = vtanh.pop %v7651
    %v8537 = vtanh.pop %v7653
    %v8538 = vtanh.pop %v7943
    %v8539 = vtanh.pop %v7945
    %v8540 = vtanh.pop %v8235
    %v8541 = vtanh.pop %v8237
    %v8542 = vtanh.pop %v8502
    %v8543 = vtanh.pop %v7657
    %v8544 = vtanh.pop %v7659
    %v8545 = vtanh.pop %v7949
    %v8546 = vtanh.pop %v7951
    %v8547 = vtanh.pop %v8241
    %v8548 = vtanh.pop %v8243
    %v8549 = vtanh.pop %v8507
    %v8550 = vtanh.pop %v7661
    %v8551 = vtanh.pop %v7663
    %v8552 = vtanh.pop %v7953
    %v8553 = vtanh.pop %v7955
    %v8554 = vtanh.pop %v8245
    %v8555 = vtanh.pop %v8247
    %v8556 = vtanh.pop %v8510
    %v8557 = vtanh.pop %v7667
    %v8558 = vtanh.pop %v7669
    %v8559 = vtanh.pop %v7959
    %v8560 = vtanh.pop %v7961
    %v8561 = vtanh.pop %v8251
    %v8562 = vtanh.pop %v8253
    %v8563 = vtanh.pop %v8515
    %v8564 = vtanh.pop %v7671
    %v8565 = vtanh.pop %v7673
    %v8566 = vtanh.pop %v7963
    %v8567 = vtanh.pop %v7965
    %v8568 = vtanh.pop %v8255
    %v8569 = vtanh.pop %v8257
    %v8570 = vtanh.pop %v8518
    %v8571 = vtanh.pop %v7677
    %v8572 = vtanh.pop %v7679
    %v8573 = vtanh.pop %v7969
    %v8574 = vtanh.pop %v7971
    %v8575 = vtanh.pop %v8261
    %v8576 = vtanh.pop %v8263
    %v8577 = vtanh.pop %v8523
    %v8578 = vtanh.pop %v7681
    %v8579 = vtanh.pop %v7683
    %v8580 = vtanh.pop %v7973
    %v8581 = vtanh.pop %v7975
    %v8582 = vtanh.pop %v8265
    %v8583 = vtanh.pop %v8267
    %v8584 = vtanh.pop %v8526
    %8585 = vst [vmem:[#allocation3] sm:$0xff] %v8529
    %8586 = vst [vmem:[#allocation3 + $0x8] sm:$0xff] %v8530
    %8587 = vst [vmem:[#allocation3 + $0x10] sm:$0xff] %v8531
    %8588 = vst [vmem:[#allocation3 + $0x18] sm:$0xff] %v8532
    %8589 = vst [vmem:[#allocation3 + $0x20] sm:$0xff] %v8533
    %8590 = vst [vmem:[#allocation3 + $0x28] sm:$0xff] %v8534
    %vm8591 = vcmask 130048
    %8592 = vst.msk [vmem:[#allocation3 + $0x30] sm:$0xff] %vm8591, %v8535
    %8593 = vst [vmem:[#allocation3 + $0x38] sm:$0xff] %v8536
    %8594 = vst [vmem:[#allocation3 + $0x40] sm:$0xff] %v8537
    %8595 = vst [vmem:[#allocation3 + $0x48] sm:$0xff] %v8538
    %8596 = vst [vmem:[#allocation3 + $0x50] sm:$0xff] %v8539
    %8597 = vst [vmem:[#allocation3 + $0x58] sm:$0xff] %v8540
    %8598 = vst [vmem:[#allocation3 + $0x60] sm:$0xff] %v8541
    %8599 = vst.msk [vmem:[#allocation3 + $0x68] sm:$0xff] %vm8591, %v8542
    %8600 = vst [vmem:[#allocation3 + $0x70] sm:$0xff] %v8543
    %8601 = vst [vmem:[#allocation3 + $0x78] sm:$0xff] %v8544
    %8602 = vst [vmem:[#allocation3 + $0x80] sm:$0xff] %v8545
    %8603 = vst [vmem:[#allocation3 + $0x88] sm:$0xff] %v8546
    %8604 = vst [vmem:[#allocation3 + $0x90] sm:$0xff] %v8547
    %8605 = vst [vmem:[#allocation3 + $0x98] sm:$0xff] %v8548
    %8606 = vst.msk [vmem:[#allocation3 + $0xa0] sm:$0xff] %vm8591, %v8549
    %8607 = vst [vmem:[#allocation3 + $0xa8] sm:$0xff] %v8550
    %8608 = vst [vmem:[#allocation3 + $0xb0] sm:$0xff] %v8551
    %8609 = vst [vmem:[#allocation3 + $0xb8] sm:$0xff] %v8552
    %8610 = vst [vmem:[#allocation3 + $0xc0] sm:$0xff] %v8553
    %8611 = vst [vmem:[#allocation3 + $0xc8] sm:$0xff] %v8554
    %8612 = vst [vmem:[#allocation3 + $0xd0] sm:$0xff] %v8555
    %8613 = vst.msk [vmem:[#allocation3 + $0xd8] sm:$0xff] %vm8591, %v8556
    %8614 = vst [vmem:[#allocation3 + $0xe0] sm:$0xff] %v8557
    %8615 = vst [vmem:[#allocation3 + $0xe8] sm:$0xff] %v8558
    %8616 = vst [vmem:[#allocation3 + $0xf0] sm:$0xff] %v8559
    %8617 = vst [vmem:[#allocation3 + $0xf8] sm:$0xff] %v8560
    %8618 = vst [vmem:[#allocation3 + $0x100] sm:$0xff] %v8561
    %8619 = vst [vmem:[#allocation3 + $0x108] sm:$0xff] %v8562
    %8620 = vst.msk [vmem:[#allocation3 + $0x110] sm:$0xff] %vm8591, %v8563
    %8621 = vst [vmem:[#allocation3 + $0x118] sm:$0xff] %v8564
    %8622 = vst [vmem:[#allocation3 + $0x120] sm:$0xff] %v8565
    %8623 = vst [vmem:[#allocation3 + $0x128] sm:$0xff] %v8566
    %8624 = vst [vmem:[#allocation3 + $0x130] sm:$0xff] %v8567
    %8625 = vst [vmem:[#allocation3 + $0x138] sm:$0xff] %v8568
    %8626 = vst [vmem:[#allocation3 + $0x140] sm:$0xff] %v8569
    %8627 = vst.msk [vmem:[#allocation3 + $0x148] sm:$0xff] %vm8591, %v8570
    %8628 = vst [vmem:[#allocation3 + $0x150] sm:$0xff] %v8571
    %8629 = vst [vmem:[#allocation3 + $0x158] sm:$0xff] %v8572
    %8630 = vst [vmem:[#allocation3 + $0x160] sm:$0xff] %v8573
    %8631 = vst [vmem:[#allocation3 + $0x168] sm:$0xff] %v8574
    %8632 = vst [vmem:[#allocation3 + $0x170] sm:$0xff] %v8575
    %8633 = vst [vmem:[#allocation3 + $0x178] sm:$0xff] %v8576
    %8634 = vst.msk [vmem:[#allocation3 + $0x180] sm:$0xff] %vm8591, %v8577
    %8635 = vst [vmem:[#allocation3 + $0x188] sm:$0xff] %v8578
    %8636 = vst [vmem:[#allocation3 + $0x190] sm:$0xff] %v8579
    %8637 = vst [vmem:[#allocation3 + $0x198] sm:$0xff] %v8580
    %8638 = vst [vmem:[#allocation3 + $0x1a0] sm:$0xff] %v8581
    %8639 = vst [vmem:[#allocation3 + $0x1a8] sm:$0xff] %v8582
    %8640 = vst [vmem:[#allocation3 + $0x1b0] sm:$0xff] %v8583
    %8641 = vst.msk [vmem:[#allocation3 + $0x1b8] sm:$0xff] %vm8591, %v8584
    // Predicated region
    $region58: #{generator_forward.1} parent=1 // pred_check
      _
    $region59: #{generator_forward.1} parent=1 // pred_check_branch
      %8643 = sbr.rel (0) target = $region61
    $region60: #{generator_forward.1} parent=1 // pred_region
      %s8645 = ssub.s32 7168, 7168
      %8646 = vsyncadd [#allocation4], %s8645
      %s8647 = sshll.u32 [#allocation3], 4
      %s8648 = int_to_ptr.vmem [resolvable:$true] %s8647
      %8653 = dma.vmem_to_hbm [thread:$0]  %s8648, 7168, %s14, [#allocation4], 896, 896, 56
    $region61: #{generator_forward.1} parent=1 // pred_fallthru
      _
    // Predicated region
    $region62: #{generator_forward.1} parent=1 // pred_check
      _
    $region63: #{generator_forward.1} parent=1 // pred_check_branch
      %8655 = sbr.rel (0) target = $region65
    $region64: #{generator_forward.1} parent=1 // pred_region
      %8656 = dma.done [#allocation4], 7168
    $region65: #{generator_forward.1} parent=1 // pred_fallthru
      _
    %8657 = vsyncpa [#allocation4], 1

</llo_original>
